<compile_context>
chip_gen: v5e
topology: v5e:2x2
jax: 0.10.0
libtpu: 0.0.40
codegen_flags: <defaults>
</compile_context>

<pallas_src>
import math

import jax
import jax.numpy as jnp
from jax import lax
from jax.experimental import pallas as pl
from jax.experimental.pallas import tpu as pltpu

DILATIONS = (1, 3, 5)          # AdaINResBlock1 dilations
KSIZE = 7                      # dwconv and res-block conv kernel size
_PI = math.pi
_INV_SQRT2 = 1.0 / math.sqrt(2.0)
_HIGHEST = lax.Precision.HIGHEST


# ----------------------------- in-kernel helpers -----------------------------

def _sin_poly(x):
    """sin(x): range-reduce to [-pi/2, pi/2] + odd Taylor poly (|err| < 1e-6)."""
    k = jnp.floor(x * (1.0 / _PI) + 0.5)              # x = k*pi + r
    r = x - k * _PI
    parity = k - 2.0 * jnp.floor(k * 0.5)             # k mod 2  (0. or 1.)
    sign = 1.0 - 2.0 * parity                         # (-1)**k
    r2 = r * r
    p = r * (1.0 + r2 * (-1.0 / 6.0 + r2 * (1.0 / 120.0 + r2 * (-1.0 / 5040.0
            + r2 * (1.0 / 362880.0 + r2 * (-1.0 / 39916800.0))))))
    return sign * p


def _erf_poly(x):
    """erf(x), Abramowitz & Stegun 7.1.26 (|err| < 1.5e-7)."""
    a1, a2, a3, a4, a5 = (0.254829592, -0.284496736, 1.421413741,
                          -1.453152027, 1.061405429)
    p = 0.3275911
    ax = jnp.abs(x)
    t = 1.0 / (1.0 + p * ax)
    poly = ((((a5 * t + a4) * t + a3) * t + a2) * t + a1) * t
    y = 1.0 - poly * jnp.exp(-ax * ax)
    return jnp.where(x >= 0, y, -y)


def _gelu_exact(x):
    return 0.5 * x * (1.0 + _erf_poly(x * _INV_SQRT2))


def _instance_norm(v, eps=1e-5):
    mu = jnp.mean(v, axis=-1, keepdims=True)
    var = jnp.mean((v - mu) ** 2, axis=-1, keepdims=True)
    return (v - mu) / jnp.sqrt(var + eps)


def _snake(v, alpha):
    s = _sin_poly(alpha * v)
    return v + (s * s) / alpha


# --------------------------------- kernel ------------------------------------

def convnext_kernel(x_ref, dww_ref, dwb_ref, ada_ref, alpha_ref,
                    cw1_ref, cb1_ref, cw2_ref, cb2_ref,
                    pw1w_ref, pw1b_ref, grng_ref, grnb_ref,
                    pw2w_ref, pw2b_ref, o_ref):
    x_in = x_ref[0]                                    # (Cin, T) raw input
    cin, t_len = x_in.shape
    cout = o_ref.shape[1]

    lane = lax.broadcasted_iota(jnp.int32, (cin, t_len), 1)

    def shift(h, s):
        # column t <- h[:, t - s]; zeros outside [0, T) (conv zero padding).
        # roll runs on the XLU slot, the mask is one VPU select.
        if s == 0:
            return h
        r = pltpu.roll(h, shift=s % t_len, axis=1)
        if s > 0:
            return jnp.where(lane >= s, r, 0.0)
        return jnp.where(lane < t_len + s, r, 0.0)

    def conv7(h, w_stk, b, dil):
        # Conv1d(C, C, k=7, dilation=dil, padding=3*dil) as ONE MXU matmul:
        # stack the 7 time-shifted copies on the contraction axis (7*C = 224).
        taps = [shift(h, (3 - k) * dil) for k in range(KSIZE)]
        h_stk = jnp.concatenate(taps, axis=0)          # (7*C, T)
        return jnp.dot(w_stk, h_stk, preferred_element_type=jnp.float32) + b

    # ---- depthwise conv (k=7, pad=3, groups=Cin): 7 broadcast MACs (VPU) ----
    h = jnp.zeros_like(x_in)
    for k in range(KSIZE):
        h = h + dww_ref[:, k:k + 1] * shift(x_in, 3 - k)
    h = h + dwb_ref[...]

    # ---- AdaINResBlock1(channels=Cin, kernel=7, dilations=(1,3,5)) ----
    for i, dil in enumerate(DILATIONS):
        g1 = ada_ref[0, 4 * i + 0]                     # (Cin, 1)
        b1 = ada_ref[0, 4 * i + 1]
        g2 = ada_ref[0, 4 * i + 2]
        b2 = ada_ref[0, 4 * i + 3]
        a1 = alpha_ref[2 * i + 0]
        a2 = alpha_ref[2 * i + 1]

        xt = (1.0 + g1) * _instance_norm(h) + b1       # AdaIN1d
        xt = _snake(xt, a1)                            # x + 1/a * sin(a x)^2
        xt = conv7(xt, cw1_ref[i], cb1_ref[i], dil)
        xt = (1.0 + g2) * _instance_norm(xt) + b2
        xt = _snake(xt, a2)
        xt = conv7(xt, cw2_ref[i], cb2_ref[i], 1)
        h = xt + h

    # ---- channel-mixing MLP: channels stay on sublanes, no transposes ----
    z = jnp.dot(pw1w_ref[...], h, preferred_element_type=jnp.float32) + pw1b_ref[...]
    z = _gelu_exact(z)                                 # exact (erf) GELU

    # GRN: L2 over time per channel, normalized by the per-sample channel mean.
    gx = jnp.sqrt(jnp.sum(z * z, axis=-1, keepdims=True))   # (Cmid, 1)
    gx_mean = jnp.mean(gx, axis=0, keepdims=True)            # (1, 1)
    nx = gx / (gx_mean + 1e-6)
    z = grng_ref[...] * (z * nx) + grnb_ref[...] + z

    y = jnp.dot(pw2w_ref[...], z, preferred_element_type=jnp.float32) + pw2b_ref[...]

    # residual = first dim_out channels of the ORIGINAL input
    o_ref[0] = (x_in[:cout, :] + y).astype(o_ref.dtype)


# ----------------------------- host-side wrapper ------------------------------

def weight_norm_effective(v, g):
    """PyTorch weight_norm (dim=0): w = g * v / ||v|| (norm over non-output dims)."""
    norm = jnp.sqrt(jnp.sum(v * v, axis=tuple(range(1, v.ndim)), keepdims=True))
    return g.reshape((-1,) + (1,) * (v.ndim - 1)) * v / norm


def convnext_block(x, s, params):
    """x: (N, Cin, T) f32;  s: (N, style_dim) f32;  params: dict (torch layouts)."""
    n, cin, t_len = x.shape
    cmid = params["pw1_w"].shape[0]
    cout = params["pw2_w"].shape[0]

    # ---- cheap host/XLA-side packing (weight_norm + tap stacking, done once) ----
    def stack_taps(w):                                  # (C, C, 7) -> (C, 7*C)
        return jnp.concatenate([w[:, :, k] for k in range(KSIZE)], axis=1)

    cw1 = jnp.stack([stack_taps(weight_norm_effective(params["c1_v"][i],
                                                      params["c1_g"][i]))
                     for i in range(3)])                # (3, Cin, 7*Cin)
    cw2 = jnp.stack([stack_taps(weight_norm_effective(params["c2_v"][i],
                                                      params["c2_g"][i]))
                     for i in range(3)])
    cb1 = params["c1_b"][..., None]                     # (3, Cin, 1)
    cb2 = params["c2_b"][..., None]

    # AdaIN style projections: tiny (N,style)x(style,2C) matmuls done here so the
    # kernel gets per-sample (gamma, beta) already channel-on-sublane.
    ada_parts = []
    for i in range(3):
        h1 = jnp.matmul(s, params["ada1_w"][i].T, precision=_HIGHEST) + params["ada1_b"][i]
        h2 = jnp.matmul(s, params["ada2_w"][i].T, precision=_HIGHEST) + params["ada2_b"][i]
        ada_parts += [h1[:, :cin], h1[:, cin:], h2[:, :cin], h2[:, cin:]]
    ada = jnp.stack(ada_parts, axis=1)[..., None]       # (N, 12, Cin, 1)

    alpha = jnp.stack([params["alpha1"][0], params["alpha2"][0],
                       params["alpha1"][1], params["alpha2"][1],
                       params["alpha1"][2], params["alpha2"][2]], axis=0)[..., None]

    dww = params["dw_w"][:, 0, :]                       # (Cin, 7)
    dwb = params["dw_b"][:, None]                       # (Cin, 1)
    pw1w, pw1b = params["pw1_w"], params["pw1_b"][:, None]
    pw2w, pw2b = params["pw2_w"], params["pw2_b"][:, None]
    grng, grnb = params["grn_g"][:, None], params["grn_b"][:, None]

    # advisory cost estimate for the XLA scheduler
    flops = n * (2 * KSIZE * cin * t_len
                 + 6 * 2 * cin * (KSIZE * cin) * t_len
                 + 2 * cmid * cin * t_len
                 + 2 * cout * cmid * t_len)
    transcendentals = n * t_len * (6 * cin + cmid)
    nbytes = 4 * (x.size + n * cout * t_len + dww.size + dwb.size + ada.size
                  + alpha.size + cw1.size + cb1.size + cw2.size + cb2.size
                  + pw1w.size + pw1b.size + grng.size + grnb.size
                  + pw2w.size + pw2b.size)

    grid_spec = pltpu.PrefetchScalarGridSpec(
        num_scalar_prefetch=0,
        grid=(n,),
        in_specs=[
            pl.BlockSpec((1, cin, t_len), lambda b: (b, 0, 0)),            # x
            pl.BlockSpec((cin, KSIZE), lambda b: (0, 0)),                  # dw weight
            pl.BlockSpec((cin, 1), lambda b: (0, 0)),                      # dw bias
            pl.BlockSpec((1, 12, cin, 1), lambda b: (b, 0, 0, 0)),         # AdaIN gamma/beta
            pl.BlockSpec((6, cin, 1), lambda b: (0, 0, 0)),                # snake alphas
            pl.BlockSpec((3, cin, KSIZE * cin), lambda b: (0, 0, 0)),      # convs1 (tap-stacked)
            pl.BlockSpec((3, cin, 1), lambda b: (0, 0, 0)),                # convs1 bias
            pl.BlockSpec((3, cin, KSIZE * cin), lambda b: (0, 0, 0)),      # convs2 (tap-stacked)
            pl.BlockSpec((3, cin, 1), lambda b: (0, 0, 0)),                # convs2 bias
            pl.BlockSpec((cmid, cin), lambda b: (0, 0)),                   # pwconv1 W
            pl.BlockSpec((cmid, 1), lambda b: (0, 0)),                     # pwconv1 b
            pl.BlockSpec((cmid, 1), lambda b: (0, 0)),                     # GRN gamma
            pl.BlockSpec((cmid, 1), lambda b: (0, 0)),                     # GRN beta
            pl.BlockSpec((cout, cmid), lambda b: (0, 0)),                  # pwconv2 W
            pl.BlockSpec((cout, 1), lambda b: (0, 0)),                     # pwconv2 b
        ],
        out_specs=pl.BlockSpec((1, cout, t_len), lambda b: (b, 0, 0)),
    )

    return pl.pallas_call(
        convnext_kernel,
        out_shape=jax.ShapeDtypeStruct((n, cout, t_len), x.dtype),
        grid_spec=grid_spec,
        compiler_params=pltpu.CompilerParams(dimension_semantics=("parallel",)),
        cost_estimate=pl.CostEstimate(flops=int(flops),
                                      transcendentals=int(transcendentals),
                                      bytes_accessed=int(nbytes)),
    )(x, dww, dwb, ada, alpha, cw1, cb1, cw2, cb2,
      pw1w, pw1b, grng, grnb, pw2w, pw2b)


# ----------------------------- plain-JAX reference -----------------------------

def reference(x, s, p):
    n, cin, t_len = x.shape
    cout = p["pw2_w"].shape[0]

    def conv1d(h, w, b, pad, dil=1, groups=1):
        y = lax.conv_general_dilated(
            h, w, window_strides=(1,), padding=[(pad, pad)], rhs_dilation=(dil,),
            dimension_numbers=("NCH", "OIH", "NCH"), feature_group_count=groups,
            precision=_HIGHEST)
        return y if b is None else y + b[None, :, None]

    def adain(v, gamma, beta):
        mu = jnp.mean(v, axis=-1, keepdims=True)
        var = jnp.mean((v - mu) ** 2, axis=-1, keepdims=True)
        vn = (v - mu) / jnp.sqrt(var + 1e-5)
        return (1.0 + gamma[:, :, None]) * vn + beta[:, :, None]

    h = conv1d(x, p["dw_w"], p["dw_b"], 3, groups=cin)
    for i, dil in enumerate(DILATIONS):
        st1 = jnp.matmul(s, p["ada1_w"][i].T, precision=_HIGHEST) + p["ada1_b"][i]
        st2 = jnp.matmul(s, p["ada2_w"][i].T, precision=_HIGHEST) + p["ada2_b"][i]
        g1, b1 = st1[:, :cin], st1[:, cin:]
        g2, b2 = st2[:, :cin], st2[:, cin:]
        a1 = p["alpha1"][i][None, :, None]
        a2 = p["alpha2"][i][None, :, None]
        w1 = weight_norm_effective(p["c1_v"][i], p["c1_g"][i])
        w2 = weight_norm_effective(p["c2_v"][i], p["c2_g"][i])

        xt = adain(h, g1, b1)
        xt = xt + (1.0 / a1) * jnp.sin(a1 * xt) ** 2
        xt = conv1d(xt, w1, p["c1_b"][i], 3 * dil, dil=dil)
        xt = adain(xt, g2, b2)
        xt = xt + (1.0 / a2) * jnp.sin(a2 * xt) ** 2
        xt = conv1d(xt, w2, p["c2_b"][i], 3)
        h = xt + h

    z = jnp.transpose(h, (0, 2, 1))                                   # (N, T, Cin)
    z = jnp.matmul(z, p["pw1_w"].T, precision=_HIGHEST) + p["pw1_b"]
    z = jax.nn.gelu(z, approximate=False)
    gx = jnp.sqrt(jnp.sum(z * z, axis=1, keepdims=True))              # (N, 1, Cmid)
    nx = gx / (jnp.mean(gx, axis=-1, keepdims=True) + 1e-6)
    z = p["grn_g"][None, None, :] * (z * nx) + p["grn_b"][None, None, :] + z
    z = jnp.matmul(z, p["pw2_w"].T, precision=_HIGHEST) + p["pw2_b"]
    y = jnp.transpose(z, (0, 2, 1))
    return x[:, :cout, :] + y


# ------------------------------------ main -------------------------------------

if __name__ == "__main__":
    key = jax.random.PRNGKey(0)
    N, Cin, Cout, Cmid, Sdim, T = 2, 32, 16, 64, 64, 128

    keys = iter(jax.random.split(key, 40))

    def nrm(shape, scale=0.1):
        return scale * jax.random.normal(next(keys), shape, jnp.float32)

    x = jax.random.normal(next(keys), (N, Cin, T), jnp.float32)
    s = jax.random.normal(next(keys), (N, Sdim), jnp.float32)

    params = dict(
        dw_w=nrm((Cin, 1, KSIZE), 0.3),        # depthwise conv (not weight-normed)
        dw_b=nrm((Cin,), 0.1),
        c1_v=nrm((3, Cin, Cin, KSIZE), 1.0),   # weight_norm direction / magnitude
        c1_g=1.0 + nrm((3, Cin), 0.1),
        c1_b=nrm((3, Cin), 0.1),
        c2_v=nrm((3, Cin, Cin, KSIZE), 1.0),
        c2_g=1.0 + nrm((3, Cin), 0.1),
        c2_b=nrm((3, Cin), 0.1),
        ada1_w=nrm((3, 2 * Cin, Sdim), 0.1),   # AdaIN1d.fc
        ada1_b=nrm((3, 2 * Cin), 0.1),
        ada2_w=nrm((3, 2 * Cin, Sdim), 0.1),
        ada2_b=nrm((3, 2 * Cin), 0.1),
        alpha1=1.0 + nrm((3, Cin), 0.1),       # snake alphas (init ~1)
        alpha2=1.0 + nrm((3, Cin), 0.1),
        pw1_w=nrm((Cmid, Cin), 0.2),
        pw1_b=nrm((Cmid,), 0.1),
        grn_g=nrm((Cmid,), 0.1),
        grn_b=nrm((Cmid,), 0.1),
        pw2_w=nrm((Cout, Cmid), 0.2),
        pw2_b=nrm((Cout,), 0.1),
    )

    out = convnext_block(x, s, params)
    out = jax.block_until_ready(out)

    ref = reference(x, s, params)
    assert out.shape == (N, Cout, T)
    max_err = float(jnp.max(jnp.abs(out - ref)))
    assert jnp.allclose(out, ref, atol=1e-2, rtol=1e-2), f"mismatch vs reference: {max_err}"

    print("KERNEL_OK")
</pallas_src>

<mosaic_0001>
module attributes {stable_mosaic.version = 11 : i64} {
  func.func @convnext_kernel(%arg0: i32, %arg1: memref<1x32x128xf32, #tpu.memory_space<vmem>>, %arg2: memref<32x7xf32, #tpu.memory_space<vmem>>, %arg3: memref<32x1xf32, #tpu.memory_space<vmem>>, %arg4: memref<1x12x32x1xf32, #tpu.memory_space<vmem>>, %arg5: memref<6x32x1xf32, #tpu.memory_space<vmem>>, %arg6: memref<3x32x224xf32, #tpu.memory_space<vmem>>, %arg7: memref<3x32x1xf32, #tpu.memory_space<vmem>>, %arg8: memref<3x32x224xf32, #tpu.memory_space<vmem>>, %arg9: memref<3x32x1xf32, #tpu.memory_space<vmem>>, %arg10: memref<64x32xf32, #tpu.memory_space<vmem>>, %arg11: memref<64x1xf32, #tpu.memory_space<vmem>>, %arg12: memref<64x1xf32, #tpu.memory_space<vmem>>, %arg13: memref<64x1xf32, #tpu.memory_space<vmem>>, %arg14: memref<16x64xf32, #tpu.memory_space<vmem>>, %arg15: memref<16x1xf32, #tpu.memory_space<vmem>>, %arg16: memref<1x16x128xf32, #tpu.memory_space<vmem>>) attributes {dimension_semantics = [#tpu.dimension_semantics<parallel>], iteration_bounds = array<i64: 2>, scalar_prefetch = 0 : i64, scratch_operands = 0 : i64, tpu.core_type = #tpu.core_type<tc>, window_params = [{transform_indices = @transform_0, window_bounds = array<i64: 1, 32, 128>}, {pipeline_mode = #tpu.pipeline_mode<synchronous>, transform_indices = @transform_1, window_bounds = array<i64: 32, 7>}, {pipeline_mode = #tpu.pipeline_mode<synchronous>, transform_indices = @transform_2, window_bounds = array<i64: 32, 1>}, {transform_indices = @transform_3, window_bounds = array<i64: 1, 12, 32, 1>}, {pipeline_mode = #tpu.pipeline_mode<synchronous>, transform_indices = @transform_4, window_bounds = array<i64: 6, 32, 1>}, {pipeline_mode = #tpu.pipeline_mode<synchronous>, transform_indices = @transform_5, window_bounds = array<i64: 3, 32, 224>}, {pipeline_mode = #tpu.pipeline_mode<synchronous>, transform_indices = @transform_6, window_bounds = array<i64: 3, 32, 1>}, {pipeline_mode = #tpu.pipeline_mode<synchronous>, transform_indices = @transform_7, window_bounds = array<i64: 3, 32, 224>}, {pipeline_mode = #tpu.pipeline_mode<synchronous>, transform_indices = @transform_8, window_bounds = array<i64: 3, 32, 1>}, {pipeline_mode = #tpu.pipeline_mode<synchronous>, transform_indices = @transform_9, window_bounds = array<i64: 64, 32>}, {pipeline_mode = #tpu.pipeline_mode<synchronous>, transform_indices = @transform_10, window_bounds = array<i64: 64, 1>}, {pipeline_mode = #tpu.pipeline_mode<synchronous>, transform_indices = @transform_11, window_bounds = array<i64: 64, 1>}, {pipeline_mode = #tpu.pipeline_mode<synchronous>, transform_indices = @transform_12, window_bounds = array<i64: 64, 1>}, {pipeline_mode = #tpu.pipeline_mode<synchronous>, transform_indices = @transform_13, window_bounds = array<i64: 16, 64>}, {pipeline_mode = #tpu.pipeline_mode<synchronous>, transform_indices = @transform_14, window_bounds = array<i64: 16, 1>}, {transform_indices = @transform_15, window_bounds = array<i64: 1, 16, 128>}]} {
    %c0 = arith.constant 0 : index
    %c0_0 = arith.constant 0 : index
    %c0_1 = arith.constant 0 : index
    %0 = vector.load %arg1[%c0, %c0_0, %c0_1] : memref<1x32x128xf32, #tpu.memory_space<vmem>>, vector<1x32x128xf32>
    %1 = vector.shape_cast %0 : vector<1x32x128xf32> to vector<32x128xf32>
    %2 = tpu.iota {dimensions = array<i32: 1>} : vector<32x128xi32>
    %cst = arith.constant 0.000000e+00 : f32
    %3 = vector.broadcast %cst : f32 to vector<32x128xf32>
    %c0_2 = arith.constant 0 : index
    %c0_3 = arith.constant 0 : index
    %4 = vector.load %arg2[%c0_2, %c0_3] : memref<32x7xf32, #tpu.memory_space<vmem>>, vector<32x1xf32>
    %c3_i32 = arith.constant 3 : i32
    %5 = tpu.dynamic_rotate %1 by %c3_i32 dim 1 : vector<32x128xf32>, i32 -> vector<32x128xf32>
    %c3_i32_4 = arith.constant 3 : i32
    %6 = vector.broadcast %c3_i32_4 : i32 to vector<32x128xi32>
    %7 = arith.cmpi sge, %2, %6 : vector<32x128xi32>
    %cst_5 = arith.constant 0.000000e+00 : f32
    %8 = vector.broadcast %cst_5 : f32 to vector<32x128xf32>
    %9 = arith.select %7, %5, %8 : vector<32x128xi1>, vector<32x128xf32>
    %10 = vector.broadcast %4 : vector<32x1xf32> to vector<32x128xf32>
    %11 = arith.mulf %10, %9 : vector<32x128xf32>
    %12 = arith.addf %3, %11 : vector<32x128xf32>
    %c0_6 = arith.constant 0 : index
    %c1 = arith.constant 1 : index
    %13 = vector.load %arg2[%c0_6, %c1] : memref<32x7xf32, #tpu.memory_space<vmem>>, vector<32x1xf32>
    %c2_i32 = arith.constant 2 : i32
    %14 = tpu.dynamic_rotate %1 by %c2_i32 dim 1 : vector<32x128xf32>, i32 -> vector<32x128xf32>
    %c2_i32_7 = arith.constant 2 : i32
    %15 = vector.broadcast %c2_i32_7 : i32 to vector<32x128xi32>
    %16 = arith.cmpi sge, %2, %15 : vector<32x128xi32>
    %cst_8 = arith.constant 0.000000e+00 : f32
    %17 = vector.broadcast %cst_8 : f32 to vector<32x128xf32>
    %18 = arith.select %16, %14, %17 : vector<32x128xi1>, vector<32x128xf32>
    %19 = vector.broadcast %13 : vector<32x1xf32> to vector<32x128xf32>
    %20 = arith.mulf %19, %18 : vector<32x128xf32>
    %21 = arith.addf %12, %20 : vector<32x128xf32>
    %c0_9 = arith.constant 0 : index
    %c2 = arith.constant 2 : index
    %22 = vector.load %arg2[%c0_9, %c2] : memref<32x7xf32, #tpu.memory_space<vmem>>, vector<32x1xf32>
    %c1_i32 = arith.constant 1 : i32
    %23 = tpu.dynamic_rotate %1 by %c1_i32 dim 1 : vector<32x128xf32>, i32 -> vector<32x128xf32>
    %c1_i32_10 = arith.constant 1 : i32
    %24 = vector.broadcast %c1_i32_10 : i32 to vector<32x128xi32>
    %25 = arith.cmpi sge, %2, %24 : vector<32x128xi32>
    %cst_11 = arith.constant 0.000000e+00 : f32
    %26 = vector.broadcast %cst_11 : f32 to vector<32x128xf32>
    %27 = arith.select %25, %23, %26 : vector<32x128xi1>, vector<32x128xf32>
    %28 = vector.broadcast %22 : vector<32x1xf32> to vector<32x128xf32>
    %29 = arith.mulf %28, %27 : vector<32x128xf32>
    %30 = arith.addf %21, %29 : vector<32x128xf32>
    %c0_12 = arith.constant 0 : index
    %c3 = arith.constant 3 : index
    %31 = vector.load %arg2[%c0_12, %c3] : memref<32x7xf32, #tpu.memory_space<vmem>>, vector<32x1xf32>
    %32 = vector.broadcast %31 : vector<32x1xf32> to vector<32x128xf32>
    %33 = arith.mulf %32, %1 : vector<32x128xf32>
    %34 = arith.addf %30, %33 : vector<32x128xf32>
    %c0_13 = arith.constant 0 : index
    %c4 = arith.constant 4 : index
    %35 = vector.load %arg2[%c0_13, %c4] : memref<32x7xf32, #tpu.memory_space<vmem>>, vector<32x1xf32>
    %c127_i32 = arith.constant 127 : i32
    %36 = tpu.dynamic_rotate %1 by %c127_i32 dim 1 : vector<32x128xf32>, i32 -> vector<32x128xf32>
    %c127_i32_14 = arith.constant 127 : i32
    %37 = vector.broadcast %c127_i32_14 : i32 to vector<32x128xi32>
    %38 = arith.cmpi slt, %2, %37 : vector<32x128xi32>
    %cst_15 = arith.constant 0.000000e+00 : f32
    %39 = vector.broadcast %cst_15 : f32 to vector<32x128xf32>
    %40 = arith.select %38, %36, %39 : vector<32x128xi1>, vector<32x128xf32>
    %41 = vector.broadcast %35 : vector<32x1xf32> to vector<32x128xf32>
    %42 = arith.mulf %41, %40 : vector<32x128xf32>
    %43 = arith.addf %34, %42 : vector<32x128xf32>
    %c0_16 = arith.constant 0 : index
    %c5 = arith.constant 5 : index
    %44 = vector.load %arg2[%c0_16, %c5] : memref<32x7xf32, #tpu.memory_space<vmem>>, vector<32x1xf32>
    %c126_i32 = arith.constant 126 : i32
    %45 = tpu.dynamic_rotate %1 by %c126_i32 dim 1 : vector<32x128xf32>, i32 -> vector<32x128xf32>
    %c126_i32_17 = arith.constant 126 : i32
    %46 = vector.broadcast %c126_i32_17 : i32 to vector<32x128xi32>
    %47 = arith.cmpi slt, %2, %46 : vector<32x128xi32>
    %cst_18 = arith.constant 0.000000e+00 : f32
    %48 = vector.broadcast %cst_18 : f32 to vector<32x128xf32>
    %49 = arith.select %47, %45, %48 : vector<32x128xi1>, vector<32x128xf32>
    %50 = vector.broadcast %44 : vector<32x1xf32> to vector<32x128xf32>
    %51 = arith.mulf %50, %49 : vector<32x128xf32>
    %52 = arith.addf %43, %51 : vector<32x128xf32>
    %c0_19 = arith.constant 0 : index
    %c6 = arith.constant 6 : index
    %53 = vector.load %arg2[%c0_19, %c6] : memref<32x7xf32, #tpu.memory_space<vmem>>, vector<32x1xf32>
    %c125_i32 = arith.constant 125 : i32
    %54 = tpu.dynamic_rotate %1 by %c125_i32 dim 1 : vector<32x128xf32>, i32 -> vector<32x128xf32>
    %c125_i32_20 = arith.constant 125 : i32
    %55 = vector.broadcast %c125_i32_20 : i32 to vector<32x128xi32>
    %56 = arith.cmpi slt, %2, %55 : vector<32x128xi32>
    %cst_21 = arith.constant 0.000000e+00 : f32
    %57 = vector.broadcast %cst_21 : f32 to vector<32x128xf32>
    %58 = arith.select %56, %54, %57 : vector<32x128xi1>, vector<32x128xf32>
    %59 = vector.broadcast %53 : vector<32x1xf32> to vector<32x128xf32>
    %60 = arith.mulf %59, %58 : vector<32x128xf32>
    %61 = arith.addf %52, %60 : vector<32x128xf32>
    %c0_22 = arith.constant 0 : index
    %c0_23 = arith.constant 0 : index
    %62 = vector.load %arg3[%c0_22, %c0_23] : memref<32x1xf32, #tpu.memory_space<vmem>>, vector<32x1xf32>
    %63 = vector.broadcast %62 : vector<32x1xf32> to vector<32x128xf32>
    %64 = arith.addf %61, %63 : vector<32x128xf32>
    %c0_24 = arith.constant 0 : index
    %c0_25 = arith.constant 0 : index
    %c0_26 = arith.constant 0 : index
    %c0_27 = arith.constant 0 : index
    %65 = vector.load %arg4[%c0_24, %c0_25, %c0_26, %c0_27] : memref<1x12x32x1xf32, #tpu.memory_space<vmem>>, vector<1x1x32x1xf32>
    %66 = vector.shape_cast %65 : vector<1x1x32x1xf32> to vector<32x1xf32>
    %c0_28 = arith.constant 0 : index
    %c1_29 = arith.constant 1 : index
    %c0_30 = arith.constant 0 : index
    %c0_31 = arith.constant 0 : index
    %67 = vector.load %arg4[%c0_28, %c1_29, %c0_30, %c0_31] : memref<1x12x32x1xf32, #tpu.memory_space<vmem>>, vector<1x1x32x1xf32>
    %68 = vector.shape_cast %67 : vector<1x1x32x1xf32> to vector<32x1xf32>
    %c0_32 = arith.constant 0 : index
    %c2_33 = arith.constant 2 : index
    %c0_34 = arith.constant 0 : index
    %c0_35 = arith.constant 0 : index
    %69 = vector.load %arg4[%c0_32, %c2_33, %c0_34, %c0_35] : memref<1x12x32x1xf32, #tpu.memory_space<vmem>>, vector<1x1x32x1xf32>
    %70 = vector.shape_cast %69 : vector<1x1x32x1xf32> to vector<32x1xf32>
    %c0_36 = arith.constant 0 : index
    %c3_37 = arith.constant 3 : index
    %c0_38 = arith.constant 0 : index
    %c0_39 = arith.constant 0 : index
    %71 = vector.load %arg4[%c0_36, %c3_37, %c0_38, %c0_39] : memref<1x12x32x1xf32, #tpu.memory_space<vmem>>, vector<1x1x32x1xf32>
    %72 = vector.shape_cast %71 : vector<1x1x32x1xf32> to vector<32x1xf32>
    %c0_40 = arith.constant 0 : index
    %c0_41 = arith.constant 0 : index
    %c0_42 = arith.constant 0 : index
    %73 = vector.load %arg5[%c0_40, %c0_41, %c0_42] : memref<6x32x1xf32, #tpu.memory_space<vmem>>, vector<1x32x1xf32>
    %74 = vector.shape_cast %73 : vector<1x32x1xf32> to vector<32x1xf32>
    %c1_43 = arith.constant 1 : index
    %c0_44 = arith.constant 0 : index
    %c0_45 = arith.constant 0 : index
    %75 = vector.load %arg5[%c1_43, %c0_44, %c0_45] : memref<6x32x1xf32, #tpu.memory_space<vmem>>, vector<1x32x1xf32>
    %76 = vector.shape_cast %75 : vector<1x32x1xf32> to vector<32x1xf32>
    %cst_46 = arith.constant 1.000000e+00 : f32
    %77 = vector.broadcast %cst_46 : f32 to vector<32x1xf32>
    %78 = arith.addf %77, %66 : vector<32x1xf32>
    %cst_47 = arith.constant dense<0.000000e+00> : vector<32xf32>
    %79 = vector.multi_reduction <add>, %64, %cst_47 [1] : vector<32x128xf32> to vector<32xf32>
    %80 = vector.shape_cast %79 : vector<32xf32> to vector<32x1xf32>
    %cst_48 = arith.constant 1.280000e+02 : f32
    %81 = vector.broadcast %cst_48 : f32 to vector<32x1xf32>
    %82 = arith.divf %80, %81 : vector<32x1xf32>
    %83 = vector.broadcast %82 : vector<32x1xf32> to vector<32x128xf32>
    %84 = arith.subf %64, %83 : vector<32x128xf32>
    %85 = arith.mulf %84, %84 : vector<32x128xf32>
    %cst_49 = arith.constant dense<0.000000e+00> : vector<32xf32>
    %86 = vector.multi_reduction <add>, %85, %cst_49 [1] : vector<32x128xf32> to vector<32xf32>
    %87 = vector.shape_cast %86 : vector<32xf32> to vector<32x1xf32>
    %cst_50 = arith.constant 1.280000e+02 : f32
    %88 = vector.broadcast %cst_50 : f32 to vector<32x1xf32>
    %89 = arith.divf %87, %88 : vector<32x1xf32>
    %90 = vector.broadcast %82 : vector<32x1xf32> to vector<32x128xf32>
    %91 = arith.subf %64, %90 : vector<32x128xf32>
    %cst_51 = arith.constant 9.99999974E-6 : f32
    %92 = vector.broadcast %cst_51 : f32 to vector<32x1xf32>
    %93 = arith.addf %89, %92 : vector<32x1xf32>
    %94 = math.sqrt %93 : vector<32x1xf32>
    %95 = vector.broadcast %94 : vector<32x1xf32> to vector<32x128xf32>
    %96 = arith.divf %91, %95 : vector<32x128xf32>
    %97 = vector.broadcast %78 : vector<32x1xf32> to vector<32x128xf32>
    %98 = arith.mulf %97, %96 : vector<32x128xf32>
    %99 = vector.broadcast %68 : vector<32x1xf32> to vector<32x128xf32>
    %100 = arith.addf %98, %99 : vector<32x128xf32>
    %101 = vector.broadcast %74 : vector<32x1xf32> to vector<32x128xf32>
    %102 = arith.mulf %101, %100 : vector<32x128xf32>
    %cst_52 = arith.constant 0.318309873 : f32
    %103 = vector.broadcast %cst_52 : f32 to vector<32x128xf32>
    %104 = arith.mulf %102, %103 : vector<32x128xf32>
    %cst_53 = arith.constant 5.000000e-01 : f32
    %105 = vector.broadcast %cst_53 : f32 to vector<32x128xf32>
    %106 = arith.addf %104, %105 : vector<32x128xf32>
    %107 = math.floor %106 : vector<32x128xf32>
    %cst_54 = arith.constant 3.14159274 : f32
    %108 = vector.broadcast %cst_54 : f32 to vector<32x128xf32>
    %109 = arith.mulf %107, %108 : vector<32x128xf32>
    %110 = arith.subf %102, %109 : vector<32x128xf32>
    %cst_55 = arith.constant 5.000000e-01 : f32
    %111 = vector.broadcast %cst_55 : f32 to vector<32x128xf32>
    %112 = arith.mulf %107, %111 : vector<32x128xf32>
    %113 = math.floor %112 : vector<32x128xf32>
    %cst_56 = arith.constant 2.000000e+00 : f32
    %114 = vector.broadcast %cst_56 : f32 to vector<32x128xf32>
    %115 = arith.mulf %114, %113 : vector<32x128xf32>
    %116 = arith.subf %107, %115 : vector<32x128xf32>
    %cst_57 = arith.constant 2.000000e+00 : f32
    %117 = vector.broadcast %cst_57 : f32 to vector<32x128xf32>
    %118 = arith.mulf %117, %116 : vector<32x128xf32>
    %cst_58 = arith.constant 1.000000e+00 : f32
    %119 = vector.broadcast %cst_58 : f32 to vector<32x128xf32>
    %120 = arith.subf %119, %118 : vector<32x128xf32>
    %121 = arith.mulf %110, %110 : vector<32x128xf32>
    %cst_59 = arith.constant -2.50521079E-8 : f32
    %122 = vector.broadcast %cst_59 : f32 to vector<32x128xf32>
    %123 = arith.mulf %121, %122 : vector<32x128xf32>
    %cst_60 = arith.constant 2.75573188E-6 : f32
    %124 = vector.broadcast %cst_60 : f32 to vector<32x128xf32>
    %125 = arith.addf %124, %123 : vector<32x128xf32>
    %126 = arith.mulf %121, %125 : vector<32x128xf32>
    %cst_61 = arith.constant -1.98412701E-4 : f32
    %127 = vector.broadcast %cst_61 : f32 to vector<32x128xf32>
    %128 = arith.addf %127, %126 : vector<32x128xf32>
    %129 = arith.mulf %121, %128 : vector<32x128xf32>
    %cst_62 = arith.constant 0.00833333377 : f32
    %130 = vector.broadcast %cst_62 : f32 to vector<32x128xf32>
    %131 = arith.addf %130, %129 : vector<32x128xf32>
    %132 = arith.mulf %121, %131 : vector<32x128xf32>
    %cst_63 = arith.constant -0.166666672 : f32
    %133 = vector.broadcast %cst_63 : f32 to vector<32x128xf32>
    %134 = arith.addf %133, %132 : vector<32x128xf32>
    %135 = arith.mulf %121, %134 : vector<32x128xf32>
    %cst_64 = arith.constant 1.000000e+00 : f32
    %136 = vector.broadcast %cst_64 : f32 to vector<32x128xf32>
    %137 = arith.addf %136, %135 : vector<32x128xf32>
    %138 = arith.mulf %110, %137 : vector<32x128xf32>
    %139 = arith.mulf %120, %138 : vector<32x128xf32>
    %140 = arith.mulf %139, %139 : vector<32x128xf32>
    %141 = vector.broadcast %74 : vector<32x1xf32> to vector<32x128xf32>
    %142 = arith.divf %140, %141 : vector<32x128xf32>
    %143 = arith.addf %100, %142 : vector<32x128xf32>
    %c0_65 = arith.constant 0 : index
    %c0_66 = arith.constant 0 : index
    %c0_67 = arith.constant 0 : index
    %144 = vector.load %arg6[%c0_65, %c0_66, %c0_67] : memref<3x32x224xf32, #tpu.memory_space<vmem>>, vector<1x32x224xf32>
    %145 = vector.shape_cast %144 : vector<1x32x224xf32> to vector<32x224xf32>
    %c0_68 = arith.constant 0 : index
    %c0_69 = arith.constant 0 : index
    %c0_70 = arith.constant 0 : index
    %146 = vector.load %arg7[%c0_68, %c0_69, %c0_70] : memref<3x32x1xf32, #tpu.memory_space<vmem>>, vector<1x32x1xf32>
    %147 = vector.shape_cast %146 : vector<1x32x1xf32> to vector<32x1xf32>
    %c3_i32_71 = arith.constant 3 : i32
    %148 = tpu.dynamic_rotate %143 by %c3_i32_71 dim 1 : vector<32x128xf32>, i32 -> vector<32x128xf32>
    %c3_i32_72 = arith.constant 3 : i32
    %149 = vector.broadcast %c3_i32_72 : i32 to vector<32x128xi32>
    %150 = arith.cmpi sge, %2, %149 : vector<32x128xi32>
    %cst_73 = arith.constant 0.000000e+00 : f32
    %151 = vector.broadcast %cst_73 : f32 to vector<32x128xf32>
    %152 = arith.select %150, %148, %151 : vector<32x128xi1>, vector<32x128xf32>
    %c2_i32_74 = arith.constant 2 : i32
    %153 = tpu.dynamic_rotate %143 by %c2_i32_74 dim 1 : vector<32x128xf32>, i32 -> vector<32x128xf32>
    %c2_i32_75 = arith.constant 2 : i32
    %154 = vector.broadcast %c2_i32_75 : i32 to vector<32x128xi32>
    %155 = arith.cmpi sge, %2, %154 : vector<32x128xi32>
    %cst_76 = arith.constant 0.000000e+00 : f32
    %156 = vector.broadcast %cst_76 : f32 to vector<32x128xf32>
    %157 = arith.select %155, %153, %156 : vector<32x128xi1>, vector<32x128xf32>
    %c1_i32_77 = arith.constant 1 : i32
    %158 = tpu.dynamic_rotate %143 by %c1_i32_77 dim 1 : vector<32x128xf32>, i32 -> vector<32x128xf32>
    %c1_i32_78 = arith.constant 1 : i32
    %159 = vector.broadcast %c1_i32_78 : i32 to vector<32x128xi32>
    %160 = arith.cmpi sge, %2, %159 : vector<32x128xi32>
    %cst_79 = arith.constant 0.000000e+00 : f32
    %161 = vector.broadcast %cst_79 : f32 to vector<32x128xf32>
    %162 = arith.select %160, %158, %161 : vector<32x128xi1>, vector<32x128xf32>
    %c127_i32_80 = arith.constant 127 : i32
    %163 = tpu.dynamic_rotate %143 by %c127_i32_80 dim 1 : vector<32x128xf32>, i32 -> vector<32x128xf32>
    %c127_i32_81 = arith.constant 127 : i32
    %164 = vector.broadcast %c127_i32_81 : i32 to vector<32x128xi32>
    %165 = arith.cmpi slt, %2, %164 : vector<32x128xi32>
    %cst_82 = arith.constant 0.000000e+00 : f32
    %166 = vector.broadcast %cst_82 : f32 to vector<32x128xf32>
    %167 = arith.select %165, %163, %166 : vector<32x128xi1>, vector<32x128xf32>
    %c126_i32_83 = arith.constant 126 : i32
    %168 = tpu.dynamic_rotate %143 by %c126_i32_83 dim 1 : vector<32x128xf32>, i32 -> vector<32x128xf32>
    %c126_i32_84 = arith.constant 126 : i32
    %169 = vector.broadcast %c126_i32_84 : i32 to vector<32x128xi32>
    %170 = arith.cmpi slt, %2, %169 : vector<32x128xi32>
    %cst_85 = arith.constant 0.000000e+00 : f32
    %171 = vector.broadcast %cst_85 : f32 to vector<32x128xf32>
    %172 = arith.select %170, %168, %171 : vector<32x128xi1>, vector<32x128xf32>
    %c125_i32_86 = arith.constant 125 : i32
    %173 = tpu.dynamic_rotate %143 by %c125_i32_86 dim 1 : vector<32x128xf32>, i32 -> vector<32x128xf32>
    %c125_i32_87 = arith.constant 125 : i32
    %174 = vector.broadcast %c125_i32_87 : i32 to vector<32x128xi32>
    %175 = arith.cmpi slt, %2, %174 : vector<32x128xi32>
    %cst_88 = arith.constant 0.000000e+00 : f32
    %176 = vector.broadcast %cst_88 : f32 to vector<32x128xf32>
    %177 = arith.select %175, %173, %176 : vector<32x128xi1>, vector<32x128xf32>
    %178 = tpu.concatenate %152, %157, %162, %143, %167, %172, %177 in 0 : vector<32x128xf32>, vector<32x128xf32>, vector<32x128xf32>, vector<32x128xf32>, vector<32x128xf32>, vector<32x128xf32>, vector<32x128xf32> -> vector<224x128xf32>
    %cst_89 = arith.constant dense<0.000000e+00> : vector<32x128xf32>
    %179 = tpu.matmul %145, %178, %cst_89 {dimension_numbers = #tpu.dot_dimension_numbers<[1], [0], [0], [1], [0, 0, 1, 1], [], []>} : vector<32x224xf32>, vector<224x128xf32>, vector<32x128xf32> -> vector<32x128xf32>
    %180 = vector.broadcast %147 : vector<32x1xf32> to vector<32x128xf32>
    %181 = arith.addf %179, %180 : vector<32x128xf32>
    %cst_90 = arith.constant 1.000000e+00 : f32
    %182 = vector.broadcast %cst_90 : f32 to vector<32x1xf32>
    %183 = arith.addf %182, %70 : vector<32x1xf32>
    %cst_91 = arith.constant dense<0.000000e+00> : vector<32xf32>
    %184 = vector.multi_reduction <add>, %181, %cst_91 [1] : vector<32x128xf32> to vector<32xf32>
    %185 = vector.shape_cast %184 : vector<32xf32> to vector<32x1xf32>
    %cst_92 = arith.constant 1.280000e+02 : f32
    %186 = vector.broadcast %cst_92 : f32 to vector<32x1xf32>
    %187 = arith.divf %185, %186 : vector<32x1xf32>
    %188 = vector.broadcast %187 : vector<32x1xf32> to vector<32x128xf32>
    %189 = arith.subf %181, %188 : vector<32x128xf32>
    %190 = arith.mulf %189, %189 : vector<32x128xf32>
    %cst_93 = arith.constant dense<0.000000e+00> : vector<32xf32>
    %191 = vector.multi_reduction <add>, %190, %cst_93 [1] : vector<32x128xf32> to vector<32xf32>
    %192 = vector.shape_cast %191 : vector<32xf32> to vector<32x1xf32>
    %cst_94 = arith.constant 1.280000e+02 : f32
    %193 = vector.broadcast %cst_94 : f32 to vector<32x1xf32>
    %194 = arith.divf %192, %193 : vector<32x1xf32>
    %195 = vector.broadcast %187 : vector<32x1xf32> to vector<32x128xf32>
    %196 = arith.subf %181, %195 : vector<32x128xf32>
    %cst_95 = arith.constant 9.99999974E-6 : f32
    %197 = vector.broadcast %cst_95 : f32 to vector<32x1xf32>
    %198 = arith.addf %194, %197 : vector<32x1xf32>
    %199 = math.sqrt %198 : vector<32x1xf32>
    %200 = vector.broadcast %199 : vector<32x1xf32> to vector<32x128xf32>
    %201 = arith.divf %196, %200 : vector<32x128xf32>
    %202 = vector.broadcast %183 : vector<32x1xf32> to vector<32x128xf32>
    %203 = arith.mulf %202, %201 : vector<32x128xf32>
    %204 = vector.broadcast %72 : vector<32x1xf32> to vector<32x128xf32>
    %205 = arith.addf %203, %204 : vector<32x128xf32>
    %206 = vector.broadcast %76 : vector<32x1xf32> to vector<32x128xf32>
    %207 = arith.mulf %206, %205 : vector<32x128xf32>
    %cst_96 = arith.constant 0.318309873 : f32
    %208 = vector.broadcast %cst_96 : f32 to vector<32x128xf32>
    %209 = arith.mulf %207, %208 : vector<32x128xf32>
    %cst_97 = arith.constant 5.000000e-01 : f32
    %210 = vector.broadcast %cst_97 : f32 to vector<32x128xf32>
    %211 = arith.addf %209, %210 : vector<32x128xf32>
    %212 = math.floor %211 : vector<32x128xf32>
    %cst_98 = arith.constant 3.14159274 : f32
    %213 = vector.broadcast %cst_98 : f32 to vector<32x128xf32>
    %214 = arith.mulf %212, %213 : vector<32x128xf32>
    %215 = arith.subf %207, %214 : vector<32x128xf32>
    %cst_99 = arith.constant 5.000000e-01 : f32
    %216 = vector.broadcast %cst_99 : f32 to vector<32x128xf32>
    %217 = arith.mulf %212, %216 : vector<32x128xf32>
    %218 = math.floor %217 : vector<32x128xf32>
    %cst_100 = arith.constant 2.000000e+00 : f32
    %219 = vector.broadcast %cst_100 : f32 to vector<32x128xf32>
    %220 = arith.mulf %219, %218 : vector<32x128xf32>
    %221 = arith.subf %212, %220 : vector<32x128xf32>
    %cst_101 = arith.constant 2.000000e+00 : f32
    %222 = vector.broadcast %cst_101 : f32 to vector<32x128xf32>
    %223 = arith.mulf %222, %221 : vector<32x128xf32>
    %cst_102 = arith.constant 1.000000e+00 : f32
    %224 = vector.broadcast %cst_102 : f32 to vector<32x128xf32>
    %225 = arith.subf %224, %223 : vector<32x128xf32>
    %226 = arith.mulf %215, %215 : vector<32x128xf32>
    %cst_103 = arith.constant -2.50521079E-8 : f32
    %227 = vector.broadcast %cst_103 : f32 to vector<32x128xf32>
    %228 = arith.mulf %226, %227 : vector<32x128xf32>
    %cst_104 = arith.constant 2.75573188E-6 : f32
    %229 = vector.broadcast %cst_104 : f32 to vector<32x128xf32>
    %230 = arith.addf %229, %228 : vector<32x128xf32>
    %231 = arith.mulf %226, %230 : vector<32x128xf32>
    %cst_105 = arith.constant -1.98412701E-4 : f32
    %232 = vector.broadcast %cst_105 : f32 to vector<32x128xf32>
    %233 = arith.addf %232, %231 : vector<32x128xf32>
    %234 = arith.mulf %226, %233 : vector<32x128xf32>
    %cst_106 = arith.constant 0.00833333377 : f32
    %235 = vector.broadcast %cst_106 : f32 to vector<32x128xf32>
    %236 = arith.addf %235, %234 : vector<32x128xf32>
    %237 = arith.mulf %226, %236 : vector<32x128xf32>
    %cst_107 = arith.constant -0.166666672 : f32
    %238 = vector.broadcast %cst_107 : f32 to vector<32x128xf32>
    %239 = arith.addf %238, %237 : vector<32x128xf32>
    %240 = arith.mulf %226, %239 : vector<32x128xf32>
    %cst_108 = arith.constant 1.000000e+00 : f32
    %241 = vector.broadcast %cst_108 : f32 to vector<32x128xf32>
    %242 = arith.addf %241, %240 : vector<32x128xf32>
    %243 = arith.mulf %215, %242 : vector<32x128xf32>
    %244 = arith.mulf %225, %243 : vector<32x128xf32>
    %245 = arith.mulf %244, %244 : vector<32x128xf32>
    %246 = vector.broadcast %76 : vector<32x1xf32> to vector<32x128xf32>
    %247 = arith.divf %245, %246 : vector<32x128xf32>
    %248 = arith.addf %205, %247 : vector<32x128xf32>
    %c0_109 = arith.constant 0 : index
    %c0_110 = arith.constant 0 : index
    %c0_111 = arith.constant 0 : index
    %249 = vector.load %arg8[%c0_109, %c0_110, %c0_111] : memref<3x32x224xf32, #tpu.memory_space<vmem>>, vector<1x32x224xf32>
    %250 = vector.shape_cast %249 : vector<1x32x224xf32> to vector<32x224xf32>
    %c0_112 = arith.constant 0 : index
    %c0_113 = arith.constant 0 : index
    %c0_114 = arith.constant 0 : index
    %251 = vector.load %arg9[%c0_112, %c0_113, %c0_114] : memref<3x32x1xf32, #tpu.memory_space<vmem>>, vector<1x32x1xf32>
    %252 = vector.shape_cast %251 : vector<1x32x1xf32> to vector<32x1xf32>
    %c3_i32_115 = arith.constant 3 : i32
    %253 = tpu.dynamic_rotate %248 by %c3_i32_115 dim 1 : vector<32x128xf32>, i32 -> vector<32x128xf32>
    %c3_i32_116 = arith.constant 3 : i32
    %254 = vector.broadcast %c3_i32_116 : i32 to vector<32x128xi32>
    %255 = arith.cmpi sge, %2, %254 : vector<32x128xi32>
    %cst_117 = arith.constant 0.000000e+00 : f32
    %256 = vector.broadcast %cst_117 : f32 to vector<32x128xf32>
    %257 = arith.select %255, %253, %256 : vector<32x128xi1>, vector<32x128xf32>
    %c2_i32_118 = arith.constant 2 : i32
    %258 = tpu.dynamic_rotate %248 by %c2_i32_118 dim 1 : vector<32x128xf32>, i32 -> vector<32x128xf32>
    %c2_i32_119 = arith.constant 2 : i32
    %259 = vector.broadcast %c2_i32_119 : i32 to vector<32x128xi32>
    %260 = arith.cmpi sge, %2, %259 : vector<32x128xi32>
    %cst_120 = arith.constant 0.000000e+00 : f32
    %261 = vector.broadcast %cst_120 : f32 to vector<32x128xf32>
    %262 = arith.select %260, %258, %261 : vector<32x128xi1>, vector<32x128xf32>
    %c1_i32_121 = arith.constant 1 : i32
    %263 = tpu.dynamic_rotate %248 by %c1_i32_121 dim 1 : vector<32x128xf32>, i32 -> vector<32x128xf32>
    %c1_i32_122 = arith.constant 1 : i32
    %264 = vector.broadcast %c1_i32_122 : i32 to vector<32x128xi32>
    %265 = arith.cmpi sge, %2, %264 : vector<32x128xi32>
    %cst_123 = arith.constant 0.000000e+00 : f32
    %266 = vector.broadcast %cst_123 : f32 to vector<32x128xf32>
    %267 = arith.select %265, %263, %266 : vector<32x128xi1>, vector<32x128xf32>
    %c127_i32_124 = arith.constant 127 : i32
    %268 = tpu.dynamic_rotate %248 by %c127_i32_124 dim 1 : vector<32x128xf32>, i32 -> vector<32x128xf32>
    %c127_i32_125 = arith.constant 127 : i32
    %269 = vector.broadcast %c127_i32_125 : i32 to vector<32x128xi32>
    %270 = arith.cmpi slt, %2, %269 : vector<32x128xi32>
    %cst_126 = arith.constant 0.000000e+00 : f32
    %271 = vector.broadcast %cst_126 : f32 to vector<32x128xf32>
    %272 = arith.select %270, %268, %271 : vector<32x128xi1>, vector<32x128xf32>
    %c126_i32_127 = arith.constant 126 : i32
    %273 = tpu.dynamic_rotate %248 by %c126_i32_127 dim 1 : vector<32x128xf32>, i32 -> vector<32x128xf32>
    %c126_i32_128 = arith.constant 126 : i32
    %274 = vector.broadcast %c126_i32_128 : i32 to vector<32x128xi32>
    %275 = arith.cmpi slt, %2, %274 : vector<32x128xi32>
    %cst_129 = arith.constant 0.000000e+00 : f32
    %276 = vector.broadcast %cst_129 : f32 to vector<32x128xf32>
    %277 = arith.select %275, %273, %276 : vector<32x128xi1>, vector<32x128xf32>
    %c125_i32_130 = arith.constant 125 : i32
    %278 = tpu.dynamic_rotate %248 by %c125_i32_130 dim 1 : vector<32x128xf32>, i32 -> vector<32x128xf32>
    %c125_i32_131 = arith.constant 125 : i32
    %279 = vector.broadcast %c125_i32_131 : i32 to vector<32x128xi32>
    %280 = arith.cmpi slt, %2, %279 : vector<32x128xi32>
    %cst_132 = arith.constant 0.000000e+00 : f32
    %281 = vector.broadcast %cst_132 : f32 to vector<32x128xf32>
    %282 = arith.select %280, %278, %281 : vector<32x128xi1>, vector<32x128xf32>
    %283 = tpu.concatenate %257, %262, %267, %248, %272, %277, %282 in 0 : vector<32x128xf32>, vector<32x128xf32>, vector<32x128xf32>, vector<32x128xf32>, vector<32x128xf32>, vector<32x128xf32>, vector<32x128xf32> -> vector<224x128xf32>
    %cst_133 = arith.constant dense<0.000000e+00> : vector<32x128xf32>
    %284 = tpu.matmul %250, %283, %cst_133 {dimension_numbers = #tpu.dot_dimension_numbers<[1], [0], [0], [1], [0, 0, 1, 1], [], []>} : vector<32x224xf32>, vector<224x128xf32>, vector<32x128xf32> -> vector<32x128xf32>
    %285 = vector.broadcast %252 : vector<32x1xf32> to vector<32x128xf32>
    %286 = arith.addf %284, %285 : vector<32x128xf32>
    %287 = arith.addf %286, %64 : vector<32x128xf32>
    %c0_134 = arith.constant 0 : index
    %c4_135 = arith.constant 4 : index
    %c0_136 = arith.constant 0 : index
    %c0_137 = arith.constant 0 : index
    %288 = vector.load %arg4[%c0_134, %c4_135, %c0_136, %c0_137] : memref<1x12x32x1xf32, #tpu.memory_space<vmem>>, vector<1x1x32x1xf32>
    %289 = vector.shape_cast %288 : vector<1x1x32x1xf32> to vector<32x1xf32>
    %c0_138 = arith.constant 0 : index
    %c5_139 = arith.constant 5 : index
    %c0_140 = arith.constant 0 : index
    %c0_141 = arith.constant 0 : index
    %290 = vector.load %arg4[%c0_138, %c5_139, %c0_140, %c0_141] : memref<1x12x32x1xf32, #tpu.memory_space<vmem>>, vector<1x1x32x1xf32>
    %291 = vector.shape_cast %290 : vector<1x1x32x1xf32> to vector<32x1xf32>
    %c0_142 = arith.constant 0 : index
    %c6_143 = arith.constant 6 : index
    %c0_144 = arith.constant 0 : index
    %c0_145 = arith.constant 0 : index
    %292 = vector.load %arg4[%c0_142, %c6_143, %c0_144, %c0_145] : memref<1x12x32x1xf32, #tpu.memory_space<vmem>>, vector<1x1x32x1xf32>
    %293 = vector.shape_cast %292 : vector<1x1x32x1xf32> to vector<32x1xf32>
    %c0_146 = arith.constant 0 : index
    %c7 = arith.constant 7 : index
    %c0_147 = arith.constant 0 : index
    %c0_148 = arith.constant 0 : index
    %294 = vector.load %arg4[%c0_146, %c7, %c0_147, %c0_148] : memref<1x12x32x1xf32, #tpu.memory_space<vmem>>, vector<1x1x32x1xf32>
    %295 = vector.shape_cast %294 : vector<1x1x32x1xf32> to vector<32x1xf32>
    %c2_149 = arith.constant 2 : index
    %c0_150 = arith.constant 0 : index
    %c0_151 = arith.constant 0 : index
    %296 = vector.load %arg5[%c2_149, %c0_150, %c0_151] : memref<6x32x1xf32, #tpu.memory_space<vmem>>, vector<1x32x1xf32>
    %297 = vector.shape_cast %296 : vector<1x32x1xf32> to vector<32x1xf32>
    %c3_152 = arith.constant 3 : index
    %c0_153 = arith.constant 0 : index
    %c0_154 = arith.constant 0 : index
    %298 = vector.load %arg5[%c3_152, %c0_153, %c0_154] : memref<6x32x1xf32, #tpu.memory_space<vmem>>, vector<1x32x1xf32>
    %299 = vector.shape_cast %298 : vector<1x32x1xf32> to vector<32x1xf32>
    %cst_155 = arith.constant 1.000000e+00 : f32
    %300 = vector.broadcast %cst_155 : f32 to vector<32x1xf32>
    %301 = arith.addf %300, %289 : vector<32x1xf32>
    %cst_156 = arith.constant dense<0.000000e+00> : vector<32xf32>
    %302 = vector.multi_reduction <add>, %287, %cst_156 [1] : vector<32x128xf32> to vector<32xf32>
    %303 = vector.shape_cast %302 : vector<32xf32> to vector<32x1xf32>
    %cst_157 = arith.constant 1.280000e+02 : f32
    %304 = vector.broadcast %cst_157 : f32 to vector<32x1xf32>
    %305 = arith.divf %303, %304 : vector<32x1xf32>
    %306 = vector.broadcast %305 : vector<32x1xf32> to vector<32x128xf32>
    %307 = arith.subf %287, %306 : vector<32x128xf32>
    %308 = arith.mulf %307, %307 : vector<32x128xf32>
    %cst_158 = arith.constant dense<0.000000e+00> : vector<32xf32>
    %309 = vector.multi_reduction <add>, %308, %cst_158 [1] : vector<32x128xf32> to vector<32xf32>
    %310 = vector.shape_cast %309 : vector<32xf32> to vector<32x1xf32>
    %cst_159 = arith.constant 1.280000e+02 : f32
    %311 = vector.broadcast %cst_159 : f32 to vector<32x1xf32>
    %312 = arith.divf %310, %311 : vector<32x1xf32>
    %313 = vector.broadcast %305 : vector<32x1xf32> to vector<32x128xf32>
    %314 = arith.subf %287, %313 : vector<32x128xf32>
    %cst_160 = arith.constant 9.99999974E-6 : f32
    %315 = vector.broadcast %cst_160 : f32 to vector<32x1xf32>
    %316 = arith.addf %312, %315 : vector<32x1xf32>
    %317 = math.sqrt %316 : vector<32x1xf32>
    %318 = vector.broadcast %317 : vector<32x1xf32> to vector<32x128xf32>
    %319 = arith.divf %314, %318 : vector<32x128xf32>
    %320 = vector.broadcast %301 : vector<32x1xf32> to vector<32x128xf32>
    %321 = arith.mulf %320, %319 : vector<32x128xf32>
    %322 = vector.broadcast %291 : vector<32x1xf32> to vector<32x128xf32>
    %323 = arith.addf %321, %322 : vector<32x128xf32>
    %324 = vector.broadcast %297 : vector<32x1xf32> to vector<32x128xf32>
    %325 = arith.mulf %324, %323 : vector<32x128xf32>
    %cst_161 = arith.constant 0.318309873 : f32
    %326 = vector.broadcast %cst_161 : f32 to vector<32x128xf32>
    %327 = arith.mulf %325, %326 : vector<32x128xf32>
    %cst_162 = arith.constant 5.000000e-01 : f32
    %328 = vector.broadcast %cst_162 : f32 to vector<32x128xf32>
    %329 = arith.addf %327, %328 : vector<32x128xf32>
    %330 = math.floor %329 : vector<32x128xf32>
    %cst_163 = arith.constant 3.14159274 : f32
    %331 = vector.broadcast %cst_163 : f32 to vector<32x128xf32>
    %332 = arith.mulf %330, %331 : vector<32x128xf32>
    %333 = arith.subf %325, %332 : vector<32x128xf32>
    %cst_164 = arith.constant 5.000000e-01 : f32
    %334 = vector.broadcast %cst_164 : f32 to vector<32x128xf32>
    %335 = arith.mulf %330, %334 : vector<32x128xf32>
    %336 = math.floor %335 : vector<32x128xf32>
    %cst_165 = arith.constant 2.000000e+00 : f32
    %337 = vector.broadcast %cst_165 : f32 to vector<32x128xf32>
    %338 = arith.mulf %337, %336 : vector<32x128xf32>
    %339 = arith.subf %330, %338 : vector<32x128xf32>
    %cst_166 = arith.constant 2.000000e+00 : f32
    %340 = vector.broadcast %cst_166 : f32 to vector<32x128xf32>
    %341 = arith.mulf %340, %339 : vector<32x128xf32>
    %cst_167 = arith.constant 1.000000e+00 : f32
    %342 = vector.broadcast %cst_167 : f32 to vector<32x128xf32>
    %343 = arith.subf %342, %341 : vector<32x128xf32>
    %344 = arith.mulf %333, %333 : vector<32x128xf32>
    %cst_168 = arith.constant -2.50521079E-8 : f32
    %345 = vector.broadcast %cst_168 : f32 to vector<32x128xf32>
    %346 = arith.mulf %344, %345 : vector<32x128xf32>
    %cst_169 = arith.constant 2.75573188E-6 : f32
    %347 = vector.broadcast %cst_169 : f32 to vector<32x128xf32>
    %348 = arith.addf %347, %346 : vector<32x128xf32>
    %349 = arith.mulf %344, %348 : vector<32x128xf32>
    %cst_170 = arith.constant -1.98412701E-4 : f32
    %350 = vector.broadcast %cst_170 : f32 to vector<32x128xf32>
    %351 = arith.addf %350, %349 : vector<32x128xf32>
    %352 = arith.mulf %344, %351 : vector<32x128xf32>
    %cst_171 = arith.constant 0.00833333377 : f32
    %353 = vector.broadcast %cst_171 : f32 to vector<32x128xf32>
    %354 = arith.addf %353, %352 : vector<32x128xf32>
    %355 = arith.mulf %344, %354 : vector<32x128xf32>
    %cst_172 = arith.constant -0.166666672 : f32
    %356 = vector.broadcast %cst_172 : f32 to vector<32x128xf32>
    %357 = arith.addf %356, %355 : vector<32x128xf32>
    %358 = arith.mulf %344, %357 : vector<32x128xf32>
    %cst_173 = arith.constant 1.000000e+00 : f32
    %359 = vector.broadcast %cst_173 : f32 to vector<32x128xf32>
    %360 = arith.addf %359, %358 : vector<32x128xf32>
    %361 = arith.mulf %333, %360 : vector<32x128xf32>
    %362 = arith.mulf %343, %361 : vector<32x128xf32>
    %363 = arith.mulf %362, %362 : vector<32x128xf32>
    %364 = vector.broadcast %297 : vector<32x1xf32> to vector<32x128xf32>
    %365 = arith.divf %363, %364 : vector<32x128xf32>
    %366 = arith.addf %323, %365 : vector<32x128xf32>
    %c1_174 = arith.constant 1 : index
    %c0_175 = arith.constant 0 : index
    %c0_176 = arith.constant 0 : index
    %367 = vector.load %arg6[%c1_174, %c0_175, %c0_176] : memref<3x32x224xf32, #tpu.memory_space<vmem>>, vector<1x32x224xf32>
    %368 = vector.shape_cast %367 : vector<1x32x224xf32> to vector<32x224xf32>
    %c1_177 = arith.constant 1 : index
    %c0_178 = arith.constant 0 : index
    %c0_179 = arith.constant 0 : index
    %369 = vector.load %arg7[%c1_177, %c0_178, %c0_179] : memref<3x32x1xf32, #tpu.memory_space<vmem>>, vector<1x32x1xf32>
    %370 = vector.shape_cast %369 : vector<1x32x1xf32> to vector<32x1xf32>
    %c9_i32 = arith.constant 9 : i32
    %371 = tpu.dynamic_rotate %366 by %c9_i32 dim 1 : vector<32x128xf32>, i32 -> vector<32x128xf32>
    %c9_i32_180 = arith.constant 9 : i32
    %372 = vector.broadcast %c9_i32_180 : i32 to vector<32x128xi32>
    %373 = arith.cmpi sge, %2, %372 : vector<32x128xi32>
    %cst_181 = arith.constant 0.000000e+00 : f32
    %374 = vector.broadcast %cst_181 : f32 to vector<32x128xf32>
    %375 = arith.select %373, %371, %374 : vector<32x128xi1>, vector<32x128xf32>
    %c6_i32 = arith.constant 6 : i32
    %376 = tpu.dynamic_rotate %366 by %c6_i32 dim 1 : vector<32x128xf32>, i32 -> vector<32x128xf32>
    %c6_i32_182 = arith.constant 6 : i32
    %377 = vector.broadcast %c6_i32_182 : i32 to vector<32x128xi32>
    %378 = arith.cmpi sge, %2, %377 : vector<32x128xi32>
    %cst_183 = arith.constant 0.000000e+00 : f32
    %379 = vector.broadcast %cst_183 : f32 to vector<32x128xf32>
    %380 = arith.select %378, %376, %379 : vector<32x128xi1>, vector<32x128xf32>
    %c3_i32_184 = arith.constant 3 : i32
    %381 = tpu.dynamic_rotate %366 by %c3_i32_184 dim 1 : vector<32x128xf32>, i32 -> vector<32x128xf32>
    %c3_i32_185 = arith.constant 3 : i32
    %382 = vector.broadcast %c3_i32_185 : i32 to vector<32x128xi32>
    %383 = arith.cmpi sge, %2, %382 : vector<32x128xi32>
    %cst_186 = arith.constant 0.000000e+00 : f32
    %384 = vector.broadcast %cst_186 : f32 to vector<32x128xf32>
    %385 = arith.select %383, %381, %384 : vector<32x128xi1>, vector<32x128xf32>
    %c125_i32_187 = arith.constant 125 : i32
    %386 = tpu.dynamic_rotate %366 by %c125_i32_187 dim 1 : vector<32x128xf32>, i32 -> vector<32x128xf32>
    %c125_i32_188 = arith.constant 125 : i32
    %387 = vector.broadcast %c125_i32_188 : i32 to vector<32x128xi32>
    %388 = arith.cmpi slt, %2, %387 : vector<32x128xi32>
    %cst_189 = arith.constant 0.000000e+00 : f32
    %389 = vector.broadcast %cst_189 : f32 to vector<32x128xf32>
    %390 = arith.select %388, %386, %389 : vector<32x128xi1>, vector<32x128xf32>
    %c122_i32 = arith.constant 122 : i32
    %391 = tpu.dynamic_rotate %366 by %c122_i32 dim 1 : vector<32x128xf32>, i32 -> vector<32x128xf32>
    %c122_i32_190 = arith.constant 122 : i32
    %392 = vector.broadcast %c122_i32_190 : i32 to vector<32x128xi32>
    %393 = arith.cmpi slt, %2, %392 : vector<32x128xi32>
    %cst_191 = arith.constant 0.000000e+00 : f32
    %394 = vector.broadcast %cst_191 : f32 to vector<32x128xf32>
    %395 = arith.select %393, %391, %394 : vector<32x128xi1>, vector<32x128xf32>
    %c119_i32 = arith.constant 119 : i32
    %396 = tpu.dynamic_rotate %366 by %c119_i32 dim 1 : vector<32x128xf32>, i32 -> vector<32x128xf32>
    %c119_i32_192 = arith.constant 119 : i32
    %397 = vector.broadcast %c119_i32_192 : i32 to vector<32x128xi32>
    %398 = arith.cmpi slt, %2, %397 : vector<32x128xi32>
    %cst_193 = arith.constant 0.000000e+00 : f32
    %399 = vector.broadcast %cst_193 : f32 to vector<32x128xf32>
    %400 = arith.select %398, %396, %399 : vector<32x128xi1>, vector<32x128xf32>
    %401 = tpu.concatenate %375, %380, %385, %366, %390, %395, %400 in 0 : vector<32x128xf32>, vector<32x128xf32>, vector<32x128xf32>, vector<32x128xf32>, vector<32x128xf32>, vector<32x128xf32>, vector<32x128xf32> -> vector<224x128xf32>
    %cst_194 = arith.constant dense<0.000000e+00> : vector<32x128xf32>
    %402 = tpu.matmul %368, %401, %cst_194 {dimension_numbers = #tpu.dot_dimension_numbers<[1], [0], [0], [1], [0, 0, 1, 1], [], []>} : vector<32x224xf32>, vector<224x128xf32>, vector<32x128xf32> -> vector<32x128xf32>
    %403 = vector.broadcast %370 : vector<32x1xf32> to vector<32x128xf32>
    %404 = arith.addf %402, %403 : vector<32x128xf32>
    %cst_195 = arith.constant 1.000000e+00 : f32
    %405 = vector.broadcast %cst_195 : f32 to vector<32x1xf32>
    %406 = arith.addf %405, %293 : vector<32x1xf32>
    %cst_196 = arith.constant dense<0.000000e+00> : vector<32xf32>
    %407 = vector.multi_reduction <add>, %404, %cst_196 [1] : vector<32x128xf32> to vector<32xf32>
    %408 = vector.shape_cast %407 : vector<32xf32> to vector<32x1xf32>
    %cst_197 = arith.constant 1.280000e+02 : f32
    %409 = vector.broadcast %cst_197 : f32 to vector<32x1xf32>
    %410 = arith.divf %408, %409 : vector<32x1xf32>
    %411 = vector.broadcast %410 : vector<32x1xf32> to vector<32x128xf32>
    %412 = arith.subf %404, %411 : vector<32x128xf32>
    %413 = arith.mulf %412, %412 : vector<32x128xf32>
    %cst_198 = arith.constant dense<0.000000e+00> : vector<32xf32>
    %414 = vector.multi_reduction <add>, %413, %cst_198 [1] : vector<32x128xf32> to vector<32xf32>
    %415 = vector.shape_cast %414 : vector<32xf32> to vector<32x1xf32>
    %cst_199 = arith.constant 1.280000e+02 : f32
    %416 = vector.broadcast %cst_199 : f32 to vector<32x1xf32>
    %417 = arith.divf %415, %416 : vector<32x1xf32>
    %418 = vector.broadcast %410 : vector<32x1xf32> to vector<32x128xf32>
    %419 = arith.subf %404, %418 : vector<32x128xf32>
    %cst_200 = arith.constant 9.99999974E-6 : f32
    %420 = vector.broadcast %cst_200 : f32 to vector<32x1xf32>
    %421 = arith.addf %417, %420 : vector<32x1xf32>
    %422 = math.sqrt %421 : vector<32x1xf32>
    %423 = vector.broadcast %422 : vector<32x1xf32> to vector<32x128xf32>
    %424 = arith.divf %419, %423 : vector<32x128xf32>
    %425 = vector.broadcast %406 : vector<32x1xf32> to vector<32x128xf32>
    %426 = arith.mulf %425, %424 : vector<32x128xf32>
    %427 = vector.broadcast %295 : vector<32x1xf32> to vector<32x128xf32>
    %428 = arith.addf %426, %427 : vector<32x128xf32>
    %429 = vector.broadcast %299 : vector<32x1xf32> to vector<32x128xf32>
    %430 = arith.mulf %429, %428 : vector<32x128xf32>
    %cst_201 = arith.constant 0.318309873 : f32
    %431 = vector.broadcast %cst_201 : f32 to vector<32x128xf32>
    %432 = arith.mulf %430, %431 : vector<32x128xf32>
    %cst_202 = arith.constant 5.000000e-01 : f32
    %433 = vector.broadcast %cst_202 : f32 to vector<32x128xf32>
    %434 = arith.addf %432, %433 : vector<32x128xf32>
    %435 = math.floor %434 : vector<32x128xf32>
    %cst_203 = arith.constant 3.14159274 : f32
    %436 = vector.broadcast %cst_203 : f32 to vector<32x128xf32>
    %437 = arith.mulf %435, %436 : vector<32x128xf32>
    %438 = arith.subf %430, %437 : vector<32x128xf32>
    %cst_204 = arith.constant 5.000000e-01 : f32
    %439 = vector.broadcast %cst_204 : f32 to vector<32x128xf32>
    %440 = arith.mulf %435, %439 : vector<32x128xf32>
    %441 = math.floor %440 : vector<32x128xf32>
    %cst_205 = arith.constant 2.000000e+00 : f32
    %442 = vector.broadcast %cst_205 : f32 to vector<32x128xf32>
    %443 = arith.mulf %442, %441 : vector<32x128xf32>
    %444 = arith.subf %435, %443 : vector<32x128xf32>
    %cst_206 = arith.constant 2.000000e+00 : f32
    %445 = vector.broadcast %cst_206 : f32 to vector<32x128xf32>
    %446 = arith.mulf %445, %444 : vector<32x128xf32>
    %cst_207 = arith.constant 1.000000e+00 : f32
    %447 = vector.broadcast %cst_207 : f32 to vector<32x128xf32>
    %448 = arith.subf %447, %446 : vector<32x128xf32>
    %449 = arith.mulf %438, %438 : vector<32x128xf32>
    %cst_208 = arith.constant -2.50521079E-8 : f32
    %450 = vector.broadcast %cst_208 : f32 to vector<32x128xf32>
    %451 = arith.mulf %449, %450 : vector<32x128xf32>
    %cst_209 = arith.constant 2.75573188E-6 : f32
    %452 = vector.broadcast %cst_209 : f32 to vector<32x128xf32>
    %453 = arith.addf %452, %451 : vector<32x128xf32>
    %454 = arith.mulf %449, %453 : vector<32x128xf32>
    %cst_210 = arith.constant -1.98412701E-4 : f32
    %455 = vector.broadcast %cst_210 : f32 to vector<32x128xf32>
    %456 = arith.addf %455, %454 : vector<32x128xf32>
    %457 = arith.mulf %449, %456 : vector<32x128xf32>
    %cst_211 = arith.constant 0.00833333377 : f32
    %458 = vector.broadcast %cst_211 : f32 to vector<32x128xf32>
    %459 = arith.addf %458, %457 : vector<32x128xf32>
    %460 = arith.mulf %449, %459 : vector<32x128xf32>
    %cst_212 = arith.constant -0.166666672 : f32
    %461 = vector.broadcast %cst_212 : f32 to vector<32x128xf32>
    %462 = arith.addf %461, %460 : vector<32x128xf32>
    %463 = arith.mulf %449, %462 : vector<32x128xf32>
    %cst_213 = arith.constant 1.000000e+00 : f32
    %464 = vector.broadcast %cst_213 : f32 to vector<32x128xf32>
    %465 = arith.addf %464, %463 : vector<32x128xf32>
    %466 = arith.mulf %438, %465 : vector<32x128xf32>
    %467 = arith.mulf %448, %466 : vector<32x128xf32>
    %468 = arith.mulf %467, %467 : vector<32x128xf32>
    %469 = vector.broadcast %299 : vector<32x1xf32> to vector<32x128xf32>
    %470 = arith.divf %468, %469 : vector<32x128xf32>
    %471 = arith.addf %428, %470 : vector<32x128xf32>
    %c1_214 = arith.constant 1 : index
    %c0_215 = arith.constant 0 : index
    %c0_216 = arith.constant 0 : index
    %472 = vector.load %arg8[%c1_214, %c0_215, %c0_216] : memref<3x32x224xf32, #tpu.memory_space<vmem>>, vector<1x32x224xf32>
    %473 = vector.shape_cast %472 : vector<1x32x224xf32> to vector<32x224xf32>
    %c1_217 = arith.constant 1 : index
    %c0_218 = arith.constant 0 : index
    %c0_219 = arith.constant 0 : index
    %474 = vector.load %arg9[%c1_217, %c0_218, %c0_219] : memref<3x32x1xf32, #tpu.memory_space<vmem>>, vector<1x32x1xf32>
    %475 = vector.shape_cast %474 : vector<1x32x1xf32> to vector<32x1xf32>
    %c3_i32_220 = arith.constant 3 : i32
    %476 = tpu.dynamic_rotate %471 by %c3_i32_220 dim 1 : vector<32x128xf32>, i32 -> vector<32x128xf32>
    %c3_i32_221 = arith.constant 3 : i32
    %477 = vector.broadcast %c3_i32_221 : i32 to vector<32x128xi32>
    %478 = arith.cmpi sge, %2, %477 : vector<32x128xi32>
    %cst_222 = arith.constant 0.000000e+00 : f32
    %479 = vector.broadcast %cst_222 : f32 to vector<32x128xf32>
    %480 = arith.select %478, %476, %479 : vector<32x128xi1>, vector<32x128xf32>
    %c2_i32_223 = arith.constant 2 : i32
    %481 = tpu.dynamic_rotate %471 by %c2_i32_223 dim 1 : vector<32x128xf32>, i32 -> vector<32x128xf32>
    %c2_i32_224 = arith.constant 2 : i32
    %482 = vector.broadcast %c2_i32_224 : i32 to vector<32x128xi32>
    %483 = arith.cmpi sge, %2, %482 : vector<32x128xi32>
    %cst_225 = arith.constant 0.000000e+00 : f32
    %484 = vector.broadcast %cst_225 : f32 to vector<32x128xf32>
    %485 = arith.select %483, %481, %484 : vector<32x128xi1>, vector<32x128xf32>
    %c1_i32_226 = arith.constant 1 : i32
    %486 = tpu.dynamic_rotate %471 by %c1_i32_226 dim 1 : vector<32x128xf32>, i32 -> vector<32x128xf32>
    %c1_i32_227 = arith.constant 1 : i32
    %487 = vector.broadcast %c1_i32_227 : i32 to vector<32x128xi32>
    %488 = arith.cmpi sge, %2, %487 : vector<32x128xi32>
    %cst_228 = arith.constant 0.000000e+00 : f32
    %489 = vector.broadcast %cst_228 : f32 to vector<32x128xf32>
    %490 = arith.select %488, %486, %489 : vector<32x128xi1>, vector<32x128xf32>
    %c127_i32_229 = arith.constant 127 : i32
    %491 = tpu.dynamic_rotate %471 by %c127_i32_229 dim 1 : vector<32x128xf32>, i32 -> vector<32x128xf32>
    %c127_i32_230 = arith.constant 127 : i32
    %492 = vector.broadcast %c127_i32_230 : i32 to vector<32x128xi32>
    %493 = arith.cmpi slt, %2, %492 : vector<32x128xi32>
    %cst_231 = arith.constant 0.000000e+00 : f32
    %494 = vector.broadcast %cst_231 : f32 to vector<32x128xf32>
    %495 = arith.select %493, %491, %494 : vector<32x128xi1>, vector<32x128xf32>
    %c126_i32_232 = arith.constant 126 : i32
    %496 = tpu.dynamic_rotate %471 by %c126_i32_232 dim 1 : vector<32x128xf32>, i32 -> vector<32x128xf32>
    %c126_i32_233 = arith.constant 126 : i32
    %497 = vector.broadcast %c126_i32_233 : i32 to vector<32x128xi32>
    %498 = arith.cmpi slt, %2, %497 : vector<32x128xi32>
    %cst_234 = arith.constant 0.000000e+00 : f32
    %499 = vector.broadcast %cst_234 : f32 to vector<32x128xf32>
    %500 = arith.select %498, %496, %499 : vector<32x128xi1>, vector<32x128xf32>
    %c125_i32_235 = arith.constant 125 : i32
    %501 = tpu.dynamic_rotate %471 by %c125_i32_235 dim 1 : vector<32x128xf32>, i32 -> vector<32x128xf32>
    %c125_i32_236 = arith.constant 125 : i32
    %502 = vector.broadcast %c125_i32_236 : i32 to vector<32x128xi32>
    %503 = arith.cmpi slt, %2, %502 : vector<32x128xi32>
    %cst_237 = arith.constant 0.000000e+00 : f32
    %504 = vector.broadcast %cst_237 : f32 to vector<32x128xf32>
    %505 = arith.select %503, %501, %504 : vector<32x128xi1>, vector<32x128xf32>
    %506 = tpu.concatenate %480, %485, %490, %471, %495, %500, %505 in 0 : vector<32x128xf32>, vector<32x128xf32>, vector<32x128xf32>, vector<32x128xf32>, vector<32x128xf32>, vector<32x128xf32>, vector<32x128xf32> -> vector<224x128xf32>
    %cst_238 = arith.constant dense<0.000000e+00> : vector<32x128xf32>
    %507 = tpu.matmul %473, %506, %cst_238 {dimension_numbers = #tpu.dot_dimension_numbers<[1], [0], [0], [1], [0, 0, 1, 1], [], []>} : vector<32x224xf32>, vector<224x128xf32>, vector<32x128xf32> -> vector<32x128xf32>
    %508 = vector.broadcast %475 : vector<32x1xf32> to vector<32x128xf32>
    %509 = arith.addf %507, %508 : vector<32x128xf32>
    %510 = arith.addf %509, %287 : vector<32x128xf32>
    %c0_239 = arith.constant 0 : index
    %c8 = arith.constant 8 : index
    %c0_240 = arith.constant 0 : index
    %c0_241 = arith.constant 0 : index
    %511 = vector.load %arg4[%c0_239, %c8, %c0_240, %c0_241] : memref<1x12x32x1xf32, #tpu.memory_space<vmem>>, vector<1x1x32x1xf32>
    %512 = vector.shape_cast %511 : vector<1x1x32x1xf32> to vector<32x1xf32>
    %c0_242 = arith.constant 0 : index
    %c9 = arith.constant 9 : index
    %c0_243 = arith.constant 0 : index
    %c0_244 = arith.constant 0 : index
    %513 = vector.load %arg4[%c0_242, %c9, %c0_243, %c0_244] : memref<1x12x32x1xf32, #tpu.memory_space<vmem>>, vector<1x1x32x1xf32>
    %514 = vector.shape_cast %513 : vector<1x1x32x1xf32> to vector<32x1xf32>
    %c0_245 = arith.constant 0 : index
    %c10 = arith.constant 10 : index
    %c0_246 = arith.constant 0 : index
    %c0_247 = arith.constant 0 : index
    %515 = vector.load %arg4[%c0_245, %c10, %c0_246, %c0_247] : memref<1x12x32x1xf32, #tpu.memory_space<vmem>>, vector<1x1x32x1xf32>
    %516 = vector.shape_cast %515 : vector<1x1x32x1xf32> to vector<32x1xf32>
    %c0_248 = arith.constant 0 : index
    %c11 = arith.constant 11 : index
    %c0_249 = arith.constant 0 : index
    %c0_250 = arith.constant 0 : index
    %517 = vector.load %arg4[%c0_248, %c11, %c0_249, %c0_250] : memref<1x12x32x1xf32, #tpu.memory_space<vmem>>, vector<1x1x32x1xf32>
    %518 = vector.shape_cast %517 : vector<1x1x32x1xf32> to vector<32x1xf32>
    %c4_251 = arith.constant 4 : index
    %c0_252 = arith.constant 0 : index
    %c0_253 = arith.constant 0 : index
    %519 = vector.load %arg5[%c4_251, %c0_252, %c0_253] : memref<6x32x1xf32, #tpu.memory_space<vmem>>, vector<1x32x1xf32>
    %520 = vector.shape_cast %519 : vector<1x32x1xf32> to vector<32x1xf32>
    %c5_254 = arith.constant 5 : index
    %c0_255 = arith.constant 0 : index
    %c0_256 = arith.constant 0 : index
    %521 = vector.load %arg5[%c5_254, %c0_255, %c0_256] : memref<6x32x1xf32, #tpu.memory_space<vmem>>, vector<1x32x1xf32>
    %522 = vector.shape_cast %521 : vector<1x32x1xf32> to vector<32x1xf32>
    %cst_257 = arith.constant 1.000000e+00 : f32
    %523 = vector.broadcast %cst_257 : f32 to vector<32x1xf32>
    %524 = arith.addf %523, %512 : vector<32x1xf32>
    %cst_258 = arith.constant dense<0.000000e+00> : vector<32xf32>
    %525 = vector.multi_reduction <add>, %510, %cst_258 [1] : vector<32x128xf32> to vector<32xf32>
    %526 = vector.shape_cast %525 : vector<32xf32> to vector<32x1xf32>
    %cst_259 = arith.constant 1.280000e+02 : f32
    %527 = vector.broadcast %cst_259 : f32 to vector<32x1xf32>
    %528 = arith.divf %526, %527 : vector<32x1xf32>
    %529 = vector.broadcast %528 : vector<32x1xf32> to vector<32x128xf32>
    %530 = arith.subf %510, %529 : vector<32x128xf32>
    %531 = arith.mulf %530, %530 : vector<32x128xf32>
    %cst_260 = arith.constant dense<0.000000e+00> : vector<32xf32>
    %532 = vector.multi_reduction <add>, %531, %cst_260 [1] : vector<32x128xf32> to vector<32xf32>
    %533 = vector.shape_cast %532 : vector<32xf32> to vector<32x1xf32>
    %cst_261 = arith.constant 1.280000e+02 : f32
    %534 = vector.broadcast %cst_261 : f32 to vector<32x1xf32>
    %535 = arith.divf %533, %534 : vector<32x1xf32>
    %536 = vector.broadcast %528 : vector<32x1xf32> to vector<32x128xf32>
    %537 = arith.subf %510, %536 : vector<32x128xf32>
    %cst_262 = arith.constant 9.99999974E-6 : f32
    %538 = vector.broadcast %cst_262 : f32 to vector<32x1xf32>
    %539 = arith.addf %535, %538 : vector<32x1xf32>
    %540 = math.sqrt %539 : vector<32x1xf32>
    %541 = vector.broadcast %540 : vector<32x1xf32> to vector<32x128xf32>
    %542 = arith.divf %537, %541 : vector<32x128xf32>
    %543 = vector.broadcast %524 : vector<32x1xf32> to vector<32x128xf32>
    %544 = arith.mulf %543, %542 : vector<32x128xf32>
    %545 = vector.broadcast %514 : vector<32x1xf32> to vector<32x128xf32>
    %546 = arith.addf %544, %545 : vector<32x128xf32>
    %547 = vector.broadcast %520 : vector<32x1xf32> to vector<32x128xf32>
    %548 = arith.mulf %547, %546 : vector<32x128xf32>
    %cst_263 = arith.constant 0.318309873 : f32
    %549 = vector.broadcast %cst_263 : f32 to vector<32x128xf32>
    %550 = arith.mulf %548, %549 : vector<32x128xf32>
    %cst_264 = arith.constant 5.000000e-01 : f32
    %551 = vector.broadcast %cst_264 : f32 to vector<32x128xf32>
    %552 = arith.addf %550, %551 : vector<32x128xf32>
    %553 = math.floor %552 : vector<32x128xf32>
    %cst_265 = arith.constant 3.14159274 : f32
    %554 = vector.broadcast %cst_265 : f32 to vector<32x128xf32>
    %555 = arith.mulf %553, %554 : vector<32x128xf32>
    %556 = arith.subf %548, %555 : vector<32x128xf32>
    %cst_266 = arith.constant 5.000000e-01 : f32
    %557 = vector.broadcast %cst_266 : f32 to vector<32x128xf32>
    %558 = arith.mulf %553, %557 : vector<32x128xf32>
    %559 = math.floor %558 : vector<32x128xf32>
    %cst_267 = arith.constant 2.000000e+00 : f32
    %560 = vector.broadcast %cst_267 : f32 to vector<32x128xf32>
    %561 = arith.mulf %560, %559 : vector<32x128xf32>
    %562 = arith.subf %553, %561 : vector<32x128xf32>
    %cst_268 = arith.constant 2.000000e+00 : f32
    %563 = vector.broadcast %cst_268 : f32 to vector<32x128xf32>
    %564 = arith.mulf %563, %562 : vector<32x128xf32>
    %cst_269 = arith.constant 1.000000e+00 : f32
    %565 = vector.broadcast %cst_269 : f32 to vector<32x128xf32>
    %566 = arith.subf %565, %564 : vector<32x128xf32>
    %567 = arith.mulf %556, %556 : vector<32x128xf32>
    %cst_270 = arith.constant -2.50521079E-8 : f32
    %568 = vector.broadcast %cst_270 : f32 to vector<32x128xf32>
    %569 = arith.mulf %567, %568 : vector<32x128xf32>
    %cst_271 = arith.constant 2.75573188E-6 : f32
    %570 = vector.broadcast %cst_271 : f32 to vector<32x128xf32>
    %571 = arith.addf %570, %569 : vector<32x128xf32>
    %572 = arith.mulf %567, %571 : vector<32x128xf32>
    %cst_272 = arith.constant -1.98412701E-4 : f32
    %573 = vector.broadcast %cst_272 : f32 to vector<32x128xf32>
    %574 = arith.addf %573, %572 : vector<32x128xf32>
    %575 = arith.mulf %567, %574 : vector<32x128xf32>
    %cst_273 = arith.constant 0.00833333377 : f32
    %576 = vector.broadcast %cst_273 : f32 to vector<32x128xf32>
    %577 = arith.addf %576, %575 : vector<32x128xf32>
    %578 = arith.mulf %567, %577 : vector<32x128xf32>
    %cst_274 = arith.constant -0.166666672 : f32
    %579 = vector.broadcast %cst_274 : f32 to vector<32x128xf32>
    %580 = arith.addf %579, %578 : vector<32x128xf32>
    %581 = arith.mulf %567, %580 : vector<32x128xf32>
    %cst_275 = arith.constant 1.000000e+00 : f32
    %582 = vector.broadcast %cst_275 : f32 to vector<32x128xf32>
    %583 = arith.addf %582, %581 : vector<32x128xf32>
    %584 = arith.mulf %556, %583 : vector<32x128xf32>
    %585 = arith.mulf %566, %584 : vector<32x128xf32>
    %586 = arith.mulf %585, %585 : vector<32x128xf32>
    %587 = vector.broadcast %520 : vector<32x1xf32> to vector<32x128xf32>
    %588 = arith.divf %586, %587 : vector<32x128xf32>
    %589 = arith.addf %546, %588 : vector<32x128xf32>
    %c2_276 = arith.constant 2 : index
    %c0_277 = arith.constant 0 : index
    %c0_278 = arith.constant 0 : index
    %590 = vector.load %arg6[%c2_276, %c0_277, %c0_278] : memref<3x32x224xf32, #tpu.memory_space<vmem>>, vector<1x32x224xf32>
    %591 = vector.shape_cast %590 : vector<1x32x224xf32> to vector<32x224xf32>
    %c2_279 = arith.constant 2 : index
    %c0_280 = arith.constant 0 : index
    %c0_281 = arith.constant 0 : index
    %592 = vector.load %arg7[%c2_279, %c0_280, %c0_281] : memref<3x32x1xf32, #tpu.memory_space<vmem>>, vector<1x32x1xf32>
    %593 = vector.shape_cast %592 : vector<1x32x1xf32> to vector<32x1xf32>
    %c15_i32 = arith.constant 15 : i32
    %594 = tpu.dynamic_rotate %589 by %c15_i32 dim 1 : vector<32x128xf32>, i32 -> vector<32x128xf32>
    %c15_i32_282 = arith.constant 15 : i32
    %595 = vector.broadcast %c15_i32_282 : i32 to vector<32x128xi32>
    %596 = arith.cmpi sge, %2, %595 : vector<32x128xi32>
    %cst_283 = arith.constant 0.000000e+00 : f32
    %597 = vector.broadcast %cst_283 : f32 to vector<32x128xf32>
    %598 = arith.select %596, %594, %597 : vector<32x128xi1>, vector<32x128xf32>
    %c10_i32 = arith.constant 10 : i32
    %599 = tpu.dynamic_rotate %589 by %c10_i32 dim 1 : vector<32x128xf32>, i32 -> vector<32x128xf32>
    %c10_i32_284 = arith.constant 10 : i32
    %600 = vector.broadcast %c10_i32_284 : i32 to vector<32x128xi32>
    %601 = arith.cmpi sge, %2, %600 : vector<32x128xi32>
    %cst_285 = arith.constant 0.000000e+00 : f32
    %602 = vector.broadcast %cst_285 : f32 to vector<32x128xf32>
    %603 = arith.select %601, %599, %602 : vector<32x128xi1>, vector<32x128xf32>
    %c5_i32 = arith.constant 5 : i32
    %604 = tpu.dynamic_rotate %589 by %c5_i32 dim 1 : vector<32x128xf32>, i32 -> vector<32x128xf32>
    %c5_i32_286 = arith.constant 5 : i32
    %605 = vector.broadcast %c5_i32_286 : i32 to vector<32x128xi32>
    %606 = arith.cmpi sge, %2, %605 : vector<32x128xi32>
    %cst_287 = arith.constant 0.000000e+00 : f32
    %607 = vector.broadcast %cst_287 : f32 to vector<32x128xf32>
    %608 = arith.select %606, %604, %607 : vector<32x128xi1>, vector<32x128xf32>
    %c123_i32 = arith.constant 123 : i32
    %609 = tpu.dynamic_rotate %589 by %c123_i32 dim 1 : vector<32x128xf32>, i32 -> vector<32x128xf32>
    %c123_i32_288 = arith.constant 123 : i32
    %610 = vector.broadcast %c123_i32_288 : i32 to vector<32x128xi32>
    %611 = arith.cmpi slt, %2, %610 : vector<32x128xi32>
    %cst_289 = arith.constant 0.000000e+00 : f32
    %612 = vector.broadcast %cst_289 : f32 to vector<32x128xf32>
    %613 = arith.select %611, %609, %612 : vector<32x128xi1>, vector<32x128xf32>
    %c118_i32 = arith.constant 118 : i32
    %614 = tpu.dynamic_rotate %589 by %c118_i32 dim 1 : vector<32x128xf32>, i32 -> vector<32x128xf32>
    %c118_i32_290 = arith.constant 118 : i32
    %615 = vector.broadcast %c118_i32_290 : i32 to vector<32x128xi32>
    %616 = arith.cmpi slt, %2, %615 : vector<32x128xi32>
    %cst_291 = arith.constant 0.000000e+00 : f32
    %617 = vector.broadcast %cst_291 : f32 to vector<32x128xf32>
    %618 = arith.select %616, %614, %617 : vector<32x128xi1>, vector<32x128xf32>
    %c113_i32 = arith.constant 113 : i32
    %619 = tpu.dynamic_rotate %589 by %c113_i32 dim 1 : vector<32x128xf32>, i32 -> vector<32x128xf32>
    %c113_i32_292 = arith.constant 113 : i32
    %620 = vector.broadcast %c113_i32_292 : i32 to vector<32x128xi32>
    %621 = arith.cmpi slt, %2, %620 : vector<32x128xi32>
    %cst_293 = arith.constant 0.000000e+00 : f32
    %622 = vector.broadcast %cst_293 : f32 to vector<32x128xf32>
    %623 = arith.select %621, %619, %622 : vector<32x128xi1>, vector<32x128xf32>
    %624 = tpu.concatenate %598, %603, %608, %589, %613, %618, %623 in 0 : vector<32x128xf32>, vector<32x128xf32>, vector<32x128xf32>, vector<32x128xf32>, vector<32x128xf32>, vector<32x128xf32>, vector<32x128xf32> -> vector<224x128xf32>
    %cst_294 = arith.constant dense<0.000000e+00> : vector<32x128xf32>
    %625 = tpu.matmul %591, %624, %cst_294 {dimension_numbers = #tpu.dot_dimension_numbers<[1], [0], [0], [1], [0, 0, 1, 1], [], []>} : vector<32x224xf32>, vector<224x128xf32>, vector<32x128xf32> -> vector<32x128xf32>
    %626 = vector.broadcast %593 : vector<32x1xf32> to vector<32x128xf32>
    %627 = arith.addf %625, %626 : vector<32x128xf32>
    %cst_295 = arith.constant 1.000000e+00 : f32
    %628 = vector.broadcast %cst_295 : f32 to vector<32x1xf32>
    %629 = arith.addf %628, %516 : vector<32x1xf32>
    %cst_296 = arith.constant dense<0.000000e+00> : vector<32xf32>
    %630 = vector.multi_reduction <add>, %627, %cst_296 [1] : vector<32x128xf32> to vector<32xf32>
    %631 = vector.shape_cast %630 : vector<32xf32> to vector<32x1xf32>
    %cst_297 = arith.constant 1.280000e+02 : f32
    %632 = vector.broadcast %cst_297 : f32 to vector<32x1xf32>
    %633 = arith.divf %631, %632 : vector<32x1xf32>
    %634 = vector.broadcast %633 : vector<32x1xf32> to vector<32x128xf32>
    %635 = arith.subf %627, %634 : vector<32x128xf32>
    %636 = arith.mulf %635, %635 : vector<32x128xf32>
    %cst_298 = arith.constant dense<0.000000e+00> : vector<32xf32>
    %637 = vector.multi_reduction <add>, %636, %cst_298 [1] : vector<32x128xf32> to vector<32xf32>
    %638 = vector.shape_cast %637 : vector<32xf32> to vector<32x1xf32>
    %cst_299 = arith.constant 1.280000e+02 : f32
    %639 = vector.broadcast %cst_299 : f32 to vector<32x1xf32>
    %640 = arith.divf %638, %639 : vector<32x1xf32>
    %641 = vector.broadcast %633 : vector<32x1xf32> to vector<32x128xf32>
    %642 = arith.subf %627, %641 : vector<32x128xf32>
    %cst_300 = arith.constant 9.99999974E-6 : f32
    %643 = vector.broadcast %cst_300 : f32 to vector<32x1xf32>
    %644 = arith.addf %640, %643 : vector<32x1xf32>
    %645 = math.sqrt %644 : vector<32x1xf32>
    %646 = vector.broadcast %645 : vector<32x1xf32> to vector<32x128xf32>
    %647 = arith.divf %642, %646 : vector<32x128xf32>
    %648 = vector.broadcast %629 : vector<32x1xf32> to vector<32x128xf32>
    %649 = arith.mulf %648, %647 : vector<32x128xf32>
    %650 = vector.broadcast %518 : vector<32x1xf32> to vector<32x128xf32>
    %651 = arith.addf %649, %650 : vector<32x128xf32>
    %652 = vector.broadcast %522 : vector<32x1xf32> to vector<32x128xf32>
    %653 = arith.mulf %652, %651 : vector<32x128xf32>
    %cst_301 = arith.constant 0.318309873 : f32
    %654 = vector.broadcast %cst_301 : f32 to vector<32x128xf32>
    %655 = arith.mulf %653, %654 : vector<32x128xf32>
    %cst_302 = arith.constant 5.000000e-01 : f32
    %656 = vector.broadcast %cst_302 : f32 to vector<32x128xf32>
    %657 = arith.addf %655, %656 : vector<32x128xf32>
    %658 = math.floor %657 : vector<32x128xf32>
    %cst_303 = arith.constant 3.14159274 : f32
    %659 = vector.broadcast %cst_303 : f32 to vector<32x128xf32>
    %660 = arith.mulf %658, %659 : vector<32x128xf32>
    %661 = arith.subf %653, %660 : vector<32x128xf32>
    %cst_304 = arith.constant 5.000000e-01 : f32
    %662 = vector.broadcast %cst_304 : f32 to vector<32x128xf32>
    %663 = arith.mulf %658, %662 : vector<32x128xf32>
    %664 = math.floor %663 : vector<32x128xf32>
    %cst_305 = arith.constant 2.000000e+00 : f32
    %665 = vector.broadcast %cst_305 : f32 to vector<32x128xf32>
    %666 = arith.mulf %665, %664 : vector<32x128xf32>
    %667 = arith.subf %658, %666 : vector<32x128xf32>
    %cst_306 = arith.constant 2.000000e+00 : f32
    %668 = vector.broadcast %cst_306 : f32 to vector<32x128xf32>
    %669 = arith.mulf %668, %667 : vector<32x128xf32>
    %cst_307 = arith.constant 1.000000e+00 : f32
    %670 = vector.broadcast %cst_307 : f32 to vector<32x128xf32>
    %671 = arith.subf %670, %669 : vector<32x128xf32>
    %672 = arith.mulf %661, %661 : vector<32x128xf32>
    %cst_308 = arith.constant -2.50521079E-8 : f32
    %673 = vector.broadcast %cst_308 : f32 to vector<32x128xf32>
    %674 = arith.mulf %672, %673 : vector<32x128xf32>
    %cst_309 = arith.constant 2.75573188E-6 : f32
    %675 = vector.broadcast %cst_309 : f32 to vector<32x128xf32>
    %676 = arith.addf %675, %674 : vector<32x128xf32>
    %677 = arith.mulf %672, %676 : vector<32x128xf32>
    %cst_310 = arith.constant -1.98412701E-4 : f32
    %678 = vector.broadcast %cst_310 : f32 to vector<32x128xf32>
    %679 = arith.addf %678, %677 : vector<32x128xf32>
    %680 = arith.mulf %672, %679 : vector<32x128xf32>
    %cst_311 = arith.constant 0.00833333377 : f32
    %681 = vector.broadcast %cst_311 : f32 to vector<32x128xf32>
    %682 = arith.addf %681, %680 : vector<32x128xf32>
    %683 = arith.mulf %672, %682 : vector<32x128xf32>
    %cst_312 = arith.constant -0.166666672 : f32
    %684 = vector.broadcast %cst_312 : f32 to vector<32x128xf32>
    %685 = arith.addf %684, %683 : vector<32x128xf32>
    %686 = arith.mulf %672, %685 : vector<32x128xf32>
    %cst_313 = arith.constant 1.000000e+00 : f32
    %687 = vector.broadcast %cst_313 : f32 to vector<32x128xf32>
    %688 = arith.addf %687, %686 : vector<32x128xf32>
    %689 = arith.mulf %661, %688 : vector<32x128xf32>
    %690 = arith.mulf %671, %689 : vector<32x128xf32>
    %691 = arith.mulf %690, %690 : vector<32x128xf32>
    %692 = vector.broadcast %522 : vector<32x1xf32> to vector<32x128xf32>
    %693 = arith.divf %691, %692 : vector<32x128xf32>
    %694 = arith.addf %651, %693 : vector<32x128xf32>
    %c2_314 = arith.constant 2 : index
    %c0_315 = arith.constant 0 : index
    %c0_316 = arith.constant 0 : index
    %695 = vector.load %arg8[%c2_314, %c0_315, %c0_316] : memref<3x32x224xf32, #tpu.memory_space<vmem>>, vector<1x32x224xf32>
    %696 = vector.shape_cast %695 : vector<1x32x224xf32> to vector<32x224xf32>
    %c2_317 = arith.constant 2 : index
    %c0_318 = arith.constant 0 : index
    %c0_319 = arith.constant 0 : index
    %697 = vector.load %arg9[%c2_317, %c0_318, %c0_319] : memref<3x32x1xf32, #tpu.memory_space<vmem>>, vector<1x32x1xf32>
    %698 = vector.shape_cast %697 : vector<1x32x1xf32> to vector<32x1xf32>
    %c3_i32_320 = arith.constant 3 : i32
    %699 = tpu.dynamic_rotate %694 by %c3_i32_320 dim 1 : vector<32x128xf32>, i32 -> vector<32x128xf32>
    %c3_i32_321 = arith.constant 3 : i32
    %700 = vector.broadcast %c3_i32_321 : i32 to vector<32x128xi32>
    %701 = arith.cmpi sge, %2, %700 : vector<32x128xi32>
    %cst_322 = arith.constant 0.000000e+00 : f32
    %702 = vector.broadcast %cst_322 : f32 to vector<32x128xf32>
    %703 = arith.select %701, %699, %702 : vector<32x128xi1>, vector<32x128xf32>
    %c2_i32_323 = arith.constant 2 : i32
    %704 = tpu.dynamic_rotate %694 by %c2_i32_323 dim 1 : vector<32x128xf32>, i32 -> vector<32x128xf32>
    %c2_i32_324 = arith.constant 2 : i32
    %705 = vector.broadcast %c2_i32_324 : i32 to vector<32x128xi32>
    %706 = arith.cmpi sge, %2, %705 : vector<32x128xi32>
    %cst_325 = arith.constant 0.000000e+00 : f32
    %707 = vector.broadcast %cst_325 : f32 to vector<32x128xf32>
    %708 = arith.select %706, %704, %707 : vector<32x128xi1>, vector<32x128xf32>
    %c1_i32_326 = arith.constant 1 : i32
    %709 = tpu.dynamic_rotate %694 by %c1_i32_326 dim 1 : vector<32x128xf32>, i32 -> vector<32x128xf32>
    %c1_i32_327 = arith.constant 1 : i32
    %710 = vector.broadcast %c1_i32_327 : i32 to vector<32x128xi32>
    %711 = arith.cmpi sge, %2, %710 : vector<32x128xi32>
    %cst_328 = arith.constant 0.000000e+00 : f32
    %712 = vector.broadcast %cst_328 : f32 to vector<32x128xf32>
    %713 = arith.select %711, %709, %712 : vector<32x128xi1>, vector<32x128xf32>
    %c127_i32_329 = arith.constant 127 : i32
    %714 = tpu.dynamic_rotate %694 by %c127_i32_329 dim 1 : vector<32x128xf32>, i32 -> vector<32x128xf32>
    %c127_i32_330 = arith.constant 127 : i32
    %715 = vector.broadcast %c127_i32_330 : i32 to vector<32x128xi32>
    %716 = arith.cmpi slt, %2, %715 : vector<32x128xi32>
    %cst_331 = arith.constant 0.000000e+00 : f32
    %717 = vector.broadcast %cst_331 : f32 to vector<32x128xf32>
    %718 = arith.select %716, %714, %717 : vector<32x128xi1>, vector<32x128xf32>
    %c126_i32_332 = arith.constant 126 : i32
    %719 = tpu.dynamic_rotate %694 by %c126_i32_332 dim 1 : vector<32x128xf32>, i32 -> vector<32x128xf32>
    %c126_i32_333 = arith.constant 126 : i32
    %720 = vector.broadcast %c126_i32_333 : i32 to vector<32x128xi32>
    %721 = arith.cmpi slt, %2, %720 : vector<32x128xi32>
    %cst_334 = arith.constant 0.000000e+00 : f32
    %722 = vector.broadcast %cst_334 : f32 to vector<32x128xf32>
    %723 = arith.select %721, %719, %722 : vector<32x128xi1>, vector<32x128xf32>
    %c125_i32_335 = arith.constant 125 : i32
    %724 = tpu.dynamic_rotate %694 by %c125_i32_335 dim 1 : vector<32x128xf32>, i32 -> vector<32x128xf32>
    %c125_i32_336 = arith.constant 125 : i32
    %725 = vector.broadcast %c125_i32_336 : i32 to vector<32x128xi32>
    %726 = arith.cmpi slt, %2, %725 : vector<32x128xi32>
    %cst_337 = arith.constant 0.000000e+00 : f32
    %727 = vector.broadcast %cst_337 : f32 to vector<32x128xf32>
    %728 = arith.select %726, %724, %727 : vector<32x128xi1>, vector<32x128xf32>
    %729 = tpu.concatenate %703, %708, %713, %694, %718, %723, %728 in 0 : vector<32x128xf32>, vector<32x128xf32>, vector<32x128xf32>, vector<32x128xf32>, vector<32x128xf32>, vector<32x128xf32>, vector<32x128xf32> -> vector<224x128xf32>
    %cst_338 = arith.constant dense<0.000000e+00> : vector<32x128xf32>
    %730 = tpu.matmul %696, %729, %cst_338 {dimension_numbers = #tpu.dot_dimension_numbers<[1], [0], [0], [1], [0, 0, 1, 1], [], []>} : vector<32x224xf32>, vector<224x128xf32>, vector<32x128xf32> -> vector<32x128xf32>
    %731 = vector.broadcast %698 : vector<32x1xf32> to vector<32x128xf32>
    %732 = arith.addf %730, %731 : vector<32x128xf32>
    %733 = arith.addf %732, %510 : vector<32x128xf32>
    %c0_339 = arith.constant 0 : index
    %c0_340 = arith.constant 0 : index
    %734 = vector.load %arg10[%c0_339, %c0_340] : memref<64x32xf32, #tpu.memory_space<vmem>>, vector<64x32xf32>
    %cst_341 = arith.constant dense<0.000000e+00> : vector<64x128xf32>
    %735 = tpu.matmul %734, %733, %cst_341 {dimension_numbers = #tpu.dot_dimension_numbers<[1], [0], [0], [1], [0, 0, 1, 1], [], []>} : vector<64x32xf32>, vector<32x128xf32>, vector<64x128xf32> -> vector<64x128xf32>
    %c0_342 = arith.constant 0 : index
    %c0_343 = arith.constant 0 : index
    %736 = vector.load %arg11[%c0_342, %c0_343] : memref<64x1xf32, #tpu.memory_space<vmem>>, vector<64x1xf32>
    %737 = vector.broadcast %736 : vector<64x1xf32> to vector<64x128xf32>
    %738 = arith.addf %735, %737 : vector<64x128xf32>
    %cst_344 = arith.constant 5.000000e-01 : f32
    %739 = vector.broadcast %cst_344 : f32 to vector<64x128xf32>
    %740 = arith.mulf %739, %738 : vector<64x128xf32>
    %cst_345 = arith.constant 0.707106769 : f32
    %741 = vector.broadcast %cst_345 : f32 to vector<64x128xf32>
    %742 = arith.mulf %738, %741 : vector<64x128xf32>
    %743 = math.absf %742 : vector<64x128xf32>
    %cst_346 = arith.constant 0.327591091 : f32
    %744 = vector.broadcast %cst_346 : f32 to vector<64x128xf32>
    %745 = arith.mulf %744, %743 : vector<64x128xf32>
    %cst_347 = arith.constant 1.000000e+00 : f32
    %746 = vector.broadcast %cst_347 : f32 to vector<64x128xf32>
    %747 = arith.addf %746, %745 : vector<64x128xf32>
    %cst_348 = arith.constant 1.000000e+00 : f32
    %748 = vector.broadcast %cst_348 : f32 to vector<64x128xf32>
    %749 = arith.divf %748, %747 : vector<64x128xf32>
    %cst_349 = arith.constant 1.06140542 : f32
    %750 = vector.broadcast %cst_349 : f32 to vector<64x128xf32>
    %751 = arith.mulf %750, %749 : vector<64x128xf32>
    %cst_350 = arith.constant -1.45315206 : f32
    %752 = vector.broadcast %cst_350 : f32 to vector<64x128xf32>
    %753 = arith.addf %751, %752 : vector<64x128xf32>
    %754 = arith.mulf %753, %749 : vector<64x128xf32>
    %cst_351 = arith.constant 1.42141378 : f32
    %755 = vector.broadcast %cst_351 : f32 to vector<64x128xf32>
    %756 = arith.addf %754, %755 : vector<64x128xf32>
    %757 = arith.mulf %756, %749 : vector<64x128xf32>
    %cst_352 = arith.constant -0.284496725 : f32
    %758 = vector.broadcast %cst_352 : f32 to vector<64x128xf32>
    %759 = arith.addf %757, %758 : vector<64x128xf32>
    %760 = arith.mulf %759, %749 : vector<64x128xf32>
    %cst_353 = arith.constant 0.254829586 : f32
    %761 = vector.broadcast %cst_353 : f32 to vector<64x128xf32>
    %762 = arith.addf %760, %761 : vector<64x128xf32>
    %763 = arith.mulf %762, %749 : vector<64x128xf32>
    %cst_354 = arith.constant 0.000000e+00 : f32
    %764 = vector.broadcast %cst_354 : f32 to vector<64x128xf32>
    %765 = arith.subf %764, %743 : vector<64x128xf32>
    %766 = arith.mulf %765, %743 : vector<64x128xf32>
    %767 = math.exp %766 : vector<64x128xf32>
    %768 = arith.mulf %763, %767 : vector<64x128xf32>
    %cst_355 = arith.constant 1.000000e+00 : f32
    %769 = vector.broadcast %cst_355 : f32 to vector<64x128xf32>
    %770 = arith.subf %769, %768 : vector<64x128xf32>
    %cst_356 = arith.constant 0.000000e+00 : f32
    %771 = vector.broadcast %cst_356 : f32 to vector<64x128xf32>
    %772 = arith.cmpf oge, %742, %771 : vector<64x128xf32>
    %cst_357 = arith.constant 0.000000e+00 : f32
    %773 = vector.broadcast %cst_357 : f32 to vector<64x128xf32>
    %774 = arith.subf %773, %770 : vector<64x128xf32>
    %775 = arith.select %772, %770, %774 : vector<64x128xi1>, vector<64x128xf32>
    %cst_358 = arith.constant 1.000000e+00 : f32
    %776 = vector.broadcast %cst_358 : f32 to vector<64x128xf32>
    %777 = arith.addf %776, %775 : vector<64x128xf32>
    %778 = arith.mulf %740, %777 : vector<64x128xf32>
    %779 = arith.mulf %778, %778 : vector<64x128xf32>
    %cst_359 = arith.constant dense<0.000000e+00> : vector<64xf32>
    %780 = vector.multi_reduction <add>, %779, %cst_359 [1] : vector<64x128xf32> to vector<64xf32>
    %781 = vector.shape_cast %780 : vector<64xf32> to vector<64x1xf32>
    %782 = math.sqrt %781 : vector<64x1xf32>
    %cst_360 = arith.constant dense<0.000000e+00> : vector<1xf32>
    %783 = vector.multi_reduction <add>, %782, %cst_360 [0] : vector<64x1xf32> to vector<1xf32>
    %784 = vector.shape_cast %783 : vector<1xf32> to vector<1x1xf32>
    %cst_361 = arith.constant 6.400000e+01 : f32
    %785 = vector.broadcast %cst_361 : f32 to vector<1x1xf32>
    %786 = arith.divf %784, %785 : vector<1x1xf32>
    %cst_362 = arith.constant 9.99999997E-7 : f32
    %787 = vector.broadcast %cst_362 : f32 to vector<1x1xf32>
    %788 = arith.addf %786, %787 : vector<1x1xf32>
    %789 = vector.broadcast %788 : vector<1x1xf32> to vector<64x1xf32>
    %790 = arith.divf %782, %789 : vector<64x1xf32>
    %c0_363 = arith.constant 0 : index
    %c0_364 = arith.constant 0 : index
    %791 = vector.load %arg12[%c0_363, %c0_364] : memref<64x1xf32, #tpu.memory_space<vmem>>, vector<64x1xf32>
    %792 = vector.broadcast %790 : vector<64x1xf32> to vector<64x128xf32>
    %793 = arith.mulf %778, %792 : vector<64x128xf32>
    %794 = vector.broadcast %791 : vector<64x1xf32> to vector<64x128xf32>
    %795 = arith.mulf %794, %793 : vector<64x128xf32>
    %c0_365 = arith.constant 0 : index
    %c0_366 = arith.constant 0 : index
    %796 = vector.load %arg13[%c0_365, %c0_366] : memref<64x1xf32, #tpu.memory_space<vmem>>, vector<64x1xf32>
    %797 = vector.broadcast %796 : vector<64x1xf32> to vector<64x128xf32>
    %798 = arith.addf %795, %797 : vector<64x128xf32>
    %799 = arith.addf %798, %778 : vector<64x128xf32>
    %c0_367 = arith.constant 0 : index
    %c0_368 = arith.constant 0 : index
    %800 = vector.load %arg14[%c0_367, %c0_368] : memref<16x64xf32, #tpu.memory_space<vmem>>, vector<16x64xf32>
    %cst_369 = arith.constant dense<0.000000e+00> : vector<16x128xf32>
    %801 = tpu.matmul %800, %799, %cst_369 {dimension_numbers = #tpu.dot_dimension_numbers<[1], [0], [0], [1], [0, 0, 1, 1], [], []>} : vector<16x64xf32>, vector<64x128xf32>, vector<16x128xf32> -> vector<16x128xf32>
    %c0_370 = arith.constant 0 : index
    %c0_371 = arith.constant 0 : index
    %802 = vector.load %arg15[%c0_370, %c0_371] : memref<16x1xf32, #tpu.memory_space<vmem>>, vector<16x1xf32>
    %803 = vector.broadcast %802 : vector<16x1xf32> to vector<16x128xf32>
    %804 = arith.addf %801, %803 : vector<16x128xf32>
    %805 = vector.extract_strided_slice %1 {offsets = [0, 0], sizes = [16, 128], strides = [1, 1]} : vector<32x128xf32> to vector<16x128xf32>
    %806 = arith.addf %805, %804 : vector<16x128xf32>
    %c0_372 = arith.constant 0 : index
    %c0_373 = arith.constant 0 : index
    %c0_374 = arith.constant 0 : index
    %807 = vector.load %arg16[%c0_372, %c0_373, %c0_374] : memref<1x16x128xf32, #tpu.memory_space<vmem>>, vector<1x16x128xf32>
    %808 = vector.shape_cast %807 : vector<1x16x128xf32> to vector<16x128xf32>
    %809 = vector.shape_cast %806 : vector<16x128xf32> to vector<1x16x128xf32>
    tpu.vector_store %arg16[%c0_372, %c0_373, %c0_374], %809 {strides = array<i32>} : memref<1x16x128xf32, #tpu.memory_space<vmem>>, vector<1x16x128xf32>,
    return
  }
  func.func @transform_0(%arg0: i32) -> (i32, i32, i32) {
    %c0_i32 = arith.constant 0 : i32
    %c0_i32_0 = arith.constant 0 : i32
    %c0_i32_1 = arith.constant 0 : i32
    return %arg0, %c0_i32, %c0_i32_0 : i32, i32, i32
  }
  func.func @transform_1(%arg0: i32) -> (i32, i32) {
    %c0_i32 = arith.constant 0 : i32
    %c0_i32_0 = arith.constant 0 : i32
    %c0_i32_1 = arith.constant 0 : i32
    return %c0_i32, %c0_i32_0 : i32, i32
  }
  func.func @transform_2(%arg0: i32) -> (i32, i32) {
    %c0_i32 = arith.constant 0 : i32
    %c0_i32_0 = arith.constant 0 : i32
    %c0_i32_1 = arith.constant 0 : i32
    return %c0_i32, %c0_i32_0 : i32, i32
  }
  func.func @transform_3(%arg0: i32) -> (i32, i32, i32, i32) {
    %c0_i32 = arith.constant 0 : i32
    %c0_i32_0 = arith.constant 0 : i32
    %c0_i32_1 = arith.constant 0 : i32
    %c0_i32_2 = arith.constant 0 : i32
    return %arg0, %c0_i32, %c0_i32_0, %c0_i32_1 : i32, i32, i32, i32
  }
  func.func @transform_4(%arg0: i32) -> (i32, i32, i32) {
    %c0_i32 = arith.constant 0 : i32
    %c0_i32_0 = arith.constant 0 : i32
    %c0_i32_1 = arith.constant 0 : i32
    %c0_i32_2 = arith.constant 0 : i32
    return %c0_i32, %c0_i32_0, %c0_i32_1 : i32, i32, i32
  }
  func.func @transform_5(%arg0: i32) -> (i32, i32, i32) {
    %c0_i32 = arith.constant 0 : i32
    %c0_i32_0 = arith.constant 0 : i32
    %c0_i32_1 = arith.constant 0 : i32
    %c0_i32_2 = arith.constant 0 : i32
    return %c0_i32, %c0_i32_0, %c0_i32_1 : i32, i32, i32
  }
  func.func @transform_6(%arg0: i32) -> (i32, i32, i32) {
    %c0_i32 = arith.constant 0 : i32
    %c0_i32_0 = arith.constant 0 : i32
    %c0_i32_1 = arith.constant 0 : i32
    %c0_i32_2 = arith.constant 0 : i32
    return %c0_i32, %c0_i32_0, %c0_i32_1 : i32, i32, i32
  }
  func.func @transform_7(%arg0: i32) -> (i32, i32, i32) {
    %c0_i32 = arith.constant 0 : i32
    %c0_i32_0 = arith.constant 0 : i32
    %c0_i32_1 = arith.constant 0 : i32
    %c0_i32_2 = arith.constant 0 : i32
    return %c0_i32, %c0_i32_0, %c0_i32_1 : i32, i32, i32
  }
  func.func @transform_8(%arg0: i32) -> (i32, i32, i32) {
    %c0_i32 = arith.constant 0 : i32
    %c0_i32_0 = arith.constant 0 : i32
    %c0_i32_1 = arith.constant 0 : i32
    %c0_i32_2 = arith.constant 0 : i32
    return %c0_i32, %c0_i32_0, %c0_i32_1 : i32, i32, i32
  }
  func.func @transform_9(%arg0: i32) -> (i32, i32) {
    %c0_i32 = arith.constant 0 : i32
    %c0_i32_0 = arith.constant 0 : i32
    %c0_i32_1 = arith.constant 0 : i32
    return %c0_i32, %c0_i32_0 : i32, i32
  }
  func.func @transform_10(%arg0: i32) -> (i32, i32) {
    %c0_i32 = arith.constant 0 : i32
    %c0_i32_0 = arith.constant 0 : i32
    %c0_i32_1 = arith.constant 0 : i32
    return %c0_i32, %c0_i32_0 : i32, i32
  }
  func.func @transform_11(%arg0: i32) -> (i32, i32) {
    %c0_i32 = arith.constant 0 : i32
    %c0_i32_0 = arith.constant 0 : i32
    %c0_i32_1 = arith.constant 0 : i32
    return %c0_i32, %c0_i32_0 : i32, i32
  }
  func.func @transform_12(%arg0: i32) -> (i32, i32) {
    %c0_i32 = arith.constant 0 : i32
    %c0_i32_0 = arith.constant 0 : i32
    %c0_i32_1 = arith.constant 0 : i32
    return %c0_i32, %c0_i32_0 : i32, i32
  }
  func.func @transform_13(%arg0: i32) -> (i32, i32) {
    %c0_i32 = arith.constant 0 : i32
    %c0_i32_0 = arith.constant 0 : i32
    %c0_i32_1 = arith.constant 0 : i32
    return %c0_i32, %c0_i32_0 : i32, i32
  }
  func.func @transform_14(%arg0: i32) -> (i32, i32) {
    %c0_i32 = arith.constant 0 : i32
    %c0_i32_0 = arith.constant 0 : i32
    %c0_i32_1 = arith.constant 0 : i32
    return %c0_i32, %c0_i32_0 : i32, i32
  }
  func.func @transform_15(%arg0: i32) -> (i32, i32, i32) {
    %c0_i32 = arith.constant 0 : i32
    %c0_i32_0 = arith.constant 0 : i32
    %c0_i32_1 = arith.constant 0 : i32
    return %arg0, %c0_i32, %c0_i32_0 : i32, i32, i32
  }
}

</mosaic_0001>

<llo_original>
// kernel: tpu_custom_call.1
$region0: #{tpu_custom_call.1}
  #allocation0 [shape = 'u32[]', space=smem, size = 0x4, offset = 0x4, fixed_abs, tag = 'smem constant byte address 0x4 - core index']
  #allocation1 [shape = 'u32[72,128]{1,0:T(1,128)}', space=vmem, size = 0x9000, scoped, tag = 'internal scratch']
  %s0 = inlined_call_operand.vmem [shape: f32[2,32,128], index: 0, kind: input, shape index: {}]
  %s1 = inlined_call_operand.vmem [shape: f32[32,7], index: 1, kind: input, shape index: {}]
  %s2 = inlined_call_operand.vmem [shape: f32[32,1], index: 2, kind: input, shape index: {}]
  %s3 = inlined_call_operand.vmem [shape: f32[2,12,32,1], index: 3, kind: input, shape index: {}]
  %s4 = inlined_call_operand.vmem [shape: f32[6,32,1], index: 4, kind: input, shape index: {}]
  %s5 = inlined_call_operand.vmem [shape: f32[3,32,224], index: 5, kind: input, shape index: {}]
  %s6 = inlined_call_operand.vmem [shape: f32[3,32,1], index: 6, kind: input, shape index: {}]
  %s7 = inlined_call_operand.vmem [shape: f32[3,32,224], index: 7, kind: input, shape index: {}]
  %s8 = inlined_call_operand.vmem [shape: f32[3,32,1], index: 8, kind: input, shape index: {}]
  %s9 = inlined_call_operand.vmem [shape: f32[64,32], index: 9, kind: input, shape index: {}]
  %s10 = inlined_call_operand.vmem [shape: f32[64,1], index: 10, kind: input, shape index: {}]
  %s11 = inlined_call_operand.vmem [shape: f32[64,1], index: 11, kind: input, shape index: {}]
  %s12 = inlined_call_operand.vmem [shape: f32[64,1], index: 12, kind: input, shape index: {}]
  %s13 = inlined_call_operand.vmem [shape: f32[16,64], index: 13, kind: input, shape index: {}]
  %s14 = inlined_call_operand.vmem [shape: f32[16,1], index: 14, kind: input, shape index: {}]
  %s15 = inlined_call_operand.hbm [shape: f32[2,16,128], index: 15, kind: output, shape index: {}]
  %s16 = sld [smem:[#allocation0]]
  $region93: #{tpu_custom_call.1} parent=0
    _
  %s18 = ssub.s32 1, %s16
  %s19 = scalar_select 0, %s18, %s16
  $region1: #{tpu_custom_call.1} parent=0
    #allocation2 [shape = 'u8[16384]{0}', space=vmem, size = 0x4000, scoped, tag = 'output window, operand 0']
    #allocation3 [shape = 's32[2]{0}', space=sflag, size = 0x8, scoped, tag = 'scoped memory for tpu_custom_call.1']
    %20 = vsyncpa [#allocation3], 0
    %s21 = scalar_lea.sflag [#allocation3], 1
    %22 = vsyncpa %s21, 0
    loop: start=0, step=1, limit=4
    $region2: #{tpu_custom_call.1} parent=1 // loop_pre_header
      _
    $region3: #{tpu_custom_call.1} parent=1 // loop_header
      %s24 = sphi 0, %s28
      %p25 = scmp.ge.s32.totalorder %s24, 4
      %s34 = sphi 0, %s36
      %s37 = sphi 0, %s34
      %s38 = sphi 0, %s37
      %s54 = sphi 0, %s38
      %s58 = sphi 0, %s58
      %s60 = sphi 0, %s58
      %s61 = sphi 0, %s60
      %s75 = sphi 0, %s61
      %s79 = sphi 0, %s79
      %s81 = sphi 0, %s79
      %s82 = sphi 0, %s81
      %s96 = sphi 0, %s82
      %s102 = sphi 0, %s104
      %s105 = sphi 0, %s102
      %s106 = sphi 0, %s105
      %s122 = sphi 0, %s106
      %s126 = sphi 0, %s126
      %s128 = sphi 0, %s126
      %s129 = sphi 0, %s128
      %s143 = sphi 0, %s129
      %s147 = sphi 0, %s147
      %s149 = sphi 0, %s147
      %s150 = sphi 0, %s149
      %s164 = sphi 0, %s150
      %s168 = sphi 0, %s168
      %s170 = sphi 0, %s168
      %s171 = sphi 0, %s170
      %s185 = sphi 0, %s171
      %s189 = sphi 0, %s189
      %s191 = sphi 0, %s189
      %s192 = sphi 0, %s191
      %s206 = sphi 0, %s192
      %s210 = sphi 0, %s210
      %s212 = sphi 0, %s210
      %s213 = sphi 0, %s212
      %s227 = sphi 0, %s213
      %s231 = sphi 0, %s231
      %s233 = sphi 0, %s231
      %s234 = sphi 0, %s233
      %s248 = sphi 0, %s234
      %s252 = sphi 0, %s252
      %s254 = sphi 0, %s252
      %s255 = sphi 0, %s254
      %s269 = sphi 0, %s255
      %s273 = sphi 0, %s273
      %s275 = sphi 0, %s273
      %s276 = sphi 0, %s275
      %s290 = sphi 0, %s276
      %s294 = sphi 0, %s294
      %s296 = sphi 0, %s294
      %s297 = sphi 0, %s296
      %s311 = sphi 0, %s297
      %s315 = sphi 0, %s315
      %s317 = sphi 0, %s315
      %s318 = sphi 0, %s317
      %s332 = sphi 0, %s318
      %s336 = sphi 0, %s336
      %s338 = sphi 0, %s336
      %s339 = sphi 0, %s338
      %s353 = sphi 0, %s339
      %s359 = sphi 0, %s361
      %s362 = sphi 0, %s359
      %s363 = sphi 0, %s362
      %s379 = sphi 0, %s363
    $region4: #{tpu_custom_call.1} parent=1 // loop_header_branch
      %27 = sbr.rel (%p25) target = $region8
    $region5: #{tpu_custom_call.1} parent=1 // loop_body
      %s29 = ssub.s32 %s24, 1
      %s30 = ssub.s32 %s24, 2
      %s31 = sadd.s32 %s24, 1
      %s32 = ssub.s32 %s24, %s31
      %p33 = scmp.eq.s32.totalorder %s32, 0
      %s35 = sadd.s32 %s34, 1
      %s36 = scalar_select %p33, %s34, %s35
      %p39 = pneg %p33
      %p40 = scmp.eq.s32.totalorder %s24, 1
      %p41 = por %p39, %p40
      %p42 = scmp.ne.s32.totalorder %s34, %s37
      %p43 = scmp.eq.s32.totalorder %s24, 0
      %p44 = por %p42, %p43
      %p45 = scmp.ne.s32.totalorder %s34, %s37
      %p46 = scmp.eq.s32.totalorder %s29, 1
      %p47 = por %p45, %p46
      %p48 = scmp.ne.s32.totalorder %s37, %s38
      %p49 = scmp.eq.s32.totalorder %s29, 0
      %p50 = por %p48, %p49
      %p51 = scmp.ne.s32.totalorder %s37, %s38
      %p52 = scmp.eq.s32.totalorder %s30, 1
      %p53 = por %p51, %p52
      %p55 = scmp.ne.s32.totalorder %s38, %s54
      %p56 = scmp.eq.s32.totalorder %s30, 0
      %p57 = por %p55, %p56
      %s59 = sadd.s32 %s58, 1
      %p62 = scmp.eq.s32.totalorder %s24, 1
      %p63 = scmp.ne.s32.totalorder %s58, %s60
      %p64 = scmp.eq.s32.totalorder %s24, 0
      %p65 = por %p63, %p64
      %p66 = scmp.ne.s32.totalorder %s58, %s60
      %p67 = scmp.eq.s32.totalorder %s29, 1
      %p68 = por %p66, %p67
      %p69 = scmp.ne.s32.totalorder %s60, %s61
      %p70 = scmp.eq.s32.totalorder %s29, 0
      %p71 = por %p69, %p70
      %p72 = scmp.ne.s32.totalorder %s60, %s61
      %p73 = scmp.eq.s32.totalorder %s30, 1
      %p74 = por %p72, %p73
      %p76 = scmp.ne.s32.totalorder %s61, %s75
      %p77 = scmp.eq.s32.totalorder %s30, 0
      %p78 = por %p76, %p77
      %s80 = sadd.s32 %s79, 1
      %p83 = scmp.eq.s32.totalorder %s24, 1
      %p84 = scmp.ne.s32.totalorder %s79, %s81
      %p85 = scmp.eq.s32.totalorder %s24, 0
      %p86 = por %p84, %p85
      %p87 = scmp.ne.s32.totalorder %s79, %s81
      %p88 = scmp.eq.s32.totalorder %s29, 1
      %p89 = por %p87, %p88
      %p90 = scmp.ne.s32.totalorder %s81, %s82
      %p91 = scmp.eq.s32.totalorder %s29, 0
      %p92 = por %p90, %p91
      %p93 = scmp.ne.s32.totalorder %s81, %s82
      %p94 = scmp.eq.s32.totalorder %s30, 1
      %p95 = por %p93, %p94
      %p97 = scmp.ne.s32.totalorder %s82, %s96
      %p98 = scmp.eq.s32.totalorder %s30, 0
      %p99 = por %p97, %p98
      %s100 = ssub.s32 %s24, %s31
      %p101 = scmp.eq.s32.totalorder %s100, 0
      %s103 = sadd.s32 %s102, 1
      %s104 = scalar_select %p101, %s102, %s103
      %p107 = pneg %p101
      %p108 = scmp.eq.s32.totalorder %s24, 1
      %p109 = por %p107, %p108
      %p110 = scmp.ne.s32.totalorder %s102, %s105
      %p111 = scmp.eq.s32.totalorder %s24, 0
      %p112 = por %p110, %p111
      %p113 = scmp.ne.s32.totalorder %s102, %s105
      %p114 = scmp.eq.s32.totalorder %s29, 1
      %p115 = por %p113, %p114
      %p116 = scmp.ne.s32.totalorder %s105, %s106
      %p117 = scmp.eq.s32.totalorder %s29, 0
      %p118 = por %p116, %p117
      %p119 = scmp.ne.s32.totalorder %s105, %s106
      %p120 = scmp.eq.s32.totalorder %s30, 1
      %p121 = por %p119, %p120
      %p123 = scmp.ne.s32.totalorder %s106, %s122
      %p124 = scmp.eq.s32.totalorder %s30, 0
      %p125 = por %p123, %p124
      %s127 = sadd.s32 %s126, 1
      %p130 = scmp.eq.s32.totalorder %s24, 1
      %p131 = scmp.ne.s32.totalorder %s126, %s128
      %p132 = scmp.eq.s32.totalorder %s24, 0
      %p133 = por %p131, %p132
      %p134 = scmp.ne.s32.totalorder %s126, %s128
      %p135 = scmp.eq.s32.totalorder %s29, 1
      %p136 = por %p134, %p135
      %p137 = scmp.ne.s32.totalorder %s128, %s129
      %p138 = scmp.eq.s32.totalorder %s29, 0
      %p139 = por %p137, %p138
      %p140 = scmp.ne.s32.totalorder %s128, %s129
      %p141 = scmp.eq.s32.totalorder %s30, 1
      %p142 = por %p140, %p141
      %p144 = scmp.ne.s32.totalorder %s129, %s143
      %p145 = scmp.eq.s32.totalorder %s30, 0
      %p146 = por %p144, %p145
      %s148 = sadd.s32 %s147, 1
      %p151 = scmp.eq.s32.totalorder %s24, 1
      %p152 = scmp.ne.s32.totalorder %s147, %s149
      %p153 = scmp.eq.s32.totalorder %s24, 0
      %p154 = por %p152, %p153
      %p155 = scmp.ne.s32.totalorder %s147, %s149
      %p156 = scmp.eq.s32.totalorder %s29, 1
      %p157 = por %p155, %p156
      %p158 = scmp.ne.s32.totalorder %s149, %s150
      %p159 = scmp.eq.s32.totalorder %s29, 0
      %p160 = por %p158, %p159
      %p161 = scmp.ne.s32.totalorder %s149, %s150
      %p162 = scmp.eq.s32.totalorder %s30, 1
      %p163 = por %p161, %p162
      %p165 = scmp.ne.s32.totalorder %s150, %s164
      %p166 = scmp.eq.s32.totalorder %s30, 0
      %p167 = por %p165, %p166
      %s169 = sadd.s32 %s168, 1
      %p172 = scmp.eq.s32.totalorder %s24, 1
      %p173 = scmp.ne.s32.totalorder %s168, %s170
      %p174 = scmp.eq.s32.totalorder %s24, 0
      %p175 = por %p173, %p174
      %p176 = scmp.ne.s32.totalorder %s168, %s170
      %p177 = scmp.eq.s32.totalorder %s29, 1
      %p178 = por %p176, %p177
      %p179 = scmp.ne.s32.totalorder %s170, %s171
      %p180 = scmp.eq.s32.totalorder %s29, 0
      %p181 = por %p179, %p180
      %p182 = scmp.ne.s32.totalorder %s170, %s171
      %p183 = scmp.eq.s32.totalorder %s30, 1
      %p184 = por %p182, %p183
      %p186 = scmp.ne.s32.totalorder %s171, %s185
      %p187 = scmp.eq.s32.totalorder %s30, 0
      %p188 = por %p186, %p187
      %s190 = sadd.s32 %s189, 1
      %p193 = scmp.eq.s32.totalorder %s24, 1
      %p194 = scmp.ne.s32.totalorder %s189, %s191
      %p195 = scmp.eq.s32.totalorder %s24, 0
      %p196 = por %p194, %p195
      %p197 = scmp.ne.s32.totalorder %s189, %s191
      %p198 = scmp.eq.s32.totalorder %s29, 1
      %p199 = por %p197, %p198
      %p200 = scmp.ne.s32.totalorder %s191, %s192
      %p201 = scmp.eq.s32.totalorder %s29, 0
      %p202 = por %p200, %p201
      %p203 = scmp.ne.s32.totalorder %s191, %s192
      %p204 = scmp.eq.s32.totalorder %s30, 1
      %p205 = por %p203, %p204
      %p207 = scmp.ne.s32.totalorder %s192, %s206
      %p208 = scmp.eq.s32.totalorder %s30, 0
      %p209 = por %p207, %p208
      %s211 = sadd.s32 %s210, 1
      %p214 = scmp.eq.s32.totalorder %s24, 1
      %p215 = scmp.ne.s32.totalorder %s210, %s212
      %p216 = scmp.eq.s32.totalorder %s24, 0
      %p217 = por %p215, %p216
      %p218 = scmp.ne.s32.totalorder %s210, %s212
      %p219 = scmp.eq.s32.totalorder %s29, 1
      %p220 = por %p218, %p219
      %p221 = scmp.ne.s32.totalorder %s212, %s213
      %p222 = scmp.eq.s32.totalorder %s29, 0
      %p223 = por %p221, %p222
      %p224 = scmp.ne.s32.totalorder %s212, %s213
      %p225 = scmp.eq.s32.totalorder %s30, 1
      %p226 = por %p224, %p225
      %p228 = scmp.ne.s32.totalorder %s213, %s227
      %p229 = scmp.eq.s32.totalorder %s30, 0
      %p230 = por %p228, %p229
      %s232 = sadd.s32 %s231, 1
      %p235 = scmp.eq.s32.totalorder %s24, 1
      %p236 = scmp.ne.s32.totalorder %s231, %s233
      %p237 = scmp.eq.s32.totalorder %s24, 0
      %p238 = por %p236, %p237
      %p239 = scmp.ne.s32.totalorder %s231, %s233
      %p240 = scmp.eq.s32.totalorder %s29, 1
      %p241 = por %p239, %p240
      %p242 = scmp.ne.s32.totalorder %s233, %s234
      %p243 = scmp.eq.s32.totalorder %s29, 0
      %p244 = por %p242, %p243
      %p245 = scmp.ne.s32.totalorder %s233, %s234
      %p246 = scmp.eq.s32.totalorder %s30, 1
      %p247 = por %p245, %p246
      %p249 = scmp.ne.s32.totalorder %s234, %s248
      %p250 = scmp.eq.s32.totalorder %s30, 0
      %p251 = por %p249, %p250
      %s253 = sadd.s32 %s252, 1
      %p256 = scmp.eq.s32.totalorder %s24, 1
      %p257 = scmp.ne.s32.totalorder %s252, %s254
      %p258 = scmp.eq.s32.totalorder %s24, 0
      %p259 = por %p257, %p258
      %p260 = scmp.ne.s32.totalorder %s252, %s254
      %p261 = scmp.eq.s32.totalorder %s29, 1
      %p262 = por %p260, %p261
      %p263 = scmp.ne.s32.totalorder %s254, %s255
      %p264 = scmp.eq.s32.totalorder %s29, 0
      %p265 = por %p263, %p264
      %p266 = scmp.ne.s32.totalorder %s254, %s255
      %p267 = scmp.eq.s32.totalorder %s30, 1
      %p268 = por %p266, %p267
      %p270 = scmp.ne.s32.totalorder %s255, %s269
      %p271 = scmp.eq.s32.totalorder %s30, 0
      %p272 = por %p270, %p271
      %s274 = sadd.s32 %s273, 1
      %p277 = scmp.eq.s32.totalorder %s24, 1
      %p278 = scmp.ne.s32.totalorder %s273, %s275
      %p279 = scmp.eq.s32.totalorder %s24, 0
      %p280 = por %p278, %p279
      %p281 = scmp.ne.s32.totalorder %s273, %s275
      %p282 = scmp.eq.s32.totalorder %s29, 1
      %p283 = por %p281, %p282
      %p284 = scmp.ne.s32.totalorder %s275, %s276
      %p285 = scmp.eq.s32.totalorder %s29, 0
      %p286 = por %p284, %p285
      %p287 = scmp.ne.s32.totalorder %s275, %s276
      %p288 = scmp.eq.s32.totalorder %s30, 1
      %p289 = por %p287, %p288
      %p291 = scmp.ne.s32.totalorder %s276, %s290
      %p292 = scmp.eq.s32.totalorder %s30, 0
      %p293 = por %p291, %p292
      %s295 = sadd.s32 %s294, 1
      %p298 = scmp.eq.s32.totalorder %s24, 1
      %p299 = scmp.ne.s32.totalorder %s294, %s296
      %p300 = scmp.eq.s32.totalorder %s24, 0
      %p301 = por %p299, %p300
      %p302 = scmp.ne.s32.totalorder %s294, %s296
      %p303 = scmp.eq.s32.totalorder %s29, 1
      %p304 = por %p302, %p303
      %p305 = scmp.ne.s32.totalorder %s296, %s297
      %p306 = scmp.eq.s32.totalorder %s29, 0
      %p307 = por %p305, %p306
      %p308 = scmp.ne.s32.totalorder %s296, %s297
      %p309 = scmp.eq.s32.totalorder %s30, 1
      %p310 = por %p308, %p309
      %p312 = scmp.ne.s32.totalorder %s297, %s311
      %p313 = scmp.eq.s32.totalorder %s30, 0
      %p314 = por %p312, %p313
      %s316 = sadd.s32 %s315, 1
      %p319 = scmp.eq.s32.totalorder %s24, 1
      %p320 = scmp.ne.s32.totalorder %s315, %s317
      %p321 = scmp.eq.s32.totalorder %s24, 0
      %p322 = por %p320, %p321
      %p323 = scmp.ne.s32.totalorder %s315, %s317
      %p324 = scmp.eq.s32.totalorder %s29, 1
      %p325 = por %p323, %p324
      %p326 = scmp.ne.s32.totalorder %s317, %s318
      %p327 = scmp.eq.s32.totalorder %s29, 0
      %p328 = por %p326, %p327
      %p329 = scmp.ne.s32.totalorder %s317, %s318
      %p330 = scmp.eq.s32.totalorder %s30, 1
      %p331 = por %p329, %p330
      %p333 = scmp.ne.s32.totalorder %s318, %s332
      %p334 = scmp.eq.s32.totalorder %s30, 0
      %p335 = por %p333, %p334
      %s337 = sadd.s32 %s336, 1
      %p340 = scmp.eq.s32.totalorder %s24, 1
      %p341 = scmp.ne.s32.totalorder %s336, %s338
      %p342 = scmp.eq.s32.totalorder %s24, 0
      %p343 = por %p341, %p342
      %p344 = scmp.ne.s32.totalorder %s336, %s338
      %p345 = scmp.eq.s32.totalorder %s29, 1
      %p346 = por %p344, %p345
      %p347 = scmp.ne.s32.totalorder %s338, %s339
      %p348 = scmp.eq.s32.totalorder %s29, 0
      %p349 = por %p347, %p348
      %p350 = scmp.ne.s32.totalorder %s338, %s339
      %p351 = scmp.eq.s32.totalorder %s30, 1
      %p352 = por %p350, %p351
      %p354 = scmp.ne.s32.totalorder %s339, %s353
      %p355 = scmp.eq.s32.totalorder %s30, 0
      %p356 = por %p354, %p355
      %s357 = ssub.s32 %s24, %s31
      %p358 = scmp.eq.s32.totalorder %s357, 0
      %s360 = sadd.s32 %s359, 1
      %s361 = scalar_select %p358, %s359, %s360
      %p364 = pneg %p358
      %p365 = scmp.eq.s32.totalorder %s24, 1
      %p366 = por %p364, %p365
      %p367 = scmp.ne.s32.totalorder %s359, %s362
      %p368 = scmp.eq.s32.totalorder %s24, 0
      %p369 = por %p367, %p368
      %p370 = scmp.ne.s32.totalorder %s359, %s362
      %p371 = scmp.eq.s32.totalorder %s29, 1
      %p372 = por %p370, %p371
      %p373 = scmp.ne.s32.totalorder %s362, %s363
      %p374 = scmp.eq.s32.totalorder %s29, 0
      %p375 = por %p373, %p374
      %p376 = scmp.ne.s32.totalorder %s362, %s363
      %p377 = scmp.eq.s32.totalorder %s30, 1
      %p378 = por %p376, %p377
      %p380 = scmp.ne.s32.totalorder %s363, %s379
      %p381 = scmp.eq.s32.totalorder %s30, 0
      %p382 = por %p380, %p381
      %p383 = scmp.le.s32.totalorder 1, %s24
      %p384 = scmp.lt.s32.totalorder %s24, 3
      %p385 = pnand %p383, %p384
      %p386 = pneg %p385
      // Predicated region
      $region9: #{tpu_custom_call.1} parent=5 // pred_check
        _
      $region10: #{tpu_custom_call.1} parent=5 // pred_check_branch
        %388 = sbr.rel (%p385) target = $region12
      $region11: #{tpu_custom_call.1} parent=5 // pred_region
        %s389 = ssub.s32 %s24, 1
        // Predicated region
        $region13: #{tpu_custom_call.1} parent=11 // pred_check
          %p390 = pneg %p71
        $region14: #{tpu_custom_call.1} parent=11 // pred_check_branch
          %392 = sbr.rel (%p390) target = $region16
        $region15: #{tpu_custom_call.1} parent=11 // pred_region
          _
        $region16: #{tpu_custom_call.1} parent=11 // pred_fallthru
          _
        // Predicated region
        $region17: #{tpu_custom_call.1} parent=11 // pred_check
          %p393 = pneg %p92
        $region18: #{tpu_custom_call.1} parent=11 // pred_check_branch
          %395 = sbr.rel (%p393) target = $region20
        $region19: #{tpu_custom_call.1} parent=11 // pred_region
          _
        $region20: #{tpu_custom_call.1} parent=11 // pred_fallthru
          _
        // Predicated region
        $region21: #{tpu_custom_call.1} parent=11 // pred_check
          %p396 = pneg %p139
        $region22: #{tpu_custom_call.1} parent=11 // pred_check_branch
          %398 = sbr.rel (%p396) target = $region24
        $region23: #{tpu_custom_call.1} parent=11 // pred_region
          _
        $region24: #{tpu_custom_call.1} parent=11 // pred_fallthru
          _
        // Predicated region
        $region25: #{tpu_custom_call.1} parent=11 // pred_check
          %p399 = pneg %p160
        $region26: #{tpu_custom_call.1} parent=11 // pred_check_branch
          %401 = sbr.rel (%p399) target = $region28
        $region27: #{tpu_custom_call.1} parent=11 // pred_region
          _
        $region28: #{tpu_custom_call.1} parent=11 // pred_fallthru
          _
        // Predicated region
        $region29: #{tpu_custom_call.1} parent=11 // pred_check
          %p402 = pneg %p181
        $region30: #{tpu_custom_call.1} parent=11 // pred_check_branch
          %404 = sbr.rel (%p402) target = $region32
        $region31: #{tpu_custom_call.1} parent=11 // pred_region
          _
        $region32: #{tpu_custom_call.1} parent=11 // pred_fallthru
          _
        // Predicated region
        $region33: #{tpu_custom_call.1} parent=11 // pred_check
          %p405 = pneg %p202
        $region34: #{tpu_custom_call.1} parent=11 // pred_check_branch
          %407 = sbr.rel (%p405) target = $region36
        $region35: #{tpu_custom_call.1} parent=11 // pred_region
          _
        $region36: #{tpu_custom_call.1} parent=11 // pred_fallthru
          _
        // Predicated region
        $region37: #{tpu_custom_call.1} parent=11 // pred_check
          %p408 = pneg %p223
        $region38: #{tpu_custom_call.1} parent=11 // pred_check_branch
          %410 = sbr.rel (%p408) target = $region40
        $region39: #{tpu_custom_call.1} parent=11 // pred_region
          _
        $region40: #{tpu_custom_call.1} parent=11 // pred_fallthru
          _
        // Predicated region
        $region41: #{tpu_custom_call.1} parent=11 // pred_check
          %p411 = pneg %p244
        $region42: #{tpu_custom_call.1} parent=11 // pred_check_branch
          %413 = sbr.rel (%p411) target = $region44
        $region43: #{tpu_custom_call.1} parent=11 // pred_region
          _
        $region44: #{tpu_custom_call.1} parent=11 // pred_fallthru
          _
        // Predicated region
        $region45: #{tpu_custom_call.1} parent=11 // pred_check
          %p414 = pneg %p265
        $region46: #{tpu_custom_call.1} parent=11 // pred_check_branch
          %416 = sbr.rel (%p414) target = $region48
        $region47: #{tpu_custom_call.1} parent=11 // pred_region
          _
        $region48: #{tpu_custom_call.1} parent=11 // pred_fallthru
          _
        // Predicated region
        $region49: #{tpu_custom_call.1} parent=11 // pred_check
          %p417 = pneg %p286
        $region50: #{tpu_custom_call.1} parent=11 // pred_check_branch
          %419 = sbr.rel (%p417) target = $region52
        $region51: #{tpu_custom_call.1} parent=11 // pred_region
          _
        $region52: #{tpu_custom_call.1} parent=11 // pred_fallthru
          _
        // Predicated region
        $region53: #{tpu_custom_call.1} parent=11 // pred_check
          %p420 = pneg %p307
        $region54: #{tpu_custom_call.1} parent=11 // pred_check_branch
          %422 = sbr.rel (%p420) target = $region56
        $region55: #{tpu_custom_call.1} parent=11 // pred_region
          _
        $region56: #{tpu_custom_call.1} parent=11 // pred_fallthru
          _
        // Predicated region
        $region57: #{tpu_custom_call.1} parent=11 // pred_check
          %p423 = pneg %p328
        $region58: #{tpu_custom_call.1} parent=11 // pred_check_branch
          %425 = sbr.rel (%p423) target = $region60
        $region59: #{tpu_custom_call.1} parent=11 // pred_region
          _
        $region60: #{tpu_custom_call.1} parent=11 // pred_fallthru
          _
        // Predicated region
        $region61: #{tpu_custom_call.1} parent=11 // pred_check
          %p426 = pneg %p349
        $region62: #{tpu_custom_call.1} parent=11 // pred_check_branch
          %428 = sbr.rel (%p426) target = $region64
        $region63: #{tpu_custom_call.1} parent=11 // pred_region
          _
        $region64: #{tpu_custom_call.1} parent=11 // pred_fallthru
          _
      $region12: #{tpu_custom_call.1} parent=5 // pred_fallthru
        _
      %p429 = scmp.lt.s32.totalorder %s24, 2
      // Predicated region
      $region65: #{tpu_custom_call.1} parent=5 // pred_check
        %p430 = pneg %p429
      $region66: #{tpu_custom_call.1} parent=5 // pred_check_branch
        %432 = sbr.rel (%p430) target = $region68
      $region67: #{tpu_custom_call.1} parent=5 // pred_region
        // Predicated region
        $region69: #{tpu_custom_call.1} parent=67 // pred_check
          %p433 = pneg %p44
        $region70: #{tpu_custom_call.1} parent=67 // pred_check_branch
          %435 = sbr.rel (%p433) target = $region72
        $region71: #{tpu_custom_call.1} parent=67 // pred_region
          %p436 = scmp.lt.s32.totalorder %s24, 1
          %s437 = scalar_select %p436, %s24, 1
          %s438 = smul.addr %s437, 4
          %s439 = smul.addr %s438, 8
          %s440 = scalar_lea.vmem %s0, %s439
        $region72: #{tpu_custom_call.1} parent=67 // pred_fallthru
          _
        // Predicated region
        $region73: #{tpu_custom_call.1} parent=67 // pred_check
          %p441 = pneg %p112
        $region74: #{tpu_custom_call.1} parent=67 // pred_check_branch
          %443 = sbr.rel (%p441) target = $region76
        $region75: #{tpu_custom_call.1} parent=67 // pred_region
          %p444 = scmp.lt.s32.totalorder %s24, 1
          %s445 = scalar_select %p444, %s24, 1
          %s446 = smul.addr %s445, 48
          %s447 = smul.addr %s446, 8
          %s448 = scalar_lea.vmem %s3, %s447
        $region76: #{tpu_custom_call.1} parent=67 // pred_fallthru
          _
      $region68: #{tpu_custom_call.1} parent=5 // pred_fallthru
        _
      %p449 = scmp.le.s32.totalorder 1, %s24
      %p450 = scmp.lt.s32.totalorder %s24, 3
      %p451 = pnand %p449, %p450
      %p452 = pneg %p451
      // Predicated region
      $region77: #{tpu_custom_call.1} parent=5 // pred_check
        _
      $region78: #{tpu_custom_call.1} parent=5 // pred_check_branch
        %454 = sbr.rel (%p451) target = $region80
      $region79: #{tpu_custom_call.1} parent=5 // pred_region
        %s455 = ssub.s32 %s24, 1
        %p456 = scmp.lt.s32.totalorder %s29, 1
        %s457 = scalar_select %p456, %s29, 1
        %s458 = smul.addr %s457, 4
        %s459 = smul.addr %s458, 8
        %s460 = scalar_lea.vmem %s0, %s459
        %p461 = pneg %p50
        %p462 = pneg %p47
        %p463 = pneg %p71
        %p464 = pneg %p68
        %p465 = pneg %p92
        %p466 = pneg %p89
        %p467 = scmp.lt.s32.totalorder %s29, 1
        %s468 = scalar_select %p467, %s29, 1
        %s469 = smul.addr %s468, 48
        %s470 = smul.addr %s469, 8
        %s471 = scalar_lea.vmem %s3, %s470
        %p472 = pneg %p118
        %p473 = pneg %p115
        %p474 = pneg %p139
        %p475 = pneg %p136
        %p476 = pneg %p160
        %p477 = pneg %p157
        %p478 = pneg %p181
        %p479 = pneg %p178
        %p480 = pneg %p202
        %p481 = pneg %p199
        %p482 = pneg %p223
        %p483 = pneg %p220
        %p484 = pneg %p244
        %p485 = pneg %p241
        %p486 = pneg %p265
        %p487 = pneg %p262
        %p488 = pneg %p286
        %p489 = pneg %p283
        %p490 = pneg %p307
        %p491 = pneg %p304
        %p492 = pneg %p328
        %p493 = pneg %p325
        %p494 = pneg %p349
        %p495 = pneg %p346
        %p496 = pneg %p375
        %p497 = pneg %p372
        %s498 = sand.u32 %s362, 1
        %s499 = scalar_lea.sflag [#allocation3], %s498
        %s500 = sand.u32 %s362, 1
        %s501 = smul.addr %s500, 16
        %s502 = scalar_lea.vmem [#allocation2], %s501
        %p503 = scmp.lt.s32.totalorder %s29, 1
        %s504 = scalar_select %p503, %s29, 1
        %s505 = smul.addr %s504, 4
        %s506 = smul.addr %s505, 8
        %s507 = scalar_lea.vmem %s0, %s506
        %p508 = scmp.lt.s32.totalorder %s29, 1
        %s509 = scalar_select %p508, %s29, 1
        %s510 = smul.addr %s509, 48
        %s511 = smul.addr %s510, 8
        %s512 = scalar_lea.vmem %s3, %s511
        %v513 = vld [vmem:[%s507] sm:$0xff]
        %v514 = vld [vmem:[%s507 + $0x8] sm:$0xff]
        %v515 = vld [vmem:[%s507 + $0x10] sm:$0xff]
        %v516 = vld [vmem:[%s507 + $0x18] sm:$0xff]
        %v517 = vlaneseq
        %v518 = vand.u32 %v517, 127
        %v519 = vld [vmem:[%s1] sm:$0xff]
        %v520 = vld [vmem:[%s1 + $0x8] sm:$0xff]
        %v521 = vld [vmem:[%s1 + $0x10] sm:$0xff]
        %v522 = vld [vmem:[%s1 + $0x18] sm:$0xff]
        %523 = vrot.lane.b32.xlu0 %v513, 3
        %v524 = vpop.permute.xlu0 %523
        %525 = vrot.lane.b32.xlu0 %v514, 3
        %v526 = vpop.permute.xlu0 %525
        %527 = vrot.lane.b32.xlu0 %v515, 3
        %v528 = vpop.permute.xlu0 %527
        %529 = vrot.lane.b32.xlu0 %v516, 3
        %v530 = vpop.permute.xlu0 %529
        %vm531 = vcmp.ge.s32.totalorder %v518, 3
        %v532 = vsel %vm531, %v524, 0.0
        %v533 = vsel %vm531, %v526, 0.0
        %v534 = vsel %vm531, %v528, 0.0
        %v535 = vsel %vm531, %v530, 0.0
        %537 = vset.pattern.permute.xlu0 0
        %538 = vperm.xlu0 %537, %v519
        %v539 = vpop.permute.xlu0 %538
        %542 = vset.pattern.permute.xlu0 0
        %543 = vperm.xlu0 %542, %v520
        %v544 = vpop.permute.xlu0 %543
        %547 = vset.pattern.permute.xlu0 0
        %548 = vperm.xlu0 %547, %v521
        %v549 = vpop.permute.xlu0 %548
        %552 = vset.pattern.permute.xlu0 0
        %553 = vperm.xlu0 %552, %v522
        %v554 = vpop.permute.xlu0 %553
        %v556 = vmul.f32 %v539, %v532
        %v557 = vmul.f32 %v544, %v533
        %v558 = vmul.f32 %v549, %v534
        %v559 = vmul.f32 %v554, %v535
        %v560 = vadd.f32 %v556, 0.0
        %v561 = vadd.f32 %v557, 0.0
        %v562 = vadd.f32 %v558, 0.0
        %v563 = vadd.f32 %v559, 0.0
        %564 = vrot.lane.b32.xlu0 %v513, 2
        %v565 = vpop.permute.xlu0 %564
        %566 = vrot.lane.b32.xlu0 %v514, 2
        %v567 = vpop.permute.xlu0 %566
        %568 = vrot.lane.b32.xlu0 %v515, 2
        %v569 = vpop.permute.xlu0 %568
        %570 = vrot.lane.b32.xlu0 %v516, 2
        %v571 = vpop.permute.xlu0 %570
        %vm572 = vcmp.ge.s32.totalorder %v518, 2
        %v573 = vsel %vm572, %v565, 0.0
        %v574 = vsel %vm572, %v567, 0.0
        %v575 = vsel %vm572, %v569, 0.0
        %v576 = vsel %vm572, %v571, 0.0
        %577 = vset.pattern.permute.xlu0 1
        %578 = vperm.xlu0 %577, %v519
        %v579 = vpop.permute.xlu0 %578
        %581 = vset.pattern.permute.xlu0 1
        %582 = vperm.xlu0 %581, %v520
        %v583 = vpop.permute.xlu0 %582
        %585 = vset.pattern.permute.xlu0 1
        %586 = vperm.xlu0 %585, %v521
        %v587 = vpop.permute.xlu0 %586
        %589 = vset.pattern.permute.xlu0 1
        %590 = vperm.xlu0 %589, %v522
        %v591 = vpop.permute.xlu0 %590
        %v593 = vmul.f32 %v579, %v573
        %v594 = vmul.f32 %v583, %v574
        %v595 = vmul.f32 %v587, %v575
        %v596 = vmul.f32 %v591, %v576
        %v597 = vadd.f32 %v560, %v593
        %v598 = vadd.f32 %v561, %v594
        %v599 = vadd.f32 %v562, %v595
        %v600 = vadd.f32 %v563, %v596
        %601 = vrot.lane.b32.xlu0 %v513, 1
        %v602 = vpop.permute.xlu0 %601
        %603 = vrot.lane.b32.xlu0 %v514, 1
        %v604 = vpop.permute.xlu0 %603
        %605 = vrot.lane.b32.xlu0 %v515, 1
        %v606 = vpop.permute.xlu0 %605
        %607 = vrot.lane.b32.xlu0 %v516, 1
        %v608 = vpop.permute.xlu0 %607
        %vm609 = vcmp.ge.s32.totalorder %v518, 1
        %v610 = vsel %vm609, %v602, 0.0
        %v611 = vsel %vm609, %v604, 0.0
        %v612 = vsel %vm609, %v606, 0.0
        %v613 = vsel %vm609, %v608, 0.0
        %614 = vset.pattern.permute.xlu0 2
        %615 = vperm.xlu0 %614, %v519
        %v616 = vpop.permute.xlu0 %615
        %618 = vset.pattern.permute.xlu0 2
        %619 = vperm.xlu0 %618, %v520
        %v620 = vpop.permute.xlu0 %619
        %622 = vset.pattern.permute.xlu0 2
        %623 = vperm.xlu0 %622, %v521
        %v624 = vpop.permute.xlu0 %623
        %626 = vset.pattern.permute.xlu0 2
        %627 = vperm.xlu0 %626, %v522
        %v628 = vpop.permute.xlu0 %627
        %v630 = vmul.f32 %v616, %v610
        %v631 = vmul.f32 %v620, %v611
        %v632 = vmul.f32 %v624, %v612
        %v633 = vmul.f32 %v628, %v613
        %v634 = vadd.f32 %v597, %v630
        %v635 = vadd.f32 %v598, %v631
        %v636 = vadd.f32 %v599, %v632
        %v637 = vadd.f32 %v600, %v633
        %638 = vset.pattern.permute.xlu0 3
        %639 = vperm.xlu0 %638, %v519
        %v640 = vpop.permute.xlu0 %639
        %642 = vset.pattern.permute.xlu0 3
        %643 = vperm.xlu0 %642, %v520
        %v644 = vpop.permute.xlu0 %643
        %646 = vset.pattern.permute.xlu0 3
        %647 = vperm.xlu0 %646, %v521
        %v648 = vpop.permute.xlu0 %647
        %650 = vset.pattern.permute.xlu0 3
        %651 = vperm.xlu0 %650, %v522
        %v652 = vpop.permute.xlu0 %651
        %v654 = vmul.f32 %v640, %v513
        %v655 = vmul.f32 %v644, %v514
        %v656 = vmul.f32 %v648, %v515
        %v657 = vmul.f32 %v652, %v516
        %v658 = vadd.f32 %v634, %v654
        %v659 = vadd.f32 %v635, %v655
        %v660 = vadd.f32 %v636, %v656
        %v661 = vadd.f32 %v637, %v657
        %662 = vrot.lane.b32.xlu0 %v513, 127
        %v663 = vpop.permute.xlu0 %662
        %664 = vrot.lane.b32.xlu0 %v514, 127
        %v665 = vpop.permute.xlu0 %664
        %666 = vrot.lane.b32.xlu0 %v515, 127
        %v667 = vpop.permute.xlu0 %666
        %668 = vrot.lane.b32.xlu0 %v516, 127
        %v669 = vpop.permute.xlu0 %668
        %vm670 = vcmp.lt.s32.totalorder %v518, 127
        %v671 = vsel %vm670, %v663, 0.0
        %v672 = vsel %vm670, %v665, 0.0
        %v673 = vsel %vm670, %v667, 0.0
        %v674 = vsel %vm670, %v669, 0.0
        %675 = vset.pattern.permute.xlu0 4
        %676 = vperm.xlu0 %675, %v519
        %v677 = vpop.permute.xlu0 %676
        %679 = vset.pattern.permute.xlu0 4
        %680 = vperm.xlu0 %679, %v520
        %v681 = vpop.permute.xlu0 %680
        %683 = vset.pattern.permute.xlu0 4
        %684 = vperm.xlu0 %683, %v521
        %v685 = vpop.permute.xlu0 %684
        %687 = vset.pattern.permute.xlu0 4
        %688 = vperm.xlu0 %687, %v522
        %v689 = vpop.permute.xlu0 %688
        %v691 = vmul.f32 %v677, %v671
        %v692 = vmul.f32 %v681, %v672
        %v693 = vmul.f32 %v685, %v673
        %v694 = vmul.f32 %v689, %v674
        %v695 = vadd.f32 %v658, %v691
        %v696 = vadd.f32 %v659, %v692
        %v697 = vadd.f32 %v660, %v693
        %v698 = vadd.f32 %v661, %v694
        %699 = vrot.lane.b32.xlu0 %v513, 126
        %v700 = vpop.permute.xlu0 %699
        %701 = vrot.lane.b32.xlu0 %v514, 126
        %v702 = vpop.permute.xlu0 %701
        %703 = vrot.lane.b32.xlu0 %v515, 126
        %v704 = vpop.permute.xlu0 %703
        %705 = vrot.lane.b32.xlu0 %v516, 126
        %v706 = vpop.permute.xlu0 %705
        %vm707 = vcmp.lt.s32.totalorder %v518, 126
        %v708 = vsel %vm707, %v700, 0.0
        %v709 = vsel %vm707, %v702, 0.0
        %v710 = vsel %vm707, %v704, 0.0
        %v711 = vsel %vm707, %v706, 0.0
        %712 = vset.pattern.permute.xlu0 5
        %713 = vperm.xlu0 %712, %v519
        %v714 = vpop.permute.xlu0 %713
        %716 = vset.pattern.permute.xlu0 5
        %717 = vperm.xlu0 %716, %v520
        %v718 = vpop.permute.xlu0 %717
        %720 = vset.pattern.permute.xlu0 5
        %721 = vperm.xlu0 %720, %v521
        %v722 = vpop.permute.xlu0 %721
        %724 = vset.pattern.permute.xlu0 5
        %725 = vperm.xlu0 %724, %v522
        %v726 = vpop.permute.xlu0 %725
        %v728 = vmul.f32 %v714, %v708
        %v729 = vmul.f32 %v718, %v709
        %v730 = vmul.f32 %v722, %v710
        %v731 = vmul.f32 %v726, %v711
        %v732 = vadd.f32 %v695, %v728
        %v733 = vadd.f32 %v696, %v729
        %v734 = vadd.f32 %v697, %v730
        %v735 = vadd.f32 %v698, %v731
        %736 = vrot.lane.b32.xlu0 %v513, 125
        %v737 = vpop.permute.xlu0 %736
        %738 = vrot.lane.b32.xlu0 %v514, 125
        %v739 = vpop.permute.xlu0 %738
        %740 = vrot.lane.b32.xlu0 %v515, 125
        %v741 = vpop.permute.xlu0 %740
        %742 = vrot.lane.b32.xlu0 %v516, 125
        %v743 = vpop.permute.xlu0 %742
        %vm744 = vcmp.lt.s32.totalorder %v518, 125
        %v745 = vsel %vm744, %v737, 0.0
        %v746 = vsel %vm744, %v739, 0.0
        %v747 = vsel %vm744, %v741, 0.0
        %v748 = vsel %vm744, %v743, 0.0
        %749 = vset.pattern.permute.xlu0 6
        %750 = vperm.xlu0 %749, %v519
        %v751 = vpop.permute.xlu0 %750
        %753 = vset.pattern.permute.xlu0 6
        %754 = vperm.xlu0 %753, %v520
        %v755 = vpop.permute.xlu0 %754
        %757 = vset.pattern.permute.xlu0 6
        %758 = vperm.xlu0 %757, %v521
        %v759 = vpop.permute.xlu0 %758
        %761 = vset.pattern.permute.xlu0 6
        %762 = vperm.xlu0 %761, %v522
        %v763 = vpop.permute.xlu0 %762
        %v765 = vmul.f32 %v751, %v745
        %v766 = vmul.f32 %v755, %v746
        %v767 = vmul.f32 %v759, %v747
        %v768 = vmul.f32 %v763, %v748
        %v769 = vadd.f32 %v732, %v765
        %v770 = vadd.f32 %v733, %v766
        %v771 = vadd.f32 %v734, %v767
        %v772 = vadd.f32 %v735, %v768
        %v773 = vld [vmem:[%s2] sm:$0xff]
        %v774 = vld [vmem:[%s2 + $0x8] sm:$0xff]
        %v775 = vld [vmem:[%s2 + $0x10] sm:$0xff]
        %v776 = vld [vmem:[%s2 + $0x18] sm:$0xff]
        %778 = vset.pattern.permute.xlu0 0
        %779 = vperm.xlu0 %778, %v773
        %v780 = vpop.permute.xlu0 %779
        %783 = vset.pattern.permute.xlu0 0
        %784 = vperm.xlu0 %783, %v774
        %v785 = vpop.permute.xlu0 %784
        %788 = vset.pattern.permute.xlu0 0
        %789 = vperm.xlu0 %788, %v775
        %v790 = vpop.permute.xlu0 %789
        %793 = vset.pattern.permute.xlu0 0
        %794 = vperm.xlu0 %793, %v776
        %v795 = vpop.permute.xlu0 %794
        %v797 = vadd.f32 %v769, %v780
        %v798 = vadd.f32 %v770, %v785
        %v799 = vadd.f32 %v771, %v790
        %v800 = vadd.f32 %v772, %v795
        %v801 = vld [vmem:[%s512] sm:$0xff]
        %v802 = vld [vmem:[%s512 + $0x8] sm:$0xff]
        %v803 = vld [vmem:[%s512 + $0x10] sm:$0xff]
        %v804 = vld [vmem:[%s512 + $0x18] sm:$0xff]
        %s805 = scalar_lea.vmem %s512, 32
        %v806 = vld [vmem:[%s805] sm:$0xff]
        %v807 = vld [vmem:[%s805 + $0x8] sm:$0xff]
        %v808 = vld [vmem:[%s805 + $0x10] sm:$0xff]
        %v809 = vld [vmem:[%s805 + $0x18] sm:$0xff]
        %s810 = scalar_lea.vmem %s512, 64
        %v811 = vld [vmem:[%s810] sm:$0xff]
        %v812 = vld [vmem:[%s810 + $0x8] sm:$0xff]
        %v813 = vld [vmem:[%s810 + $0x10] sm:$0xff]
        %v814 = vld [vmem:[%s810 + $0x18] sm:$0xff]
        %s815 = scalar_lea.vmem %s512, 96
        %v816 = vld [vmem:[%s815] sm:$0xff]
        %v817 = vld [vmem:[%s815 + $0x8] sm:$0xff]
        %v818 = vld [vmem:[%s815 + $0x10] sm:$0xff]
        %v819 = vld [vmem:[%s815 + $0x18] sm:$0xff]
        %v820 = vld [vmem:[%s4] sm:$0xff]
        %v821 = vld [vmem:[%s4 + $0x8] sm:$0xff]
        %v822 = vld [vmem:[%s4 + $0x10] sm:$0xff]
        %v823 = vld [vmem:[%s4 + $0x18] sm:$0xff]
        %s824 = scalar_lea.vmem %s4, 32
        %v825 = vld [vmem:[%s824] sm:$0xff]
        %v826 = vld [vmem:[%s824 + $0x8] sm:$0xff]
        %v827 = vld [vmem:[%s824 + $0x10] sm:$0xff]
        %v828 = vld [vmem:[%s824 + $0x18] sm:$0xff]
        %v829 = vadd.f32 %v801, 1.0
        %v830 = vadd.f32 %v802, 1.0
        %v831 = vadd.f32 %v803, 1.0
        %v832 = vadd.f32 %v804, 1.0
        %833 = vadd.xlane.f32.xlu0 %v797
        %v834 = vpop.xlane.xlu0 %833
        %835 = vadd.xlane.f32.xlu0 %v798
        %v836 = vpop.xlane.xlu0 %835
        %837 = vadd.xlane.f32.xlu0 %v799
        %v838 = vpop.xlane.xlu0 %837
        %839 = vadd.xlane.f32.xlu0 %v800
        %v840 = vpop.xlane.xlu0 %839
        %v841 = vrcp.pop 128.0
        %v842 = vmul.f32 128.0, %v841
        %v843 = vsub.f32 1.0, %v842
        %v844 = vmul.f32 %v841, %v843
        %v845 = vadd.f32 %v841, %v844
        %vm846 = vweird.f32 %v841
        %v847 = vsel %vm846, %v841, %v845
        %v848 = vmul.f32 %v834, %v847
        %v849 = vmul.f32 %v836, %v847
        %v850 = vmul.f32 %v838, %v847
        %v851 = vmul.f32 %v840, %v847
        %v852 = vsub.f32 %v797, %v848
        %v853 = vsub.f32 %v798, %v849
        %v854 = vsub.f32 %v799, %v850
        %v855 = vsub.f32 %v800, %v851
        %v856 = vmul.f32 %v852, %v852
        %v857 = vmul.f32 %v853, %v853
        %v858 = vmul.f32 %v854, %v854
        %v859 = vmul.f32 %v855, %v855
        %860 = vadd.xlane.f32.xlu0 %v856
        %v861 = vpop.xlane.xlu0 %860
        %862 = vadd.xlane.f32.xlu0 %v857
        %v863 = vpop.xlane.xlu0 %862
        %864 = vadd.xlane.f32.xlu0 %v858
        %v865 = vpop.xlane.xlu0 %864
        %866 = vadd.xlane.f32.xlu0 %v859
        %v867 = vpop.xlane.xlu0 %866
        %v868 = vmul.f32 %v861, %v847
        %v869 = vmul.f32 %v863, %v847
        %v870 = vmul.f32 %v865, %v847
        %v871 = vmul.f32 %v867, %v847
        %v872 = vadd.f32 %v868, 1e-05
        %v873 = vadd.f32 %v869, 1e-05
        %v874 = vadd.f32 %v870, 1e-05
        %v875 = vadd.f32 %v871, 1e-05
        %v876 = vrsqrt.pop %v872
        %v877 = vmul.f32 %v876, %v872
        %v878 = vmul.f32 %v877, %v876
        %v879 = vmul.f32 0.5, %v878
        %v880 = vsub.f32 1.5, %v879
        %v881 = vmul.f32 %v876, %v880
        %v882 = vmul.f32 %v872, %v881
        %vm883 = vcmp.eq.f32.partialorder %v872, inf
        %v884 = vsel %vm883, %v872, %v882
        %vm885 = vcmp.eq.f32.partialorder %v872, 0.0
        %v886 = vand.u32 %v872, 2147483648
        %v887 = vsel %vm885, %v886, %v884
        %v888 = vrsqrt.pop %v873
        %v889 = vmul.f32 %v888, %v873
        %v890 = vmul.f32 %v889, %v888
        %v891 = vmul.f32 0.5, %v890
        %v892 = vsub.f32 1.5, %v891
        %v893 = vmul.f32 %v888, %v892
        %v894 = vmul.f32 %v873, %v893
        %vm895 = vcmp.eq.f32.partialorder %v873, inf
        %v896 = vsel %vm895, %v873, %v894
        %vm897 = vcmp.eq.f32.partialorder %v873, 0.0
        %v898 = vand.u32 %v873, 2147483648
        %v899 = vsel %vm897, %v898, %v896
        %v900 = vrsqrt.pop %v874
        %v901 = vmul.f32 %v900, %v874
        %v902 = vmul.f32 %v901, %v900
        %v903 = vmul.f32 0.5, %v902
        %v904 = vsub.f32 1.5, %v903
        %v905 = vmul.f32 %v900, %v904
        %v906 = vmul.f32 %v874, %v905
        %vm907 = vcmp.eq.f32.partialorder %v874, inf
        %v908 = vsel %vm907, %v874, %v906
        %vm909 = vcmp.eq.f32.partialorder %v874, 0.0
        %v910 = vand.u32 %v874, 2147483648
        %v911 = vsel %vm909, %v910, %v908
        %v912 = vrsqrt.pop %v875
        %v913 = vmul.f32 %v912, %v875
        %v914 = vmul.f32 %v913, %v912
        %v915 = vmul.f32 0.5, %v914
        %v916 = vsub.f32 1.5, %v915
        %v917 = vmul.f32 %v912, %v916
        %v918 = vmul.f32 %v875, %v917
        %vm919 = vcmp.eq.f32.partialorder %v875, inf
        %v920 = vsel %vm919, %v875, %v918
        %vm921 = vcmp.eq.f32.partialorder %v875, 0.0
        %v922 = vand.u32 %v875, 2147483648
        %v923 = vsel %vm921, %v922, %v920
        %v924 = vrcp.pop %v887
        %v925 = vmul.f32 %v887, %v924
        %v926 = vsub.f32 1.0, %v925
        %v927 = vmul.f32 %v924, %v926
        %v928 = vadd.f32 %v924, %v927
        %vm929 = vweird.f32 %v887
        %vm930 = vweird.f32 %v924
        %vm931 = vmor %vm929, %vm930
        %v932 = vsel %vm931, %v924, %v928
        %v933 = vand.u32 2147483647, %v887
        %vm934 = vcmp.eq.f32.partialorder %v933, 8.507059e+37
        %v935 = vand.u32 %v887, 2147483648
        %v936 = vor.u32 1.1754944e-38, %v935
        %v937 = vsel %vm934, %v936, %v932
        %v938 = vmul.f32 %v852, %v937
        %v939 = vrcp.pop %v899
        %v940 = vmul.f32 %v899, %v939
        %v941 = vsub.f32 1.0, %v940
        %v942 = vmul.f32 %v939, %v941
        %v943 = vadd.f32 %v939, %v942
        %vm944 = vweird.f32 %v899
        %vm945 = vweird.f32 %v939
        %vm946 = vmor %vm944, %vm945
        %v947 = vsel %vm946, %v939, %v943
        %v948 = vand.u32 2147483647, %v899
        %vm949 = vcmp.eq.f32.partialorder %v948, 8.507059e+37
        %v950 = vand.u32 %v899, 2147483648
        %v951 = vor.u32 1.1754944e-38, %v950
        %v952 = vsel %vm949, %v951, %v947
        %v953 = vmul.f32 %v853, %v952
        %v954 = vrcp.pop %v911
        %v955 = vmul.f32 %v911, %v954
        %v956 = vsub.f32 1.0, %v955
        %v957 = vmul.f32 %v954, %v956
        %v958 = vadd.f32 %v954, %v957
        %vm959 = vweird.f32 %v911
        %vm960 = vweird.f32 %v954
        %vm961 = vmor %vm959, %vm960
        %v962 = vsel %vm961, %v954, %v958
        %v963 = vand.u32 2147483647, %v911
        %vm964 = vcmp.eq.f32.partialorder %v963, 8.507059e+37
        %v965 = vand.u32 %v911, 2147483648
        %v966 = vor.u32 1.1754944e-38, %v965
        %v967 = vsel %vm964, %v966, %v962
        %v968 = vmul.f32 %v854, %v967
        %v969 = vrcp.pop %v923
        %v970 = vmul.f32 %v923, %v969
        %v971 = vsub.f32 1.0, %v970
        %v972 = vmul.f32 %v969, %v971
        %v973 = vadd.f32 %v969, %v972
        %vm974 = vweird.f32 %v923
        %vm975 = vweird.f32 %v969
        %vm976 = vmor %vm974, %vm975
        %v977 = vsel %vm976, %v969, %v973
        %v978 = vand.u32 2147483647, %v923
        %vm979 = vcmp.eq.f32.partialorder %v978, 8.507059e+37
        %v980 = vand.u32 %v923, 2147483648
        %v981 = vor.u32 1.1754944e-38, %v980
        %v982 = vsel %vm979, %v981, %v977
        %v983 = vmul.f32 %v855, %v982
        %985 = vset.pattern.permute.xlu0 0
        %986 = vperm.xlu0 %985, %v829
        %v987 = vpop.permute.xlu0 %986
        %990 = vset.pattern.permute.xlu0 0
        %991 = vperm.xlu0 %990, %v830
        %v992 = vpop.permute.xlu0 %991
        %995 = vset.pattern.permute.xlu0 0
        %996 = vperm.xlu0 %995, %v831
        %v997 = vpop.permute.xlu0 %996
        %1000 = vset.pattern.permute.xlu0 0
        %1001 = vperm.xlu0 %1000, %v832
        %v1002 = vpop.permute.xlu0 %1001
        %v1004 = vmul.f32 %v987, %v938
        %v1005 = vmul.f32 %v992, %v953
        %v1006 = vmul.f32 %v997, %v968
        %v1007 = vmul.f32 %v1002, %v983
        %1009 = vset.pattern.permute.xlu0 0
        %1010 = vperm.xlu0 %1009, %v806
        %v1011 = vpop.permute.xlu0 %1010
        %1014 = vset.pattern.permute.xlu0 0
        %1015 = vperm.xlu0 %1014, %v807
        %v1016 = vpop.permute.xlu0 %1015
        %1019 = vset.pattern.permute.xlu0 0
        %1020 = vperm.xlu0 %1019, %v808
        %v1021 = vpop.permute.xlu0 %1020
        %1024 = vset.pattern.permute.xlu0 0
        %1025 = vperm.xlu0 %1024, %v809
        %v1026 = vpop.permute.xlu0 %1025
        %v1028 = vadd.f32 %v1004, %v1011
        %v1029 = vadd.f32 %v1005, %v1016
        %v1030 = vadd.f32 %v1006, %v1021
        %v1031 = vadd.f32 %v1007, %v1026
        %1033 = vset.pattern.permute.xlu0 0
        %1034 = vperm.xlu0 %1033, %v820
        %v1035 = vpop.permute.xlu0 %1034
        %1038 = vset.pattern.permute.xlu0 0
        %1039 = vperm.xlu0 %1038, %v821
        %v1040 = vpop.permute.xlu0 %1039
        %1043 = vset.pattern.permute.xlu0 0
        %1044 = vperm.xlu0 %1043, %v822
        %v1045 = vpop.permute.xlu0 %1044
        %1048 = vset.pattern.permute.xlu0 0
        %1049 = vperm.xlu0 %1048, %v823
        %v1050 = vpop.permute.xlu0 %1049
        %v1052 = vmul.f32 %v1035, %v1028
        %v1053 = vmul.f32 %v1040, %v1029
        %v1054 = vmul.f32 %v1045, %v1030
        %v1055 = vmul.f32 %v1050, %v1031
        %v1056 = vmul.f32 %v1052, 0.31830987
        %v1057 = vmul.f32 %v1053, 0.31830987
        %v1058 = vmul.f32 %v1054, 0.31830987
        %v1059 = vmul.f32 %v1055, 0.31830987
        %v1060 = vadd.f32 %v1056, 0.5
        %v1061 = vadd.f32 %v1057, 0.5
        %v1062 = vadd.f32 %v1058, 0.5
        %v1063 = vadd.f32 %v1059, 0.5
        %v1064 = vfloor.f32 %v1060
        %v1065 = vfloor.f32 %v1061
        %v1066 = vfloor.f32 %v1062
        %v1067 = vfloor.f32 %v1063
        %v1068 = vmul.f32 %v1064, 3.1415927
        %v1069 = vmul.f32 %v1065, 3.1415927
        %v1070 = vmul.f32 %v1066, 3.1415927
        %v1071 = vmul.f32 %v1067, 3.1415927
        %v1072 = vsub.f32 %v1052, %v1068
        %v1073 = vsub.f32 %v1053, %v1069
        %v1074 = vsub.f32 %v1054, %v1070
        %v1075 = vsub.f32 %v1055, %v1071
        %v1076 = vmul.f32 %v1064, 0.5
        %v1077 = vmul.f32 %v1065, 0.5
        %v1078 = vmul.f32 %v1066, 0.5
        %v1079 = vmul.f32 %v1067, 0.5
        %v1080 = vfloor.f32 %v1076
        %v1081 = vfloor.f32 %v1077
        %v1082 = vfloor.f32 %v1078
        %v1083 = vfloor.f32 %v1079
        %v1084 = vmul.f32 %v1080, 2.0
        %v1085 = vmul.f32 %v1081, 2.0
        %v1086 = vmul.f32 %v1082, 2.0
        %v1087 = vmul.f32 %v1083, 2.0
        %v1088 = vsub.f32 %v1064, %v1084
        %v1089 = vsub.f32 %v1065, %v1085
        %v1090 = vsub.f32 %v1066, %v1086
        %v1091 = vsub.f32 %v1067, %v1087
        %v1092 = vmul.f32 %v1088, 2.0
        %v1093 = vmul.f32 %v1089, 2.0
        %v1094 = vmul.f32 %v1090, 2.0
        %v1095 = vmul.f32 %v1091, 2.0
        %v1096 = vsub.f32 1.0, %v1092
        %v1097 = vsub.f32 1.0, %v1093
        %v1098 = vsub.f32 1.0, %v1094
        %v1099 = vsub.f32 1.0, %v1095
        %v1100 = vmul.f32 %v1072, %v1072
        %v1101 = vmul.f32 %v1073, %v1073
        %v1102 = vmul.f32 %v1074, %v1074
        %v1103 = vmul.f32 %v1075, %v1075
        %v1104 = vmul.f32 %v1100, -2.5052108e-08
        %v1105 = vmul.f32 %v1101, -2.5052108e-08
        %v1106 = vmul.f32 %v1102, -2.5052108e-08
        %v1107 = vmul.f32 %v1103, -2.5052108e-08
        %v1108 = vadd.f32 %v1104, 2.7557319e-06
        %v1109 = vadd.f32 %v1105, 2.7557319e-06
        %v1110 = vadd.f32 %v1106, 2.7557319e-06
        %v1111 = vadd.f32 %v1107, 2.7557319e-06
        %v1112 = vmul.f32 %v1100, %v1108
        %v1113 = vmul.f32 %v1101, %v1109
        %v1114 = vmul.f32 %v1102, %v1110
        %v1115 = vmul.f32 %v1103, %v1111
        %v1116 = vadd.f32 %v1112, -0.0001984127
        %v1117 = vadd.f32 %v1113, -0.0001984127
        %v1118 = vadd.f32 %v1114, -0.0001984127
        %v1119 = vadd.f32 %v1115, -0.0001984127
        %v1120 = vmul.f32 %v1100, %v1116
        %v1121 = vmul.f32 %v1101, %v1117
        %v1122 = vmul.f32 %v1102, %v1118
        %v1123 = vmul.f32 %v1103, %v1119
        %v1124 = vadd.f32 %v1120, 0.008333334
        %v1125 = vadd.f32 %v1121, 0.008333334
        %v1126 = vadd.f32 %v1122, 0.008333334
        %v1127 = vadd.f32 %v1123, 0.008333334
        %v1128 = vmul.f32 %v1100, %v1124
        %v1129 = vmul.f32 %v1101, %v1125
        %v1130 = vmul.f32 %v1102, %v1126
        %v1131 = vmul.f32 %v1103, %v1127
        %v1132 = vadd.f32 %v1128, -0.16666667
        %v1133 = vadd.f32 %v1129, -0.16666667
        %v1134 = vadd.f32 %v1130, -0.16666667
        %v1135 = vadd.f32 %v1131, -0.16666667
        %v1136 = vmul.f32 %v1100, %v1132
        %v1137 = vmul.f32 %v1101, %v1133
        %v1138 = vmul.f32 %v1102, %v1134
        %v1139 = vmul.f32 %v1103, %v1135
        %v1140 = vadd.f32 %v1136, 1.0
        %v1141 = vadd.f32 %v1137, 1.0
        %v1142 = vadd.f32 %v1138, 1.0
        %v1143 = vadd.f32 %v1139, 1.0
        %v1144 = vmul.f32 %v1072, %v1140
        %v1145 = vmul.f32 %v1073, %v1141
        %v1146 = vmul.f32 %v1074, %v1142
        %v1147 = vmul.f32 %v1075, %v1143
        %v1148 = vmul.f32 %v1096, %v1144
        %v1149 = vmul.f32 %v1097, %v1145
        %v1150 = vmul.f32 %v1098, %v1146
        %v1151 = vmul.f32 %v1099, %v1147
        %v1152 = vmul.f32 %v1148, %v1148
        %v1153 = vmul.f32 %v1149, %v1149
        %v1154 = vmul.f32 %v1150, %v1150
        %v1155 = vmul.f32 %v1151, %v1151
        %v1156 = vrcp.pop %v1035
        %v1157 = vmul.f32 %v1035, %v1156
        %v1158 = vsub.f32 1.0, %v1157
        %v1159 = vmul.f32 %v1156, %v1158
        %v1160 = vadd.f32 %v1156, %v1159
        %vm1161 = vweird.f32 %v1035
        %vm1162 = vweird.f32 %v1156
        %vm1163 = vmor %vm1161, %vm1162
        %v1164 = vsel %vm1163, %v1156, %v1160
        %v1165 = vand.u32 2147483647, %v1035
        %vm1166 = vcmp.eq.f32.partialorder %v1165, 8.507059e+37
        %v1167 = vand.u32 %v1035, 2147483648
        %v1168 = vor.u32 1.1754944e-38, %v1167
        %v1169 = vsel %vm1166, %v1168, %v1164
        %v1170 = vmul.f32 %v1152, %v1169
        %v1171 = vrcp.pop %v1040
        %v1172 = vmul.f32 %v1040, %v1171
        %v1173 = vsub.f32 1.0, %v1172
        %v1174 = vmul.f32 %v1171, %v1173
        %v1175 = vadd.f32 %v1171, %v1174
        %vm1176 = vweird.f32 %v1040
        %vm1177 = vweird.f32 %v1171
        %vm1178 = vmor %vm1176, %vm1177
        %v1179 = vsel %vm1178, %v1171, %v1175
        %v1180 = vand.u32 2147483647, %v1040
        %vm1181 = vcmp.eq.f32.partialorder %v1180, 8.507059e+37
        %v1182 = vand.u32 %v1040, 2147483648
        %v1183 = vor.u32 1.1754944e-38, %v1182
        %v1184 = vsel %vm1181, %v1183, %v1179
        %v1185 = vmul.f32 %v1153, %v1184
        %v1186 = vrcp.pop %v1045
        %v1187 = vmul.f32 %v1045, %v1186
        %v1188 = vsub.f32 1.0, %v1187
        %v1189 = vmul.f32 %v1186, %v1188
        %v1190 = vadd.f32 %v1186, %v1189
        %vm1191 = vweird.f32 %v1045
        %vm1192 = vweird.f32 %v1186
        %vm1193 = vmor %vm1191, %vm1192
        %v1194 = vsel %vm1193, %v1186, %v1190
        %v1195 = vand.u32 2147483647, %v1045
        %vm1196 = vcmp.eq.f32.partialorder %v1195, 8.507059e+37
        %v1197 = vand.u32 %v1045, 2147483648
        %v1198 = vor.u32 1.1754944e-38, %v1197
        %v1199 = vsel %vm1196, %v1198, %v1194
        %v1200 = vmul.f32 %v1154, %v1199
        %v1201 = vrcp.pop %v1050
        %v1202 = vmul.f32 %v1050, %v1201
        %v1203 = vsub.f32 1.0, %v1202
        %v1204 = vmul.f32 %v1201, %v1203
        %v1205 = vadd.f32 %v1201, %v1204
        %vm1206 = vweird.f32 %v1050
        %vm1207 = vweird.f32 %v1201
        %vm1208 = vmor %vm1206, %vm1207
        %v1209 = vsel %vm1208, %v1201, %v1205
        %v1210 = vand.u32 2147483647, %v1050
        %vm1211 = vcmp.eq.f32.partialorder %v1210, 8.507059e+37
        %v1212 = vand.u32 %v1050, 2147483648
        %v1213 = vor.u32 1.1754944e-38, %v1212
        %v1214 = vsel %vm1211, %v1213, %v1209
        %v1215 = vmul.f32 %v1155, %v1214
        %v1216 = vadd.f32 %v1028, %v1170
        %v1217 = vadd.f32 %v1029, %v1185
        %v1218 = vadd.f32 %v1030, %v1200
        %v1219 = vadd.f32 %v1031, %v1215
        %v1220 = vld [vmem:[%s5] sm:$0xff]
        %v1221 = vld [vmem:[%s5 + $0x8] sm:$0xff]
        %v1222 = vld [vmem:[%s5 + $0x10] sm:$0xff]
        %v1223 = vld [vmem:[%s5 + $0x18] sm:$0xff]
        %v1224 = vld [vmem:[%s5 + $0x20] sm:$0xff]
        %v1225 = vld [vmem:[%s5 + $0x28] sm:$0xff]
        %v1226 = vld [vmem:[%s5 + $0x30] sm:$0xff]
        %v1227 = vld [vmem:[%s5 + $0x38] sm:$0xff]
        %v1228 = vld [vmem:[%s6] sm:$0xff]
        %v1229 = vld [vmem:[%s6 + $0x8] sm:$0xff]
        %v1230 = vld [vmem:[%s6 + $0x10] sm:$0xff]
        %v1231 = vld [vmem:[%s6 + $0x18] sm:$0xff]
        %1232 = vrot.lane.b32.xlu0 %v1216, 3
        %v1233 = vpop.permute.xlu0 %1232
        %1234 = vrot.lane.b32.xlu0 %v1217, 3
        %v1235 = vpop.permute.xlu0 %1234
        %1236 = vrot.lane.b32.xlu0 %v1218, 3
        %v1237 = vpop.permute.xlu0 %1236
        %1238 = vrot.lane.b32.xlu0 %v1219, 3
        %v1239 = vpop.permute.xlu0 %1238
        %v1240 = vsel %vm531, %v1233, 0.0
        %v1241 = vsel %vm531, %v1235, 0.0
        %v1242 = vsel %vm531, %v1237, 0.0
        %v1243 = vsel %vm531, %v1239, 0.0
        %1244 = vrot.lane.b32.xlu0 %v1216, 2
        %v1245 = vpop.permute.xlu0 %1244
        %1246 = vrot.lane.b32.xlu0 %v1217, 2
        %v1247 = vpop.permute.xlu0 %1246
        %1248 = vrot.lane.b32.xlu0 %v1218, 2
        %v1249 = vpop.permute.xlu0 %1248
        %1250 = vrot.lane.b32.xlu0 %v1219, 2
        %v1251 = vpop.permute.xlu0 %1250
        %v1252 = vsel %vm572, %v1245, 0.0
        %v1253 = vsel %vm572, %v1247, 0.0
        %v1254 = vsel %vm572, %v1249, 0.0
        %v1255 = vsel %vm572, %v1251, 0.0
        %1256 = vrot.lane.b32.xlu0 %v1216, 1
        %v1257 = vpop.permute.xlu0 %1256
        %1258 = vrot.lane.b32.xlu0 %v1217, 1
        %v1259 = vpop.permute.xlu0 %1258
        %1260 = vrot.lane.b32.xlu0 %v1218, 1
        %v1261 = vpop.permute.xlu0 %1260
        %1262 = vrot.lane.b32.xlu0 %v1219, 1
        %v1263 = vpop.permute.xlu0 %1262
        %v1264 = vsel %vm609, %v1257, 0.0
        %v1265 = vsel %vm609, %v1259, 0.0
        %v1266 = vsel %vm609, %v1261, 0.0
        %v1267 = vsel %vm609, %v1263, 0.0
        %1268 = vrot.lane.b32.xlu0 %v1216, 127
        %v1269 = vpop.permute.xlu0 %1268
        %1270 = vrot.lane.b32.xlu0 %v1217, 127
        %v1271 = vpop.permute.xlu0 %1270
        %1272 = vrot.lane.b32.xlu0 %v1218, 127
        %v1273 = vpop.permute.xlu0 %1272
        %1274 = vrot.lane.b32.xlu0 %v1219, 127
        %v1275 = vpop.permute.xlu0 %1274
        %v1276 = vsel %vm670, %v1269, 0.0
        %v1277 = vsel %vm670, %v1271, 0.0
        %v1278 = vsel %vm670, %v1273, 0.0
        %v1279 = vsel %vm670, %v1275, 0.0
        %1280 = vrot.lane.b32.xlu0 %v1216, 126
        %v1281 = vpop.permute.xlu0 %1280
        %1282 = vrot.lane.b32.xlu0 %v1217, 126
        %v1283 = vpop.permute.xlu0 %1282
        %1284 = vrot.lane.b32.xlu0 %v1218, 126
        %v1285 = vpop.permute.xlu0 %1284
        %1286 = vrot.lane.b32.xlu0 %v1219, 126
        %v1287 = vpop.permute.xlu0 %1286
        %v1288 = vsel %vm707, %v1281, 0.0
        %v1289 = vsel %vm707, %v1283, 0.0
        %v1290 = vsel %vm707, %v1285, 0.0
        %v1291 = vsel %vm707, %v1287, 0.0
        %1292 = vrot.lane.b32.xlu0 %v1216, 125
        %v1293 = vpop.permute.xlu0 %1292
        %1294 = vrot.lane.b32.xlu0 %v1217, 125
        %v1295 = vpop.permute.xlu0 %1294
        %1296 = vrot.lane.b32.xlu0 %v1218, 125
        %v1297 = vpop.permute.xlu0 %1296
        %1298 = vrot.lane.b32.xlu0 %v1219, 125
        %v1299 = vpop.permute.xlu0 %1298
        %v1300 = vsel %vm744, %v1293, 0.0
        %v1301 = vsel %vm744, %v1295, 0.0
        %v1302 = vsel %vm744, %v1297, 0.0
        %v1303 = vsel %vm744, %v1299, 0.0
        %1305 = vset.pattern.permute.xlu0 0
        %1306 = vperm.xlu0 %1305, %v1228
        %v1307 = vpop.permute.xlu0 %1306
        %1310 = vset.pattern.permute.xlu0 0
        %1311 = vperm.xlu0 %1310, %v1229
        %v1312 = vpop.permute.xlu0 %1311
        %1315 = vset.pattern.permute.xlu0 0
        %1316 = vperm.xlu0 %1315, %v1230
        %v1317 = vpop.permute.xlu0 %1316
        %1320 = vset.pattern.permute.xlu0 0
        %1321 = vperm.xlu0 %1320, %v1231
        %v1322 = vpop.permute.xlu0 %1321
        %vm1324 = vcmask 785408
        %v1326 = vsel %vm1324, %v1221, 0
        %v1329 = vsel %vm1324, %v1223, 0
        %v1332 = vsel %vm1324, %v1225, 0
        %v1335 = vsel %vm1324, %v1227, 0
        %1337 = vmatpush.msra.mxu0 %v1219
        %1338 = vmatpush.msra.mxu0 %v1218
        %1339 = vmatpush.msra.mxu0 %v1217
        %1340 = vmatpush.msra.mxu0 %v1216
        %1341 = vmatpush.msra.mxu0 %v1267
        %1342 = vmatpush.msra.mxu0 %v1266
        %1343 = vmatpush.msra.mxu0 %v1265
        %1344 = vmatpush.msra.mxu0 %v1264
        %1345 = vmatpush.msra.mxu0 %v1255
        %1346 = vmatpush.msra.mxu0 %v1254
        %1347 = vmatpush.msra.mxu0 %v1253
        %1348 = vmatpush.msra.mxu0 %v1252
        %1349 = vmatpush.msra.mxu0 %v1243
        %1350 = vmatpush.msra.mxu0 %v1242
        %1351 = vmatpush.msra.mxu0 %v1241
        %1352 = vmatpush.msra.mxu0 %v1240
        %1353 = vmatmul.f32.gmra.mxu0 %v1220
        %v1354 = vpop.f32.mrf.mxu0
        %v1355 = vadd.f32 %v1307, %v1354
        %1356 = vmatmul.f32.gmra.mxu0 %v1222
        %v1357 = vpop.f32.mrf.mxu0
        %v1358 = vadd.f32 %v1312, %v1357
        %1359 = vmatmul.f32.gmra.mxu0 %v1224
        %v1360 = vpop.f32.mrf.mxu0
        %v1361 = vadd.f32 %v1317, %v1360
        %1362 = vmatmul.f32.gmra.mxu0 %v1226
        %v1363 = vpop.f32.mrf.mxu0
        %v1364 = vadd.f32 %v1322, %v1363
        %1365 = vdwg.mxu0
        %1366 = vmatpush.msra.mxu0 0.0
        %1367 = vmatpush.msra.mxu0 0.0
        %1368 = vmatpush.msra.mxu0 0.0
        %1369 = vmatpush.msra.mxu0 0.0
        %1370 = vmatpush.msra.mxu0 %v1303
        %1371 = vmatpush.msra.mxu0 %v1302
        %1372 = vmatpush.msra.mxu0 %v1301
        %1373 = vmatpush.msra.mxu0 %v1300
        %1374 = vmatpush.msra.mxu0 %v1291
        %1375 = vmatpush.msra.mxu0 %v1290
        %1376 = vmatpush.msra.mxu0 %v1289
        %1377 = vmatpush.msra.mxu0 %v1288
        %1378 = vmatpush.msra.mxu0 %v1279
        %1379 = vmatpush.msra.mxu0 %v1278
        %1380 = vmatpush.msra.mxu0 %v1277
        %1381 = vmatpush.msra.mxu0 %v1276
        %1382 = vmatmul.f32.gmra.mxu0 %v1326
        %v1383 = vpop.f32.mrf.mxu0
        %v1384 = vadd.f32 %v1355, %v1383
        %1385 = vmatmul.f32.gmra.mxu0 %v1329
        %v1386 = vpop.f32.mrf.mxu0
        %v1387 = vadd.f32 %v1358, %v1386
        %1388 = vmatmul.f32.gmra.mxu0 %v1332
        %v1389 = vpop.f32.mrf.mxu0
        %v1390 = vadd.f32 %v1361, %v1389
        %1391 = vmatmul.f32.gmra.mxu0 %v1335
        %v1392 = vpop.f32.mrf.mxu0
        %v1393 = vadd.f32 %v1364, %v1392
        %1394 = vdwg.mxu0
        %v1395 = vadd.f32 %v811, 1.0
        %v1396 = vadd.f32 %v812, 1.0
        %v1397 = vadd.f32 %v813, 1.0
        %v1398 = vadd.f32 %v814, 1.0
        %1399 = vadd.xlane.f32.xlu0 %v1384
        %v1400 = vpop.xlane.xlu0 %1399
        %1401 = vadd.xlane.f32.xlu0 %v1387
        %v1402 = vpop.xlane.xlu0 %1401
        %1403 = vadd.xlane.f32.xlu0 %v1390
        %v1404 = vpop.xlane.xlu0 %1403
        %1405 = vadd.xlane.f32.xlu0 %v1393
        %v1406 = vpop.xlane.xlu0 %1405
        %v1407 = vmul.f32 %v1400, %v847
        %v1408 = vmul.f32 %v1402, %v847
        %v1409 = vmul.f32 %v1404, %v847
        %v1410 = vmul.f32 %v1406, %v847
        %v1411 = vsub.f32 %v1384, %v1407
        %v1412 = vsub.f32 %v1387, %v1408
        %v1413 = vsub.f32 %v1390, %v1409
        %v1414 = vsub.f32 %v1393, %v1410
        %v1415 = vmul.f32 %v1411, %v1411
        %v1416 = vmul.f32 %v1412, %v1412
        %v1417 = vmul.f32 %v1413, %v1413
        %v1418 = vmul.f32 %v1414, %v1414
        %1419 = vadd.xlane.f32.xlu0 %v1415
        %v1420 = vpop.xlane.xlu0 %1419
        %1421 = vadd.xlane.f32.xlu0 %v1416
        %v1422 = vpop.xlane.xlu0 %1421
        %1423 = vadd.xlane.f32.xlu0 %v1417
        %v1424 = vpop.xlane.xlu0 %1423
        %1425 = vadd.xlane.f32.xlu0 %v1418
        %v1426 = vpop.xlane.xlu0 %1425
        %v1427 = vmul.f32 %v1420, %v847
        %v1428 = vmul.f32 %v1422, %v847
        %v1429 = vmul.f32 %v1424, %v847
        %v1430 = vmul.f32 %v1426, %v847
        %v1431 = vadd.f32 %v1427, 1e-05
        %v1432 = vadd.f32 %v1428, 1e-05
        %v1433 = vadd.f32 %v1429, 1e-05
        %v1434 = vadd.f32 %v1430, 1e-05
        %v1435 = vrsqrt.pop %v1431
        %v1436 = vmul.f32 %v1435, %v1431
        %v1437 = vmul.f32 %v1436, %v1435
        %v1438 = vmul.f32 0.5, %v1437
        %v1439 = vsub.f32 1.5, %v1438
        %v1440 = vmul.f32 %v1435, %v1439
        %v1441 = vmul.f32 %v1431, %v1440
        %vm1442 = vcmp.eq.f32.partialorder %v1431, inf
        %v1443 = vsel %vm1442, %v1431, %v1441
        %vm1444 = vcmp.eq.f32.partialorder %v1431, 0.0
        %v1445 = vand.u32 %v1431, 2147483648
        %v1446 = vsel %vm1444, %v1445, %v1443
        %v1447 = vrsqrt.pop %v1432
        %v1448 = vmul.f32 %v1447, %v1432
        %v1449 = vmul.f32 %v1448, %v1447
        %v1450 = vmul.f32 0.5, %v1449
        %v1451 = vsub.f32 1.5, %v1450
        %v1452 = vmul.f32 %v1447, %v1451
        %v1453 = vmul.f32 %v1432, %v1452
        %vm1454 = vcmp.eq.f32.partialorder %v1432, inf
        %v1455 = vsel %vm1454, %v1432, %v1453
        %vm1456 = vcmp.eq.f32.partialorder %v1432, 0.0
        %v1457 = vand.u32 %v1432, 2147483648
        %v1458 = vsel %vm1456, %v1457, %v1455
        %v1459 = vrsqrt.pop %v1433
        %v1460 = vmul.f32 %v1459, %v1433
        %v1461 = vmul.f32 %v1460, %v1459
        %v1462 = vmul.f32 0.5, %v1461
        %v1463 = vsub.f32 1.5, %v1462
        %v1464 = vmul.f32 %v1459, %v1463
        %v1465 = vmul.f32 %v1433, %v1464
        %vm1466 = vcmp.eq.f32.partialorder %v1433, inf
        %v1467 = vsel %vm1466, %v1433, %v1465
        %vm1468 = vcmp.eq.f32.partialorder %v1433, 0.0
        %v1469 = vand.u32 %v1433, 2147483648
        %v1470 = vsel %vm1468, %v1469, %v1467
        %v1471 = vrsqrt.pop %v1434
        %v1472 = vmul.f32 %v1471, %v1434
        %v1473 = vmul.f32 %v1472, %v1471
        %v1474 = vmul.f32 0.5, %v1473
        %v1475 = vsub.f32 1.5, %v1474
        %v1476 = vmul.f32 %v1471, %v1475
        %v1477 = vmul.f32 %v1434, %v1476
        %vm1478 = vcmp.eq.f32.partialorder %v1434, inf
        %v1479 = vsel %vm1478, %v1434, %v1477
        %vm1480 = vcmp.eq.f32.partialorder %v1434, 0.0
        %v1481 = vand.u32 %v1434, 2147483648
        %v1482 = vsel %vm1480, %v1481, %v1479
        %v1483 = vrcp.pop %v1446
        %v1484 = vmul.f32 %v1446, %v1483
        %v1485 = vsub.f32 1.0, %v1484
        %v1486 = vmul.f32 %v1483, %v1485
        %v1487 = vadd.f32 %v1483, %v1486
        %vm1488 = vweird.f32 %v1446
        %vm1489 = vweird.f32 %v1483
        %vm1490 = vmor %vm1488, %vm1489
        %v1491 = vsel %vm1490, %v1483, %v1487
        %v1492 = vand.u32 2147483647, %v1446
        %vm1493 = vcmp.eq.f32.partialorder %v1492, 8.507059e+37
        %v1494 = vand.u32 %v1446, 2147483648
        %v1495 = vor.u32 1.1754944e-38, %v1494
        %v1496 = vsel %vm1493, %v1495, %v1491
        %v1497 = vmul.f32 %v1411, %v1496
        %v1498 = vrcp.pop %v1458
        %v1499 = vmul.f32 %v1458, %v1498
        %v1500 = vsub.f32 1.0, %v1499
        %v1501 = vmul.f32 %v1498, %v1500
        %v1502 = vadd.f32 %v1498, %v1501
        %vm1503 = vweird.f32 %v1458
        %vm1504 = vweird.f32 %v1498
        %vm1505 = vmor %vm1503, %vm1504
        %v1506 = vsel %vm1505, %v1498, %v1502
        %v1507 = vand.u32 2147483647, %v1458
        %vm1508 = vcmp.eq.f32.partialorder %v1507, 8.507059e+37
        %v1509 = vand.u32 %v1458, 2147483648
        %v1510 = vor.u32 1.1754944e-38, %v1509
        %v1511 = vsel %vm1508, %v1510, %v1506
        %v1512 = vmul.f32 %v1412, %v1511
        %v1513 = vrcp.pop %v1470
        %v1514 = vmul.f32 %v1470, %v1513
        %v1515 = vsub.f32 1.0, %v1514
        %v1516 = vmul.f32 %v1513, %v1515
        %v1517 = vadd.f32 %v1513, %v1516
        %vm1518 = vweird.f32 %v1470
        %vm1519 = vweird.f32 %v1513
        %vm1520 = vmor %vm1518, %vm1519
        %v1521 = vsel %vm1520, %v1513, %v1517
        %v1522 = vand.u32 2147483647, %v1470
        %vm1523 = vcmp.eq.f32.partialorder %v1522, 8.507059e+37
        %v1524 = vand.u32 %v1470, 2147483648
        %v1525 = vor.u32 1.1754944e-38, %v1524
        %v1526 = vsel %vm1523, %v1525, %v1521
        %v1527 = vmul.f32 %v1413, %v1526
        %v1528 = vrcp.pop %v1482
        %v1529 = vmul.f32 %v1482, %v1528
        %v1530 = vsub.f32 1.0, %v1529
        %v1531 = vmul.f32 %v1528, %v1530
        %v1532 = vadd.f32 %v1528, %v1531
        %vm1533 = vweird.f32 %v1482
        %vm1534 = vweird.f32 %v1528
        %vm1535 = vmor %vm1533, %vm1534
        %v1536 = vsel %vm1535, %v1528, %v1532
        %v1537 = vand.u32 2147483647, %v1482
        %vm1538 = vcmp.eq.f32.partialorder %v1537, 8.507059e+37
        %v1539 = vand.u32 %v1482, 2147483648
        %v1540 = vor.u32 1.1754944e-38, %v1539
        %v1541 = vsel %vm1538, %v1540, %v1536
        %v1542 = vmul.f32 %v1414, %v1541
        %1544 = vset.pattern.permute.xlu0 0
        %1545 = vperm.xlu0 %1544, %v1395
        %v1546 = vpop.permute.xlu0 %1545
        %1549 = vset.pattern.permute.xlu0 0
        %1550 = vperm.xlu0 %1549, %v1396
        %v1551 = vpop.permute.xlu0 %1550
        %1554 = vset.pattern.permute.xlu0 0
        %1555 = vperm.xlu0 %1554, %v1397
        %v1556 = vpop.permute.xlu0 %1555
        %1559 = vset.pattern.permute.xlu0 0
        %1560 = vperm.xlu0 %1559, %v1398
        %v1561 = vpop.permute.xlu0 %1560
        %v1563 = vmul.f32 %v1546, %v1497
        %v1564 = vmul.f32 %v1551, %v1512
        %v1565 = vmul.f32 %v1556, %v1527
        %v1566 = vmul.f32 %v1561, %v1542
        %1568 = vset.pattern.permute.xlu0 0
        %1569 = vperm.xlu0 %1568, %v816
        %v1570 = vpop.permute.xlu0 %1569
        %1573 = vset.pattern.permute.xlu0 0
        %1574 = vperm.xlu0 %1573, %v817
        %v1575 = vpop.permute.xlu0 %1574
        %1578 = vset.pattern.permute.xlu0 0
        %1579 = vperm.xlu0 %1578, %v818
        %v1580 = vpop.permute.xlu0 %1579
        %1583 = vset.pattern.permute.xlu0 0
        %1584 = vperm.xlu0 %1583, %v819
        %v1585 = vpop.permute.xlu0 %1584
        %v1587 = vadd.f32 %v1563, %v1570
        %v1588 = vadd.f32 %v1564, %v1575
        %v1589 = vadd.f32 %v1565, %v1580
        %v1590 = vadd.f32 %v1566, %v1585
        %1592 = vset.pattern.permute.xlu0 0
        %1593 = vperm.xlu0 %1592, %v825
        %v1594 = vpop.permute.xlu0 %1593
        %1597 = vset.pattern.permute.xlu0 0
        %1598 = vperm.xlu0 %1597, %v826
        %v1599 = vpop.permute.xlu0 %1598
        %1602 = vset.pattern.permute.xlu0 0
        %1603 = vperm.xlu0 %1602, %v827
        %v1604 = vpop.permute.xlu0 %1603
        %1607 = vset.pattern.permute.xlu0 0
        %1608 = vperm.xlu0 %1607, %v828
        %v1609 = vpop.permute.xlu0 %1608
        %v1611 = vmul.f32 %v1594, %v1587
        %v1612 = vmul.f32 %v1599, %v1588
        %v1613 = vmul.f32 %v1604, %v1589
        %v1614 = vmul.f32 %v1609, %v1590
        %v1615 = vmul.f32 %v1611, 0.31830987
        %v1616 = vmul.f32 %v1612, 0.31830987
        %v1617 = vmul.f32 %v1613, 0.31830987
        %v1618 = vmul.f32 %v1614, 0.31830987
        %v1619 = vadd.f32 %v1615, 0.5
        %v1620 = vadd.f32 %v1616, 0.5
        %v1621 = vadd.f32 %v1617, 0.5
        %v1622 = vadd.f32 %v1618, 0.5
        %v1623 = vfloor.f32 %v1619
        %v1624 = vfloor.f32 %v1620
        %v1625 = vfloor.f32 %v1621
        %v1626 = vfloor.f32 %v1622
        %v1627 = vmul.f32 %v1623, 3.1415927
        %v1628 = vmul.f32 %v1624, 3.1415927
        %v1629 = vmul.f32 %v1625, 3.1415927
        %v1630 = vmul.f32 %v1626, 3.1415927
        %v1631 = vsub.f32 %v1611, %v1627
        %v1632 = vsub.f32 %v1612, %v1628
        %v1633 = vsub.f32 %v1613, %v1629
        %v1634 = vsub.f32 %v1614, %v1630
        %v1635 = vmul.f32 %v1623, 0.5
        %v1636 = vmul.f32 %v1624, 0.5
        %v1637 = vmul.f32 %v1625, 0.5
        %v1638 = vmul.f32 %v1626, 0.5
        %v1639 = vfloor.f32 %v1635
        %v1640 = vfloor.f32 %v1636
        %v1641 = vfloor.f32 %v1637
        %v1642 = vfloor.f32 %v1638
        %v1643 = vmul.f32 %v1639, 2.0
        %v1644 = vmul.f32 %v1640, 2.0
        %v1645 = vmul.f32 %v1641, 2.0
        %v1646 = vmul.f32 %v1642, 2.0
        %v1647 = vsub.f32 %v1623, %v1643
        %v1648 = vsub.f32 %v1624, %v1644
        %v1649 = vsub.f32 %v1625, %v1645
        %v1650 = vsub.f32 %v1626, %v1646
        %v1651 = vmul.f32 %v1647, 2.0
        %v1652 = vmul.f32 %v1648, 2.0
        %v1653 = vmul.f32 %v1649, 2.0
        %v1654 = vmul.f32 %v1650, 2.0
        %v1655 = vsub.f32 1.0, %v1651
        %v1656 = vsub.f32 1.0, %v1652
        %v1657 = vsub.f32 1.0, %v1653
        %v1658 = vsub.f32 1.0, %v1654
        %v1659 = vmul.f32 %v1631, %v1631
        %v1660 = vmul.f32 %v1632, %v1632
        %v1661 = vmul.f32 %v1633, %v1633
        %v1662 = vmul.f32 %v1634, %v1634
        %v1663 = vmul.f32 %v1659, -2.5052108e-08
        %v1664 = vmul.f32 %v1660, -2.5052108e-08
        %v1665 = vmul.f32 %v1661, -2.5052108e-08
        %v1666 = vmul.f32 %v1662, -2.5052108e-08
        %v1667 = vadd.f32 %v1663, 2.7557319e-06
        %v1668 = vadd.f32 %v1664, 2.7557319e-06
        %v1669 = vadd.f32 %v1665, 2.7557319e-06
        %v1670 = vadd.f32 %v1666, 2.7557319e-06
        %v1671 = vmul.f32 %v1659, %v1667
        %v1672 = vmul.f32 %v1660, %v1668
        %v1673 = vmul.f32 %v1661, %v1669
        %v1674 = vmul.f32 %v1662, %v1670
        %v1675 = vadd.f32 %v1671, -0.0001984127
        %v1676 = vadd.f32 %v1672, -0.0001984127
        %v1677 = vadd.f32 %v1673, -0.0001984127
        %v1678 = vadd.f32 %v1674, -0.0001984127
        %v1679 = vmul.f32 %v1659, %v1675
        %v1680 = vmul.f32 %v1660, %v1676
        %v1681 = vmul.f32 %v1661, %v1677
        %v1682 = vmul.f32 %v1662, %v1678
        %v1683 = vadd.f32 %v1679, 0.008333334
        %v1684 = vadd.f32 %v1680, 0.008333334
        %v1685 = vadd.f32 %v1681, 0.008333334
        %v1686 = vadd.f32 %v1682, 0.008333334
        %v1687 = vmul.f32 %v1659, %v1683
        %v1688 = vmul.f32 %v1660, %v1684
        %v1689 = vmul.f32 %v1661, %v1685
        %v1690 = vmul.f32 %v1662, %v1686
        %v1691 = vadd.f32 %v1687, -0.16666667
        %v1692 = vadd.f32 %v1688, -0.16666667
        %v1693 = vadd.f32 %v1689, -0.16666667
        %v1694 = vadd.f32 %v1690, -0.16666667
        %v1695 = vmul.f32 %v1659, %v1691
        %v1696 = vmul.f32 %v1660, %v1692
        %v1697 = vmul.f32 %v1661, %v1693
        %v1698 = vmul.f32 %v1662, %v1694
        %v1699 = vadd.f32 %v1695, 1.0
        %v1700 = vadd.f32 %v1696, 1.0
        %v1701 = vadd.f32 %v1697, 1.0
        %v1702 = vadd.f32 %v1698, 1.0
        %v1703 = vmul.f32 %v1631, %v1699
        %v1704 = vmul.f32 %v1632, %v1700
        %v1705 = vmul.f32 %v1633, %v1701
        %v1706 = vmul.f32 %v1634, %v1702
        %v1707 = vmul.f32 %v1655, %v1703
        %v1708 = vmul.f32 %v1656, %v1704
        %v1709 = vmul.f32 %v1657, %v1705
        %v1710 = vmul.f32 %v1658, %v1706
        %v1711 = vmul.f32 %v1707, %v1707
        %v1712 = vmul.f32 %v1708, %v1708
        %v1713 = vmul.f32 %v1709, %v1709
        %v1714 = vmul.f32 %v1710, %v1710
        %v1715 = vrcp.pop %v1594
        %v1716 = vmul.f32 %v1594, %v1715
        %v1717 = vsub.f32 1.0, %v1716
        %v1718 = vmul.f32 %v1715, %v1717
        %v1719 = vadd.f32 %v1715, %v1718
        %vm1720 = vweird.f32 %v1594
        %vm1721 = vweird.f32 %v1715
        %vm1722 = vmor %vm1720, %vm1721
        %v1723 = vsel %vm1722, %v1715, %v1719
        %v1724 = vand.u32 2147483647, %v1594
        %vm1725 = vcmp.eq.f32.partialorder %v1724, 8.507059e+37
        %v1726 = vand.u32 %v1594, 2147483648
        %v1727 = vor.u32 1.1754944e-38, %v1726
        %v1728 = vsel %vm1725, %v1727, %v1723
        %v1729 = vmul.f32 %v1711, %v1728
        %v1730 = vrcp.pop %v1599
        %v1731 = vmul.f32 %v1599, %v1730
        %v1732 = vsub.f32 1.0, %v1731
        %v1733 = vmul.f32 %v1730, %v1732
        %v1734 = vadd.f32 %v1730, %v1733
        %vm1735 = vweird.f32 %v1599
        %vm1736 = vweird.f32 %v1730
        %vm1737 = vmor %vm1735, %vm1736
        %v1738 = vsel %vm1737, %v1730, %v1734
        %v1739 = vand.u32 2147483647, %v1599
        %vm1740 = vcmp.eq.f32.partialorder %v1739, 8.507059e+37
        %v1741 = vand.u32 %v1599, 2147483648
        %v1742 = vor.u32 1.1754944e-38, %v1741
        %v1743 = vsel %vm1740, %v1742, %v1738
        %v1744 = vmul.f32 %v1712, %v1743
        %v1745 = vrcp.pop %v1604
        %v1746 = vmul.f32 %v1604, %v1745
        %v1747 = vsub.f32 1.0, %v1746
        %v1748 = vmul.f32 %v1745, %v1747
        %v1749 = vadd.f32 %v1745, %v1748
        %vm1750 = vweird.f32 %v1604
        %vm1751 = vweird.f32 %v1745
        %vm1752 = vmor %vm1750, %vm1751
        %v1753 = vsel %vm1752, %v1745, %v1749
        %v1754 = vand.u32 2147483647, %v1604
        %vm1755 = vcmp.eq.f32.partialorder %v1754, 8.507059e+37
        %v1756 = vand.u32 %v1604, 2147483648
        %v1757 = vor.u32 1.1754944e-38, %v1756
        %v1758 = vsel %vm1755, %v1757, %v1753
        %v1759 = vmul.f32 %v1713, %v1758
        %v1760 = vrcp.pop %v1609
        %v1761 = vmul.f32 %v1609, %v1760
        %v1762 = vsub.f32 1.0, %v1761
        %v1763 = vmul.f32 %v1760, %v1762
        %v1764 = vadd.f32 %v1760, %v1763
        %vm1765 = vweird.f32 %v1609
        %vm1766 = vweird.f32 %v1760
        %vm1767 = vmor %vm1765, %vm1766
        %v1768 = vsel %vm1767, %v1760, %v1764
        %v1769 = vand.u32 2147483647, %v1609
        %vm1770 = vcmp.eq.f32.partialorder %v1769, 8.507059e+37
        %v1771 = vand.u32 %v1609, 2147483648
        %v1772 = vor.u32 1.1754944e-38, %v1771
        %v1773 = vsel %vm1770, %v1772, %v1768
        %v1774 = vmul.f32 %v1714, %v1773
        %v1775 = vadd.f32 %v1587, %v1729
        %v1776 = vadd.f32 %v1588, %v1744
        %v1777 = vadd.f32 %v1589, %v1759
        %v1778 = vadd.f32 %v1590, %v1774
        %v1779 = vld [vmem:[%s7] sm:$0xff]
        %v1780 = vld [vmem:[%s7 + $0x8] sm:$0xff]
        %v1781 = vld [vmem:[%s7 + $0x10] sm:$0xff]
        %v1782 = vld [vmem:[%s7 + $0x18] sm:$0xff]
        %v1783 = vld [vmem:[%s7 + $0x20] sm:$0xff]
        %v1784 = vld [vmem:[%s7 + $0x28] sm:$0xff]
        %v1785 = vld [vmem:[%s7 + $0x30] sm:$0xff]
        %v1786 = vld [vmem:[%s7 + $0x38] sm:$0xff]
        %v1787 = vld [vmem:[%s8] sm:$0xff]
        %v1788 = vld [vmem:[%s8 + $0x8] sm:$0xff]
        %v1789 = vld [vmem:[%s8 + $0x10] sm:$0xff]
        %v1790 = vld [vmem:[%s8 + $0x18] sm:$0xff]
        %1791 = vrot.lane.b32.xlu0 %v1775, 3
        %v1792 = vpop.permute.xlu0 %1791
        %1793 = vrot.lane.b32.xlu0 %v1776, 3
        %v1794 = vpop.permute.xlu0 %1793
        %1795 = vrot.lane.b32.xlu0 %v1777, 3
        %v1796 = vpop.permute.xlu0 %1795
        %1797 = vrot.lane.b32.xlu0 %v1778, 3
        %v1798 = vpop.permute.xlu0 %1797
        %v1799 = vsel %vm531, %v1792, 0.0
        %v1800 = vsel %vm531, %v1794, 0.0
        %v1801 = vsel %vm531, %v1796, 0.0
        %v1802 = vsel %vm531, %v1798, 0.0
        %1803 = vrot.lane.b32.xlu0 %v1775, 2
        %v1804 = vpop.permute.xlu0 %1803
        %1805 = vrot.lane.b32.xlu0 %v1776, 2
        %v1806 = vpop.permute.xlu0 %1805
        %1807 = vrot.lane.b32.xlu0 %v1777, 2
        %v1808 = vpop.permute.xlu0 %1807
        %1809 = vrot.lane.b32.xlu0 %v1778, 2
        %v1810 = vpop.permute.xlu0 %1809
        %v1811 = vsel %vm572, %v1804, 0.0
        %v1812 = vsel %vm572, %v1806, 0.0
        %v1813 = vsel %vm572, %v1808, 0.0
        %v1814 = vsel %vm572, %v1810, 0.0
        %1815 = vrot.lane.b32.xlu0 %v1775, 1
        %v1816 = vpop.permute.xlu0 %1815
        %1817 = vrot.lane.b32.xlu0 %v1776, 1
        %v1818 = vpop.permute.xlu0 %1817
        %1819 = vrot.lane.b32.xlu0 %v1777, 1
        %v1820 = vpop.permute.xlu0 %1819
        %1821 = vrot.lane.b32.xlu0 %v1778, 1
        %v1822 = vpop.permute.xlu0 %1821
        %v1823 = vsel %vm609, %v1816, 0.0
        %v1824 = vsel %vm609, %v1818, 0.0
        %v1825 = vsel %vm609, %v1820, 0.0
        %v1826 = vsel %vm609, %v1822, 0.0
        %1827 = vrot.lane.b32.xlu0 %v1775, 127
        %v1828 = vpop.permute.xlu0 %1827
        %1829 = vrot.lane.b32.xlu0 %v1776, 127
        %v1830 = vpop.permute.xlu0 %1829
        %1831 = vrot.lane.b32.xlu0 %v1777, 127
        %v1832 = vpop.permute.xlu0 %1831
        %1833 = vrot.lane.b32.xlu0 %v1778, 127
        %v1834 = vpop.permute.xlu0 %1833
        %v1835 = vsel %vm670, %v1828, 0.0
        %v1836 = vsel %vm670, %v1830, 0.0
        %v1837 = vsel %vm670, %v1832, 0.0
        %v1838 = vsel %vm670, %v1834, 0.0
        %1839 = vrot.lane.b32.xlu0 %v1775, 126
        %v1840 = vpop.permute.xlu0 %1839
        %1841 = vrot.lane.b32.xlu0 %v1776, 126
        %v1842 = vpop.permute.xlu0 %1841
        %1843 = vrot.lane.b32.xlu0 %v1777, 126
        %v1844 = vpop.permute.xlu0 %1843
        %1845 = vrot.lane.b32.xlu0 %v1778, 126
        %v1846 = vpop.permute.xlu0 %1845
        %v1847 = vsel %vm707, %v1840, 0.0
        %v1848 = vsel %vm707, %v1842, 0.0
        %v1849 = vsel %vm707, %v1844, 0.0
        %v1850 = vsel %vm707, %v1846, 0.0
        %1851 = vrot.lane.b32.xlu0 %v1775, 125
        %v1852 = vpop.permute.xlu0 %1851
        %1853 = vrot.lane.b32.xlu0 %v1776, 125
        %v1854 = vpop.permute.xlu0 %1853
        %1855 = vrot.lane.b32.xlu0 %v1777, 125
        %v1856 = vpop.permute.xlu0 %1855
        %1857 = vrot.lane.b32.xlu0 %v1778, 125
        %v1858 = vpop.permute.xlu0 %1857
        %v1859 = vsel %vm744, %v1852, 0.0
        %v1860 = vsel %vm744, %v1854, 0.0
        %v1861 = vsel %vm744, %v1856, 0.0
        %v1862 = vsel %vm744, %v1858, 0.0
        %1864 = vset.pattern.permute.xlu0 0
        %1865 = vperm.xlu0 %1864, %v1787
        %v1866 = vpop.permute.xlu0 %1865
        %1869 = vset.pattern.permute.xlu0 0
        %1870 = vperm.xlu0 %1869, %v1788
        %v1871 = vpop.permute.xlu0 %1870
        %1874 = vset.pattern.permute.xlu0 0
        %1875 = vperm.xlu0 %1874, %v1789
        %v1876 = vpop.permute.xlu0 %1875
        %1879 = vset.pattern.permute.xlu0 0
        %1880 = vperm.xlu0 %1879, %v1790
        %v1881 = vpop.permute.xlu0 %1880
        %v1884 = vsel %vm1324, %v1780, 0
        %v1887 = vsel %vm1324, %v1782, 0
        %v1890 = vsel %vm1324, %v1784, 0
        %v1893 = vsel %vm1324, %v1786, 0
        %1895 = vmatpush.msra.mxu0 %v1778
        %1896 = vmatpush.msra.mxu0 %v1777
        %1897 = vmatpush.msra.mxu0 %v1776
        %1898 = vmatpush.msra.mxu0 %v1775
        %1899 = vmatpush.msra.mxu0 %v1826
        %1900 = vmatpush.msra.mxu0 %v1825
        %1901 = vmatpush.msra.mxu0 %v1824
        %1902 = vmatpush.msra.mxu0 %v1823
        %1903 = vmatpush.msra.mxu0 %v1814
        %1904 = vmatpush.msra.mxu0 %v1813
        %1905 = vmatpush.msra.mxu0 %v1812
        %1906 = vmatpush.msra.mxu0 %v1811
        %1907 = vmatpush.msra.mxu0 %v1802
        %1908 = vmatpush.msra.mxu0 %v1801
        %1909 = vmatpush.msra.mxu0 %v1800
        %1910 = vmatpush.msra.mxu0 %v1799
        %1911 = vmatmul.f32.gmra.mxu0 %v1779
        %v1912 = vpop.f32.mrf.mxu0
        %v1913 = vadd.f32 %v1866, %v1912
        %1914 = vmatmul.f32.gmra.mxu0 %v1781
        %v1915 = vpop.f32.mrf.mxu0
        %v1916 = vadd.f32 %v1871, %v1915
        %1917 = vmatmul.f32.gmra.mxu0 %v1783
        %v1918 = vpop.f32.mrf.mxu0
        %v1919 = vadd.f32 %v1876, %v1918
        %1920 = vmatmul.f32.gmra.mxu0 %v1785
        %v1921 = vpop.f32.mrf.mxu0
        %v1922 = vadd.f32 %v1881, %v1921
        %1923 = vdwg.mxu0
        %1924 = vmatpush.msra.mxu0 0.0
        %1925 = vmatpush.msra.mxu0 0.0
        %1926 = vmatpush.msra.mxu0 0.0
        %1927 = vmatpush.msra.mxu0 0.0
        %1928 = vmatpush.msra.mxu0 %v1862
        %1929 = vmatpush.msra.mxu0 %v1861
        %1930 = vmatpush.msra.mxu0 %v1860
        %1931 = vmatpush.msra.mxu0 %v1859
        %1932 = vmatpush.msra.mxu0 %v1850
        %1933 = vmatpush.msra.mxu0 %v1849
        %1934 = vmatpush.msra.mxu0 %v1848
        %1935 = vmatpush.msra.mxu0 %v1847
        %1936 = vmatpush.msra.mxu0 %v1838
        %1937 = vmatpush.msra.mxu0 %v1837
        %1938 = vmatpush.msra.mxu0 %v1836
        %1939 = vmatpush.msra.mxu0 %v1835
        %1940 = vmatmul.f32.gmra.mxu0 %v1884
        %v1941 = vpop.f32.mrf.mxu0
        %v1942 = vadd.f32 %v1913, %v1941
        %1943 = vmatmul.f32.gmra.mxu0 %v1887
        %v1944 = vpop.f32.mrf.mxu0
        %v1945 = vadd.f32 %v1916, %v1944
        %1946 = vmatmul.f32.gmra.mxu0 %v1890
        %v1947 = vpop.f32.mrf.mxu0
        %v1948 = vadd.f32 %v1919, %v1947
        %1949 = vmatmul.f32.gmra.mxu0 %v1893
        %v1950 = vpop.f32.mrf.mxu0
        %v1951 = vadd.f32 %v1922, %v1950
        %1952 = vdwg.mxu0
        %v1953 = vadd.f32 %v1942, %v797
        %v1954 = vadd.f32 %v1945, %v798
        %v1955 = vadd.f32 %v1948, %v799
        %v1956 = vadd.f32 %v1951, %v800
        %s1957 = scalar_lea.vmem %s512, 128
        %v1958 = vld [vmem:[%s1957] sm:$0xff]
        %v1959 = vld [vmem:[%s1957 + $0x8] sm:$0xff]
        %v1960 = vld [vmem:[%s1957 + $0x10] sm:$0xff]
        %v1961 = vld [vmem:[%s1957 + $0x18] sm:$0xff]
        %s1962 = scalar_lea.vmem %s512, 160
        %v1963 = vld [vmem:[%s1962] sm:$0xff]
        %v1964 = vld [vmem:[%s1962 + $0x8] sm:$0xff]
        %v1965 = vld [vmem:[%s1962 + $0x10] sm:$0xff]
        %v1966 = vld [vmem:[%s1962 + $0x18] sm:$0xff]
        %s1967 = scalar_lea.vmem %s512, 192
        %v1968 = vld [vmem:[%s1967] sm:$0xff]
        %v1969 = vld [vmem:[%s1967 + $0x8] sm:$0xff]
        %v1970 = vld [vmem:[%s1967 + $0x10] sm:$0xff]
        %v1971 = vld [vmem:[%s1967 + $0x18] sm:$0xff]
        %s1972 = scalar_lea.vmem %s512, 224
        %v1973 = vld [vmem:[%s1972] sm:$0xff]
        %v1974 = vld [vmem:[%s1972 + $0x8] sm:$0xff]
        %v1975 = vld [vmem:[%s1972 + $0x10] sm:$0xff]
        %v1976 = vld [vmem:[%s1972 + $0x18] sm:$0xff]
        %s1977 = scalar_lea.vmem %s4, 64
        %v1978 = vld [vmem:[%s1977] sm:$0xff]
        %v1979 = vld [vmem:[%s1977 + $0x8] sm:$0xff]
        %v1980 = vld [vmem:[%s1977 + $0x10] sm:$0xff]
        %v1981 = vld [vmem:[%s1977 + $0x18] sm:$0xff]
        %s1982 = scalar_lea.vmem %s4, 96
        %v1983 = vld [vmem:[%s1982] sm:$0xff]
        %v1984 = vld [vmem:[%s1982 + $0x8] sm:$0xff]
        %v1985 = vld [vmem:[%s1982 + $0x10] sm:$0xff]
        %v1986 = vld [vmem:[%s1982 + $0x18] sm:$0xff]
        %v1987 = vadd.f32 %v1958, 1.0
        %v1988 = vadd.f32 %v1959, 1.0
        %v1989 = vadd.f32 %v1960, 1.0
        %v1990 = vadd.f32 %v1961, 1.0
        %1991 = vadd.xlane.f32.xlu0 %v1953
        %v1992 = vpop.xlane.xlu0 %1991
        %1993 = vadd.xlane.f32.xlu0 %v1954
        %v1994 = vpop.xlane.xlu0 %1993
        %1995 = vadd.xlane.f32.xlu0 %v1955
        %v1996 = vpop.xlane.xlu0 %1995
        %1997 = vadd.xlane.f32.xlu0 %v1956
        %v1998 = vpop.xlane.xlu0 %1997
        %v1999 = vmul.f32 %v1992, %v847
        %v2000 = vmul.f32 %v1994, %v847
        %v2001 = vmul.f32 %v1996, %v847
        %v2002 = vmul.f32 %v1998, %v847
        %v2003 = vsub.f32 %v1953, %v1999
        %v2004 = vsub.f32 %v1954, %v2000
        %v2005 = vsub.f32 %v1955, %v2001
        %v2006 = vsub.f32 %v1956, %v2002
        %v2007 = vmul.f32 %v2003, %v2003
        %v2008 = vmul.f32 %v2004, %v2004
        %v2009 = vmul.f32 %v2005, %v2005
        %v2010 = vmul.f32 %v2006, %v2006
        %2011 = vadd.xlane.f32.xlu0 %v2007
        %v2012 = vpop.xlane.xlu0 %2011
        %2013 = vadd.xlane.f32.xlu0 %v2008
        %v2014 = vpop.xlane.xlu0 %2013
        %2015 = vadd.xlane.f32.xlu0 %v2009
        %v2016 = vpop.xlane.xlu0 %2015
        %2017 = vadd.xlane.f32.xlu0 %v2010
        %v2018 = vpop.xlane.xlu0 %2017
        %v2019 = vmul.f32 %v2012, %v847
        %v2020 = vmul.f32 %v2014, %v847
        %v2021 = vmul.f32 %v2016, %v847
        %v2022 = vmul.f32 %v2018, %v847
        %v2023 = vadd.f32 %v2019, 1e-05
        %v2024 = vadd.f32 %v2020, 1e-05
        %v2025 = vadd.f32 %v2021, 1e-05
        %v2026 = vadd.f32 %v2022, 1e-05
        %v2027 = vrsqrt.pop %v2023
        %v2028 = vmul.f32 %v2027, %v2023
        %v2029 = vmul.f32 %v2028, %v2027
        %v2030 = vmul.f32 0.5, %v2029
        %v2031 = vsub.f32 1.5, %v2030
        %v2032 = vmul.f32 %v2027, %v2031
        %v2033 = vmul.f32 %v2023, %v2032
        %vm2034 = vcmp.eq.f32.partialorder %v2023, inf
        %v2035 = vsel %vm2034, %v2023, %v2033
        %vm2036 = vcmp.eq.f32.partialorder %v2023, 0.0
        %v2037 = vand.u32 %v2023, 2147483648
        %v2038 = vsel %vm2036, %v2037, %v2035
        %v2039 = vrsqrt.pop %v2024
        %v2040 = vmul.f32 %v2039, %v2024
        %v2041 = vmul.f32 %v2040, %v2039
        %v2042 = vmul.f32 0.5, %v2041
        %v2043 = vsub.f32 1.5, %v2042
        %v2044 = vmul.f32 %v2039, %v2043
        %v2045 = vmul.f32 %v2024, %v2044
        %vm2046 = vcmp.eq.f32.partialorder %v2024, inf
        %v2047 = vsel %vm2046, %v2024, %v2045
        %vm2048 = vcmp.eq.f32.partialorder %v2024, 0.0
        %v2049 = vand.u32 %v2024, 2147483648
        %v2050 = vsel %vm2048, %v2049, %v2047
        %v2051 = vrsqrt.pop %v2025
        %v2052 = vmul.f32 %v2051, %v2025
        %v2053 = vmul.f32 %v2052, %v2051
        %v2054 = vmul.f32 0.5, %v2053
        %v2055 = vsub.f32 1.5, %v2054
        %v2056 = vmul.f32 %v2051, %v2055
        %v2057 = vmul.f32 %v2025, %v2056
        %vm2058 = vcmp.eq.f32.partialorder %v2025, inf
        %v2059 = vsel %vm2058, %v2025, %v2057
        %vm2060 = vcmp.eq.f32.partialorder %v2025, 0.0
        %v2061 = vand.u32 %v2025, 2147483648
        %v2062 = vsel %vm2060, %v2061, %v2059
        %v2063 = vrsqrt.pop %v2026
        %v2064 = vmul.f32 %v2063, %v2026
        %v2065 = vmul.f32 %v2064, %v2063
        %v2066 = vmul.f32 0.5, %v2065
        %v2067 = vsub.f32 1.5, %v2066
        %v2068 = vmul.f32 %v2063, %v2067
        %v2069 = vmul.f32 %v2026, %v2068
        %vm2070 = vcmp.eq.f32.partialorder %v2026, inf
        %v2071 = vsel %vm2070, %v2026, %v2069
        %vm2072 = vcmp.eq.f32.partialorder %v2026, 0.0
        %v2073 = vand.u32 %v2026, 2147483648
        %v2074 = vsel %vm2072, %v2073, %v2071
        %v2075 = vrcp.pop %v2038
        %v2076 = vmul.f32 %v2038, %v2075
        %v2077 = vsub.f32 1.0, %v2076
        %v2078 = vmul.f32 %v2075, %v2077
        %v2079 = vadd.f32 %v2075, %v2078
        %vm2080 = vweird.f32 %v2038
        %vm2081 = vweird.f32 %v2075
        %vm2082 = vmor %vm2080, %vm2081
        %v2083 = vsel %vm2082, %v2075, %v2079
        %v2084 = vand.u32 2147483647, %v2038
        %vm2085 = vcmp.eq.f32.partialorder %v2084, 8.507059e+37
        %v2086 = vand.u32 %v2038, 2147483648
        %v2087 = vor.u32 1.1754944e-38, %v2086
        %v2088 = vsel %vm2085, %v2087, %v2083
        %v2089 = vmul.f32 %v2003, %v2088
        %v2090 = vrcp.pop %v2050
        %v2091 = vmul.f32 %v2050, %v2090
        %v2092 = vsub.f32 1.0, %v2091
        %v2093 = vmul.f32 %v2090, %v2092
        %v2094 = vadd.f32 %v2090, %v2093
        %vm2095 = vweird.f32 %v2050
        %vm2096 = vweird.f32 %v2090
        %vm2097 = vmor %vm2095, %vm2096
        %v2098 = vsel %vm2097, %v2090, %v2094
        %v2099 = vand.u32 2147483647, %v2050
        %vm2100 = vcmp.eq.f32.partialorder %v2099, 8.507059e+37
        %v2101 = vand.u32 %v2050, 2147483648
        %v2102 = vor.u32 1.1754944e-38, %v2101
        %v2103 = vsel %vm2100, %v2102, %v2098
        %v2104 = vmul.f32 %v2004, %v2103
        %v2105 = vrcp.pop %v2062
        %v2106 = vmul.f32 %v2062, %v2105
        %v2107 = vsub.f32 1.0, %v2106
        %v2108 = vmul.f32 %v2105, %v2107
        %v2109 = vadd.f32 %v2105, %v2108
        %vm2110 = vweird.f32 %v2062
        %vm2111 = vweird.f32 %v2105
        %vm2112 = vmor %vm2110, %vm2111
        %v2113 = vsel %vm2112, %v2105, %v2109
        %v2114 = vand.u32 2147483647, %v2062
        %vm2115 = vcmp.eq.f32.partialorder %v2114, 8.507059e+37
        %v2116 = vand.u32 %v2062, 2147483648
        %v2117 = vor.u32 1.1754944e-38, %v2116
        %v2118 = vsel %vm2115, %v2117, %v2113
        %v2119 = vmul.f32 %v2005, %v2118
        %v2120 = vrcp.pop %v2074
        %v2121 = vmul.f32 %v2074, %v2120
        %v2122 = vsub.f32 1.0, %v2121
        %v2123 = vmul.f32 %v2120, %v2122
        %v2124 = vadd.f32 %v2120, %v2123
        %vm2125 = vweird.f32 %v2074
        %vm2126 = vweird.f32 %v2120
        %vm2127 = vmor %vm2125, %vm2126
        %v2128 = vsel %vm2127, %v2120, %v2124
        %v2129 = vand.u32 2147483647, %v2074
        %vm2130 = vcmp.eq.f32.partialorder %v2129, 8.507059e+37
        %v2131 = vand.u32 %v2074, 2147483648
        %v2132 = vor.u32 1.1754944e-38, %v2131
        %v2133 = vsel %vm2130, %v2132, %v2128
        %v2134 = vmul.f32 %v2006, %v2133
        %2136 = vset.pattern.permute.xlu0 0
        %2137 = vperm.xlu0 %2136, %v1987
        %v2138 = vpop.permute.xlu0 %2137
        %2141 = vset.pattern.permute.xlu0 0
        %2142 = vperm.xlu0 %2141, %v1988
        %v2143 = vpop.permute.xlu0 %2142
        %2146 = vset.pattern.permute.xlu0 0
        %2147 = vperm.xlu0 %2146, %v1989
        %v2148 = vpop.permute.xlu0 %2147
        %2151 = vset.pattern.permute.xlu0 0
        %2152 = vperm.xlu0 %2151, %v1990
        %v2153 = vpop.permute.xlu0 %2152
        %v2155 = vmul.f32 %v2138, %v2089
        %v2156 = vmul.f32 %v2143, %v2104
        %v2157 = vmul.f32 %v2148, %v2119
        %v2158 = vmul.f32 %v2153, %v2134
        %2160 = vset.pattern.permute.xlu0 0
        %2161 = vperm.xlu0 %2160, %v1963
        %v2162 = vpop.permute.xlu0 %2161
        %2165 = vset.pattern.permute.xlu0 0
        %2166 = vperm.xlu0 %2165, %v1964
        %v2167 = vpop.permute.xlu0 %2166
        %2170 = vset.pattern.permute.xlu0 0
        %2171 = vperm.xlu0 %2170, %v1965
        %v2172 = vpop.permute.xlu0 %2171
        %2175 = vset.pattern.permute.xlu0 0
        %2176 = vperm.xlu0 %2175, %v1966
        %v2177 = vpop.permute.xlu0 %2176
        %v2179 = vadd.f32 %v2155, %v2162
        %v2180 = vadd.f32 %v2156, %v2167
        %v2181 = vadd.f32 %v2157, %v2172
        %v2182 = vadd.f32 %v2158, %v2177
        %2184 = vset.pattern.permute.xlu0 0
        %2185 = vperm.xlu0 %2184, %v1978
        %v2186 = vpop.permute.xlu0 %2185
        %2189 = vset.pattern.permute.xlu0 0
        %2190 = vperm.xlu0 %2189, %v1979
        %v2191 = vpop.permute.xlu0 %2190
        %2194 = vset.pattern.permute.xlu0 0
        %2195 = vperm.xlu0 %2194, %v1980
        %v2196 = vpop.permute.xlu0 %2195
        %2199 = vset.pattern.permute.xlu0 0
        %2200 = vperm.xlu0 %2199, %v1981
        %v2201 = vpop.permute.xlu0 %2200
        %v2203 = vmul.f32 %v2186, %v2179
        %v2204 = vmul.f32 %v2191, %v2180
        %v2205 = vmul.f32 %v2196, %v2181
        %v2206 = vmul.f32 %v2201, %v2182
        %v2207 = vmul.f32 %v2203, 0.31830987
        %v2208 = vmul.f32 %v2204, 0.31830987
        %v2209 = vmul.f32 %v2205, 0.31830987
        %v2210 = vmul.f32 %v2206, 0.31830987
        %v2211 = vadd.f32 %v2207, 0.5
        %v2212 = vadd.f32 %v2208, 0.5
        %v2213 = vadd.f32 %v2209, 0.5
        %v2214 = vadd.f32 %v2210, 0.5
        %v2215 = vfloor.f32 %v2211
        %v2216 = vfloor.f32 %v2212
        %v2217 = vfloor.f32 %v2213
        %v2218 = vfloor.f32 %v2214
        %v2219 = vmul.f32 %v2215, 3.1415927
        %v2220 = vmul.f32 %v2216, 3.1415927
        %v2221 = vmul.f32 %v2217, 3.1415927
        %v2222 = vmul.f32 %v2218, 3.1415927
        %v2223 = vsub.f32 %v2203, %v2219
        %v2224 = vsub.f32 %v2204, %v2220
        %v2225 = vsub.f32 %v2205, %v2221
        %v2226 = vsub.f32 %v2206, %v2222
        %v2227 = vmul.f32 %v2215, 0.5
        %v2228 = vmul.f32 %v2216, 0.5
        %v2229 = vmul.f32 %v2217, 0.5
        %v2230 = vmul.f32 %v2218, 0.5
        %v2231 = vfloor.f32 %v2227
        %v2232 = vfloor.f32 %v2228
        %v2233 = vfloor.f32 %v2229
        %v2234 = vfloor.f32 %v2230
        %v2235 = vmul.f32 %v2231, 2.0
        %v2236 = vmul.f32 %v2232, 2.0
        %v2237 = vmul.f32 %v2233, 2.0
        %v2238 = vmul.f32 %v2234, 2.0
        %v2239 = vsub.f32 %v2215, %v2235
        %v2240 = vsub.f32 %v2216, %v2236
        %v2241 = vsub.f32 %v2217, %v2237
        %v2242 = vsub.f32 %v2218, %v2238
        %v2243 = vmul.f32 %v2239, 2.0
        %v2244 = vmul.f32 %v2240, 2.0
        %v2245 = vmul.f32 %v2241, 2.0
        %v2246 = vmul.f32 %v2242, 2.0
        %v2247 = vsub.f32 1.0, %v2243
        %v2248 = vsub.f32 1.0, %v2244
        %v2249 = vsub.f32 1.0, %v2245
        %v2250 = vsub.f32 1.0, %v2246
        %v2251 = vmul.f32 %v2223, %v2223
        %v2252 = vmul.f32 %v2224, %v2224
        %v2253 = vmul.f32 %v2225, %v2225
        %v2254 = vmul.f32 %v2226, %v2226
        %v2255 = vmul.f32 %v2251, -2.5052108e-08
        %v2256 = vmul.f32 %v2252, -2.5052108e-08
        %v2257 = vmul.f32 %v2253, -2.5052108e-08
        %v2258 = vmul.f32 %v2254, -2.5052108e-08
        %v2259 = vadd.f32 %v2255, 2.7557319e-06
        %v2260 = vadd.f32 %v2256, 2.7557319e-06
        %v2261 = vadd.f32 %v2257, 2.7557319e-06
        %v2262 = vadd.f32 %v2258, 2.7557319e-06
        %v2263 = vmul.f32 %v2251, %v2259
        %v2264 = vmul.f32 %v2252, %v2260
        %v2265 = vmul.f32 %v2253, %v2261
        %v2266 = vmul.f32 %v2254, %v2262
        %v2267 = vadd.f32 %v2263, -0.0001984127
        %v2268 = vadd.f32 %v2264, -0.0001984127
        %v2269 = vadd.f32 %v2265, -0.0001984127
        %v2270 = vadd.f32 %v2266, -0.0001984127
        %v2271 = vmul.f32 %v2251, %v2267
        %v2272 = vmul.f32 %v2252, %v2268
        %v2273 = vmul.f32 %v2253, %v2269
        %v2274 = vmul.f32 %v2254, %v2270
        %v2275 = vadd.f32 %v2271, 0.008333334
        %v2276 = vadd.f32 %v2272, 0.008333334
        %v2277 = vadd.f32 %v2273, 0.008333334
        %v2278 = vadd.f32 %v2274, 0.008333334
        %v2279 = vmul.f32 %v2251, %v2275
        %v2280 = vmul.f32 %v2252, %v2276
        %v2281 = vmul.f32 %v2253, %v2277
        %v2282 = vmul.f32 %v2254, %v2278
        %v2283 = vadd.f32 %v2279, -0.16666667
        %v2284 = vadd.f32 %v2280, -0.16666667
        %v2285 = vadd.f32 %v2281, -0.16666667
        %v2286 = vadd.f32 %v2282, -0.16666667
        %v2287 = vmul.f32 %v2251, %v2283
        %v2288 = vmul.f32 %v2252, %v2284
        %v2289 = vmul.f32 %v2253, %v2285
        %v2290 = vmul.f32 %v2254, %v2286
        %v2291 = vadd.f32 %v2287, 1.0
        %v2292 = vadd.f32 %v2288, 1.0
        %v2293 = vadd.f32 %v2289, 1.0
        %v2294 = vadd.f32 %v2290, 1.0
        %v2295 = vmul.f32 %v2223, %v2291
        %v2296 = vmul.f32 %v2224, %v2292
        %v2297 = vmul.f32 %v2225, %v2293
        %v2298 = vmul.f32 %v2226, %v2294
        %v2299 = vmul.f32 %v2247, %v2295
        %v2300 = vmul.f32 %v2248, %v2296
        %v2301 = vmul.f32 %v2249, %v2297
        %v2302 = vmul.f32 %v2250, %v2298
        %v2303 = vmul.f32 %v2299, %v2299
        %v2304 = vmul.f32 %v2300, %v2300
        %v2305 = vmul.f32 %v2301, %v2301
        %v2306 = vmul.f32 %v2302, %v2302
        %v2307 = vrcp.pop %v2186
        %v2308 = vmul.f32 %v2186, %v2307
        %v2309 = vsub.f32 1.0, %v2308
        %v2310 = vmul.f32 %v2307, %v2309
        %v2311 = vadd.f32 %v2307, %v2310
        %vm2312 = vweird.f32 %v2186
        %vm2313 = vweird.f32 %v2307
        %vm2314 = vmor %vm2312, %vm2313
        %v2315 = vsel %vm2314, %v2307, %v2311
        %v2316 = vand.u32 2147483647, %v2186
        %vm2317 = vcmp.eq.f32.partialorder %v2316, 8.507059e+37
        %v2318 = vand.u32 %v2186, 2147483648
        %v2319 = vor.u32 1.1754944e-38, %v2318
        %v2320 = vsel %vm2317, %v2319, %v2315
        %v2321 = vmul.f32 %v2303, %v2320
        %v2322 = vrcp.pop %v2191
        %v2323 = vmul.f32 %v2191, %v2322
        %v2324 = vsub.f32 1.0, %v2323
        %v2325 = vmul.f32 %v2322, %v2324
        %v2326 = vadd.f32 %v2322, %v2325
        %vm2327 = vweird.f32 %v2191
        %vm2328 = vweird.f32 %v2322
        %vm2329 = vmor %vm2327, %vm2328
        %v2330 = vsel %vm2329, %v2322, %v2326
        %v2331 = vand.u32 2147483647, %v2191
        %vm2332 = vcmp.eq.f32.partialorder %v2331, 8.507059e+37
        %v2333 = vand.u32 %v2191, 2147483648
        %v2334 = vor.u32 1.1754944e-38, %v2333
        %v2335 = vsel %vm2332, %v2334, %v2330
        %v2336 = vmul.f32 %v2304, %v2335
        %v2337 = vrcp.pop %v2196
        %v2338 = vmul.f32 %v2196, %v2337
        %v2339 = vsub.f32 1.0, %v2338
        %v2340 = vmul.f32 %v2337, %v2339
        %v2341 = vadd.f32 %v2337, %v2340
        %vm2342 = vweird.f32 %v2196
        %vm2343 = vweird.f32 %v2337
        %vm2344 = vmor %vm2342, %vm2343
        %v2345 = vsel %vm2344, %v2337, %v2341
        %v2346 = vand.u32 2147483647, %v2196
        %vm2347 = vcmp.eq.f32.partialorder %v2346, 8.507059e+37
        %v2348 = vand.u32 %v2196, 2147483648
        %v2349 = vor.u32 1.1754944e-38, %v2348
        %v2350 = vsel %vm2347, %v2349, %v2345
        %v2351 = vmul.f32 %v2305, %v2350
        %v2352 = vrcp.pop %v2201
        %v2353 = vmul.f32 %v2201, %v2352
        %v2354 = vsub.f32 1.0, %v2353
        %v2355 = vmul.f32 %v2352, %v2354
        %v2356 = vadd.f32 %v2352, %v2355
        %vm2357 = vweird.f32 %v2201
        %vm2358 = vweird.f32 %v2352
        %vm2359 = vmor %vm2357, %vm2358
        %v2360 = vsel %vm2359, %v2352, %v2356
        %v2361 = vand.u32 2147483647, %v2201
        %vm2362 = vcmp.eq.f32.partialorder %v2361, 8.507059e+37
        %v2363 = vand.u32 %v2201, 2147483648
        %v2364 = vor.u32 1.1754944e-38, %v2363
        %v2365 = vsel %vm2362, %v2364, %v2360
        %v2366 = vmul.f32 %v2306, %v2365
        %v2367 = vadd.f32 %v2179, %v2321
        %v2368 = vadd.f32 %v2180, %v2336
        %v2369 = vadd.f32 %v2181, %v2351
        %v2370 = vadd.f32 %v2182, %v2366
        %s2371 = scalar_lea.vmem %s5, 64
        %v2372 = vld [vmem:[%s2371] sm:$0xff]
        %v2373 = vld [vmem:[%s2371 + $0x8] sm:$0xff]
        %v2374 = vld [vmem:[%s2371 + $0x10] sm:$0xff]
        %v2375 = vld [vmem:[%s2371 + $0x18] sm:$0xff]
        %v2376 = vld [vmem:[%s2371 + $0x20] sm:$0xff]
        %v2377 = vld [vmem:[%s2371 + $0x28] sm:$0xff]
        %v2378 = vld [vmem:[%s2371 + $0x30] sm:$0xff]
        %v2379 = vld [vmem:[%s2371 + $0x38] sm:$0xff]
        %s2380 = scalar_lea.vmem %s6, 32
        %v2381 = vld [vmem:[%s2380] sm:$0xff]
        %v2382 = vld [vmem:[%s2380 + $0x8] sm:$0xff]
        %v2383 = vld [vmem:[%s2380 + $0x10] sm:$0xff]
        %v2384 = vld [vmem:[%s2380 + $0x18] sm:$0xff]
        %2385 = vrot.lane.b32.xlu0 %v2367, 9
        %v2386 = vpop.permute.xlu0 %2385
        %2387 = vrot.lane.b32.xlu0 %v2368, 9
        %v2388 = vpop.permute.xlu0 %2387
        %2389 = vrot.lane.b32.xlu0 %v2369, 9
        %v2390 = vpop.permute.xlu0 %2389
        %2391 = vrot.lane.b32.xlu0 %v2370, 9
        %v2392 = vpop.permute.xlu0 %2391
        %vm2393 = vcmp.ge.s32.totalorder %v518, 9
        %v2394 = vsel %vm2393, %v2386, 0.0
        %v2395 = vsel %vm2393, %v2388, 0.0
        %v2396 = vsel %vm2393, %v2390, 0.0
        %v2397 = vsel %vm2393, %v2392, 0.0
        %2398 = vrot.lane.b32.xlu0 %v2367, 6
        %v2399 = vpop.permute.xlu0 %2398
        %2400 = vrot.lane.b32.xlu0 %v2368, 6
        %v2401 = vpop.permute.xlu0 %2400
        %2402 = vrot.lane.b32.xlu0 %v2369, 6
        %v2403 = vpop.permute.xlu0 %2402
        %2404 = vrot.lane.b32.xlu0 %v2370, 6
        %v2405 = vpop.permute.xlu0 %2404
        %vm2406 = vcmp.ge.s32.totalorder %v518, 6
        %v2407 = vsel %vm2406, %v2399, 0.0
        %v2408 = vsel %vm2406, %v2401, 0.0
        %v2409 = vsel %vm2406, %v2403, 0.0
        %v2410 = vsel %vm2406, %v2405, 0.0
        %2411 = vrot.lane.b32.xlu0 %v2367, 3
        %v2412 = vpop.permute.xlu0 %2411
        %2413 = vrot.lane.b32.xlu0 %v2368, 3
        %v2414 = vpop.permute.xlu0 %2413
        %2415 = vrot.lane.b32.xlu0 %v2369, 3
        %v2416 = vpop.permute.xlu0 %2415
        %2417 = vrot.lane.b32.xlu0 %v2370, 3
        %v2418 = vpop.permute.xlu0 %2417
        %v2419 = vsel %vm531, %v2412, 0.0
        %v2420 = vsel %vm531, %v2414, 0.0
        %v2421 = vsel %vm531, %v2416, 0.0
        %v2422 = vsel %vm531, %v2418, 0.0
        %2423 = vrot.lane.b32.xlu0 %v2367, 125
        %v2424 = vpop.permute.xlu0 %2423
        %2425 = vrot.lane.b32.xlu0 %v2368, 125
        %v2426 = vpop.permute.xlu0 %2425
        %2427 = vrot.lane.b32.xlu0 %v2369, 125
        %v2428 = vpop.permute.xlu0 %2427
        %2429 = vrot.lane.b32.xlu0 %v2370, 125
        %v2430 = vpop.permute.xlu0 %2429
        %v2431 = vsel %vm744, %v2424, 0.0
        %v2432 = vsel %vm744, %v2426, 0.0
        %v2433 = vsel %vm744, %v2428, 0.0
        %v2434 = vsel %vm744, %v2430, 0.0
        %2435 = vrot.lane.b32.xlu0 %v2367, 122
        %v2436 = vpop.permute.xlu0 %2435
        %2437 = vrot.lane.b32.xlu0 %v2368, 122
        %v2438 = vpop.permute.xlu0 %2437
        %2439 = vrot.lane.b32.xlu0 %v2369, 122
        %v2440 = vpop.permute.xlu0 %2439
        %2441 = vrot.lane.b32.xlu0 %v2370, 122
        %v2442 = vpop.permute.xlu0 %2441
        %vm2443 = vcmp.lt.s32.totalorder %v518, 122
        %v2444 = vsel %vm2443, %v2436, 0.0
        %v2445 = vsel %vm2443, %v2438, 0.0
        %v2446 = vsel %vm2443, %v2440, 0.0
        %v2447 = vsel %vm2443, %v2442, 0.0
        %2448 = vrot.lane.b32.xlu0 %v2367, 119
        %v2449 = vpop.permute.xlu0 %2448
        %2450 = vrot.lane.b32.xlu0 %v2368, 119
        %v2451 = vpop.permute.xlu0 %2450
        %2452 = vrot.lane.b32.xlu0 %v2369, 119
        %v2453 = vpop.permute.xlu0 %2452
        %2454 = vrot.lane.b32.xlu0 %v2370, 119
        %v2455 = vpop.permute.xlu0 %2454
        %vm2456 = vcmp.lt.s32.totalorder %v518, 119
        %v2457 = vsel %vm2456, %v2449, 0.0
        %v2458 = vsel %vm2456, %v2451, 0.0
        %v2459 = vsel %vm2456, %v2453, 0.0
        %v2460 = vsel %vm2456, %v2455, 0.0
        %2462 = vset.pattern.permute.xlu0 0
        %2463 = vperm.xlu0 %2462, %v2381
        %v2464 = vpop.permute.xlu0 %2463
        %2467 = vset.pattern.permute.xlu0 0
        %2468 = vperm.xlu0 %2467, %v2382
        %v2469 = vpop.permute.xlu0 %2468
        %2472 = vset.pattern.permute.xlu0 0
        %2473 = vperm.xlu0 %2472, %v2383
        %v2474 = vpop.permute.xlu0 %2473
        %2477 = vset.pattern.permute.xlu0 0
        %2478 = vperm.xlu0 %2477, %v2384
        %v2479 = vpop.permute.xlu0 %2478
        %v2482 = vsel %vm1324, %v2373, 0
        %v2485 = vsel %vm1324, %v2375, 0
        %v2488 = vsel %vm1324, %v2377, 0
        %v2491 = vsel %vm1324, %v2379, 0
        %2493 = vmatpush.msra.mxu0 %v2370
        %2494 = vmatpush.msra.mxu0 %v2369
        %2495 = vmatpush.msra.mxu0 %v2368
        %2496 = vmatpush.msra.mxu0 %v2367
        %2497 = vmatpush.msra.mxu0 %v2422
        %2498 = vmatpush.msra.mxu0 %v2421
        %2499 = vmatpush.msra.mxu0 %v2420
        %2500 = vmatpush.msra.mxu0 %v2419
        %2501 = vmatpush.msra.mxu0 %v2410
        %2502 = vmatpush.msra.mxu0 %v2409
        %2503 = vmatpush.msra.mxu0 %v2408
        %2504 = vmatpush.msra.mxu0 %v2407
        %2505 = vmatpush.msra.mxu0 %v2397
        %2506 = vmatpush.msra.mxu0 %v2396
        %2507 = vmatpush.msra.mxu0 %v2395
        %2508 = vmatpush.msra.mxu0 %v2394
        %2509 = vmatmul.f32.gmra.mxu0 %v2372
        %v2510 = vpop.f32.mrf.mxu0
        %v2511 = vadd.f32 %v2464, %v2510
        %2512 = vmatmul.f32.gmra.mxu0 %v2374
        %v2513 = vpop.f32.mrf.mxu0
        %v2514 = vadd.f32 %v2469, %v2513
        %2515 = vmatmul.f32.gmra.mxu0 %v2376
        %v2516 = vpop.f32.mrf.mxu0
        %v2517 = vadd.f32 %v2474, %v2516
        %2518 = vmatmul.f32.gmra.mxu0 %v2378
        %v2519 = vpop.f32.mrf.mxu0
        %v2520 = vadd.f32 %v2479, %v2519
        %2521 = vdwg.mxu0
        %2522 = vmatpush.msra.mxu0 0.0
        %2523 = vmatpush.msra.mxu0 0.0
        %2524 = vmatpush.msra.mxu0 0.0
        %2525 = vmatpush.msra.mxu0 0.0
        %2526 = vmatpush.msra.mxu0 %v2460
        %2527 = vmatpush.msra.mxu0 %v2459
        %2528 = vmatpush.msra.mxu0 %v2458
        %2529 = vmatpush.msra.mxu0 %v2457
        %2530 = vmatpush.msra.mxu0 %v2447
        %2531 = vmatpush.msra.mxu0 %v2446
        %2532 = vmatpush.msra.mxu0 %v2445
        %2533 = vmatpush.msra.mxu0 %v2444
        %2534 = vmatpush.msra.mxu0 %v2434
        %2535 = vmatpush.msra.mxu0 %v2433
        %2536 = vmatpush.msra.mxu0 %v2432
        %2537 = vmatpush.msra.mxu0 %v2431
        %2538 = vmatmul.f32.gmra.mxu0 %v2482
        %v2539 = vpop.f32.mrf.mxu0
        %v2540 = vadd.f32 %v2511, %v2539
        %2541 = vmatmul.f32.gmra.mxu0 %v2485
        %v2542 = vpop.f32.mrf.mxu0
        %v2543 = vadd.f32 %v2514, %v2542
        %2544 = vmatmul.f32.gmra.mxu0 %v2488
        %v2545 = vpop.f32.mrf.mxu0
        %v2546 = vadd.f32 %v2517, %v2545
        %2547 = vmatmul.f32.gmra.mxu0 %v2491
        %v2548 = vpop.f32.mrf.mxu0
        %v2549 = vadd.f32 %v2520, %v2548
        %2550 = vdwg.mxu0
        %v2551 = vadd.f32 %v1968, 1.0
        %v2552 = vadd.f32 %v1969, 1.0
        %v2553 = vadd.f32 %v1970, 1.0
        %v2554 = vadd.f32 %v1971, 1.0
        %2555 = vadd.xlane.f32.xlu0 %v2540
        %v2556 = vpop.xlane.xlu0 %2555
        %2557 = vadd.xlane.f32.xlu0 %v2543
        %v2558 = vpop.xlane.xlu0 %2557
        %2559 = vadd.xlane.f32.xlu0 %v2546
        %v2560 = vpop.xlane.xlu0 %2559
        %2561 = vadd.xlane.f32.xlu0 %v2549
        %v2562 = vpop.xlane.xlu0 %2561
        %v2563 = vmul.f32 %v2556, %v847
        %v2564 = vmul.f32 %v2558, %v847
        %v2565 = vmul.f32 %v2560, %v847
        %v2566 = vmul.f32 %v2562, %v847
        %v2567 = vsub.f32 %v2540, %v2563
        %v2568 = vsub.f32 %v2543, %v2564
        %v2569 = vsub.f32 %v2546, %v2565
        %v2570 = vsub.f32 %v2549, %v2566
        %v2571 = vmul.f32 %v2567, %v2567
        %v2572 = vmul.f32 %v2568, %v2568
        %v2573 = vmul.f32 %v2569, %v2569
        %v2574 = vmul.f32 %v2570, %v2570
        %2575 = vadd.xlane.f32.xlu0 %v2571
        %v2576 = vpop.xlane.xlu0 %2575
        %2577 = vadd.xlane.f32.xlu0 %v2572
        %v2578 = vpop.xlane.xlu0 %2577
        %2579 = vadd.xlane.f32.xlu0 %v2573
        %v2580 = vpop.xlane.xlu0 %2579
        %2581 = vadd.xlane.f32.xlu0 %v2574
        %v2582 = vpop.xlane.xlu0 %2581
        %v2583 = vmul.f32 %v2576, %v847
        %v2584 = vmul.f32 %v2578, %v847
        %v2585 = vmul.f32 %v2580, %v847
        %v2586 = vmul.f32 %v2582, %v847
        %v2587 = vadd.f32 %v2583, 1e-05
        %v2588 = vadd.f32 %v2584, 1e-05
        %v2589 = vadd.f32 %v2585, 1e-05
        %v2590 = vadd.f32 %v2586, 1e-05
        %v2591 = vrsqrt.pop %v2587
        %v2592 = vmul.f32 %v2591, %v2587
        %v2593 = vmul.f32 %v2592, %v2591
        %v2594 = vmul.f32 0.5, %v2593
        %v2595 = vsub.f32 1.5, %v2594
        %v2596 = vmul.f32 %v2591, %v2595
        %v2597 = vmul.f32 %v2587, %v2596
        %vm2598 = vcmp.eq.f32.partialorder %v2587, inf
        %v2599 = vsel %vm2598, %v2587, %v2597
        %vm2600 = vcmp.eq.f32.partialorder %v2587, 0.0
        %v2601 = vand.u32 %v2587, 2147483648
        %v2602 = vsel %vm2600, %v2601, %v2599
        %v2603 = vrsqrt.pop %v2588
        %v2604 = vmul.f32 %v2603, %v2588
        %v2605 = vmul.f32 %v2604, %v2603
        %v2606 = vmul.f32 0.5, %v2605
        %v2607 = vsub.f32 1.5, %v2606
        %v2608 = vmul.f32 %v2603, %v2607
        %v2609 = vmul.f32 %v2588, %v2608
        %vm2610 = vcmp.eq.f32.partialorder %v2588, inf
        %v2611 = vsel %vm2610, %v2588, %v2609
        %vm2612 = vcmp.eq.f32.partialorder %v2588, 0.0
        %v2613 = vand.u32 %v2588, 2147483648
        %v2614 = vsel %vm2612, %v2613, %v2611
        %v2615 = vrsqrt.pop %v2589
        %v2616 = vmul.f32 %v2615, %v2589
        %v2617 = vmul.f32 %v2616, %v2615
        %v2618 = vmul.f32 0.5, %v2617
        %v2619 = vsub.f32 1.5, %v2618
        %v2620 = vmul.f32 %v2615, %v2619
        %v2621 = vmul.f32 %v2589, %v2620
        %vm2622 = vcmp.eq.f32.partialorder %v2589, inf
        %v2623 = vsel %vm2622, %v2589, %v2621
        %vm2624 = vcmp.eq.f32.partialorder %v2589, 0.0
        %v2625 = vand.u32 %v2589, 2147483648
        %v2626 = vsel %vm2624, %v2625, %v2623
        %v2627 = vrsqrt.pop %v2590
        %v2628 = vmul.f32 %v2627, %v2590
        %v2629 = vmul.f32 %v2628, %v2627
        %v2630 = vmul.f32 0.5, %v2629
        %v2631 = vsub.f32 1.5, %v2630
        %v2632 = vmul.f32 %v2627, %v2631
        %v2633 = vmul.f32 %v2590, %v2632
        %vm2634 = vcmp.eq.f32.partialorder %v2590, inf
        %v2635 = vsel %vm2634, %v2590, %v2633
        %vm2636 = vcmp.eq.f32.partialorder %v2590, 0.0
        %v2637 = vand.u32 %v2590, 2147483648
        %v2638 = vsel %vm2636, %v2637, %v2635
        %v2639 = vrcp.pop %v2602
        %v2640 = vmul.f32 %v2602, %v2639
        %v2641 = vsub.f32 1.0, %v2640
        %v2642 = vmul.f32 %v2639, %v2641
        %v2643 = vadd.f32 %v2639, %v2642
        %vm2644 = vweird.f32 %v2602
        %vm2645 = vweird.f32 %v2639
        %vm2646 = vmor %vm2644, %vm2645
        %v2647 = vsel %vm2646, %v2639, %v2643
        %v2648 = vand.u32 2147483647, %v2602
        %vm2649 = vcmp.eq.f32.partialorder %v2648, 8.507059e+37
        %v2650 = vand.u32 %v2602, 2147483648
        %v2651 = vor.u32 1.1754944e-38, %v2650
        %v2652 = vsel %vm2649, %v2651, %v2647
        %v2653 = vmul.f32 %v2567, %v2652
        %v2654 = vrcp.pop %v2614
        %v2655 = vmul.f32 %v2614, %v2654
        %v2656 = vsub.f32 1.0, %v2655
        %v2657 = vmul.f32 %v2654, %v2656
        %v2658 = vadd.f32 %v2654, %v2657
        %vm2659 = vweird.f32 %v2614
        %vm2660 = vweird.f32 %v2654
        %vm2661 = vmor %vm2659, %vm2660
        %v2662 = vsel %vm2661, %v2654, %v2658
        %v2663 = vand.u32 2147483647, %v2614
        %vm2664 = vcmp.eq.f32.partialorder %v2663, 8.507059e+37
        %v2665 = vand.u32 %v2614, 2147483648
        %v2666 = vor.u32 1.1754944e-38, %v2665
        %v2667 = vsel %vm2664, %v2666, %v2662
        %v2668 = vmul.f32 %v2568, %v2667
        %v2669 = vrcp.pop %v2626
        %v2670 = vmul.f32 %v2626, %v2669
        %v2671 = vsub.f32 1.0, %v2670
        %v2672 = vmul.f32 %v2669, %v2671
        %v2673 = vadd.f32 %v2669, %v2672
        %vm2674 = vweird.f32 %v2626
        %vm2675 = vweird.f32 %v2669
        %vm2676 = vmor %vm2674, %vm2675
        %v2677 = vsel %vm2676, %v2669, %v2673
        %v2678 = vand.u32 2147483647, %v2626
        %vm2679 = vcmp.eq.f32.partialorder %v2678, 8.507059e+37
        %v2680 = vand.u32 %v2626, 2147483648
        %v2681 = vor.u32 1.1754944e-38, %v2680
        %v2682 = vsel %vm2679, %v2681, %v2677
        %v2683 = vmul.f32 %v2569, %v2682
        %v2684 = vrcp.pop %v2638
        %v2685 = vmul.f32 %v2638, %v2684
        %v2686 = vsub.f32 1.0, %v2685
        %v2687 = vmul.f32 %v2684, %v2686
        %v2688 = vadd.f32 %v2684, %v2687
        %vm2689 = vweird.f32 %v2638
        %vm2690 = vweird.f32 %v2684
        %vm2691 = vmor %vm2689, %vm2690
        %v2692 = vsel %vm2691, %v2684, %v2688
        %v2693 = vand.u32 2147483647, %v2638
        %vm2694 = vcmp.eq.f32.partialorder %v2693, 8.507059e+37
        %v2695 = vand.u32 %v2638, 2147483648
        %v2696 = vor.u32 1.1754944e-38, %v2695
        %v2697 = vsel %vm2694, %v2696, %v2692
        %v2698 = vmul.f32 %v2570, %v2697
        %2700 = vset.pattern.permute.xlu0 0
        %2701 = vperm.xlu0 %2700, %v2551
        %v2702 = vpop.permute.xlu0 %2701
        %2705 = vset.pattern.permute.xlu0 0
        %2706 = vperm.xlu0 %2705, %v2552
        %v2707 = vpop.permute.xlu0 %2706
        %2710 = vset.pattern.permute.xlu0 0
        %2711 = vperm.xlu0 %2710, %v2553
        %v2712 = vpop.permute.xlu0 %2711
        %2715 = vset.pattern.permute.xlu0 0
        %2716 = vperm.xlu0 %2715, %v2554
        %v2717 = vpop.permute.xlu0 %2716
        %v2719 = vmul.f32 %v2702, %v2653
        %v2720 = vmul.f32 %v2707, %v2668
        %v2721 = vmul.f32 %v2712, %v2683
        %v2722 = vmul.f32 %v2717, %v2698
        %2724 = vset.pattern.permute.xlu0 0
        %2725 = vperm.xlu0 %2724, %v1973
        %v2726 = vpop.permute.xlu0 %2725
        %2729 = vset.pattern.permute.xlu0 0
        %2730 = vperm.xlu0 %2729, %v1974
        %v2731 = vpop.permute.xlu0 %2730
        %2734 = vset.pattern.permute.xlu0 0
        %2735 = vperm.xlu0 %2734, %v1975
        %v2736 = vpop.permute.xlu0 %2735
        %2739 = vset.pattern.permute.xlu0 0
        %2740 = vperm.xlu0 %2739, %v1976
        %v2741 = vpop.permute.xlu0 %2740
        %v2743 = vadd.f32 %v2719, %v2726
        %v2744 = vadd.f32 %v2720, %v2731
        %v2745 = vadd.f32 %v2721, %v2736
        %v2746 = vadd.f32 %v2722, %v2741
        %2748 = vset.pattern.permute.xlu0 0
        %2749 = vperm.xlu0 %2748, %v1983
        %v2750 = vpop.permute.xlu0 %2749
        %2753 = vset.pattern.permute.xlu0 0
        %2754 = vperm.xlu0 %2753, %v1984
        %v2755 = vpop.permute.xlu0 %2754
        %2758 = vset.pattern.permute.xlu0 0
        %2759 = vperm.xlu0 %2758, %v1985
        %v2760 = vpop.permute.xlu0 %2759
        %2763 = vset.pattern.permute.xlu0 0
        %2764 = vperm.xlu0 %2763, %v1986
        %v2765 = vpop.permute.xlu0 %2764
        %v2767 = vmul.f32 %v2750, %v2743
        %v2768 = vmul.f32 %v2755, %v2744
        %v2769 = vmul.f32 %v2760, %v2745
        %v2770 = vmul.f32 %v2765, %v2746
        %v2771 = vmul.f32 %v2767, 0.31830987
        %v2772 = vmul.f32 %v2768, 0.31830987
        %v2773 = vmul.f32 %v2769, 0.31830987
        %v2774 = vmul.f32 %v2770, 0.31830987
        %v2775 = vadd.f32 %v2771, 0.5
        %v2776 = vadd.f32 %v2772, 0.5
        %v2777 = vadd.f32 %v2773, 0.5
        %v2778 = vadd.f32 %v2774, 0.5
        %v2779 = vfloor.f32 %v2775
        %v2780 = vfloor.f32 %v2776
        %v2781 = vfloor.f32 %v2777
        %v2782 = vfloor.f32 %v2778
        %v2783 = vmul.f32 %v2779, 3.1415927
        %v2784 = vmul.f32 %v2780, 3.1415927
        %v2785 = vmul.f32 %v2781, 3.1415927
        %v2786 = vmul.f32 %v2782, 3.1415927
        %v2787 = vsub.f32 %v2767, %v2783
        %v2788 = vsub.f32 %v2768, %v2784
        %v2789 = vsub.f32 %v2769, %v2785
        %v2790 = vsub.f32 %v2770, %v2786
        %v2791 = vmul.f32 %v2779, 0.5
        %v2792 = vmul.f32 %v2780, 0.5
        %v2793 = vmul.f32 %v2781, 0.5
        %v2794 = vmul.f32 %v2782, 0.5
        %v2795 = vfloor.f32 %v2791
        %v2796 = vfloor.f32 %v2792
        %v2797 = vfloor.f32 %v2793
        %v2798 = vfloor.f32 %v2794
        %v2799 = vmul.f32 %v2795, 2.0
        %v2800 = vmul.f32 %v2796, 2.0
        %v2801 = vmul.f32 %v2797, 2.0
        %v2802 = vmul.f32 %v2798, 2.0
        %v2803 = vsub.f32 %v2779, %v2799
        %v2804 = vsub.f32 %v2780, %v2800
        %v2805 = vsub.f32 %v2781, %v2801
        %v2806 = vsub.f32 %v2782, %v2802
        %v2807 = vmul.f32 %v2803, 2.0
        %v2808 = vmul.f32 %v2804, 2.0
        %v2809 = vmul.f32 %v2805, 2.0
        %v2810 = vmul.f32 %v2806, 2.0
        %v2811 = vsub.f32 1.0, %v2807
        %v2812 = vsub.f32 1.0, %v2808
        %v2813 = vsub.f32 1.0, %v2809
        %v2814 = vsub.f32 1.0, %v2810
        %v2815 = vmul.f32 %v2787, %v2787
        %v2816 = vmul.f32 %v2788, %v2788
        %v2817 = vmul.f32 %v2789, %v2789
        %v2818 = vmul.f32 %v2790, %v2790
        %v2819 = vmul.f32 %v2815, -2.5052108e-08
        %v2820 = vmul.f32 %v2816, -2.5052108e-08
        %v2821 = vmul.f32 %v2817, -2.5052108e-08
        %v2822 = vmul.f32 %v2818, -2.5052108e-08
        %v2823 = vadd.f32 %v2819, 2.7557319e-06
        %v2824 = vadd.f32 %v2820, 2.7557319e-06
        %v2825 = vadd.f32 %v2821, 2.7557319e-06
        %v2826 = vadd.f32 %v2822, 2.7557319e-06
        %v2827 = vmul.f32 %v2815, %v2823
        %v2828 = vmul.f32 %v2816, %v2824
        %v2829 = vmul.f32 %v2817, %v2825
        %v2830 = vmul.f32 %v2818, %v2826
        %v2831 = vadd.f32 %v2827, -0.0001984127
        %v2832 = vadd.f32 %v2828, -0.0001984127
        %v2833 = vadd.f32 %v2829, -0.0001984127
        %v2834 = vadd.f32 %v2830, -0.0001984127
        %v2835 = vmul.f32 %v2815, %v2831
        %v2836 = vmul.f32 %v2816, %v2832
        %v2837 = vmul.f32 %v2817, %v2833
        %v2838 = vmul.f32 %v2818, %v2834
        %v2839 = vadd.f32 %v2835, 0.008333334
        %v2840 = vadd.f32 %v2836, 0.008333334
        %v2841 = vadd.f32 %v2837, 0.008333334
        %v2842 = vadd.f32 %v2838, 0.008333334
        %v2843 = vmul.f32 %v2815, %v2839
        %v2844 = vmul.f32 %v2816, %v2840
        %v2845 = vmul.f32 %v2817, %v2841
        %v2846 = vmul.f32 %v2818, %v2842
        %v2847 = vadd.f32 %v2843, -0.16666667
        %v2848 = vadd.f32 %v2844, -0.16666667
        %v2849 = vadd.f32 %v2845, -0.16666667
        %v2850 = vadd.f32 %v2846, -0.16666667
        %v2851 = vmul.f32 %v2815, %v2847
        %v2852 = vmul.f32 %v2816, %v2848
        %v2853 = vmul.f32 %v2817, %v2849
        %v2854 = vmul.f32 %v2818, %v2850
        %v2855 = vadd.f32 %v2851, 1.0
        %v2856 = vadd.f32 %v2852, 1.0
        %v2857 = vadd.f32 %v2853, 1.0
        %v2858 = vadd.f32 %v2854, 1.0
        %v2859 = vmul.f32 %v2787, %v2855
        %v2860 = vmul.f32 %v2788, %v2856
        %v2861 = vmul.f32 %v2789, %v2857
        %v2862 = vmul.f32 %v2790, %v2858
        %v2863 = vmul.f32 %v2811, %v2859
        %v2864 = vmul.f32 %v2812, %v2860
        %v2865 = vmul.f32 %v2813, %v2861
        %v2866 = vmul.f32 %v2814, %v2862
        %v2867 = vmul.f32 %v2863, %v2863
        %v2868 = vmul.f32 %v2864, %v2864
        %v2869 = vmul.f32 %v2865, %v2865
        %v2870 = vmul.f32 %v2866, %v2866
        %v2871 = vrcp.pop %v2750
        %v2872 = vmul.f32 %v2750, %v2871
        %v2873 = vsub.f32 1.0, %v2872
        %v2874 = vmul.f32 %v2871, %v2873
        %v2875 = vadd.f32 %v2871, %v2874
        %vm2876 = vweird.f32 %v2750
        %vm2877 = vweird.f32 %v2871
        %vm2878 = vmor %vm2876, %vm2877
        %v2879 = vsel %vm2878, %v2871, %v2875
        %v2880 = vand.u32 2147483647, %v2750
        %vm2881 = vcmp.eq.f32.partialorder %v2880, 8.507059e+37
        %v2882 = vand.u32 %v2750, 2147483648
        %v2883 = vor.u32 1.1754944e-38, %v2882
        %v2884 = vsel %vm2881, %v2883, %v2879
        %v2885 = vmul.f32 %v2867, %v2884
        %v2886 = vrcp.pop %v2755
        %v2887 = vmul.f32 %v2755, %v2886
        %v2888 = vsub.f32 1.0, %v2887
        %v2889 = vmul.f32 %v2886, %v2888
        %v2890 = vadd.f32 %v2886, %v2889
        %vm2891 = vweird.f32 %v2755
        %vm2892 = vweird.f32 %v2886
        %vm2893 = vmor %vm2891, %vm2892
        %v2894 = vsel %vm2893, %v2886, %v2890
        %v2895 = vand.u32 2147483647, %v2755
        %vm2896 = vcmp.eq.f32.partialorder %v2895, 8.507059e+37
        %v2897 = vand.u32 %v2755, 2147483648
        %v2898 = vor.u32 1.1754944e-38, %v2897
        %v2899 = vsel %vm2896, %v2898, %v2894
        %v2900 = vmul.f32 %v2868, %v2899
        %v2901 = vrcp.pop %v2760
        %v2902 = vmul.f32 %v2760, %v2901
        %v2903 = vsub.f32 1.0, %v2902
        %v2904 = vmul.f32 %v2901, %v2903
        %v2905 = vadd.f32 %v2901, %v2904
        %vm2906 = vweird.f32 %v2760
        %vm2907 = vweird.f32 %v2901
        %vm2908 = vmor %vm2906, %vm2907
        %v2909 = vsel %vm2908, %v2901, %v2905
        %v2910 = vand.u32 2147483647, %v2760
        %vm2911 = vcmp.eq.f32.partialorder %v2910, 8.507059e+37
        %v2912 = vand.u32 %v2760, 2147483648
        %v2913 = vor.u32 1.1754944e-38, %v2912
        %v2914 = vsel %vm2911, %v2913, %v2909
        %v2915 = vmul.f32 %v2869, %v2914
        %v2916 = vrcp.pop %v2765
        %v2917 = vmul.f32 %v2765, %v2916
        %v2918 = vsub.f32 1.0, %v2917
        %v2919 = vmul.f32 %v2916, %v2918
        %v2920 = vadd.f32 %v2916, %v2919
        %vm2921 = vweird.f32 %v2765
        %vm2922 = vweird.f32 %v2916
        %vm2923 = vmor %vm2921, %vm2922
        %v2924 = vsel %vm2923, %v2916, %v2920
        %v2925 = vand.u32 2147483647, %v2765
        %vm2926 = vcmp.eq.f32.partialorder %v2925, 8.507059e+37
        %v2927 = vand.u32 %v2765, 2147483648
        %v2928 = vor.u32 1.1754944e-38, %v2927
        %v2929 = vsel %vm2926, %v2928, %v2924
        %v2930 = vmul.f32 %v2870, %v2929
        %v2931 = vadd.f32 %v2743, %v2885
        %v2932 = vadd.f32 %v2744, %v2900
        %v2933 = vadd.f32 %v2745, %v2915
        %v2934 = vadd.f32 %v2746, %v2930
        %s2935 = scalar_lea.vmem %s7, 64
        %v2936 = vld [vmem:[%s2935] sm:$0xff]
        %v2937 = vld [vmem:[%s2935 + $0x8] sm:$0xff]
        %v2938 = vld [vmem:[%s2935 + $0x10] sm:$0xff]
        %v2939 = vld [vmem:[%s2935 + $0x18] sm:$0xff]
        %v2940 = vld [vmem:[%s2935 + $0x20] sm:$0xff]
        %v2941 = vld [vmem:[%s2935 + $0x28] sm:$0xff]
        %v2942 = vld [vmem:[%s2935 + $0x30] sm:$0xff]
        %v2943 = vld [vmem:[%s2935 + $0x38] sm:$0xff]
        %s2944 = scalar_lea.vmem %s8, 32
        %v2945 = vld [vmem:[%s2944] sm:$0xff]
        %v2946 = vld [vmem:[%s2944 + $0x8] sm:$0xff]
        %v2947 = vld [vmem:[%s2944 + $0x10] sm:$0xff]
        %v2948 = vld [vmem:[%s2944 + $0x18] sm:$0xff]
        %2949 = vrot.lane.b32.xlu0 %v2931, 3
        %v2950 = vpop.permute.xlu0 %2949
        %2951 = vrot.lane.b32.xlu0 %v2932, 3
        %v2952 = vpop.permute.xlu0 %2951
        %2953 = vrot.lane.b32.xlu0 %v2933, 3
        %v2954 = vpop.permute.xlu0 %2953
        %2955 = vrot.lane.b32.xlu0 %v2934, 3
        %v2956 = vpop.permute.xlu0 %2955
        %v2957 = vsel %vm531, %v2950, 0.0
        %v2958 = vsel %vm531, %v2952, 0.0
        %v2959 = vsel %vm531, %v2954, 0.0
        %v2960 = vsel %vm531, %v2956, 0.0
        %2961 = vrot.lane.b32.xlu0 %v2931, 2
        %v2962 = vpop.permute.xlu0 %2961
        %2963 = vrot.lane.b32.xlu0 %v2932, 2
        %v2964 = vpop.permute.xlu0 %2963
        %2965 = vrot.lane.b32.xlu0 %v2933, 2
        %v2966 = vpop.permute.xlu0 %2965
        %2967 = vrot.lane.b32.xlu0 %v2934, 2
        %v2968 = vpop.permute.xlu0 %2967
        %v2969 = vsel %vm572, %v2962, 0.0
        %v2970 = vsel %vm572, %v2964, 0.0
        %v2971 = vsel %vm572, %v2966, 0.0
        %v2972 = vsel %vm572, %v2968, 0.0
        %2973 = vrot.lane.b32.xlu0 %v2931, 1
        %v2974 = vpop.permute.xlu0 %2973
        %2975 = vrot.lane.b32.xlu0 %v2932, 1
        %v2976 = vpop.permute.xlu0 %2975
        %2977 = vrot.lane.b32.xlu0 %v2933, 1
        %v2978 = vpop.permute.xlu0 %2977
        %2979 = vrot.lane.b32.xlu0 %v2934, 1
        %v2980 = vpop.permute.xlu0 %2979
        %v2981 = vsel %vm609, %v2974, 0.0
        %v2982 = vsel %vm609, %v2976, 0.0
        %v2983 = vsel %vm609, %v2978, 0.0
        %v2984 = vsel %vm609, %v2980, 0.0
        %2985 = vrot.lane.b32.xlu0 %v2931, 127
        %v2986 = vpop.permute.xlu0 %2985
        %2987 = vrot.lane.b32.xlu0 %v2932, 127
        %v2988 = vpop.permute.xlu0 %2987
        %2989 = vrot.lane.b32.xlu0 %v2933, 127
        %v2990 = vpop.permute.xlu0 %2989
        %2991 = vrot.lane.b32.xlu0 %v2934, 127
        %v2992 = vpop.permute.xlu0 %2991
        %v2993 = vsel %vm670, %v2986, 0.0
        %v2994 = vsel %vm670, %v2988, 0.0
        %v2995 = vsel %vm670, %v2990, 0.0
        %v2996 = vsel %vm670, %v2992, 0.0
        %2997 = vrot.lane.b32.xlu0 %v2931, 126
        %v2998 = vpop.permute.xlu0 %2997
        %2999 = vrot.lane.b32.xlu0 %v2932, 126
        %v3000 = vpop.permute.xlu0 %2999
        %3001 = vrot.lane.b32.xlu0 %v2933, 126
        %v3002 = vpop.permute.xlu0 %3001
        %3003 = vrot.lane.b32.xlu0 %v2934, 126
        %v3004 = vpop.permute.xlu0 %3003
        %v3005 = vsel %vm707, %v2998, 0.0
        %v3006 = vsel %vm707, %v3000, 0.0
        %v3007 = vsel %vm707, %v3002, 0.0
        %v3008 = vsel %vm707, %v3004, 0.0
        %3009 = vrot.lane.b32.xlu0 %v2931, 125
        %v3010 = vpop.permute.xlu0 %3009
        %3011 = vrot.lane.b32.xlu0 %v2932, 125
        %v3012 = vpop.permute.xlu0 %3011
        %3013 = vrot.lane.b32.xlu0 %v2933, 125
        %v3014 = vpop.permute.xlu0 %3013
        %3015 = vrot.lane.b32.xlu0 %v2934, 125
        %v3016 = vpop.permute.xlu0 %3015
        %v3017 = vsel %vm744, %v3010, 0.0
        %v3018 = vsel %vm744, %v3012, 0.0
        %v3019 = vsel %vm744, %v3014, 0.0
        %v3020 = vsel %vm744, %v3016, 0.0
        %3022 = vset.pattern.permute.xlu0 0
        %3023 = vperm.xlu0 %3022, %v2945
        %v3024 = vpop.permute.xlu0 %3023
        %3027 = vset.pattern.permute.xlu0 0
        %3028 = vperm.xlu0 %3027, %v2946
        %v3029 = vpop.permute.xlu0 %3028
        %3032 = vset.pattern.permute.xlu0 0
        %3033 = vperm.xlu0 %3032, %v2947
        %v3034 = vpop.permute.xlu0 %3033
        %3037 = vset.pattern.permute.xlu0 0
        %3038 = vperm.xlu0 %3037, %v2948
        %v3039 = vpop.permute.xlu0 %3038
        %v3042 = vsel %vm1324, %v2937, 0
        %v3045 = vsel %vm1324, %v2939, 0
        %v3048 = vsel %vm1324, %v2941, 0
        %v3051 = vsel %vm1324, %v2943, 0
        %3053 = vmatpush.msra.mxu0 %v2934
        %3054 = vmatpush.msra.mxu0 %v2933
        %3055 = vmatpush.msra.mxu0 %v2932
        %3056 = vmatpush.msra.mxu0 %v2931
        %3057 = vmatpush.msra.mxu0 %v2984
        %3058 = vmatpush.msra.mxu0 %v2983
        %3059 = vmatpush.msra.mxu0 %v2982
        %3060 = vmatpush.msra.mxu0 %v2981
        %3061 = vmatpush.msra.mxu0 %v2972
        %3062 = vmatpush.msra.mxu0 %v2971
        %3063 = vmatpush.msra.mxu0 %v2970
        %3064 = vmatpush.msra.mxu0 %v2969
        %3065 = vmatpush.msra.mxu0 %v2960
        %3066 = vmatpush.msra.mxu0 %v2959
        %3067 = vmatpush.msra.mxu0 %v2958
        %3068 = vmatpush.msra.mxu0 %v2957
        %3069 = vmatmul.f32.gmra.mxu0 %v2936
        %v3070 = vpop.f32.mrf.mxu0
        %v3071 = vadd.f32 %v3024, %v3070
        %3072 = vmatmul.f32.gmra.mxu0 %v2938
        %v3073 = vpop.f32.mrf.mxu0
        %v3074 = vadd.f32 %v3029, %v3073
        %3075 = vmatmul.f32.gmra.mxu0 %v2940
        %v3076 = vpop.f32.mrf.mxu0
        %v3077 = vadd.f32 %v3034, %v3076
        %3078 = vmatmul.f32.gmra.mxu0 %v2942
        %v3079 = vpop.f32.mrf.mxu0
        %v3080 = vadd.f32 %v3039, %v3079
        %3081 = vdwg.mxu0
        %3082 = vmatpush.msra.mxu0 0.0
        %3083 = vmatpush.msra.mxu0 0.0
        %3084 = vmatpush.msra.mxu0 0.0
        %3085 = vmatpush.msra.mxu0 0.0
        %3086 = vmatpush.msra.mxu0 %v3020
        %3087 = vmatpush.msra.mxu0 %v3019
        %3088 = vmatpush.msra.mxu0 %v3018
        %3089 = vmatpush.msra.mxu0 %v3017
        %3090 = vmatpush.msra.mxu0 %v3008
        %3091 = vmatpush.msra.mxu0 %v3007
        %3092 = vmatpush.msra.mxu0 %v3006
        %3093 = vmatpush.msra.mxu0 %v3005
        %3094 = vmatpush.msra.mxu0 %v2996
        %3095 = vmatpush.msra.mxu0 %v2995
        %3096 = vmatpush.msra.mxu0 %v2994
        %3097 = vmatpush.msra.mxu0 %v2993
        %3098 = vmatmul.f32.gmra.mxu0 %v3042
        %v3099 = vpop.f32.mrf.mxu0
        %v3100 = vadd.f32 %v3071, %v3099
        %3101 = vmatmul.f32.gmra.mxu0 %v3045
        %v3102 = vpop.f32.mrf.mxu0
        %v3103 = vadd.f32 %v3074, %v3102
        %3104 = vmatmul.f32.gmra.mxu0 %v3048
        %v3105 = vpop.f32.mrf.mxu0
        %v3106 = vadd.f32 %v3077, %v3105
        %3107 = vmatmul.f32.gmra.mxu0 %v3051
        %v3108 = vpop.f32.mrf.mxu0
        %v3109 = vadd.f32 %v3080, %v3108
        %3110 = vdwg.mxu0
        %v3111 = vadd.f32 %v3100, %v1953
        %v3112 = vadd.f32 %v3103, %v1954
        %v3113 = vadd.f32 %v3106, %v1955
        %v3114 = vadd.f32 %v3109, %v1956
        %s3115 = scalar_lea.vmem %s512, 256
        %v3116 = vld [vmem:[%s3115] sm:$0xff]
        %v3117 = vld [vmem:[%s3115 + $0x8] sm:$0xff]
        %v3118 = vld [vmem:[%s3115 + $0x10] sm:$0xff]
        %v3119 = vld [vmem:[%s3115 + $0x18] sm:$0xff]
        %s3120 = scalar_lea.vmem %s512, 288
        %v3121 = vld [vmem:[%s3120] sm:$0xff]
        %v3122 = vld [vmem:[%s3120 + $0x8] sm:$0xff]
        %v3123 = vld [vmem:[%s3120 + $0x10] sm:$0xff]
        %v3124 = vld [vmem:[%s3120 + $0x18] sm:$0xff]
        %s3125 = scalar_lea.vmem %s512, 320
        %v3126 = vld [vmem:[%s3125] sm:$0xff]
        %v3127 = vld [vmem:[%s3125 + $0x8] sm:$0xff]
        %v3128 = vld [vmem:[%s3125 + $0x10] sm:$0xff]
        %v3129 = vld [vmem:[%s3125 + $0x18] sm:$0xff]
        %s3130 = scalar_lea.vmem %s512, 352
        %v3131 = vld [vmem:[%s3130] sm:$0xff]
        %v3132 = vld [vmem:[%s3130 + $0x8] sm:$0xff]
        %v3133 = vld [vmem:[%s3130 + $0x10] sm:$0xff]
        %v3134 = vld [vmem:[%s3130 + $0x18] sm:$0xff]
        %s3135 = scalar_lea.vmem %s4, 128
        %v3136 = vld [vmem:[%s3135] sm:$0xff]
        %v3137 = vld [vmem:[%s3135 + $0x8] sm:$0xff]
        %v3138 = vld [vmem:[%s3135 + $0x10] sm:$0xff]
        %v3139 = vld [vmem:[%s3135 + $0x18] sm:$0xff]
        %s3140 = scalar_lea.vmem %s4, 160
        %v3141 = vld [vmem:[%s3140] sm:$0xff]
        %v3142 = vld [vmem:[%s3140 + $0x8] sm:$0xff]
        %v3143 = vld [vmem:[%s3140 + $0x10] sm:$0xff]
        %v3144 = vld [vmem:[%s3140 + $0x18] sm:$0xff]
        %v3145 = vadd.f32 %v3116, 1.0
        %v3146 = vadd.f32 %v3117, 1.0
        %v3147 = vadd.f32 %v3118, 1.0
        %v3148 = vadd.f32 %v3119, 1.0
        %3149 = vadd.xlane.f32.xlu0 %v3111
        %v3150 = vpop.xlane.xlu0 %3149
        %3151 = vadd.xlane.f32.xlu0 %v3112
        %v3152 = vpop.xlane.xlu0 %3151
        %3153 = vadd.xlane.f32.xlu0 %v3113
        %v3154 = vpop.xlane.xlu0 %3153
        %3155 = vadd.xlane.f32.xlu0 %v3114
        %v3156 = vpop.xlane.xlu0 %3155
        %v3157 = vmul.f32 %v3150, %v847
        %v3158 = vmul.f32 %v3152, %v847
        %v3159 = vmul.f32 %v3154, %v847
        %v3160 = vmul.f32 %v3156, %v847
        %v3161 = vsub.f32 %v3111, %v3157
        %v3162 = vsub.f32 %v3112, %v3158
        %v3163 = vsub.f32 %v3113, %v3159
        %v3164 = vsub.f32 %v3114, %v3160
        %v3165 = vmul.f32 %v3161, %v3161
        %v3166 = vmul.f32 %v3162, %v3162
        %v3167 = vmul.f32 %v3163, %v3163
        %v3168 = vmul.f32 %v3164, %v3164
        %3169 = vadd.xlane.f32.xlu0 %v3165
        %v3170 = vpop.xlane.xlu0 %3169
        %3171 = vadd.xlane.f32.xlu0 %v3166
        %v3172 = vpop.xlane.xlu0 %3171
        %3173 = vadd.xlane.f32.xlu0 %v3167
        %v3174 = vpop.xlane.xlu0 %3173
        %3175 = vadd.xlane.f32.xlu0 %v3168
        %v3176 = vpop.xlane.xlu0 %3175
        %v3177 = vmul.f32 %v3170, %v847
        %v3178 = vmul.f32 %v3172, %v847
        %v3179 = vmul.f32 %v3174, %v847
        %v3180 = vmul.f32 %v3176, %v847
        %v3181 = vadd.f32 %v3177, 1e-05
        %v3182 = vadd.f32 %v3178, 1e-05
        %v3183 = vadd.f32 %v3179, 1e-05
        %v3184 = vadd.f32 %v3180, 1e-05
        %v3185 = vrsqrt.pop %v3181
        %v3186 = vmul.f32 %v3185, %v3181
        %v3187 = vmul.f32 %v3186, %v3185
        %v3188 = vmul.f32 0.5, %v3187
        %v3189 = vsub.f32 1.5, %v3188
        %v3190 = vmul.f32 %v3185, %v3189
        %v3191 = vmul.f32 %v3181, %v3190
        %vm3192 = vcmp.eq.f32.partialorder %v3181, inf
        %v3193 = vsel %vm3192, %v3181, %v3191
        %vm3194 = vcmp.eq.f32.partialorder %v3181, 0.0
        %v3195 = vand.u32 %v3181, 2147483648
        %v3196 = vsel %vm3194, %v3195, %v3193
        %v3197 = vrsqrt.pop %v3182
        %v3198 = vmul.f32 %v3197, %v3182
        %v3199 = vmul.f32 %v3198, %v3197
        %v3200 = vmul.f32 0.5, %v3199
        %v3201 = vsub.f32 1.5, %v3200
        %v3202 = vmul.f32 %v3197, %v3201
        %v3203 = vmul.f32 %v3182, %v3202
        %vm3204 = vcmp.eq.f32.partialorder %v3182, inf
        %v3205 = vsel %vm3204, %v3182, %v3203
        %vm3206 = vcmp.eq.f32.partialorder %v3182, 0.0
        %v3207 = vand.u32 %v3182, 2147483648
        %v3208 = vsel %vm3206, %v3207, %v3205
        %v3209 = vrsqrt.pop %v3183
        %v3210 = vmul.f32 %v3209, %v3183
        %v3211 = vmul.f32 %v3210, %v3209
        %v3212 = vmul.f32 0.5, %v3211
        %v3213 = vsub.f32 1.5, %v3212
        %v3214 = vmul.f32 %v3209, %v3213
        %v3215 = vmul.f32 %v3183, %v3214
        %vm3216 = vcmp.eq.f32.partialorder %v3183, inf
        %v3217 = vsel %vm3216, %v3183, %v3215
        %vm3218 = vcmp.eq.f32.partialorder %v3183, 0.0
        %v3219 = vand.u32 %v3183, 2147483648
        %v3220 = vsel %vm3218, %v3219, %v3217
        %v3221 = vrsqrt.pop %v3184
        %v3222 = vmul.f32 %v3221, %v3184
        %v3223 = vmul.f32 %v3222, %v3221
        %v3224 = vmul.f32 0.5, %v3223
        %v3225 = vsub.f32 1.5, %v3224
        %v3226 = vmul.f32 %v3221, %v3225
        %v3227 = vmul.f32 %v3184, %v3226
        %vm3228 = vcmp.eq.f32.partialorder %v3184, inf
        %v3229 = vsel %vm3228, %v3184, %v3227
        %vm3230 = vcmp.eq.f32.partialorder %v3184, 0.0
        %v3231 = vand.u32 %v3184, 2147483648
        %v3232 = vsel %vm3230, %v3231, %v3229
        %v3233 = vrcp.pop %v3196
        %v3234 = vmul.f32 %v3196, %v3233
        %v3235 = vsub.f32 1.0, %v3234
        %v3236 = vmul.f32 %v3233, %v3235
        %v3237 = vadd.f32 %v3233, %v3236
        %vm3238 = vweird.f32 %v3196
        %vm3239 = vweird.f32 %v3233
        %vm3240 = vmor %vm3238, %vm3239
        %v3241 = vsel %vm3240, %v3233, %v3237
        %v3242 = vand.u32 2147483647, %v3196
        %vm3243 = vcmp.eq.f32.partialorder %v3242, 8.507059e+37
        %v3244 = vand.u32 %v3196, 2147483648
        %v3245 = vor.u32 1.1754944e-38, %v3244
        %v3246 = vsel %vm3243, %v3245, %v3241
        %v3247 = vmul.f32 %v3161, %v3246
        %v3248 = vrcp.pop %v3208
        %v3249 = vmul.f32 %v3208, %v3248
        %v3250 = vsub.f32 1.0, %v3249
        %v3251 = vmul.f32 %v3248, %v3250
        %v3252 = vadd.f32 %v3248, %v3251
        %vm3253 = vweird.f32 %v3208
        %vm3254 = vweird.f32 %v3248
        %vm3255 = vmor %vm3253, %vm3254
        %v3256 = vsel %vm3255, %v3248, %v3252
        %v3257 = vand.u32 2147483647, %v3208
        %vm3258 = vcmp.eq.f32.partialorder %v3257, 8.507059e+37
        %v3259 = vand.u32 %v3208, 2147483648
        %v3260 = vor.u32 1.1754944e-38, %v3259
        %v3261 = vsel %vm3258, %v3260, %v3256
        %v3262 = vmul.f32 %v3162, %v3261
        %v3263 = vrcp.pop %v3220
        %v3264 = vmul.f32 %v3220, %v3263
        %v3265 = vsub.f32 1.0, %v3264
        %v3266 = vmul.f32 %v3263, %v3265
        %v3267 = vadd.f32 %v3263, %v3266
        %vm3268 = vweird.f32 %v3220
        %vm3269 = vweird.f32 %v3263
        %vm3270 = vmor %vm3268, %vm3269
        %v3271 = vsel %vm3270, %v3263, %v3267
        %v3272 = vand.u32 2147483647, %v3220
        %vm3273 = vcmp.eq.f32.partialorder %v3272, 8.507059e+37
        %v3274 = vand.u32 %v3220, 2147483648
        %v3275 = vor.u32 1.1754944e-38, %v3274
        %v3276 = vsel %vm3273, %v3275, %v3271
        %v3277 = vmul.f32 %v3163, %v3276
        %v3278 = vrcp.pop %v3232
        %v3279 = vmul.f32 %v3232, %v3278
        %v3280 = vsub.f32 1.0, %v3279
        %v3281 = vmul.f32 %v3278, %v3280
        %v3282 = vadd.f32 %v3278, %v3281
        %vm3283 = vweird.f32 %v3232
        %vm3284 = vweird.f32 %v3278
        %vm3285 = vmor %vm3283, %vm3284
        %v3286 = vsel %vm3285, %v3278, %v3282
        %v3287 = vand.u32 2147483647, %v3232
        %vm3288 = vcmp.eq.f32.partialorder %v3287, 8.507059e+37
        %v3289 = vand.u32 %v3232, 2147483648
        %v3290 = vor.u32 1.1754944e-38, %v3289
        %v3291 = vsel %vm3288, %v3290, %v3286
        %v3292 = vmul.f32 %v3164, %v3291
        %3294 = vset.pattern.permute.xlu0 0
        %3295 = vperm.xlu0 %3294, %v3145
        %v3296 = vpop.permute.xlu0 %3295
        %3299 = vset.pattern.permute.xlu0 0
        %3300 = vperm.xlu0 %3299, %v3146
        %v3301 = vpop.permute.xlu0 %3300
        %3304 = vset.pattern.permute.xlu0 0
        %3305 = vperm.xlu0 %3304, %v3147
        %v3306 = vpop.permute.xlu0 %3305
        %3309 = vset.pattern.permute.xlu0 0
        %3310 = vperm.xlu0 %3309, %v3148
        %v3311 = vpop.permute.xlu0 %3310
        %v3313 = vmul.f32 %v3296, %v3247
        %v3314 = vmul.f32 %v3301, %v3262
        %v3315 = vmul.f32 %v3306, %v3277
        %v3316 = vmul.f32 %v3311, %v3292
        %3318 = vset.pattern.permute.xlu0 0
        %3319 = vperm.xlu0 %3318, %v3121
        %v3320 = vpop.permute.xlu0 %3319
        %3323 = vset.pattern.permute.xlu0 0
        %3324 = vperm.xlu0 %3323, %v3122
        %v3325 = vpop.permute.xlu0 %3324
        %3328 = vset.pattern.permute.xlu0 0
        %3329 = vperm.xlu0 %3328, %v3123
        %v3330 = vpop.permute.xlu0 %3329
        %3333 = vset.pattern.permute.xlu0 0
        %3334 = vperm.xlu0 %3333, %v3124
        %v3335 = vpop.permute.xlu0 %3334
        %v3337 = vadd.f32 %v3313, %v3320
        %v3338 = vadd.f32 %v3314, %v3325
        %v3339 = vadd.f32 %v3315, %v3330
        %v3340 = vadd.f32 %v3316, %v3335
        %3342 = vset.pattern.permute.xlu0 0
        %3343 = vperm.xlu0 %3342, %v3136
        %v3344 = vpop.permute.xlu0 %3343
        %3347 = vset.pattern.permute.xlu0 0
        %3348 = vperm.xlu0 %3347, %v3137
        %v3349 = vpop.permute.xlu0 %3348
        %3352 = vset.pattern.permute.xlu0 0
        %3353 = vperm.xlu0 %3352, %v3138
        %v3354 = vpop.permute.xlu0 %3353
        %3357 = vset.pattern.permute.xlu0 0
        %3358 = vperm.xlu0 %3357, %v3139
        %v3359 = vpop.permute.xlu0 %3358
        %v3361 = vmul.f32 %v3344, %v3337
        %v3362 = vmul.f32 %v3349, %v3338
        %v3363 = vmul.f32 %v3354, %v3339
        %v3364 = vmul.f32 %v3359, %v3340
        %v3365 = vmul.f32 %v3361, 0.31830987
        %v3366 = vmul.f32 %v3362, 0.31830987
        %v3367 = vmul.f32 %v3363, 0.31830987
        %v3368 = vmul.f32 %v3364, 0.31830987
        %v3369 = vadd.f32 %v3365, 0.5
        %v3370 = vadd.f32 %v3366, 0.5
        %v3371 = vadd.f32 %v3367, 0.5
        %v3372 = vadd.f32 %v3368, 0.5
        %v3373 = vfloor.f32 %v3369
        %v3374 = vfloor.f32 %v3370
        %v3375 = vfloor.f32 %v3371
        %v3376 = vfloor.f32 %v3372
        %v3377 = vmul.f32 %v3373, 3.1415927
        %v3378 = vmul.f32 %v3374, 3.1415927
        %v3379 = vmul.f32 %v3375, 3.1415927
        %v3380 = vmul.f32 %v3376, 3.1415927
        %v3381 = vsub.f32 %v3361, %v3377
        %v3382 = vsub.f32 %v3362, %v3378
        %v3383 = vsub.f32 %v3363, %v3379
        %v3384 = vsub.f32 %v3364, %v3380
        %v3385 = vmul.f32 %v3373, 0.5
        %v3386 = vmul.f32 %v3374, 0.5
        %v3387 = vmul.f32 %v3375, 0.5
        %v3388 = vmul.f32 %v3376, 0.5
        %v3389 = vfloor.f32 %v3385
        %v3390 = vfloor.f32 %v3386
        %v3391 = vfloor.f32 %v3387
        %v3392 = vfloor.f32 %v3388
        %v3393 = vmul.f32 %v3389, 2.0
        %v3394 = vmul.f32 %v3390, 2.0
        %v3395 = vmul.f32 %v3391, 2.0
        %v3396 = vmul.f32 %v3392, 2.0
        %v3397 = vsub.f32 %v3373, %v3393
        %v3398 = vsub.f32 %v3374, %v3394
        %v3399 = vsub.f32 %v3375, %v3395
        %v3400 = vsub.f32 %v3376, %v3396
        %v3401 = vmul.f32 %v3397, 2.0
        %v3402 = vmul.f32 %v3398, 2.0
        %v3403 = vmul.f32 %v3399, 2.0
        %v3404 = vmul.f32 %v3400, 2.0
        %v3405 = vsub.f32 1.0, %v3401
        %v3406 = vsub.f32 1.0, %v3402
        %v3407 = vsub.f32 1.0, %v3403
        %v3408 = vsub.f32 1.0, %v3404
        %v3409 = vmul.f32 %v3381, %v3381
        %v3410 = vmul.f32 %v3382, %v3382
        %v3411 = vmul.f32 %v3383, %v3383
        %v3412 = vmul.f32 %v3384, %v3384
        %v3413 = vmul.f32 %v3409, -2.5052108e-08
        %v3414 = vmul.f32 %v3410, -2.5052108e-08
        %v3415 = vmul.f32 %v3411, -2.5052108e-08
        %v3416 = vmul.f32 %v3412, -2.5052108e-08
        %v3417 = vadd.f32 %v3413, 2.7557319e-06
        %v3418 = vadd.f32 %v3414, 2.7557319e-06
        %v3419 = vadd.f32 %v3415, 2.7557319e-06
        %v3420 = vadd.f32 %v3416, 2.7557319e-06
        %v3421 = vmul.f32 %v3409, %v3417
        %v3422 = vmul.f32 %v3410, %v3418
        %v3423 = vmul.f32 %v3411, %v3419
        %v3424 = vmul.f32 %v3412, %v3420
        %v3425 = vadd.f32 %v3421, -0.0001984127
        %v3426 = vadd.f32 %v3422, -0.0001984127
        %v3427 = vadd.f32 %v3423, -0.0001984127
        %v3428 = vadd.f32 %v3424, -0.0001984127
        %v3429 = vmul.f32 %v3409, %v3425
        %v3430 = vmul.f32 %v3410, %v3426
        %v3431 = vmul.f32 %v3411, %v3427
        %v3432 = vmul.f32 %v3412, %v3428
        %v3433 = vadd.f32 %v3429, 0.008333334
        %v3434 = vadd.f32 %v3430, 0.008333334
        %v3435 = vadd.f32 %v3431, 0.008333334
        %v3436 = vadd.f32 %v3432, 0.008333334
        %v3437 = vmul.f32 %v3409, %v3433
        %v3438 = vmul.f32 %v3410, %v3434
        %v3439 = vmul.f32 %v3411, %v3435
        %v3440 = vmul.f32 %v3412, %v3436
        %v3441 = vadd.f32 %v3437, -0.16666667
        %v3442 = vadd.f32 %v3438, -0.16666667
        %v3443 = vadd.f32 %v3439, -0.16666667
        %v3444 = vadd.f32 %v3440, -0.16666667
        %v3445 = vmul.f32 %v3409, %v3441
        %v3446 = vmul.f32 %v3410, %v3442
        %v3447 = vmul.f32 %v3411, %v3443
        %v3448 = vmul.f32 %v3412, %v3444
        %v3449 = vadd.f32 %v3445, 1.0
        %v3450 = vadd.f32 %v3446, 1.0
        %v3451 = vadd.f32 %v3447, 1.0
        %v3452 = vadd.f32 %v3448, 1.0
        %v3453 = vmul.f32 %v3381, %v3449
        %v3454 = vmul.f32 %v3382, %v3450
        %v3455 = vmul.f32 %v3383, %v3451
        %v3456 = vmul.f32 %v3384, %v3452
        %v3457 = vmul.f32 %v3405, %v3453
        %v3458 = vmul.f32 %v3406, %v3454
        %v3459 = vmul.f32 %v3407, %v3455
        %v3460 = vmul.f32 %v3408, %v3456
        %v3461 = vmul.f32 %v3457, %v3457
        %v3462 = vmul.f32 %v3458, %v3458
        %v3463 = vmul.f32 %v3459, %v3459
        %v3464 = vmul.f32 %v3460, %v3460
        %v3465 = vrcp.pop %v3344
        %v3466 = vmul.f32 %v3344, %v3465
        %v3467 = vsub.f32 1.0, %v3466
        %v3468 = vmul.f32 %v3465, %v3467
        %v3469 = vadd.f32 %v3465, %v3468
        %vm3470 = vweird.f32 %v3344
        %vm3471 = vweird.f32 %v3465
        %vm3472 = vmor %vm3470, %vm3471
        %v3473 = vsel %vm3472, %v3465, %v3469
        %v3474 = vand.u32 2147483647, %v3344
        %vm3475 = vcmp.eq.f32.partialorder %v3474, 8.507059e+37
        %v3476 = vand.u32 %v3344, 2147483648
        %v3477 = vor.u32 1.1754944e-38, %v3476
        %v3478 = vsel %vm3475, %v3477, %v3473
        %v3479 = vmul.f32 %v3461, %v3478
        %v3480 = vrcp.pop %v3349
        %v3481 = vmul.f32 %v3349, %v3480
        %v3482 = vsub.f32 1.0, %v3481
        %v3483 = vmul.f32 %v3480, %v3482
        %v3484 = vadd.f32 %v3480, %v3483
        %vm3485 = vweird.f32 %v3349
        %vm3486 = vweird.f32 %v3480
        %vm3487 = vmor %vm3485, %vm3486
        %v3488 = vsel %vm3487, %v3480, %v3484
        %v3489 = vand.u32 2147483647, %v3349
        %vm3490 = vcmp.eq.f32.partialorder %v3489, 8.507059e+37
        %v3491 = vand.u32 %v3349, 2147483648
        %v3492 = vor.u32 1.1754944e-38, %v3491
        %v3493 = vsel %vm3490, %v3492, %v3488
        %v3494 = vmul.f32 %v3462, %v3493
        %v3495 = vrcp.pop %v3354
        %v3496 = vmul.f32 %v3354, %v3495
        %v3497 = vsub.f32 1.0, %v3496
        %v3498 = vmul.f32 %v3495, %v3497
        %v3499 = vadd.f32 %v3495, %v3498
        %vm3500 = vweird.f32 %v3354
        %vm3501 = vweird.f32 %v3495
        %vm3502 = vmor %vm3500, %vm3501
        %v3503 = vsel %vm3502, %v3495, %v3499
        %v3504 = vand.u32 2147483647, %v3354
        %vm3505 = vcmp.eq.f32.partialorder %v3504, 8.507059e+37
        %v3506 = vand.u32 %v3354, 2147483648
        %v3507 = vor.u32 1.1754944e-38, %v3506
        %v3508 = vsel %vm3505, %v3507, %v3503
        %v3509 = vmul.f32 %v3463, %v3508
        %v3510 = vrcp.pop %v3359
        %v3511 = vmul.f32 %v3359, %v3510
        %v3512 = vsub.f32 1.0, %v3511
        %v3513 = vmul.f32 %v3510, %v3512
        %v3514 = vadd.f32 %v3510, %v3513
        %vm3515 = vweird.f32 %v3359
        %vm3516 = vweird.f32 %v3510
        %vm3517 = vmor %vm3515, %vm3516
        %v3518 = vsel %vm3517, %v3510, %v3514
        %v3519 = vand.u32 2147483647, %v3359
        %vm3520 = vcmp.eq.f32.partialorder %v3519, 8.507059e+37
        %v3521 = vand.u32 %v3359, 2147483648
        %v3522 = vor.u32 1.1754944e-38, %v3521
        %v3523 = vsel %vm3520, %v3522, %v3518
        %v3524 = vmul.f32 %v3464, %v3523
        %v3525 = vadd.f32 %v3337, %v3479
        %v3526 = vadd.f32 %v3338, %v3494
        %v3527 = vadd.f32 %v3339, %v3509
        %v3528 = vadd.f32 %v3340, %v3524
        %s3529 = scalar_lea.vmem %s5, 128
        %v3530 = vld [vmem:[%s3529] sm:$0xff]
        %v3531 = vld [vmem:[%s3529 + $0x8] sm:$0xff]
        %v3532 = vld [vmem:[%s3529 + $0x10] sm:$0xff]
        %v3533 = vld [vmem:[%s3529 + $0x18] sm:$0xff]
        %v3534 = vld [vmem:[%s3529 + $0x20] sm:$0xff]
        %v3535 = vld [vmem:[%s3529 + $0x28] sm:$0xff]
        %v3536 = vld [vmem:[%s3529 + $0x30] sm:$0xff]
        %v3537 = vld [vmem:[%s3529 + $0x38] sm:$0xff]
        %s3538 = scalar_lea.vmem %s6, 64
        %v3539 = vld [vmem:[%s3538] sm:$0xff]
        %v3540 = vld [vmem:[%s3538 + $0x8] sm:$0xff]
        %v3541 = vld [vmem:[%s3538 + $0x10] sm:$0xff]
        %v3542 = vld [vmem:[%s3538 + $0x18] sm:$0xff]
        %3543 = vrot.lane.b32.xlu0 %v3525, 15
        %v3544 = vpop.permute.xlu0 %3543
        %3545 = vrot.lane.b32.xlu0 %v3526, 15
        %v3546 = vpop.permute.xlu0 %3545
        %3547 = vrot.lane.b32.xlu0 %v3527, 15
        %v3548 = vpop.permute.xlu0 %3547
        %3549 = vrot.lane.b32.xlu0 %v3528, 15
        %v3550 = vpop.permute.xlu0 %3549
        %vm3551 = vcmp.ge.s32.totalorder %v518, 15
        %v3552 = vsel %vm3551, %v3544, 0.0
        %v3553 = vsel %vm3551, %v3546, 0.0
        %v3554 = vsel %vm3551, %v3548, 0.0
        %v3555 = vsel %vm3551, %v3550, 0.0
        %3556 = vrot.lane.b32.xlu0 %v3525, 10
        %v3557 = vpop.permute.xlu0 %3556
        %3558 = vrot.lane.b32.xlu0 %v3526, 10
        %v3559 = vpop.permute.xlu0 %3558
        %3560 = vrot.lane.b32.xlu0 %v3527, 10
        %v3561 = vpop.permute.xlu0 %3560
        %3562 = vrot.lane.b32.xlu0 %v3528, 10
        %v3563 = vpop.permute.xlu0 %3562
        %vm3564 = vcmp.ge.s32.totalorder %v518, 10
        %v3565 = vsel %vm3564, %v3557, 0.0
        %v3566 = vsel %vm3564, %v3559, 0.0
        %v3567 = vsel %vm3564, %v3561, 0.0
        %v3568 = vsel %vm3564, %v3563, 0.0
        %3569 = vrot.lane.b32.xlu0 %v3525, 5
        %v3570 = vpop.permute.xlu0 %3569
        %3571 = vrot.lane.b32.xlu0 %v3526, 5
        %v3572 = vpop.permute.xlu0 %3571
        %3573 = vrot.lane.b32.xlu0 %v3527, 5
        %v3574 = vpop.permute.xlu0 %3573
        %3575 = vrot.lane.b32.xlu0 %v3528, 5
        %v3576 = vpop.permute.xlu0 %3575
        %vm3577 = vcmp.ge.s32.totalorder %v518, 5
        %v3578 = vsel %vm3577, %v3570, 0.0
        %v3579 = vsel %vm3577, %v3572, 0.0
        %v3580 = vsel %vm3577, %v3574, 0.0
        %v3581 = vsel %vm3577, %v3576, 0.0
        %3582 = vrot.lane.b32.xlu0 %v3525, 123
        %v3583 = vpop.permute.xlu0 %3582
        %3584 = vrot.lane.b32.xlu0 %v3526, 123
        %v3585 = vpop.permute.xlu0 %3584
        %3586 = vrot.lane.b32.xlu0 %v3527, 123
        %v3587 = vpop.permute.xlu0 %3586
        %3588 = vrot.lane.b32.xlu0 %v3528, 123
        %v3589 = vpop.permute.xlu0 %3588
        %vm3590 = vcmp.lt.s32.totalorder %v518, 123
        %v3591 = vsel %vm3590, %v3583, 0.0
        %v3592 = vsel %vm3590, %v3585, 0.0
        %v3593 = vsel %vm3590, %v3587, 0.0
        %v3594 = vsel %vm3590, %v3589, 0.0
        %3595 = vrot.lane.b32.xlu0 %v3525, 118
        %v3596 = vpop.permute.xlu0 %3595
        %3597 = vrot.lane.b32.xlu0 %v3526, 118
        %v3598 = vpop.permute.xlu0 %3597
        %3599 = vrot.lane.b32.xlu0 %v3527, 118
        %v3600 = vpop.permute.xlu0 %3599
        %3601 = vrot.lane.b32.xlu0 %v3528, 118
        %v3602 = vpop.permute.xlu0 %3601
        %vm3603 = vcmp.lt.s32.totalorder %v518, 118
        %v3604 = vsel %vm3603, %v3596, 0.0
        %v3605 = vsel %vm3603, %v3598, 0.0
        %v3606 = vsel %vm3603, %v3600, 0.0
        %v3607 = vsel %vm3603, %v3602, 0.0
        %3608 = vrot.lane.b32.xlu0 %v3525, 113
        %v3609 = vpop.permute.xlu0 %3608
        %3610 = vrot.lane.b32.xlu0 %v3526, 113
        %v3611 = vpop.permute.xlu0 %3610
        %3612 = vrot.lane.b32.xlu0 %v3527, 113
        %v3613 = vpop.permute.xlu0 %3612
        %3614 = vrot.lane.b32.xlu0 %v3528, 113
        %v3615 = vpop.permute.xlu0 %3614
        %vm3616 = vcmp.lt.s32.totalorder %v518, 113
        %v3617 = vsel %vm3616, %v3609, 0.0
        %v3618 = vsel %vm3616, %v3611, 0.0
        %v3619 = vsel %vm3616, %v3613, 0.0
        %v3620 = vsel %vm3616, %v3615, 0.0
        %3622 = vset.pattern.permute.xlu0 0
        %3623 = vperm.xlu0 %3622, %v3539
        %v3624 = vpop.permute.xlu0 %3623
        %3627 = vset.pattern.permute.xlu0 0
        %3628 = vperm.xlu0 %3627, %v3540
        %v3629 = vpop.permute.xlu0 %3628
        %3632 = vset.pattern.permute.xlu0 0
        %3633 = vperm.xlu0 %3632, %v3541
        %v3634 = vpop.permute.xlu0 %3633
        %3637 = vset.pattern.permute.xlu0 0
        %3638 = vperm.xlu0 %3637, %v3542
        %v3639 = vpop.permute.xlu0 %3638
        %v3642 = vsel %vm1324, %v3531, 0
        %v3645 = vsel %vm1324, %v3533, 0
        %v3648 = vsel %vm1324, %v3535, 0
        %v3651 = vsel %vm1324, %v3537, 0
        %3653 = vmatpush.msra.mxu0 %v3528
        %3654 = vmatpush.msra.mxu0 %v3527
        %3655 = vmatpush.msra.mxu0 %v3526
        %3656 = vmatpush.msra.mxu0 %v3525
        %3657 = vmatpush.msra.mxu0 %v3581
        %3658 = vmatpush.msra.mxu0 %v3580
        %3659 = vmatpush.msra.mxu0 %v3579
        %3660 = vmatpush.msra.mxu0 %v3578
        %3661 = vmatpush.msra.mxu0 %v3568
        %3662 = vmatpush.msra.mxu0 %v3567
        %3663 = vmatpush.msra.mxu0 %v3566
        %3664 = vmatpush.msra.mxu0 %v3565
        %3665 = vmatpush.msra.mxu0 %v3555
        %3666 = vmatpush.msra.mxu0 %v3554
        %3667 = vmatpush.msra.mxu0 %v3553
        %3668 = vmatpush.msra.mxu0 %v3552
        %3669 = vmatmul.f32.gmra.mxu0 %v3530
        %v3670 = vpop.f32.mrf.mxu0
        %v3671 = vadd.f32 %v3624, %v3670
        %3672 = vmatmul.f32.gmra.mxu0 %v3532
        %v3673 = vpop.f32.mrf.mxu0
        %v3674 = vadd.f32 %v3629, %v3673
        %3675 = vmatmul.f32.gmra.mxu0 %v3534
        %v3676 = vpop.f32.mrf.mxu0
        %v3677 = vadd.f32 %v3634, %v3676
        %3678 = vmatmul.f32.gmra.mxu0 %v3536
        %v3679 = vpop.f32.mrf.mxu0
        %v3680 = vadd.f32 %v3639, %v3679
        %3681 = vdwg.mxu0
        %3682 = vmatpush.msra.mxu0 0.0
        %3683 = vmatpush.msra.mxu0 0.0
        %3684 = vmatpush.msra.mxu0 0.0
        %3685 = vmatpush.msra.mxu0 0.0
        %3686 = vmatpush.msra.mxu0 %v3620
        %3687 = vmatpush.msra.mxu0 %v3619
        %3688 = vmatpush.msra.mxu0 %v3618
        %3689 = vmatpush.msra.mxu0 %v3617
        %3690 = vmatpush.msra.mxu0 %v3607
        %3691 = vmatpush.msra.mxu0 %v3606
        %3692 = vmatpush.msra.mxu0 %v3605
        %3693 = vmatpush.msra.mxu0 %v3604
        %3694 = vmatpush.msra.mxu0 %v3594
        %3695 = vmatpush.msra.mxu0 %v3593
        %3696 = vmatpush.msra.mxu0 %v3592
        %3697 = vmatpush.msra.mxu0 %v3591
        %3698 = vmatmul.f32.gmra.mxu0 %v3642
        %v3699 = vpop.f32.mrf.mxu0
        %v3700 = vadd.f32 %v3671, %v3699
        %3701 = vmatmul.f32.gmra.mxu0 %v3645
        %v3702 = vpop.f32.mrf.mxu0
        %v3703 = vadd.f32 %v3674, %v3702
        %3704 = vmatmul.f32.gmra.mxu0 %v3648
        %v3705 = vpop.f32.mrf.mxu0
        %v3706 = vadd.f32 %v3677, %v3705
        %3707 = vmatmul.f32.gmra.mxu0 %v3651
        %v3708 = vpop.f32.mrf.mxu0
        %v3709 = vadd.f32 %v3680, %v3708
        %3710 = vdwg.mxu0
        %v3711 = vadd.f32 %v3126, 1.0
        %v3712 = vadd.f32 %v3127, 1.0
        %v3713 = vadd.f32 %v3128, 1.0
        %v3714 = vadd.f32 %v3129, 1.0
        %3715 = vadd.xlane.f32.xlu0 %v3700
        %v3716 = vpop.xlane.xlu0 %3715
        %3717 = vadd.xlane.f32.xlu0 %v3703
        %v3718 = vpop.xlane.xlu0 %3717
        %3719 = vadd.xlane.f32.xlu0 %v3706
        %v3720 = vpop.xlane.xlu0 %3719
        %3721 = vadd.xlane.f32.xlu0 %v3709
        %v3722 = vpop.xlane.xlu0 %3721
        %v3723 = vmul.f32 %v3716, %v847
        %v3724 = vmul.f32 %v3718, %v847
        %v3725 = vmul.f32 %v3720, %v847
        %v3726 = vmul.f32 %v3722, %v847
        %v3727 = vsub.f32 %v3700, %v3723
        %v3728 = vsub.f32 %v3703, %v3724
        %v3729 = vsub.f32 %v3706, %v3725
        %v3730 = vsub.f32 %v3709, %v3726
        %v3731 = vmul.f32 %v3727, %v3727
        %v3732 = vmul.f32 %v3728, %v3728
        %v3733 = vmul.f32 %v3729, %v3729
        %v3734 = vmul.f32 %v3730, %v3730
        %3735 = vadd.xlane.f32.xlu0 %v3731
        %v3736 = vpop.xlane.xlu0 %3735
        %3737 = vadd.xlane.f32.xlu0 %v3732
        %v3738 = vpop.xlane.xlu0 %3737
        %3739 = vadd.xlane.f32.xlu0 %v3733
        %v3740 = vpop.xlane.xlu0 %3739
        %3741 = vadd.xlane.f32.xlu0 %v3734
        %v3742 = vpop.xlane.xlu0 %3741
        %v3743 = vmul.f32 %v3736, %v847
        %v3744 = vmul.f32 %v3738, %v847
        %v3745 = vmul.f32 %v3740, %v847
        %v3746 = vmul.f32 %v3742, %v847
        %v3747 = vadd.f32 %v3743, 1e-05
        %v3748 = vadd.f32 %v3744, 1e-05
        %v3749 = vadd.f32 %v3745, 1e-05
        %v3750 = vadd.f32 %v3746, 1e-05
        %v3751 = vrsqrt.pop %v3747
        %v3752 = vmul.f32 %v3751, %v3747
        %v3753 = vmul.f32 %v3752, %v3751
        %v3754 = vmul.f32 0.5, %v3753
        %v3755 = vsub.f32 1.5, %v3754
        %v3756 = vmul.f32 %v3751, %v3755
        %v3757 = vmul.f32 %v3747, %v3756
        %vm3758 = vcmp.eq.f32.partialorder %v3747, inf
        %v3759 = vsel %vm3758, %v3747, %v3757
        %vm3760 = vcmp.eq.f32.partialorder %v3747, 0.0
        %v3761 = vand.u32 %v3747, 2147483648
        %v3762 = vsel %vm3760, %v3761, %v3759
        %v3763 = vrsqrt.pop %v3748
        %v3764 = vmul.f32 %v3763, %v3748
        %v3765 = vmul.f32 %v3764, %v3763
        %v3766 = vmul.f32 0.5, %v3765
        %v3767 = vsub.f32 1.5, %v3766
        %v3768 = vmul.f32 %v3763, %v3767
        %v3769 = vmul.f32 %v3748, %v3768
        %vm3770 = vcmp.eq.f32.partialorder %v3748, inf
        %v3771 = vsel %vm3770, %v3748, %v3769
        %vm3772 = vcmp.eq.f32.partialorder %v3748, 0.0
        %v3773 = vand.u32 %v3748, 2147483648
        %v3774 = vsel %vm3772, %v3773, %v3771
        %v3775 = vrsqrt.pop %v3749
        %v3776 = vmul.f32 %v3775, %v3749
        %v3777 = vmul.f32 %v3776, %v3775
        %v3778 = vmul.f32 0.5, %v3777
        %v3779 = vsub.f32 1.5, %v3778
        %v3780 = vmul.f32 %v3775, %v3779
        %v3781 = vmul.f32 %v3749, %v3780
        %vm3782 = vcmp.eq.f32.partialorder %v3749, inf
        %v3783 = vsel %vm3782, %v3749, %v3781
        %vm3784 = vcmp.eq.f32.partialorder %v3749, 0.0
        %v3785 = vand.u32 %v3749, 2147483648
        %v3786 = vsel %vm3784, %v3785, %v3783
        %v3787 = vrsqrt.pop %v3750
        %v3788 = vmul.f32 %v3787, %v3750
        %v3789 = vmul.f32 %v3788, %v3787
        %v3790 = vmul.f32 0.5, %v3789
        %v3791 = vsub.f32 1.5, %v3790
        %v3792 = vmul.f32 %v3787, %v3791
        %v3793 = vmul.f32 %v3750, %v3792
        %vm3794 = vcmp.eq.f32.partialorder %v3750, inf
        %v3795 = vsel %vm3794, %v3750, %v3793
        %vm3796 = vcmp.eq.f32.partialorder %v3750, 0.0
        %v3797 = vand.u32 %v3750, 2147483648
        %v3798 = vsel %vm3796, %v3797, %v3795
        %v3799 = vrcp.pop %v3762
        %v3800 = vmul.f32 %v3762, %v3799
        %v3801 = vsub.f32 1.0, %v3800
        %v3802 = vmul.f32 %v3799, %v3801
        %v3803 = vadd.f32 %v3799, %v3802
        %vm3804 = vweird.f32 %v3762
        %vm3805 = vweird.f32 %v3799
        %vm3806 = vmor %vm3804, %vm3805
        %v3807 = vsel %vm3806, %v3799, %v3803
        %v3808 = vand.u32 2147483647, %v3762
        %vm3809 = vcmp.eq.f32.partialorder %v3808, 8.507059e+37
        %v3810 = vand.u32 %v3762, 2147483648
        %v3811 = vor.u32 1.1754944e-38, %v3810
        %v3812 = vsel %vm3809, %v3811, %v3807
        %v3813 = vmul.f32 %v3727, %v3812
        %v3814 = vrcp.pop %v3774
        %v3815 = vmul.f32 %v3774, %v3814
        %v3816 = vsub.f32 1.0, %v3815
        %v3817 = vmul.f32 %v3814, %v3816
        %v3818 = vadd.f32 %v3814, %v3817
        %vm3819 = vweird.f32 %v3774
        %vm3820 = vweird.f32 %v3814
        %vm3821 = vmor %vm3819, %vm3820
        %v3822 = vsel %vm3821, %v3814, %v3818
        %v3823 = vand.u32 2147483647, %v3774
        %vm3824 = vcmp.eq.f32.partialorder %v3823, 8.507059e+37
        %v3825 = vand.u32 %v3774, 2147483648
        %v3826 = vor.u32 1.1754944e-38, %v3825
        %v3827 = vsel %vm3824, %v3826, %v3822
        %v3828 = vmul.f32 %v3728, %v3827
        %v3829 = vrcp.pop %v3786
        %v3830 = vmul.f32 %v3786, %v3829
        %v3831 = vsub.f32 1.0, %v3830
        %v3832 = vmul.f32 %v3829, %v3831
        %v3833 = vadd.f32 %v3829, %v3832
        %vm3834 = vweird.f32 %v3786
        %vm3835 = vweird.f32 %v3829
        %vm3836 = vmor %vm3834, %vm3835
        %v3837 = vsel %vm3836, %v3829, %v3833
        %v3838 = vand.u32 2147483647, %v3786
        %vm3839 = vcmp.eq.f32.partialorder %v3838, 8.507059e+37
        %v3840 = vand.u32 %v3786, 2147483648
        %v3841 = vor.u32 1.1754944e-38, %v3840
        %v3842 = vsel %vm3839, %v3841, %v3837
        %v3843 = vmul.f32 %v3729, %v3842
        %v3844 = vrcp.pop %v3798
        %v3845 = vmul.f32 %v3798, %v3844
        %v3846 = vsub.f32 1.0, %v3845
        %v3847 = vmul.f32 %v3844, %v3846
        %v3848 = vadd.f32 %v3844, %v3847
        %vm3849 = vweird.f32 %v3798
        %vm3850 = vweird.f32 %v3844
        %vm3851 = vmor %vm3849, %vm3850
        %v3852 = vsel %vm3851, %v3844, %v3848
        %v3853 = vand.u32 2147483647, %v3798
        %vm3854 = vcmp.eq.f32.partialorder %v3853, 8.507059e+37
        %v3855 = vand.u32 %v3798, 2147483648
        %v3856 = vor.u32 1.1754944e-38, %v3855
        %v3857 = vsel %vm3854, %v3856, %v3852
        %v3858 = vmul.f32 %v3730, %v3857
        %3860 = vset.pattern.permute.xlu0 0
        %3861 = vperm.xlu0 %3860, %v3711
        %v3862 = vpop.permute.xlu0 %3861
        %3865 = vset.pattern.permute.xlu0 0
        %3866 = vperm.xlu0 %3865, %v3712
        %v3867 = vpop.permute.xlu0 %3866
        %3870 = vset.pattern.permute.xlu0 0
        %3871 = vperm.xlu0 %3870, %v3713
        %v3872 = vpop.permute.xlu0 %3871
        %3875 = vset.pattern.permute.xlu0 0
        %3876 = vperm.xlu0 %3875, %v3714
        %v3877 = vpop.permute.xlu0 %3876
        %v3879 = vmul.f32 %v3862, %v3813
        %v3880 = vmul.f32 %v3867, %v3828
        %v3881 = vmul.f32 %v3872, %v3843
        %v3882 = vmul.f32 %v3877, %v3858
        %3884 = vset.pattern.permute.xlu0 0
        %3885 = vperm.xlu0 %3884, %v3131
        %v3886 = vpop.permute.xlu0 %3885
        %3889 = vset.pattern.permute.xlu0 0
        %3890 = vperm.xlu0 %3889, %v3132
        %v3891 = vpop.permute.xlu0 %3890
        %3894 = vset.pattern.permute.xlu0 0
        %3895 = vperm.xlu0 %3894, %v3133
        %v3896 = vpop.permute.xlu0 %3895
        %3899 = vset.pattern.permute.xlu0 0
        %3900 = vperm.xlu0 %3899, %v3134
        %v3901 = vpop.permute.xlu0 %3900
        %v3903 = vadd.f32 %v3879, %v3886
        %v3904 = vadd.f32 %v3880, %v3891
        %v3905 = vadd.f32 %v3881, %v3896
        %v3906 = vadd.f32 %v3882, %v3901
        %3908 = vset.pattern.permute.xlu0 0
        %3909 = vperm.xlu0 %3908, %v3141
        %v3910 = vpop.permute.xlu0 %3909
        %3913 = vset.pattern.permute.xlu0 0
        %3914 = vperm.xlu0 %3913, %v3142
        %v3915 = vpop.permute.xlu0 %3914
        %3918 = vset.pattern.permute.xlu0 0
        %3919 = vperm.xlu0 %3918, %v3143
        %v3920 = vpop.permute.xlu0 %3919
        %3923 = vset.pattern.permute.xlu0 0
        %3924 = vperm.xlu0 %3923, %v3144
        %v3925 = vpop.permute.xlu0 %3924
        %v3927 = vmul.f32 %v3910, %v3903
        %v3928 = vmul.f32 %v3915, %v3904
        %v3929 = vmul.f32 %v3920, %v3905
        %v3930 = vmul.f32 %v3925, %v3906
        %v3931 = vmul.f32 %v3927, 0.31830987
        %v3932 = vmul.f32 %v3928, 0.31830987
        %v3933 = vmul.f32 %v3929, 0.31830987
        %v3934 = vmul.f32 %v3930, 0.31830987
        %v3935 = vadd.f32 %v3931, 0.5
        %v3936 = vadd.f32 %v3932, 0.5
        %v3937 = vadd.f32 %v3933, 0.5
        %v3938 = vadd.f32 %v3934, 0.5
        %v3939 = vfloor.f32 %v3935
        %v3940 = vfloor.f32 %v3936
        %v3941 = vfloor.f32 %v3937
        %v3942 = vfloor.f32 %v3938
        %v3943 = vmul.f32 %v3939, 3.1415927
        %v3944 = vmul.f32 %v3940, 3.1415927
        %v3945 = vmul.f32 %v3941, 3.1415927
        %v3946 = vmul.f32 %v3942, 3.1415927
        %v3947 = vsub.f32 %v3927, %v3943
        %v3948 = vsub.f32 %v3928, %v3944
        %v3949 = vsub.f32 %v3929, %v3945
        %v3950 = vsub.f32 %v3930, %v3946
        %v3951 = vmul.f32 %v3939, 0.5
        %v3952 = vmul.f32 %v3940, 0.5
        %v3953 = vmul.f32 %v3941, 0.5
        %v3954 = vmul.f32 %v3942, 0.5
        %v3955 = vfloor.f32 %v3951
        %v3956 = vfloor.f32 %v3952
        %v3957 = vfloor.f32 %v3953
        %v3958 = vfloor.f32 %v3954
        %v3959 = vmul.f32 %v3955, 2.0
        %v3960 = vmul.f32 %v3956, 2.0
        %v3961 = vmul.f32 %v3957, 2.0
        %v3962 = vmul.f32 %v3958, 2.0
        %v3963 = vsub.f32 %v3939, %v3959
        %v3964 = vsub.f32 %v3940, %v3960
        %v3965 = vsub.f32 %v3941, %v3961
        %v3966 = vsub.f32 %v3942, %v3962
        %v3967 = vmul.f32 %v3963, 2.0
        %v3968 = vmul.f32 %v3964, 2.0
        %v3969 = vmul.f32 %v3965, 2.0
        %v3970 = vmul.f32 %v3966, 2.0
        %v3971 = vsub.f32 1.0, %v3967
        %v3972 = vsub.f32 1.0, %v3968
        %v3973 = vsub.f32 1.0, %v3969
        %v3974 = vsub.f32 1.0, %v3970
        %v3975 = vmul.f32 %v3947, %v3947
        %v3976 = vmul.f32 %v3948, %v3948
        %v3977 = vmul.f32 %v3949, %v3949
        %v3978 = vmul.f32 %v3950, %v3950
        %v3979 = vmul.f32 %v3975, -2.5052108e-08
        %v3980 = vmul.f32 %v3976, -2.5052108e-08
        %v3981 = vmul.f32 %v3977, -2.5052108e-08
        %v3982 = vmul.f32 %v3978, -2.5052108e-08
        %v3983 = vadd.f32 %v3979, 2.7557319e-06
        %v3984 = vadd.f32 %v3980, 2.7557319e-06
        %v3985 = vadd.f32 %v3981, 2.7557319e-06
        %v3986 = vadd.f32 %v3982, 2.7557319e-06
        %v3987 = vmul.f32 %v3975, %v3983
        %v3988 = vmul.f32 %v3976, %v3984
        %v3989 = vmul.f32 %v3977, %v3985
        %v3990 = vmul.f32 %v3978, %v3986
        %v3991 = vadd.f32 %v3987, -0.0001984127
        %v3992 = vadd.f32 %v3988, -0.0001984127
        %v3993 = vadd.f32 %v3989, -0.0001984127
        %v3994 = vadd.f32 %v3990, -0.0001984127
        %v3995 = vmul.f32 %v3975, %v3991
        %v3996 = vmul.f32 %v3976, %v3992
        %v3997 = vmul.f32 %v3977, %v3993
        %v3998 = vmul.f32 %v3978, %v3994
        %v3999 = vadd.f32 %v3995, 0.008333334
        %v4000 = vadd.f32 %v3996, 0.008333334
        %v4001 = vadd.f32 %v3997, 0.008333334
        %v4002 = vadd.f32 %v3998, 0.008333334
        %v4003 = vmul.f32 %v3975, %v3999
        %v4004 = vmul.f32 %v3976, %v4000
        %v4005 = vmul.f32 %v3977, %v4001
        %v4006 = vmul.f32 %v3978, %v4002
        %v4007 = vadd.f32 %v4003, -0.16666667
        %v4008 = vadd.f32 %v4004, -0.16666667
        %v4009 = vadd.f32 %v4005, -0.16666667
        %v4010 = vadd.f32 %v4006, -0.16666667
        %v4011 = vmul.f32 %v3975, %v4007
        %v4012 = vmul.f32 %v3976, %v4008
        %v4013 = vmul.f32 %v3977, %v4009
        %v4014 = vmul.f32 %v3978, %v4010
        %v4015 = vadd.f32 %v4011, 1.0
        %v4016 = vadd.f32 %v4012, 1.0
        %v4017 = vadd.f32 %v4013, 1.0
        %v4018 = vadd.f32 %v4014, 1.0
        %v4019 = vmul.f32 %v3947, %v4015
        %v4020 = vmul.f32 %v3948, %v4016
        %v4021 = vmul.f32 %v3949, %v4017
        %v4022 = vmul.f32 %v3950, %v4018
        %v4023 = vmul.f32 %v3971, %v4019
        %v4024 = vmul.f32 %v3972, %v4020
        %v4025 = vmul.f32 %v3973, %v4021
        %v4026 = vmul.f32 %v3974, %v4022
        %v4027 = vmul.f32 %v4023, %v4023
        %v4028 = vmul.f32 %v4024, %v4024
        %v4029 = vmul.f32 %v4025, %v4025
        %v4030 = vmul.f32 %v4026, %v4026
        %v4031 = vrcp.pop %v3910
        %v4032 = vmul.f32 %v3910, %v4031
        %v4033 = vsub.f32 1.0, %v4032
        %v4034 = vmul.f32 %v4031, %v4033
        %v4035 = vadd.f32 %v4031, %v4034
        %vm4036 = vweird.f32 %v3910
        %vm4037 = vweird.f32 %v4031
        %vm4038 = vmor %vm4036, %vm4037
        %v4039 = vsel %vm4038, %v4031, %v4035
        %v4040 = vand.u32 2147483647, %v3910
        %vm4041 = vcmp.eq.f32.partialorder %v4040, 8.507059e+37
        %v4042 = vand.u32 %v3910, 2147483648
        %v4043 = vor.u32 1.1754944e-38, %v4042
        %v4044 = vsel %vm4041, %v4043, %v4039
        %v4045 = vmul.f32 %v4027, %v4044
        %v4046 = vrcp.pop %v3915
        %v4047 = vmul.f32 %v3915, %v4046
        %v4048 = vsub.f32 1.0, %v4047
        %v4049 = vmul.f32 %v4046, %v4048
        %v4050 = vadd.f32 %v4046, %v4049
        %vm4051 = vweird.f32 %v3915
        %vm4052 = vweird.f32 %v4046
        %vm4053 = vmor %vm4051, %vm4052
        %v4054 = vsel %vm4053, %v4046, %v4050
        %v4055 = vand.u32 2147483647, %v3915
        %vm4056 = vcmp.eq.f32.partialorder %v4055, 8.507059e+37
        %v4057 = vand.u32 %v3915, 2147483648
        %v4058 = vor.u32 1.1754944e-38, %v4057
        %v4059 = vsel %vm4056, %v4058, %v4054
        %v4060 = vmul.f32 %v4028, %v4059
        %v4061 = vrcp.pop %v3920
        %v4062 = vmul.f32 %v3920, %v4061
        %v4063 = vsub.f32 1.0, %v4062
        %v4064 = vmul.f32 %v4061, %v4063
        %v4065 = vadd.f32 %v4061, %v4064
        %vm4066 = vweird.f32 %v3920
        %vm4067 = vweird.f32 %v4061
        %vm4068 = vmor %vm4066, %vm4067
        %v4069 = vsel %vm4068, %v4061, %v4065
        %v4070 = vand.u32 2147483647, %v3920
        %vm4071 = vcmp.eq.f32.partialorder %v4070, 8.507059e+37
        %v4072 = vand.u32 %v3920, 2147483648
        %v4073 = vor.u32 1.1754944e-38, %v4072
        %v4074 = vsel %vm4071, %v4073, %v4069
        %v4075 = vmul.f32 %v4029, %v4074
        %v4076 = vrcp.pop %v3925
        %v4077 = vmul.f32 %v3925, %v4076
        %v4078 = vsub.f32 1.0, %v4077
        %v4079 = vmul.f32 %v4076, %v4078
        %v4080 = vadd.f32 %v4076, %v4079
        %vm4081 = vweird.f32 %v3925
        %vm4082 = vweird.f32 %v4076
        %vm4083 = vmor %vm4081, %vm4082
        %v4084 = vsel %vm4083, %v4076, %v4080
        %v4085 = vand.u32 2147483647, %v3925
        %vm4086 = vcmp.eq.f32.partialorder %v4085, 8.507059e+37
        %v4087 = vand.u32 %v3925, 2147483648
        %v4088 = vor.u32 1.1754944e-38, %v4087
        %v4089 = vsel %vm4086, %v4088, %v4084
        %v4090 = vmul.f32 %v4030, %v4089
        %v4091 = vadd.f32 %v3903, %v4045
        %v4092 = vadd.f32 %v3904, %v4060
        %v4093 = vadd.f32 %v3905, %v4075
        %v4094 = vadd.f32 %v3906, %v4090
        %s4095 = scalar_lea.vmem %s7, 128
        %v4096 = vld [vmem:[%s4095] sm:$0xff]
        %v4097 = vld [vmem:[%s4095 + $0x8] sm:$0xff]
        %v4098 = vld [vmem:[%s4095 + $0x10] sm:$0xff]
        %v4099 = vld [vmem:[%s4095 + $0x18] sm:$0xff]
        %v4100 = vld [vmem:[%s4095 + $0x20] sm:$0xff]
        %v4101 = vld [vmem:[%s4095 + $0x28] sm:$0xff]
        %v4102 = vld [vmem:[%s4095 + $0x30] sm:$0xff]
        %v4103 = vld [vmem:[%s4095 + $0x38] sm:$0xff]
        %s4104 = scalar_lea.vmem %s8, 64
        %v4105 = vld [vmem:[%s4104] sm:$0xff]
        %v4106 = vld [vmem:[%s4104 + $0x8] sm:$0xff]
        %v4107 = vld [vmem:[%s4104 + $0x10] sm:$0xff]
        %v4108 = vld [vmem:[%s4104 + $0x18] sm:$0xff]
        %4109 = vrot.lane.b32.xlu0 %v4091, 3
        %v4110 = vpop.permute.xlu0 %4109
        %4111 = vrot.lane.b32.xlu0 %v4092, 3
        %v4112 = vpop.permute.xlu0 %4111
        %4113 = vrot.lane.b32.xlu0 %v4093, 3
        %v4114 = vpop.permute.xlu0 %4113
        %4115 = vrot.lane.b32.xlu0 %v4094, 3
        %v4116 = vpop.permute.xlu0 %4115
        %v4117 = vsel %vm531, %v4110, 0.0
        %v4118 = vsel %vm531, %v4112, 0.0
        %v4119 = vsel %vm531, %v4114, 0.0
        %v4120 = vsel %vm531, %v4116, 0.0
        %4121 = vrot.lane.b32.xlu0 %v4091, 2
        %v4122 = vpop.permute.xlu0 %4121
        %4123 = vrot.lane.b32.xlu0 %v4092, 2
        %v4124 = vpop.permute.xlu0 %4123
        %4125 = vrot.lane.b32.xlu0 %v4093, 2
        %v4126 = vpop.permute.xlu0 %4125
        %4127 = vrot.lane.b32.xlu0 %v4094, 2
        %v4128 = vpop.permute.xlu0 %4127
        %v4129 = vsel %vm572, %v4122, 0.0
        %v4130 = vsel %vm572, %v4124, 0.0
        %v4131 = vsel %vm572, %v4126, 0.0
        %v4132 = vsel %vm572, %v4128, 0.0
        %4133 = vrot.lane.b32.xlu0 %v4091, 1
        %v4134 = vpop.permute.xlu0 %4133
        %4135 = vrot.lane.b32.xlu0 %v4092, 1
        %v4136 = vpop.permute.xlu0 %4135
        %4137 = vrot.lane.b32.xlu0 %v4093, 1
        %v4138 = vpop.permute.xlu0 %4137
        %4139 = vrot.lane.b32.xlu0 %v4094, 1
        %v4140 = vpop.permute.xlu0 %4139
        %v4141 = vsel %vm609, %v4134, 0.0
        %v4142 = vsel %vm609, %v4136, 0.0
        %v4143 = vsel %vm609, %v4138, 0.0
        %v4144 = vsel %vm609, %v4140, 0.0
        %4145 = vrot.lane.b32.xlu0 %v4091, 127
        %v4146 = vpop.permute.xlu0 %4145
        %4147 = vrot.lane.b32.xlu0 %v4092, 127
        %v4148 = vpop.permute.xlu0 %4147
        %4149 = vrot.lane.b32.xlu0 %v4093, 127
        %v4150 = vpop.permute.xlu0 %4149
        %4151 = vrot.lane.b32.xlu0 %v4094, 127
        %v4152 = vpop.permute.xlu0 %4151
        %v4153 = vsel %vm670, %v4146, 0.0
        %v4154 = vsel %vm670, %v4148, 0.0
        %v4155 = vsel %vm670, %v4150, 0.0
        %v4156 = vsel %vm670, %v4152, 0.0
        %4157 = vrot.lane.b32.xlu0 %v4091, 126
        %v4158 = vpop.permute.xlu0 %4157
        %4159 = vrot.lane.b32.xlu0 %v4092, 126
        %v4160 = vpop.permute.xlu0 %4159
        %4161 = vrot.lane.b32.xlu0 %v4093, 126
        %v4162 = vpop.permute.xlu0 %4161
        %4163 = vrot.lane.b32.xlu0 %v4094, 126
        %v4164 = vpop.permute.xlu0 %4163
        %v4165 = vsel %vm707, %v4158, 0.0
        %v4166 = vsel %vm707, %v4160, 0.0
        %v4167 = vsel %vm707, %v4162, 0.0
        %v4168 = vsel %vm707, %v4164, 0.0
        %4169 = vrot.lane.b32.xlu0 %v4091, 125
        %v4170 = vpop.permute.xlu0 %4169
        %4171 = vrot.lane.b32.xlu0 %v4092, 125
        %v4172 = vpop.permute.xlu0 %4171
        %4173 = vrot.lane.b32.xlu0 %v4093, 125
        %v4174 = vpop.permute.xlu0 %4173
        %4175 = vrot.lane.b32.xlu0 %v4094, 125
        %v4176 = vpop.permute.xlu0 %4175
        %v4177 = vsel %vm744, %v4170, 0.0
        %v4178 = vsel %vm744, %v4172, 0.0
        %v4179 = vsel %vm744, %v4174, 0.0
        %v4180 = vsel %vm744, %v4176, 0.0
        %4182 = vset.pattern.permute.xlu0 0
        %4183 = vperm.xlu0 %4182, %v4105
        %v4184 = vpop.permute.xlu0 %4183
        %4187 = vset.pattern.permute.xlu0 0
        %4188 = vperm.xlu0 %4187, %v4106
        %v4189 = vpop.permute.xlu0 %4188
        %4192 = vset.pattern.permute.xlu0 0
        %4193 = vperm.xlu0 %4192, %v4107
        %v4194 = vpop.permute.xlu0 %4193
        %4197 = vset.pattern.permute.xlu0 0
        %4198 = vperm.xlu0 %4197, %v4108
        %v4199 = vpop.permute.xlu0 %4198
        %v4202 = vsel %vm1324, %v4097, 0
        %v4205 = vsel %vm1324, %v4099, 0
        %v4208 = vsel %vm1324, %v4101, 0
        %v4211 = vsel %vm1324, %v4103, 0
        %4213 = vmatpush.msra.mxu0 %v4094
        %4214 = vmatpush.msra.mxu0 %v4093
        %4215 = vmatpush.msra.mxu0 %v4092
        %4216 = vmatpush.msra.mxu0 %v4091
        %4217 = vmatpush.msra.mxu0 %v4144
        %4218 = vmatpush.msra.mxu0 %v4143
        %4219 = vmatpush.msra.mxu0 %v4142
        %4220 = vmatpush.msra.mxu0 %v4141
        %4221 = vmatpush.msra.mxu0 %v4132
        %4222 = vmatpush.msra.mxu0 %v4131
        %4223 = vmatpush.msra.mxu0 %v4130
        %4224 = vmatpush.msra.mxu0 %v4129
        %4225 = vmatpush.msra.mxu0 %v4120
        %4226 = vmatpush.msra.mxu0 %v4119
        %4227 = vmatpush.msra.mxu0 %v4118
        %4228 = vmatpush.msra.mxu0 %v4117
        %4229 = vmatmul.f32.gmra.mxu0 %v4096
        %v4230 = vpop.f32.mrf.mxu0
        %v4231 = vadd.f32 %v4184, %v4230
        %4232 = vmatmul.f32.gmra.mxu0 %v4098
        %v4233 = vpop.f32.mrf.mxu0
        %v4234 = vadd.f32 %v4189, %v4233
        %4235 = vmatmul.f32.gmra.mxu0 %v4100
        %v4236 = vpop.f32.mrf.mxu0
        %v4237 = vadd.f32 %v4194, %v4236
        %4238 = vmatmul.f32.gmra.mxu0 %v4102
        %v4239 = vpop.f32.mrf.mxu0
        %v4240 = vadd.f32 %v4199, %v4239
        %4241 = vdwg.mxu0
        %4242 = vmatpush.msra.mxu0 0.0
        %4243 = vmatpush.msra.mxu0 0.0
        %4244 = vmatpush.msra.mxu0 0.0
        %4245 = vmatpush.msra.mxu0 0.0
        %4246 = vmatpush.msra.mxu0 %v4180
        %4247 = vmatpush.msra.mxu0 %v4179
        %4248 = vmatpush.msra.mxu0 %v4178
        %4249 = vmatpush.msra.mxu0 %v4177
        %4250 = vmatpush.msra.mxu0 %v4168
        %4251 = vmatpush.msra.mxu0 %v4167
        %4252 = vmatpush.msra.mxu0 %v4166
        %4253 = vmatpush.msra.mxu0 %v4165
        %4254 = vmatpush.msra.mxu0 %v4156
        %4255 = vmatpush.msra.mxu0 %v4155
        %4256 = vmatpush.msra.mxu0 %v4154
        %4257 = vmatpush.msra.mxu0 %v4153
        %4258 = vmatmul.f32.gmra.mxu0 %v4202
        %v4259 = vpop.f32.mrf.mxu0
        %v4260 = vadd.f32 %v4231, %v4259
        %4261 = vmatmul.f32.gmra.mxu0 %v4205
        %v4262 = vpop.f32.mrf.mxu0
        %v4263 = vadd.f32 %v4234, %v4262
        %4264 = vmatmul.f32.gmra.mxu0 %v4208
        %v4265 = vpop.f32.mrf.mxu0
        %v4266 = vadd.f32 %v4237, %v4265
        %4267 = vmatmul.f32.gmra.mxu0 %v4211
        %v4268 = vpop.f32.mrf.mxu0
        %v4269 = vadd.f32 %v4240, %v4268
        %4270 = vdwg.mxu0
        %v4271 = vadd.f32 %v4260, %v3111
        %v4272 = vadd.f32 %v4263, %v3112
        %v4273 = vadd.f32 %v4266, %v3113
        %v4274 = vadd.f32 %v4269, %v3114
        %v4275 = vld [vmem:[%s9] sm:$0xff]
        %v4276 = vld [vmem:[%s9 + $0x8] sm:$0xff]
        %v4277 = vld [vmem:[%s9 + $0x10] sm:$0xff]
        %v4278 = vld [vmem:[%s9 + $0x18] sm:$0xff]
        %v4279 = vld [vmem:[%s9 + $0x20] sm:$0xff]
        %v4280 = vld [vmem:[%s9 + $0x28] sm:$0xff]
        %v4281 = vld [vmem:[%s9 + $0x30] sm:$0xff]
        %v4282 = vld [vmem:[%s9 + $0x38] sm:$0xff]
        %v4283 = vld [vmem:[%s10] sm:$0xff]
        %v4284 = vld [vmem:[%s10 + $0x8] sm:$0xff]
        %v4285 = vld [vmem:[%s10 + $0x10] sm:$0xff]
        %v4286 = vld [vmem:[%s10 + $0x18] sm:$0xff]
        %v4287 = vld [vmem:[%s10 + $0x20] sm:$0xff]
        %v4288 = vld [vmem:[%s10 + $0x28] sm:$0xff]
        %v4289 = vld [vmem:[%s10 + $0x30] sm:$0xff]
        %v4290 = vld [vmem:[%s10 + $0x38] sm:$0xff]
        %4292 = vset.pattern.permute.xlu0 0
        %4293 = vperm.xlu0 %4292, %v4283
        %v4294 = vpop.permute.xlu0 %4293
        %4297 = vset.pattern.permute.xlu0 0
        %4298 = vperm.xlu0 %4297, %v4284
        %v4299 = vpop.permute.xlu0 %4298
        %4302 = vset.pattern.permute.xlu0 0
        %4303 = vperm.xlu0 %4302, %v4285
        %v4304 = vpop.permute.xlu0 %4303
        %4307 = vset.pattern.permute.xlu0 0
        %4308 = vperm.xlu0 %4307, %v4286
        %v4309 = vpop.permute.xlu0 %4308
        %4312 = vset.pattern.permute.xlu0 0
        %4313 = vperm.xlu0 %4312, %v4287
        %v4314 = vpop.permute.xlu0 %4313
        %4317 = vset.pattern.permute.xlu0 0
        %4318 = vperm.xlu0 %4317, %v4288
        %v4319 = vpop.permute.xlu0 %4318
        %4322 = vset.pattern.permute.xlu0 0
        %4323 = vperm.xlu0 %4322, %v4289
        %v4324 = vpop.permute.xlu0 %4323
        %4327 = vset.pattern.permute.xlu0 0
        %4328 = vperm.xlu0 %4327, %v4290
        %v4329 = vpop.permute.xlu0 %4328
        %vm4331 = vcmask 261120
        %v4333 = vsel %vm4331, %v4275, 0
        %v4336 = vsel %vm4331, %v4276, 0
        %v4339 = vsel %vm4331, %v4277, 0
        %v4342 = vsel %vm4331, %v4278, 0
        %v4345 = vsel %vm4331, %v4279, 0
        %v4348 = vsel %vm4331, %v4280, 0
        %v4351 = vsel %vm4331, %v4281, 0
        %v4354 = vsel %vm4331, %v4282, 0
        %4356 = vmatpush.msra.mxu0 0.0
        %4357 = vmatpush.msra.mxu0 0.0
        %4358 = vmatpush.msra.mxu0 0.0
        %4359 = vmatpush.msra.mxu0 0.0
        %4360 = vmatpush.msra.mxu0 0.0
        %4361 = vmatpush.msra.mxu0 0.0
        %4362 = vmatpush.msra.mxu0 0.0
        %4363 = vmatpush.msra.mxu0 0.0
        %4364 = vmatpush.msra.mxu0 0.0
        %4365 = vmatpush.msra.mxu0 0.0
        %4366 = vmatpush.msra.mxu0 0.0
        %4367 = vmatpush.msra.mxu0 0.0
        %4368 = vmatpush.msra.mxu0 %v4274
        %4369 = vmatpush.msra.mxu0 %v4273
        %4370 = vmatpush.msra.mxu0 %v4272
        %4371 = vmatpush.msra.mxu0 %v4271
        %4372 = vmatmul.f32.gmra.mxu0 %v4333
        %v4373 = vpop.f32.mrf.mxu0
        %v4374 = vadd.f32 %v4294, %v4373
        %4375 = vmatmul.f32.gmra.mxu0 %v4336
        %v4376 = vpop.f32.mrf.mxu0
        %v4377 = vadd.f32 %v4299, %v4376
        %4378 = vmatmul.f32.gmra.mxu0 %v4339
        %v4379 = vpop.f32.mrf.mxu0
        %v4380 = vadd.f32 %v4304, %v4379
        %4381 = vmatmul.f32.gmra.mxu0 %v4342
        %v4382 = vpop.f32.mrf.mxu0
        %v4383 = vadd.f32 %v4309, %v4382
        %4384 = vmatmul.f32.gmra.mxu0 %v4345
        %v4385 = vpop.f32.mrf.mxu0
        %v4386 = vadd.f32 %v4314, %v4385
        %4387 = vmatmul.f32.gmra.mxu0 %v4348
        %v4388 = vpop.f32.mrf.mxu0
        %v4389 = vadd.f32 %v4319, %v4388
        %4390 = vmatmul.f32.gmra.mxu0 %v4351
        %v4391 = vpop.f32.mrf.mxu0
        %v4392 = vadd.f32 %v4324, %v4391
        %4393 = vmatmul.f32.gmra.mxu0 %v4354
        %v4394 = vpop.f32.mrf.mxu0
        %v4395 = vadd.f32 %v4329, %v4394
        %4396 = vdwg.mxu0
        %v4397 = vmul.f32 %v4374, 0.5
        %v4398 = vmul.f32 %v4377, 0.5
        %v4399 = vmul.f32 %v4380, 0.5
        %v4400 = vmul.f32 %v4383, 0.5
        %v4401 = vmul.f32 %v4386, 0.5
        %v4402 = vmul.f32 %v4389, 0.5
        %v4403 = vmul.f32 %v4392, 0.5
        %v4404 = vmul.f32 %v4395, 0.5
        %v4405 = vmul.f32 %v4374, 0.70710677
        %v4406 = vmul.f32 %v4377, 0.70710677
        %v4407 = vmul.f32 %v4380, 0.70710677
        %v4408 = vmul.f32 %v4383, 0.70710677
        %v4409 = vmul.f32 %v4386, 0.70710677
        %v4410 = vmul.f32 %v4389, 0.70710677
        %v4411 = vmul.f32 %v4392, 0.70710677
        %v4412 = vmul.f32 %v4395, 0.70710677
        %v4413 = vand.u32 2147483647, %v4405
        %v4414 = vand.u32 2147483647, %v4406
        %v4415 = vand.u32 2147483647, %v4407
        %v4416 = vand.u32 2147483647, %v4408
        %v4417 = vand.u32 2147483647, %v4409
        %v4418 = vand.u32 2147483647, %v4410
        %v4419 = vand.u32 2147483647, %v4411
        %v4420 = vand.u32 2147483647, %v4412
        %v4421 = vmul.f32 %v4413, 0.3275911
        %v4422 = vmul.f32 %v4414, 0.3275911
        %v4423 = vmul.f32 %v4415, 0.3275911
        %v4424 = vmul.f32 %v4416, 0.3275911
        %v4425 = vmul.f32 %v4417, 0.3275911
        %v4426 = vmul.f32 %v4418, 0.3275911
        %v4427 = vmul.f32 %v4419, 0.3275911
        %v4428 = vmul.f32 %v4420, 0.3275911
        %v4429 = vadd.f32 %v4421, 1.0
        %v4430 = vadd.f32 %v4422, 1.0
        %v4431 = vadd.f32 %v4423, 1.0
        %v4432 = vadd.f32 %v4424, 1.0
        %v4433 = vadd.f32 %v4425, 1.0
        %v4434 = vadd.f32 %v4426, 1.0
        %v4435 = vadd.f32 %v4427, 1.0
        %v4436 = vadd.f32 %v4428, 1.0
        %v4437 = vrcp.pop %v4429
        %v4438 = vmul.f32 %v4429, %v4437
        %v4439 = vsub.f32 1.0, %v4438
        %v4440 = vmul.f32 %v4437, %v4439
        %v4441 = vadd.f32 %v4437, %v4440
        %vm4442 = vweird.f32 %v4429
        %vm4443 = vweird.f32 %v4437
        %vm4444 = vmor %vm4442, %vm4443
        %v4445 = vsel %vm4444, %v4437, %v4441
        %v4446 = vand.u32 2147483647, %v4429
        %vm4447 = vcmp.eq.f32.partialorder %v4446, 8.507059e+37
        %v4448 = vand.u32 %v4429, 2147483648
        %v4449 = vor.u32 1.1754944e-38, %v4448
        %v4450 = vsel %vm4447, %v4449, %v4445
        %v4451 = vmul.f32 1.0, %v4450
        %v4452 = vrcp.pop %v4430
        %v4453 = vmul.f32 %v4430, %v4452
        %v4454 = vsub.f32 1.0, %v4453
        %v4455 = vmul.f32 %v4452, %v4454
        %v4456 = vadd.f32 %v4452, %v4455
        %vm4457 = vweird.f32 %v4430
        %vm4458 = vweird.f32 %v4452
        %vm4459 = vmor %vm4457, %vm4458
        %v4460 = vsel %vm4459, %v4452, %v4456
        %v4461 = vand.u32 2147483647, %v4430
        %vm4462 = vcmp.eq.f32.partialorder %v4461, 8.507059e+37
        %v4463 = vand.u32 %v4430, 2147483648
        %v4464 = vor.u32 1.1754944e-38, %v4463
        %v4465 = vsel %vm4462, %v4464, %v4460
        %v4466 = vmul.f32 1.0, %v4465
        %v4467 = vrcp.pop %v4431
        %v4468 = vmul.f32 %v4431, %v4467
        %v4469 = vsub.f32 1.0, %v4468
        %v4470 = vmul.f32 %v4467, %v4469
        %v4471 = vadd.f32 %v4467, %v4470
        %vm4472 = vweird.f32 %v4431
        %vm4473 = vweird.f32 %v4467
        %vm4474 = vmor %vm4472, %vm4473
        %v4475 = vsel %vm4474, %v4467, %v4471
        %v4476 = vand.u32 2147483647, %v4431
        %vm4477 = vcmp.eq.f32.partialorder %v4476, 8.507059e+37
        %v4478 = vand.u32 %v4431, 2147483648
        %v4479 = vor.u32 1.1754944e-38, %v4478
        %v4480 = vsel %vm4477, %v4479, %v4475
        %v4481 = vmul.f32 1.0, %v4480
        %v4482 = vrcp.pop %v4432
        %v4483 = vmul.f32 %v4432, %v4482
        %v4484 = vsub.f32 1.0, %v4483
        %v4485 = vmul.f32 %v4482, %v4484
        %v4486 = vadd.f32 %v4482, %v4485
        %vm4487 = vweird.f32 %v4432
        %vm4488 = vweird.f32 %v4482
        %vm4489 = vmor %vm4487, %vm4488
        %v4490 = vsel %vm4489, %v4482, %v4486
        %v4491 = vand.u32 2147483647, %v4432
        %vm4492 = vcmp.eq.f32.partialorder %v4491, 8.507059e+37
        %v4493 = vand.u32 %v4432, 2147483648
        %v4494 = vor.u32 1.1754944e-38, %v4493
        %v4495 = vsel %vm4492, %v4494, %v4490
        %v4496 = vmul.f32 1.0, %v4495
        %v4497 = vrcp.pop %v4433
        %v4498 = vmul.f32 %v4433, %v4497
        %v4499 = vsub.f32 1.0, %v4498
        %v4500 = vmul.f32 %v4497, %v4499
        %v4501 = vadd.f32 %v4497, %v4500
        %vm4502 = vweird.f32 %v4433
        %vm4503 = vweird.f32 %v4497
        %vm4504 = vmor %vm4502, %vm4503
        %v4505 = vsel %vm4504, %v4497, %v4501
        %v4506 = vand.u32 2147483647, %v4433
        %vm4507 = vcmp.eq.f32.partialorder %v4506, 8.507059e+37
        %v4508 = vand.u32 %v4433, 2147483648
        %v4509 = vor.u32 1.1754944e-38, %v4508
        %v4510 = vsel %vm4507, %v4509, %v4505
        %v4511 = vmul.f32 1.0, %v4510
        %v4512 = vrcp.pop %v4434
        %v4513 = vmul.f32 %v4434, %v4512
        %v4514 = vsub.f32 1.0, %v4513
        %v4515 = vmul.f32 %v4512, %v4514
        %v4516 = vadd.f32 %v4512, %v4515
        %vm4517 = vweird.f32 %v4434
        %vm4518 = vweird.f32 %v4512
        %vm4519 = vmor %vm4517, %vm4518
        %v4520 = vsel %vm4519, %v4512, %v4516
        %v4521 = vand.u32 2147483647, %v4434
        %vm4522 = vcmp.eq.f32.partialorder %v4521, 8.507059e+37
        %v4523 = vand.u32 %v4434, 2147483648
        %v4524 = vor.u32 1.1754944e-38, %v4523
        %v4525 = vsel %vm4522, %v4524, %v4520
        %v4526 = vmul.f32 1.0, %v4525
        %v4527 = vrcp.pop %v4435
        %v4528 = vmul.f32 %v4435, %v4527
        %v4529 = vsub.f32 1.0, %v4528
        %v4530 = vmul.f32 %v4527, %v4529
        %v4531 = vadd.f32 %v4527, %v4530
        %vm4532 = vweird.f32 %v4435
        %vm4533 = vweird.f32 %v4527
        %vm4534 = vmor %vm4532, %vm4533
        %v4535 = vsel %vm4534, %v4527, %v4531
        %v4536 = vand.u32 2147483647, %v4435
        %vm4537 = vcmp.eq.f32.partialorder %v4536, 8.507059e+37
        %v4538 = vand.u32 %v4435, 2147483648
        %v4539 = vor.u32 1.1754944e-38, %v4538
        %v4540 = vsel %vm4537, %v4539, %v4535
        %v4541 = vmul.f32 1.0, %v4540
        %v4542 = vrcp.pop %v4436
        %v4543 = vmul.f32 %v4436, %v4542
        %v4544 = vsub.f32 1.0, %v4543
        %v4545 = vmul.f32 %v4542, %v4544
        %v4546 = vadd.f32 %v4542, %v4545
        %vm4547 = vweird.f32 %v4436
        %vm4548 = vweird.f32 %v4542
        %vm4549 = vmor %vm4547, %vm4548
        %v4550 = vsel %vm4549, %v4542, %v4546
        %v4551 = vand.u32 2147483647, %v4436
        %vm4552 = vcmp.eq.f32.partialorder %v4551, 8.507059e+37
        %v4553 = vand.u32 %v4436, 2147483648
        %v4554 = vor.u32 1.1754944e-38, %v4553
        %v4555 = vsel %vm4552, %v4554, %v4550
        %v4556 = vmul.f32 1.0, %v4555
        %v4557 = vmul.f32 %v4451, 1.0614054
        %v4558 = vmul.f32 %v4466, 1.0614054
        %v4559 = vmul.f32 %v4481, 1.0614054
        %v4560 = vmul.f32 %v4496, 1.0614054
        %v4561 = vmul.f32 %v4511, 1.0614054
        %v4562 = vmul.f32 %v4526, 1.0614054
        %v4563 = vmul.f32 %v4541, 1.0614054
        %v4564 = vmul.f32 %v4556, 1.0614054
        %v4565 = vadd.f32 %v4557, -1.4531521
        %v4566 = vadd.f32 %v4558, -1.4531521
        %v4567 = vadd.f32 %v4559, -1.4531521
        %v4568 = vadd.f32 %v4560, -1.4531521
        %v4569 = vadd.f32 %v4561, -1.4531521
        %v4570 = vadd.f32 %v4562, -1.4531521
        %v4571 = vadd.f32 %v4563, -1.4531521
        %v4572 = vadd.f32 %v4564, -1.4531521
        %v4573 = vmul.f32 %v4565, %v4451
        %v4574 = vmul.f32 %v4566, %v4466
        %v4575 = vmul.f32 %v4567, %v4481
        %v4576 = vmul.f32 %v4568, %v4496
        %v4577 = vmul.f32 %v4569, %v4511
        %v4578 = vmul.f32 %v4570, %v4526
        %v4579 = vmul.f32 %v4571, %v4541
        %v4580 = vmul.f32 %v4572, %v4556
        %v4581 = vadd.f32 %v4573, 1.4214138
        %v4582 = vadd.f32 %v4574, 1.4214138
        %v4583 = vadd.f32 %v4575, 1.4214138
        %v4584 = vadd.f32 %v4576, 1.4214138
        %v4585 = vadd.f32 %v4577, 1.4214138
        %v4586 = vadd.f32 %v4578, 1.4214138
        %v4587 = vadd.f32 %v4579, 1.4214138
        %v4588 = vadd.f32 %v4580, 1.4214138
        %v4589 = vmul.f32 %v4581, %v4451
        %v4590 = vmul.f32 %v4582, %v4466
        %v4591 = vmul.f32 %v4583, %v4481
        %v4592 = vmul.f32 %v4584, %v4496
        %v4593 = vmul.f32 %v4585, %v4511
        %v4594 = vmul.f32 %v4586, %v4526
        %v4595 = vmul.f32 %v4587, %v4541
        %v4596 = vmul.f32 %v4588, %v4556
        %v4597 = vadd.f32 %v4589, -0.28449672
        %v4598 = vadd.f32 %v4590, -0.28449672
        %v4599 = vadd.f32 %v4591, -0.28449672
        %v4600 = vadd.f32 %v4592, -0.28449672
        %v4601 = vadd.f32 %v4593, -0.28449672
        %v4602 = vadd.f32 %v4594, -0.28449672
        %v4603 = vadd.f32 %v4595, -0.28449672
        %v4604 = vadd.f32 %v4596, -0.28449672
        %v4605 = vmul.f32 %v4597, %v4451
        %v4606 = vmul.f32 %v4598, %v4466
        %v4607 = vmul.f32 %v4599, %v4481
        %v4608 = vmul.f32 %v4600, %v4496
        %v4609 = vmul.f32 %v4601, %v4511
        %v4610 = vmul.f32 %v4602, %v4526
        %v4611 = vmul.f32 %v4603, %v4541
        %v4612 = vmul.f32 %v4604, %v4556
        %v4613 = vadd.f32 %v4605, 0.2548296
        %v4614 = vadd.f32 %v4606, 0.2548296
        %v4615 = vadd.f32 %v4607, 0.2548296
        %v4616 = vadd.f32 %v4608, 0.2548296
        %v4617 = vadd.f32 %v4609, 0.2548296
        %v4618 = vadd.f32 %v4610, 0.2548296
        %v4619 = vadd.f32 %v4611, 0.2548296
        %v4620 = vadd.f32 %v4612, 0.2548296
        %v4621 = vmul.f32 %v4613, %v4451
        %v4622 = vmul.f32 %v4614, %v4466
        %v4623 = vmul.f32 %v4615, %v4481
        %v4624 = vmul.f32 %v4616, %v4496
        %v4625 = vmul.f32 %v4617, %v4511
        %v4626 = vmul.f32 %v4618, %v4526
        %v4627 = vmul.f32 %v4619, %v4541
        %v4628 = vmul.f32 %v4620, %v4556
        %v4629 = vsub.f32 0.0, %v4413
        %v4630 = vsub.f32 0.0, %v4414
        %v4631 = vsub.f32 0.0, %v4415
        %v4632 = vsub.f32 0.0, %v4416
        %v4633 = vsub.f32 0.0, %v4417
        %v4634 = vsub.f32 0.0, %v4418
        %v4635 = vsub.f32 0.0, %v4419
        %v4636 = vsub.f32 0.0, %v4420
        %v4637 = vmul.f32 %v4629, %v4413
        %v4638 = vmul.f32 %v4630, %v4414
        %v4639 = vmul.f32 %v4631, %v4415
        %v4640 = vmul.f32 %v4632, %v4416
        %v4641 = vmul.f32 %v4633, %v4417
        %v4642 = vmul.f32 %v4634, %v4418
        %v4643 = vmul.f32 %v4635, %v4419
        %v4644 = vmul.f32 %v4636, %v4420
        %v4645 = vmul.f32 %v4637, 1.442695
        %v4646 = vpow.pop %v4645
        %v4647 = vmul.f32 %v4638, 1.442695
        %v4648 = vpow.pop %v4647
        %v4649 = vmul.f32 %v4639, 1.442695
        %v4650 = vpow.pop %v4649
        %v4651 = vmul.f32 %v4640, 1.442695
        %v4652 = vpow.pop %v4651
        %v4653 = vmul.f32 %v4641, 1.442695
        %v4654 = vpow.pop %v4653
        %v4655 = vmul.f32 %v4642, 1.442695
        %v4656 = vpow.pop %v4655
        %v4657 = vmul.f32 %v4643, 1.442695
        %v4658 = vpow.pop %v4657
        %v4659 = vmul.f32 %v4644, 1.442695
        %v4660 = vpow.pop %v4659
        %v4661 = vmul.f32 %v4621, %v4646
        %v4662 = vmul.f32 %v4622, %v4648
        %v4663 = vmul.f32 %v4623, %v4650
        %v4664 = vmul.f32 %v4624, %v4652
        %v4665 = vmul.f32 %v4625, %v4654
        %v4666 = vmul.f32 %v4626, %v4656
        %v4667 = vmul.f32 %v4627, %v4658
        %v4668 = vmul.f32 %v4628, %v4660
        %v4669 = vsub.f32 1.0, %v4661
        %v4670 = vsub.f32 1.0, %v4662
        %v4671 = vsub.f32 1.0, %v4663
        %v4672 = vsub.f32 1.0, %v4664
        %v4673 = vsub.f32 1.0, %v4665
        %v4674 = vsub.f32 1.0, %v4666
        %v4675 = vsub.f32 1.0, %v4667
        %v4676 = vsub.f32 1.0, %v4668
        %vm4677 = vcmp.ge.f32.partialorder %v4405, 0.0
        %vm4678 = vcmp.ge.f32.partialorder %v4406, 0.0
        %vm4679 = vcmp.ge.f32.partialorder %v4407, 0.0
        %vm4680 = vcmp.ge.f32.partialorder %v4408, 0.0
        %vm4681 = vcmp.ge.f32.partialorder %v4409, 0.0
        %vm4682 = vcmp.ge.f32.partialorder %v4410, 0.0
        %vm4683 = vcmp.ge.f32.partialorder %v4411, 0.0
        %vm4684 = vcmp.ge.f32.partialorder %v4412, 0.0
        %v4685 = vsub.f32 0.0, %v4669
        %v4686 = vsub.f32 0.0, %v4670
        %v4687 = vsub.f32 0.0, %v4671
        %v4688 = vsub.f32 0.0, %v4672
        %v4689 = vsub.f32 0.0, %v4673
        %v4690 = vsub.f32 0.0, %v4674
        %v4691 = vsub.f32 0.0, %v4675
        %v4692 = vsub.f32 0.0, %v4676
        %v4693 = vsel %vm4677, %v4669, %v4685
        %v4694 = vsel %vm4678, %v4670, %v4686
        %v4695 = vsel %vm4679, %v4671, %v4687
        %v4696 = vsel %vm4680, %v4672, %v4688
        %v4697 = vsel %vm4681, %v4673, %v4689
        %v4698 = vsel %vm4682, %v4674, %v4690
        %v4699 = vsel %vm4683, %v4675, %v4691
        %v4700 = vsel %vm4684, %v4676, %v4692
        %v4701 = vadd.f32 %v4693, 1.0
        %v4702 = vadd.f32 %v4694, 1.0
        %v4703 = vadd.f32 %v4695, 1.0
        %v4704 = vadd.f32 %v4696, 1.0
        %v4705 = vadd.f32 %v4697, 1.0
        %v4706 = vadd.f32 %v4698, 1.0
        %v4707 = vadd.f32 %v4699, 1.0
        %v4708 = vadd.f32 %v4700, 1.0
        %v4709 = vmul.f32 %v4397, %v4701
        %v4710 = vmul.f32 %v4398, %v4702
        %v4711 = vmul.f32 %v4399, %v4703
        %v4712 = vmul.f32 %v4400, %v4704
        %v4713 = vmul.f32 %v4401, %v4705
        %v4714 = vmul.f32 %v4402, %v4706
        %v4715 = vmul.f32 %v4403, %v4707
        %v4716 = vmul.f32 %v4404, %v4708
        %v4717 = vmul.f32 %v4709, %v4709
        %v4718 = vmul.f32 %v4710, %v4710
        %v4719 = vmul.f32 %v4711, %v4711
        %v4720 = vmul.f32 %v4712, %v4712
        %v4721 = vmul.f32 %v4713, %v4713
        %v4722 = vmul.f32 %v4714, %v4714
        %v4723 = vmul.f32 %v4715, %v4715
        %v4724 = vmul.f32 %v4716, %v4716
        %4725 = vadd.xlane.f32.xlu0 %v4717
        %v4726 = vpop.xlane.xlu0 %4725
        %4727 = vadd.xlane.f32.xlu0 %v4718
        %v4728 = vpop.xlane.xlu0 %4727
        %4729 = vadd.xlane.f32.xlu0 %v4719
        %v4730 = vpop.xlane.xlu0 %4729
        %4731 = vadd.xlane.f32.xlu0 %v4720
        %v4732 = vpop.xlane.xlu0 %4731
        %4733 = vadd.xlane.f32.xlu0 %v4721
        %v4734 = vpop.xlane.xlu0 %4733
        %4735 = vadd.xlane.f32.xlu0 %v4722
        %v4736 = vpop.xlane.xlu0 %4735
        %4737 = vadd.xlane.f32.xlu0 %v4723
        %v4738 = vpop.xlane.xlu0 %4737
        %4739 = vadd.xlane.f32.xlu0 %v4724
        %v4740 = vpop.xlane.xlu0 %4739
        %v4741 = vrsqrt.pop %v4726
        %v4742 = vmul.f32 %v4741, %v4726
        %v4743 = vmul.f32 %v4742, %v4741
        %v4744 = vmul.f32 0.5, %v4743
        %v4745 = vsub.f32 1.5, %v4744
        %v4746 = vmul.f32 %v4741, %v4745
        %v4747 = vmul.f32 %v4726, %v4746
        %vm4748 = vcmp.eq.f32.partialorder %v4726, inf
        %v4749 = vsel %vm4748, %v4726, %v4747
        %vm4750 = vcmp.eq.f32.partialorder %v4726, 0.0
        %v4751 = vand.u32 %v4726, 2147483648
        %v4752 = vsel %vm4750, %v4751, %v4749
        %v4753 = vrsqrt.pop %v4728
        %v4754 = vmul.f32 %v4753, %v4728
        %v4755 = vmul.f32 %v4754, %v4753
        %v4756 = vmul.f32 0.5, %v4755
        %v4757 = vsub.f32 1.5, %v4756
        %v4758 = vmul.f32 %v4753, %v4757
        %v4759 = vmul.f32 %v4728, %v4758
        %vm4760 = vcmp.eq.f32.partialorder %v4728, inf
        %v4761 = vsel %vm4760, %v4728, %v4759
        %vm4762 = vcmp.eq.f32.partialorder %v4728, 0.0
        %v4763 = vand.u32 %v4728, 2147483648
        %v4764 = vsel %vm4762, %v4763, %v4761
        %v4765 = vrsqrt.pop %v4730
        %v4766 = vmul.f32 %v4765, %v4730
        %v4767 = vmul.f32 %v4766, %v4765
        %v4768 = vmul.f32 0.5, %v4767
        %v4769 = vsub.f32 1.5, %v4768
        %v4770 = vmul.f32 %v4765, %v4769
        %v4771 = vmul.f32 %v4730, %v4770
        %vm4772 = vcmp.eq.f32.partialorder %v4730, inf
        %v4773 = vsel %vm4772, %v4730, %v4771
        %vm4774 = vcmp.eq.f32.partialorder %v4730, 0.0
        %v4775 = vand.u32 %v4730, 2147483648
        %v4776 = vsel %vm4774, %v4775, %v4773
        %v4777 = vrsqrt.pop %v4732
        %v4778 = vmul.f32 %v4777, %v4732
        %v4779 = vmul.f32 %v4778, %v4777
        %v4780 = vmul.f32 0.5, %v4779
        %v4781 = vsub.f32 1.5, %v4780
        %v4782 = vmul.f32 %v4777, %v4781
        %v4783 = vmul.f32 %v4732, %v4782
        %vm4784 = vcmp.eq.f32.partialorder %v4732, inf
        %v4785 = vsel %vm4784, %v4732, %v4783
        %vm4786 = vcmp.eq.f32.partialorder %v4732, 0.0
        %v4787 = vand.u32 %v4732, 2147483648
        %v4788 = vsel %vm4786, %v4787, %v4785
        %v4789 = vrsqrt.pop %v4734
        %v4790 = vmul.f32 %v4789, %v4734
        %v4791 = vmul.f32 %v4790, %v4789
        %v4792 = vmul.f32 0.5, %v4791
        %v4793 = vsub.f32 1.5, %v4792
        %v4794 = vmul.f32 %v4789, %v4793
        %v4795 = vmul.f32 %v4734, %v4794
        %vm4796 = vcmp.eq.f32.partialorder %v4734, inf
        %v4797 = vsel %vm4796, %v4734, %v4795
        %vm4798 = vcmp.eq.f32.partialorder %v4734, 0.0
        %v4799 = vand.u32 %v4734, 2147483648
        %v4800 = vsel %vm4798, %v4799, %v4797
        %v4801 = vrsqrt.pop %v4736
        %v4802 = vmul.f32 %v4801, %v4736
        %v4803 = vmul.f32 %v4802, %v4801
        %v4804 = vmul.f32 0.5, %v4803
        %v4805 = vsub.f32 1.5, %v4804
        %v4806 = vmul.f32 %v4801, %v4805
        %v4807 = vmul.f32 %v4736, %v4806
        %vm4808 = vcmp.eq.f32.partialorder %v4736, inf
        %v4809 = vsel %vm4808, %v4736, %v4807
        %vm4810 = vcmp.eq.f32.partialorder %v4736, 0.0
        %v4811 = vand.u32 %v4736, 2147483648
        %v4812 = vsel %vm4810, %v4811, %v4809
        %v4813 = vrsqrt.pop %v4738
        %v4814 = vmul.f32 %v4813, %v4738
        %v4815 = vmul.f32 %v4814, %v4813
        %v4816 = vmul.f32 0.5, %v4815
        %v4817 = vsub.f32 1.5, %v4816
        %v4818 = vmul.f32 %v4813, %v4817
        %v4819 = vmul.f32 %v4738, %v4818
        %vm4820 = vcmp.eq.f32.partialorder %v4738, inf
        %v4821 = vsel %vm4820, %v4738, %v4819
        %vm4822 = vcmp.eq.f32.partialorder %v4738, 0.0
        %v4823 = vand.u32 %v4738, 2147483648
        %v4824 = vsel %vm4822, %v4823, %v4821
        %v4825 = vrsqrt.pop %v4740
        %v4826 = vmul.f32 %v4825, %v4740
        %v4827 = vmul.f32 %v4826, %v4825
        %v4828 = vmul.f32 0.5, %v4827
        %v4829 = vsub.f32 1.5, %v4828
        %v4830 = vmul.f32 %v4825, %v4829
        %v4831 = vmul.f32 %v4740, %v4830
        %vm4832 = vcmp.eq.f32.partialorder %v4740, inf
        %v4833 = vsel %vm4832, %v4740, %v4831
        %vm4834 = vcmp.eq.f32.partialorder %v4740, 0.0
        %v4835 = vand.u32 %v4740, 2147483648
        %v4836 = vsel %vm4834, %v4835, %v4833
        %v4837 = vadd.f32 %v4752, %v4764
        %v4838 = vadd.f32 %v4837, %v4776
        %v4839 = vadd.f32 %v4838, %v4788
        %v4840 = vadd.f32 %v4839, %v4800
        %v4841 = vadd.f32 %v4840, %v4812
        %v4842 = vadd.f32 %v4841, %v4824
        %v4843 = vadd.f32 %v4842, %v4836
        %v4844 = vrot.slane %v4843, 4
        %v4845 = vadd.f32 %v4843, %v4844
        %v4846 = vrot.slane %v4845, 2
        %v4847 = vadd.f32 %v4845, %v4846
        %v4848 = vrot.slane %v4847, 1
        %v4849 = vadd.f32 %v4847, %v4848
        %v4850 = vrcp.pop 64.0
        %v4851 = vmul.f32 64.0, %v4850
        %v4852 = vsub.f32 1.0, %v4851
        %v4853 = vmul.f32 %v4850, %v4852
        %v4854 = vadd.f32 %v4850, %v4853
        %vm4855 = vweird.f32 %v4850
        %v4856 = vsel %vm4855, %v4850, %v4854
        %v4857 = vmul.f32 %v4849, %v4856
        %v4858 = vadd.f32 %v4857, 1e-06
        %v4859 = vrcp.pop %v4858
        %v4860 = vmul.f32 %v4858, %v4859
        %v4861 = vsub.f32 1.0, %v4860
        %v4862 = vmul.f32 %v4859, %v4861
        %v4863 = vadd.f32 %v4859, %v4862
        %vm4864 = vweird.f32 %v4858
        %vm4865 = vweird.f32 %v4859
        %vm4866 = vmor %vm4864, %vm4865
        %v4867 = vsel %vm4866, %v4859, %v4863
        %v4868 = vand.u32 2147483647, %v4858
        %vm4869 = vcmp.eq.f32.partialorder %v4868, 8.507059e+37
        %v4870 = vand.u32 %v4858, 2147483648
        %v4871 = vor.u32 1.1754944e-38, %v4870
        %v4872 = vsel %vm4869, %v4871, %v4867
        %v4873 = vmul.f32 %v4752, %v4872
        %v4874 = vmul.f32 %v4764, %v4872
        %v4875 = vmul.f32 %v4776, %v4872
        %v4876 = vmul.f32 %v4788, %v4872
        %v4877 = vmul.f32 %v4800, %v4872
        %v4878 = vmul.f32 %v4812, %v4872
        %v4879 = vmul.f32 %v4824, %v4872
        %v4880 = vmul.f32 %v4836, %v4872
        %v4881 = vld [vmem:[%s11] sm:$0xff]
        %v4882 = vld [vmem:[%s11 + $0x8] sm:$0xff]
        %v4883 = vld [vmem:[%s11 + $0x10] sm:$0xff]
        %v4884 = vld [vmem:[%s11 + $0x18] sm:$0xff]
        %v4885 = vld [vmem:[%s11 + $0x20] sm:$0xff]
        %v4886 = vld [vmem:[%s11 + $0x28] sm:$0xff]
        %v4887 = vld [vmem:[%s11 + $0x30] sm:$0xff]
        %v4888 = vld [vmem:[%s11 + $0x38] sm:$0xff]
        %v4889 = vmul.f32 %v4709, %v4873
        %v4890 = vmul.f32 %v4710, %v4874
        %v4891 = vmul.f32 %v4711, %v4875
        %v4892 = vmul.f32 %v4712, %v4876
        %v4893 = vmul.f32 %v4713, %v4877
        %v4894 = vmul.f32 %v4714, %v4878
        %v4895 = vmul.f32 %v4715, %v4879
        %v4896 = vmul.f32 %v4716, %v4880
        %4898 = vset.pattern.permute.xlu0 0
        %4899 = vperm.xlu0 %4898, %v4881
        %v4900 = vpop.permute.xlu0 %4899
        %4903 = vset.pattern.permute.xlu0 0
        %4904 = vperm.xlu0 %4903, %v4882
        %v4905 = vpop.permute.xlu0 %4904
        %4908 = vset.pattern.permute.xlu0 0
        %4909 = vperm.xlu0 %4908, %v4883
        %v4910 = vpop.permute.xlu0 %4909
        %4913 = vset.pattern.permute.xlu0 0
        %4914 = vperm.xlu0 %4913, %v4884
        %v4915 = vpop.permute.xlu0 %4914
        %4918 = vset.pattern.permute.xlu0 0
        %4919 = vperm.xlu0 %4918, %v4885
        %v4920 = vpop.permute.xlu0 %4919
        %4923 = vset.pattern.permute.xlu0 0
        %4924 = vperm.xlu0 %4923, %v4886
        %v4925 = vpop.permute.xlu0 %4924
        %4928 = vset.pattern.permute.xlu0 0
        %4929 = vperm.xlu0 %4928, %v4887
        %v4930 = vpop.permute.xlu0 %4929
        %4933 = vset.pattern.permute.xlu0 0
        %4934 = vperm.xlu0 %4933, %v4888
        %v4935 = vpop.permute.xlu0 %4934
        %v4937 = vmul.f32 %v4900, %v4889
        %v4938 = vmul.f32 %v4905, %v4890
        %v4939 = vmul.f32 %v4910, %v4891
        %v4940 = vmul.f32 %v4915, %v4892
        %v4941 = vmul.f32 %v4920, %v4893
        %v4942 = vmul.f32 %v4925, %v4894
        %v4943 = vmul.f32 %v4930, %v4895
        %v4944 = vmul.f32 %v4935, %v4896
        %v4945 = vld [vmem:[%s12] sm:$0xff]
        %v4946 = vld [vmem:[%s12 + $0x8] sm:$0xff]
        %v4947 = vld [vmem:[%s12 + $0x10] sm:$0xff]
        %v4948 = vld [vmem:[%s12 + $0x18] sm:$0xff]
        %v4949 = vld [vmem:[%s12 + $0x20] sm:$0xff]
        %v4950 = vld [vmem:[%s12 + $0x28] sm:$0xff]
        %v4951 = vld [vmem:[%s12 + $0x30] sm:$0xff]
        %v4952 = vld [vmem:[%s12 + $0x38] sm:$0xff]
        %4954 = vset.pattern.permute.xlu0 0
        %4955 = vperm.xlu0 %4954, %v4945
        %v4956 = vpop.permute.xlu0 %4955
        %4959 = vset.pattern.permute.xlu0 0
        %4960 = vperm.xlu0 %4959, %v4946
        %v4961 = vpop.permute.xlu0 %4960
        %4964 = vset.pattern.permute.xlu0 0
        %4965 = vperm.xlu0 %4964, %v4947
        %v4966 = vpop.permute.xlu0 %4965
        %4969 = vset.pattern.permute.xlu0 0
        %4970 = vperm.xlu0 %4969, %v4948
        %v4971 = vpop.permute.xlu0 %4970
        %4974 = vset.pattern.permute.xlu0 0
        %4975 = vperm.xlu0 %4974, %v4949
        %v4976 = vpop.permute.xlu0 %4975
        %4979 = vset.pattern.permute.xlu0 0
        %4980 = vperm.xlu0 %4979, %v4950
        %v4981 = vpop.permute.xlu0 %4980
        %4984 = vset.pattern.permute.xlu0 0
        %4985 = vperm.xlu0 %4984, %v4951
        %v4986 = vpop.permute.xlu0 %4985
        %4989 = vset.pattern.permute.xlu0 0
        %4990 = vperm.xlu0 %4989, %v4952
        %v4991 = vpop.permute.xlu0 %4990
        %v4993 = vadd.f32 %v4937, %v4956
        %v4994 = vadd.f32 %v4938, %v4961
        %v4995 = vadd.f32 %v4939, %v4966
        %v4996 = vadd.f32 %v4940, %v4971
        %v4997 = vadd.f32 %v4941, %v4976
        %v4998 = vadd.f32 %v4942, %v4981
        %v4999 = vadd.f32 %v4943, %v4986
        %v5000 = vadd.f32 %v4944, %v4991
        %v5001 = vadd.f32 %v4993, %v4709
        %v5002 = vadd.f32 %v4994, %v4710
        %v5003 = vadd.f32 %v4995, %v4711
        %v5004 = vadd.f32 %v4996, %v4712
        %v5005 = vadd.f32 %v4997, %v4713
        %v5006 = vadd.f32 %v4998, %v4714
        %v5007 = vadd.f32 %v4999, %v4715
        %v5008 = vadd.f32 %v5000, %v4716
        %v5009 = vld [vmem:[%s13] sm:$0xff]
        %v5010 = vld [vmem:[%s13 + $0x8] sm:$0xff]
        %v5011 = vld [vmem:[%s14] sm:$0xff]
        %v5012 = vld [vmem:[%s14 + $0x8] sm:$0xff]
        %5014 = vset.pattern.permute.xlu0 0
        %5015 = vperm.xlu0 %5014, %v5011
        %v5016 = vpop.permute.xlu0 %5015
        %5019 = vset.pattern.permute.xlu0 0
        %5020 = vperm.xlu0 %5019, %v5012
        %v5021 = vpop.permute.xlu0 %5020
        %vm5023 = vcmask 523264
        %v5025 = vsel %vm5023, %v5009, 0
        %v5028 = vsel %vm5023, %v5010, 0
        %5030 = vmatpush.msra.mxu0 0.0
        %5031 = vmatpush.msra.mxu0 0.0
        %5032 = vmatpush.msra.mxu0 0.0
        %5033 = vmatpush.msra.mxu0 0.0
        %5034 = vmatpush.msra.mxu0 0.0
        %5035 = vmatpush.msra.mxu0 0.0
        %5036 = vmatpush.msra.mxu0 0.0
        %5037 = vmatpush.msra.mxu0 0.0
        %5038 = vmatpush.msra.mxu0 %v5008
        %5039 = vmatpush.msra.mxu0 %v5007
        %5040 = vmatpush.msra.mxu0 %v5006
        %5041 = vmatpush.msra.mxu0 %v5005
        %5042 = vmatpush.msra.mxu0 %v5004
        %5043 = vmatpush.msra.mxu0 %v5003
        %5044 = vmatpush.msra.mxu0 %v5002
        %5045 = vmatpush.msra.mxu0 %v5001
        %5046 = vmatmul.f32.gmra.mxu0 %v5025
        %v5047 = vpop.f32.mrf.mxu0
        %v5048 = vadd.f32 %v5016, %v5047
        %5049 = vmatmul.f32.gmra.mxu0 %v5028
        %v5050 = vpop.f32.mrf.mxu0
        %v5051 = vadd.f32 %v5021, %v5050
        %5052 = vdwg.mxu0
        %v5053 = vadd.f32 %v513, %v5048
        %v5054 = vadd.f32 %v514, %v5051
        %5055 = vst [vmem:[%s502] sm:$0xff] %v5053
        %5056 = vst [vmem:[%s502 + $0x8] sm:$0xff] %v5054
        %s5057 = sand.u32 %s362, 1
        %s5058 = scalar_lea.sflag [#allocation3], %s5057
        %s5059 = sand.u32 %s362, 1
        %s5060 = smul.addr %s5059, 16
        %s5061 = scalar_lea.vmem [#allocation2], %s5060
        // Predicated region
        $region81: #{tpu_custom_call.1} parent=79 // pred_check
          %p5062 = pneg %p372
        $region82: #{tpu_custom_call.1} parent=79 // pred_check_branch
          %5064 = sbr.rel (%p5062) target = $region84
        $region83: #{tpu_custom_call.1} parent=79 // pred_region
          %5066 = vsyncadd %s5058, 0
          %s5067 = smul.addr %s29, 2
          %s5068 = smul.addr %s5067, 8
          %s5069 = scalar_lea.hbm %s15, %s5068
          %s5070 = sshll.u32 %s5061, 4
          %s5071 = int_to_ptr.vmem [resolvable:$true] %s5070
          %s5072 = sshll.u32 %s5069, 4
          %s5073 = int_to_ptr.hbm [resolvable:$true] %s5072
          %5078 = dma.vmem_to_hbm [thread:$0]  %s5071, 256, %s5073, %s5058, 128, 128, 8
        $region84: #{tpu_custom_call.1} parent=79 // pred_fallthru
          _
      $region80: #{tpu_custom_call.1} parent=5 // pred_fallthru
        _
      %p5079 = scmp.le.s32.totalorder 2, %s24
      // Predicated region
      $region85: #{tpu_custom_call.1} parent=5 // pred_check
        %p5080 = pneg %p5079
      $region86: #{tpu_custom_call.1} parent=5 // pred_check_branch
        %5082 = sbr.rel (%p5080) target = $region88
      $region87: #{tpu_custom_call.1} parent=5 // pred_region
        %s5083 = ssub.s32 %s24, 2
        // Predicated region
        $region89: #{tpu_custom_call.1} parent=87 // pred_check
          %p5084 = pneg %p378
        $region90: #{tpu_custom_call.1} parent=87 // pred_check_branch
          %5086 = sbr.rel (%p5084) target = $region92
        $region91: #{tpu_custom_call.1} parent=87 // pred_region
          %s5087 = sand.u32 %s363, 1
          %s5088 = scalar_lea.sflag [#allocation3], %s5087
          %s5089 = sand.u32 %s363, 1
          %s5090 = smul.addr %s5089, 16
          %s5091 = scalar_lea.vmem [#allocation2], %s5090
          %5093 = dma.done %s5088, 256
        $region92: #{tpu_custom_call.1} parent=87 // pred_fallthru
          _
      $region88: #{tpu_custom_call.1} parent=5 // pred_fallthru
        _
    $region6: #{tpu_custom_call.1} parent=1 // loop_footer
      %s28 = sadd.s32 1, %s24
    $region7: #{tpu_custom_call.1} parent=1 // loop_footer_branch
      %23 = sbr.rel target = $region3
    $region8: #{tpu_custom_call.1} parent=1 // loop_exit
      _
    %5094 = vsyncpa [#allocation3], 1
    %s5095 = scalar_lea.sflag [#allocation3], 1
    %5096 = vsyncpa %s5095, 1

</llo_original>
